<compile_context>
chip_gen: v7x
topology: tpu7x:2x2x1
jax: 0.10.0
libtpu: 0.0.40
codegen_flags: <defaults>
</compile_context>

<pallas_src>
import jax
import jax.numpy as jnp
from jax.experimental import pallas as pl
from jax.experimental.pallas import tpu as pltpu

# ----------------------------- small config ---------------------------------
PERCEPTION_IN = 256          # cfg.perception_in
ZD = 32                      # cfg.vae_zd
WAYPOINT_DIM = 2             # cfg.waypoint_dim
WAYPOINTS_NUM = 8            # cfg.waypoints_num
OUTPUT_THRESHOLD = 5.0       # cfg.vae_output_threshold
BATCH = 2
OUTPUT_DIM = WAYPOINT_DIM * WAYPOINTS_NUM
H3 = 3 * ZD                  # fused gate / head width (= 96)

# packed-weight-slab row offsets (w_small: (640, 96) bf16)
R_HEAD = 0                   # rows [0,512)    : [wmu | wlv | wx]     (512, 96)
R_IHX = 512                  # rows [512,544)  : Wih rows for x_emb   (32, 96)
R_IHZ = R_IHX + ZD           # rows [544,576)  : Wih rows for z       (32, 96)
R_HH = R_IHZ + ZD            # rows [576,608)  : [whr | whz | whn]    (32, 96)
R_WO = R_HH + ZD             # rows [608,640)  : wo padded to 96 cols (32, 96)

# packed-bias-slab lane offsets (b_small: (1, 512) f32, 128-aligned segments)
L_BHEAD = 0
L_BIH = 128
L_BHH = 256
L_BO = 384

# encoder-bias slab lane offsets (b_enc: (1, 4096) f32)
L_B1, L_B2, L_B3, L_B4 = 0, 1024, 3072, 3584


def softsign_ref(x):
    # nn.Softsign (exact; used by the pure-JAX reference)
    return x / (1.0 + jnp.abs(x))


def softsign_k(x):
    # nn.Softsign via EUP approx reciprocal (inside the kernel only)
    return x * pl.reciprocal(1.0 + jnp.abs(x), approx=True)


# ------------------------------- kernel -------------------------------------
def cvae_kernel(obs_ref, eps_ref,
                w1_ref, w2_hbm, w3_hbm, w4_hbm,
                benc_ref, wsmall_ref, bsmall_ref,
                yraw_ref, mu_ref, lv_ref,
                w2_vmem, w3_vmem, w4_vmem, dma_sem, hs_ref):
    # Issue all big-weight DMAs up front; wait on each only right before use
    # so layer-k MXU work overlaps layer-(k+1) weight traffic.
    cp2 = pltpu.make_async_copy(w2_hbm, w2_vmem, dma_sem.at[0])
    cp3 = pltpu.make_async_copy(w3_hbm, w3_vmem, dma_sem.at[1])
    cp4 = pltpu.make_async_copy(w4_hbm, w4_vmem, dma_sem.at[2])
    cp2.start()
    cp3.start()
    cp4.start()

    def matmul(x, w):
        # bf16 MXU matmul, f32 accumulation
        return jnp.dot(x.astype(jnp.bfloat16), w,
                       preferred_element_type=jnp.float32)

    obs = obs_ref[...]

    # ---- encoder MLP (4 MXU matmuls + Softsign on VPU/EUP) ----
    h = softsign_k(matmul(obs, w1_ref[...]) + benc_ref[:, L_B1:L_B1 + 1024])
    cp2.wait()
    h = softsign_k(matmul(h, w2_vmem[...]) + benc_ref[:, L_B2:L_B2 + 2048])
    cp3.wait()
    h = softsign_k(matmul(h, w3_vmem[...]) + benc_ref[:, L_B3:L_B3 + 512])
    cp4.wait()
    h = softsign_k(matmul(h, w4_vmem[...]) + benc_ref[:, L_B4:L_B4 + 512])

    # ---- fused heads: one (512,96) matmul for [mu | logvar | x_emb_pre] ----
    heads = (matmul(h, wsmall_ref[R_HEAD:R_HEAD + 512, :]) +
             bsmall_ref[:, L_BHEAD:L_BHEAD + H3])
    mu = heads[:, 0:ZD]
    logvar = heads[:, ZD:2 * ZD]
    x_emb = softsign_k(heads[:, 2 * ZD:3 * ZD])
    mu_ref[...] = mu
    lv_ref[...] = logvar

    # ---- reparameterize ----
    std = jnp.exp(0.5 * logvar)
    z = mu + eps_ref[...] * std

    # ---- GRU decoder (fused gates, no lane-axis concatenates) ----
    # input-side gates: gi = [x_emb|z] @ Wih + b_ih, computed as a split matmul
    bih = bsmall_ref[:, L_BIH:L_BIH + H3]
    gi = (matmul(x_emb, wsmall_ref[R_IHX:R_IHX + ZD, :]) +
          matmul(z, wsmall_ref[R_IHZ:R_IHZ + ZD, :]) + bih)            # (B, 96)
    gi_n = gi[:, 2 * ZD:3 * ZD]

    # hoist loop-invariant small weights / biases into vregs once
    whh_v = wsmall_ref[R_HH:R_HH + ZD, :]                              # (32, 96) bf16
    bhh = bsmall_ref[:, L_BHH:L_BHH + H3]                              # (1, 96)

    B = z.shape[0]
    hstate = jnp.zeros_like(z)
    for t in range(WAYPOINTS_NUM):                                     # static unroll (8 steps)
        gh = matmul(hstate, whh_v) + bhh                               # one fused matmul / step
        g = gi + gh
        r = jax.nn.sigmoid(g[:, 0:ZD])
        u = jax.nn.sigmoid(g[:, ZD:2 * ZD])
        n = jnp.tanh(gi_n + r * gh[:, 2 * ZD:3 * ZD])
        hstate = (1.0 - u) * n + u * hstate
        # stash hidden state (step-major along sublanes); projection is batched
        hs_ref[t * B:(t + 1) * B, :] = hstate

    # ---- single batched output projection over all steps ----
    wo_v = wsmall_ref[R_WO:R_WO + ZD, :]                               # (32, 96) bf16 (cols >=2 zero)
    bo = bsmall_ref[:, L_BO:L_BO + WAYPOINT_DIM]                       # (1, 2)
    proj = matmul(hs_ref[...], wo_v)[:, 0:WAYPOINT_DIM] + bo           # (W*B, 2)
    yraw_ref[...] = OUTPUT_THRESHOLD * softsign_k(proj)


# ------------------------------- wrapper -------------------------------------
def cvae_forward(obs, eps, packed):
    """packed: (w1,w2,w3,w4 bf16, b_enc f32, w_small bf16, b_small f32)."""
    B = obs.shape[0]
    w1, w2, w3, w4, b_enc, w_small, b_small = packed

    vmem = pl.BlockSpec(memory_space=pltpu.MemorySpace.VMEM)
    hbm = pl.BlockSpec(memory_space=pl.ANY)   # big slabs stay in HBM; streamed manually

    out_shape = (
        jax.ShapeDtypeStruct((WAYPOINTS_NUM * B, WAYPOINT_DIM), jnp.float32),  # step-major waypoints
        jax.ShapeDtypeStruct((B, ZD), jnp.float32),                            # mu
        jax.ShapeDtypeStruct((B, ZD), jnp.float32),                            # logvar
    )

    # Advisory cost estimate so XLA can overlap surrounding ops with this call.
    flops = 2 * B * (PERCEPTION_IN * 1024 + 1024 * 2048 + 2048 * 512 + 512 * 512
                     + 512 * H3 + 2 * ZD * H3 + WAYPOINTS_NUM * ZD * H3) \
            + 2 * (WAYPOINTS_NUM * B) * ZD * H3
    bytes_accessed = 2 * (PERCEPTION_IN * 1024 + 1024 * 2048 + 2048 * 512
                          + 512 * 512 + 640 * H3) \
                     + 4 * (4096 + 512) \
                     + 4 * (B * PERCEPTION_IN + B * ZD) \
                     + 4 * (WAYPOINTS_NUM * B * WAYPOINT_DIM + 2 * B * ZD)
    transcendentals = B * (1024 + 2048 + 512 + 512 + 2 * ZD) \
                      + WAYPOINTS_NUM * B * 3 * ZD + WAYPOINTS_NUM * B * WAYPOINT_DIM

    y_raw, mu, logvar = pl.pallas_call(
        cvae_kernel,
        out_shape=out_shape,
        in_specs=[vmem, vmem,            # obs, eps
                  vmem,                  # w1 (needed immediately)
                  hbm, hbm, hbm,         # w2, w3, w4 streamed inside the kernel
                  vmem, vmem, vmem],     # b_enc, w_small, b_small
        out_specs=(vmem, vmem, vmem),
        scratch_shapes=[
            pltpu.VMEM((1024, 2048), jnp.bfloat16),          # w2 landing buffer
            pltpu.VMEM((2048, 512), jnp.bfloat16),           # w3 landing buffer
            pltpu.VMEM((512, 512), jnp.bfloat16),            # w4 landing buffer
            pltpu.SemaphoreType.DMA((3,)),
            pltpu.VMEM((WAYPOINTS_NUM * B, ZD), jnp.float32),  # per-step hidden states
        ],
        cost_estimate=pl.CostEstimate(flops=int(flops),
                                      transcendentals=int(transcendentals),
                                      bytes_accessed=int(bytes_accessed)),
        # ~7.2 MiB VMEM working set -> fits the default scoped VMEM limit on
        # v5e/v6e/v7x; no vmem_limit_bytes override.
    )(obs, eps, w1, w2, w3, w4, b_enc, w_small, b_small)

    # step-major (W*B, 2) -> (B, W*waypoint_dim); layout plumbing in the wrapper
    y = (y_raw.reshape(WAYPOINTS_NUM, B, WAYPOINT_DIM)
              .transpose(1, 0, 2)
              .reshape(B, OUTPUT_DIM))
    return y, mu, logvar


# ------------------------- deterministic parameters ---------------------------
def linear_params(key, fan_in, fan_out):
    kw, kb = jax.random.split(key)
    bound = 1.0 / (fan_in ** 0.5)
    w = jax.random.uniform(kw, (fan_in, fan_out), jnp.float32, -bound, bound)
    b = jax.random.uniform(kb, (1, fan_out), jnp.float32, -bound, bound)
    return w, b


def make_params(key):
    keys = jax.random.split(key, 16)
    w1, b1 = linear_params(keys[0], PERCEPTION_IN, 1024)
    w2, b2 = linear_params(keys[1], 1024, 2048)
    w3, b3 = linear_params(keys[2], 2048, 512)
    w4, b4 = linear_params(keys[3], 512, 512)
    wmu, bmu = linear_params(keys[4], 512, ZD)
    wlv, blv = linear_params(keys[5], 512, ZD)
    wx, bx = linear_params(keys[6], 512, ZD)                 # decoder x_pre embedding
    # GRU cell: input-side gates (in_dim = 2*zd), hidden-side gates (zd)
    wir, bir = linear_params(keys[7], 2 * ZD, ZD)
    wiz, biz = linear_params(keys[8], 2 * ZD, ZD)
    win_, bin_ = linear_params(keys[9], 2 * ZD, ZD)
    whr, bhr = linear_params(keys[10], ZD, ZD)
    whz, bhz = linear_params(keys[11], ZD, ZD)
    whn, bhn = linear_params(keys[12], ZD, ZD)
    wo, bo = linear_params(keys[13], ZD, WAYPOINT_DIM)
    return (w1, b1, w2, b2, w3, b3, w4, b4,
            wmu, bmu, wlv, blv, wx, bx,
            wir, wiz, win_, whr, whz, whn,
            bir, biz, bin_, bhr, bhz, bhn,
            wo, bo)


def pack_params(p):
    """Pack 28 per-layer tensors into 7 kernel slabs (weights -> bf16)."""
    (w1, b1, w2, b2, w3, b3, w4, b4,
     wmu, bmu, wlv, blv, wx, bx,
     wir, wiz, win_, whr, whz, whn,
     bir, biz, bin_, bhr, bhz, bhn,
     wo, bo) = p
    bf = lambda a: a.astype(jnp.bfloat16)

    b_enc = jnp.concatenate([b1, b2, b3, b4], axis=1)                  # (1, 4096) f32

    whead = jnp.concatenate([wmu, wlv, wx], axis=1)                    # (512, 96)
    wih = jnp.concatenate([wir, wiz, win_], axis=1)                    # (64, 96)
    whh = jnp.concatenate([whr, whz, whn], axis=1)                     # (32, 96)
    wo_p = jnp.pad(wo, ((0, 0), (0, H3 - WAYPOINT_DIM)))               # (32, 96)
    w_small = bf(jnp.concatenate([whead, wih, whh, wo_p], axis=0))     # (640, 96) bf16

    pad128 = lambda a: jnp.pad(a, ((0, 0), (0, 128 - a.shape[1])))
    bhead = jnp.concatenate([bmu, blv, bx], axis=1)                    # (1, 96)
    bih = jnp.concatenate([bir, biz, bin_], axis=1)                    # (1, 96)
    bhh = jnp.concatenate([bhr, bhz, bhn], axis=1)                     # (1, 96)
    b_small = jnp.concatenate([pad128(bhead), pad128(bih),
                               pad128(bhh), pad128(bo)], axis=1)       # (1, 512) f32

    return (bf(w1), bf(w2), bf(w3), bf(w4), b_enc, w_small, b_small)


# ----------------------------- pure-JAX reference -----------------------------
def reference_forward(obs, eps, p):
    """Mirrors the kernel numerics: bf16 weights/matmul inputs, f32 accumulation."""
    (w1, b1, w2, b2, w3, b3, w4, b4,
     wmu, bmu, wlv, blv, wx, bx,
     wir, wiz, win_, whr, whz, whn,
     bir, biz, bin_, bhr, bhz, bhn,
     wo, bo) = p

    def dense(x, w, b):
        return jnp.dot(x.astype(jnp.bfloat16), w.astype(jnp.bfloat16),
                       preferred_element_type=jnp.float32) + b

    h = softsign_ref(dense(obs, w1, b1))
    h = softsign_ref(dense(h, w2, b2))
    h = softsign_ref(dense(h, w3, b3))
    h = softsign_ref(dense(h, w4, b4))
    mu = dense(h, wmu, bmu)
    logvar = dense(h, wlv, blv)
    z = mu + eps * jnp.exp(0.5 * logvar)
    x_emb = softsign_ref(dense(h, wx, bx))
    rnn_in = jnp.concatenate([x_emb, z], axis=-1)
    gi_r = dense(rnn_in, wir, bir)
    gi_z = dense(rnn_in, wiz, biz)
    gi_n = dense(rnn_in, win_, bin_)
    hstate = jnp.zeros_like(z)
    outs = []
    for _ in range(WAYPOINTS_NUM):
        r = jax.nn.sigmoid(gi_r + dense(hstate, whr, bhr))
        u = jax.nn.sigmoid(gi_z + dense(hstate, whz, bhz))
        n = jnp.tanh(gi_n + r * dense(hstate, whn, bhn))
        hstate = (1.0 - u) * n + u * hstate
        outs.append(OUTPUT_THRESHOLD * softsign_ref(dense(hstate, wo, bo)))
    return jnp.concatenate(outs, axis=-1), mu, logvar


# --------------------------------- main --------------------------------------
if __name__ == "__main__":
    key = jax.random.PRNGKey(0)
    k_param, k_obs, k_eps = jax.random.split(key, 3)

    params = make_params(k_param)
    packed = pack_params(params)
    observation = jax.random.normal(k_obs, (BATCH, PERCEPTION_IN), jnp.float32)
    eps = jax.random.normal(k_eps, (BATCH, ZD), jnp.float32)

    y, mu, logvar = cvae_forward(observation, eps, packed)
    jax.block_until_ready((y, mu, logvar))

    assert y.shape == (BATCH, OUTPUT_DIM)
    assert mu.shape == (BATCH, ZD)
    assert logvar.shape == (BATCH, ZD)

    y_ref, mu_ref, lv_ref = reference_forward(observation, eps, params)
    assert jnp.allclose(mu, mu_ref, atol=1e-2, rtol=1e-2)
    assert jnp.allclose(logvar, lv_ref, atol=1e-2, rtol=1e-2)
    assert jnp.allclose(y, y_ref, atol=1e-2, rtol=1e-2)

    print("KERNEL_OK")
</pallas_src>

<mosaic_0001>
module attributes {stable_mosaic.version = 11 : i64} {
  func.func @cvae_kernel(%arg0: memref<2x256xf32, #tpu.memory_space<vmem>>, %arg1: memref<2x32xf32, #tpu.memory_space<vmem>>, %arg2: memref<256x1024xbf16, #tpu.memory_space<vmem>>, %arg3: memref<1024x2048xbf16, #tpu.memory_space<any>>, %arg4: memref<2048x512xbf16, #tpu.memory_space<any>>, %arg5: memref<512x512xbf16, #tpu.memory_space<any>>, %arg6: memref<1x4096xf32, #tpu.memory_space<vmem>>, %arg7: memref<640x96xbf16, #tpu.memory_space<vmem>>, %arg8: memref<1x512xf32, #tpu.memory_space<vmem>>, %arg9: memref<16x2xf32, #tpu.memory_space<vmem>>, %arg10: memref<2x32xf32, #tpu.memory_space<vmem>>, %arg11: memref<2x32xf32, #tpu.memory_space<vmem>>, %arg12: memref<1024x2048xbf16, #tpu.memory_space<vmem>>, %arg13: memref<2048x512xbf16, #tpu.memory_space<vmem>>, %arg14: memref<512x512xbf16, #tpu.memory_space<vmem>>, %arg15: memref<3x!tpu.dma_semaphore, #tpu.memory_space<semaphore_mem>>, %arg16: memref<16x32xf32, #tpu.memory_space<vmem>>) attributes {dimension_semantics = [], scalar_prefetch = 0 : i64, scratch_operands = 5 : i64, tpu.core_type = #tpu.core_type<tc>} {
    %c0_i32 = arith.constant 0 : i32
    %0 = tpu.memref_slice %arg15[%c0_i32] : memref<3x!tpu.dma_semaphore, #tpu.memory_space<semaphore_mem>> -> memref<1x!tpu.dma_semaphore, #tpu.memory_space<semaphore_mem>>
    %1 = tpu.memref_squeeze %0 : memref<1x!tpu.dma_semaphore, #tpu.memory_space<semaphore_mem>> -> memref<!tpu.dma_semaphore, #tpu.memory_space<semaphore_mem>>
    tpu.enqueue_dma source(%arg3 : memref<1024x2048xbf16, #tpu.memory_space<any>>) target(%arg12 : memref<1024x2048xbf16, #tpu.memory_space<vmem>>) target_semaphore(%1 : memref<!tpu.dma_semaphore, #tpu.memory_space<semaphore_mem>>)
    %c1_i32 = arith.constant 1 : i32
    %2 = tpu.memref_slice %arg15[%c1_i32] : memref<3x!tpu.dma_semaphore, #tpu.memory_space<semaphore_mem>> -> memref<1x!tpu.dma_semaphore, #tpu.memory_space<semaphore_mem>>
    %3 = tpu.memref_squeeze %2 : memref<1x!tpu.dma_semaphore, #tpu.memory_space<semaphore_mem>> -> memref<!tpu.dma_semaphore, #tpu.memory_space<semaphore_mem>>
    tpu.enqueue_dma source(%arg4 : memref<2048x512xbf16, #tpu.memory_space<any>>) target(%arg13 : memref<2048x512xbf16, #tpu.memory_space<vmem>>) target_semaphore(%3 : memref<!tpu.dma_semaphore, #tpu.memory_space<semaphore_mem>>)
    %c2_i32 = arith.constant 2 : i32
    %4 = tpu.memref_slice %arg15[%c2_i32] : memref<3x!tpu.dma_semaphore, #tpu.memory_space<semaphore_mem>> -> memref<1x!tpu.dma_semaphore, #tpu.memory_space<semaphore_mem>>
    %5 = tpu.memref_squeeze %4 : memref<1x!tpu.dma_semaphore, #tpu.memory_space<semaphore_mem>> -> memref<!tpu.dma_semaphore, #tpu.memory_space<semaphore_mem>>
    tpu.enqueue_dma source(%arg5 : memref<512x512xbf16, #tpu.memory_space<any>>) target(%arg14 : memref<512x512xbf16, #tpu.memory_space<vmem>>) target_semaphore(%5 : memref<!tpu.dma_semaphore, #tpu.memory_space<semaphore_mem>>)
    %c0 = arith.constant 0 : index
    %c0_0 = arith.constant 0 : index
    %6 = vector.load %arg0[%c0, %c0_0] : memref<2x256xf32, #tpu.memory_space<vmem>>, vector<2x256xf32>
    %c0_1 = arith.constant 0 : index
    %c0_2 = arith.constant 0 : index
    %7 = vector.load %arg2[%c0_1, %c0_2] : memref<256x1024xbf16, #tpu.memory_space<vmem>>, vector<256x1024xbf16>
    %8 = arith.truncf %6 : vector<2x256xf32> to vector<2x256xbf16>
    %cst = arith.constant dense<0.000000e+00> : vector<2x1024xf32>
    %9 = tpu.matmul %8, %7, %cst {dimension_numbers = #tpu.dot_dimension_numbers<[1], [0], [0], [1], [0, 0, 1, 1], [], []>} : vector<2x256xbf16>, vector<256x1024xbf16>, vector<2x1024xf32> -> vector<2x1024xf32>
    %c0_3 = arith.constant 0 : index
    %c0_4 = arith.constant 0 : index
    %10 = vector.load %arg6[%c0_3, %c0_4] : memref<1x4096xf32, #tpu.memory_space<vmem>>, vector<1x1024xf32>
    %11 = vector.broadcast %10 : vector<1x1024xf32> to vector<2x1024xf32>
    %12 = arith.addf %9, %11 : vector<2x1024xf32>
    %13 = math.absf %12 : vector<2x1024xf32>
    %cst_5 = arith.constant 1.000000e+00 : f32
    %14 = vector.broadcast %cst_5 : f32 to vector<2x1024xf32>
    %15 = arith.addf %14, %13 : vector<2x1024xf32>
    %16 = tpu.reciprocal %15 {approx = true} : vector<2x1024xf32> -> vector<2x1024xf32>
    %17 = arith.mulf %12, %16 : vector<2x1024xf32>
    %c0_i32_6 = arith.constant 0 : i32
    %18 = tpu.memref_slice %arg15[%c0_i32_6] : memref<3x!tpu.dma_semaphore, #tpu.memory_space<semaphore_mem>> -> memref<1x!tpu.dma_semaphore, #tpu.memory_space<semaphore_mem>>
    %19 = tpu.memref_squeeze %18 : memref<1x!tpu.dma_semaphore, #tpu.memory_space<semaphore_mem>> -> memref<!tpu.dma_semaphore, #tpu.memory_space<semaphore_mem>>
    tpu.wait_dma2 semaphore(%19 : memref<!tpu.dma_semaphore, #tpu.memory_space<semaphore_mem>>) src(%arg3 : memref<1024x2048xbf16, #tpu.memory_space<any>>) dst(%arg12 : memref<1024x2048xbf16, #tpu.memory_space<vmem>>)
    %c0_7 = arith.constant 0 : index
    %c0_8 = arith.constant 0 : index
    %20 = vector.load %arg12[%c0_7, %c0_8] : memref<1024x2048xbf16, #tpu.memory_space<vmem>>, vector<1024x2048xbf16>
    %21 = arith.truncf %17 : vector<2x1024xf32> to vector<2x1024xbf16>
    %cst_9 = arith.constant dense<0.000000e+00> : vector<2x2048xf32>
    %22 = tpu.matmul %21, %20, %cst_9 {dimension_numbers = #tpu.dot_dimension_numbers<[1], [0], [0], [1], [0, 0, 1, 1], [], []>} : vector<2x1024xbf16>, vector<1024x2048xbf16>, vector<2x2048xf32> -> vector<2x2048xf32>
    %c0_10 = arith.constant 0 : index
    %c1024 = arith.constant 1024 : index
    %23 = vector.load %arg6[%c0_10, %c1024] : memref<1x4096xf32, #tpu.memory_space<vmem>>, vector<1x2048xf32>
    %24 = vector.broadcast %23 : vector<1x2048xf32> to vector<2x2048xf32>
    %25 = arith.addf %22, %24 : vector<2x2048xf32>
    %26 = math.absf %25 : vector<2x2048xf32>
    %cst_11 = arith.constant 1.000000e+00 : f32
    %27 = vector.broadcast %cst_11 : f32 to vector<2x2048xf32>
    %28 = arith.addf %27, %26 : vector<2x2048xf32>
    %29 = tpu.reciprocal %28 {approx = true} : vector<2x2048xf32> -> vector<2x2048xf32>
    %30 = arith.mulf %25, %29 : vector<2x2048xf32>
    %c1_i32_12 = arith.constant 1 : i32
    %31 = tpu.memref_slice %arg15[%c1_i32_12] : memref<3x!tpu.dma_semaphore, #tpu.memory_space<semaphore_mem>> -> memref<1x!tpu.dma_semaphore, #tpu.memory_space<semaphore_mem>>
    %32 = tpu.memref_squeeze %31 : memref<1x!tpu.dma_semaphore, #tpu.memory_space<semaphore_mem>> -> memref<!tpu.dma_semaphore, #tpu.memory_space<semaphore_mem>>
    tpu.wait_dma2 semaphore(%32 : memref<!tpu.dma_semaphore, #tpu.memory_space<semaphore_mem>>) src(%arg4 : memref<2048x512xbf16, #tpu.memory_space<any>>) dst(%arg13 : memref<2048x512xbf16, #tpu.memory_space<vmem>>)
    %c0_13 = arith.constant 0 : index
    %c0_14 = arith.constant 0 : index
    %33 = vector.load %arg13[%c0_13, %c0_14] : memref<2048x512xbf16, #tpu.memory_space<vmem>>, vector<2048x512xbf16>
    %34 = arith.truncf %30 : vector<2x2048xf32> to vector<2x2048xbf16>
    %cst_15 = arith.constant dense<0.000000e+00> : vector<2x512xf32>
    %35 = tpu.matmul %34, %33, %cst_15 {dimension_numbers = #tpu.dot_dimension_numbers<[1], [0], [0], [1], [0, 0, 1, 1], [], []>} : vector<2x2048xbf16>, vector<2048x512xbf16>, vector<2x512xf32> -> vector<2x512xf32>
    %c0_16 = arith.constant 0 : index
    %c3072 = arith.constant 3072 : index
    %36 = vector.load %arg6[%c0_16, %c3072] : memref<1x4096xf32, #tpu.memory_space<vmem>>, vector<1x512xf32>
    %37 = vector.broadcast %36 : vector<1x512xf32> to vector<2x512xf32>
    %38 = arith.addf %35, %37 : vector<2x512xf32>
    %39 = math.absf %38 : vector<2x512xf32>
    %cst_17 = arith.constant 1.000000e+00 : f32
    %40 = vector.broadcast %cst_17 : f32 to vector<2x512xf32>
    %41 = arith.addf %40, %39 : vector<2x512xf32>
    %42 = tpu.reciprocal %41 {approx = true} : vector<2x512xf32> -> vector<2x512xf32>
    %43 = arith.mulf %38, %42 : vector<2x512xf32>
    %c2_i32_18 = arith.constant 2 : i32
    %44 = tpu.memref_slice %arg15[%c2_i32_18] : memref<3x!tpu.dma_semaphore, #tpu.memory_space<semaphore_mem>> -> memref<1x!tpu.dma_semaphore, #tpu.memory_space<semaphore_mem>>
    %45 = tpu.memref_squeeze %44 : memref<1x!tpu.dma_semaphore, #tpu.memory_space<semaphore_mem>> -> memref<!tpu.dma_semaphore, #tpu.memory_space<semaphore_mem>>
    tpu.wait_dma2 semaphore(%45 : memref<!tpu.dma_semaphore, #tpu.memory_space<semaphore_mem>>) src(%arg5 : memref<512x512xbf16, #tpu.memory_space<any>>) dst(%arg14 : memref<512x512xbf16, #tpu.memory_space<vmem>>)
    %c0_19 = arith.constant 0 : index
    %c0_20 = arith.constant 0 : index
    %46 = vector.load %arg14[%c0_19, %c0_20] : memref<512x512xbf16, #tpu.memory_space<vmem>>, vector<512x512xbf16>
    %47 = arith.truncf %43 : vector<2x512xf32> to vector<2x512xbf16>
    %cst_21 = arith.constant dense<0.000000e+00> : vector<2x512xf32>
    %48 = tpu.matmul %47, %46, %cst_21 {dimension_numbers = #tpu.dot_dimension_numbers<[1], [0], [0], [1], [0, 0, 1, 1], [], []>} : vector<2x512xbf16>, vector<512x512xbf16>, vector<2x512xf32> -> vector<2x512xf32>
    %c0_22 = arith.constant 0 : index
    %c3584 = arith.constant 3584 : index
    %49 = vector.load %arg6[%c0_22, %c3584] : memref<1x4096xf32, #tpu.memory_space<vmem>>, vector<1x512xf32>
    %50 = vector.broadcast %49 : vector<1x512xf32> to vector<2x512xf32>
    %51 = arith.addf %48, %50 : vector<2x512xf32>
    %52 = math.absf %51 : vector<2x512xf32>
    %cst_23 = arith.constant 1.000000e+00 : f32
    %53 = vector.broadcast %cst_23 : f32 to vector<2x512xf32>
    %54 = arith.addf %53, %52 : vector<2x512xf32>
    %55 = tpu.reciprocal %54 {approx = true} : vector<2x512xf32> -> vector<2x512xf32>
    %56 = arith.mulf %51, %55 : vector<2x512xf32>
    %c0_24 = arith.constant 0 : index
    %c0_25 = arith.constant 0 : index
    %57 = vector.load %arg7[%c0_24, %c0_25] : memref<640x96xbf16, #tpu.memory_space<vmem>>, vector<512x96xbf16>
    %58 = arith.truncf %56 : vector<2x512xf32> to vector<2x512xbf16>
    %cst_26 = arith.constant dense<0.000000e+00> : vector<2x96xf32>
    %59 = tpu.matmul %58, %57, %cst_26 {dimension_numbers = #tpu.dot_dimension_numbers<[1], [0], [0], [1], [0, 0, 1, 1], [], []>} : vector<2x512xbf16>, vector<512x96xbf16>, vector<2x96xf32> -> vector<2x96xf32>
    %c0_27 = arith.constant 0 : index
    %c0_28 = arith.constant 0 : index
    %60 = vector.load %arg8[%c0_27, %c0_28] : memref<1x512xf32, #tpu.memory_space<vmem>>, vector<1x96xf32>
    %61 = vector.broadcast %60 : vector<1x96xf32> to vector<2x96xf32>
    %62 = arith.addf %59, %61 : vector<2x96xf32>
    %63 = vector.extract_strided_slice %62 {offsets = [0, 0], sizes = [2, 32], strides = [1, 1]} : vector<2x96xf32> to vector<2x32xf32>
    %64 = vector.extract_strided_slice %62 {offsets = [0, 32], sizes = [2, 32], strides = [1, 1]} : vector<2x96xf32> to vector<2x32xf32>
    %65 = vector.extract_strided_slice %62 {offsets = [0, 64], sizes = [2, 32], strides = [1, 1]} : vector<2x96xf32> to vector<2x32xf32>
    %66 = math.absf %65 : vector<2x32xf32>
    %cst_29 = arith.constant 1.000000e+00 : f32
    %67 = vector.broadcast %cst_29 : f32 to vector<2x32xf32>
    %68 = arith.addf %67, %66 : vector<2x32xf32>
    %69 = tpu.reciprocal %68 {approx = true} : vector<2x32xf32> -> vector<2x32xf32>
    %70 = arith.mulf %65, %69 : vector<2x32xf32>
    %c0_30 = arith.constant 0 : index
    %c0_31 = arith.constant 0 : index
    %71 = vector.load %arg10[%c0_30, %c0_31] : memref<2x32xf32, #tpu.memory_space<vmem>>, vector<2x32xf32>
    tpu.vector_store %arg10[%c0_30, %c0_31], %63 {strides = array<i32>} : memref<2x32xf32, #tpu.memory_space<vmem>>, vector<2x32xf32>,
    %c0_32 = arith.constant 0 : index
    %c0_33 = arith.constant 0 : index
    %72 = vector.load %arg11[%c0_32, %c0_33] : memref<2x32xf32, #tpu.memory_space<vmem>>, vector<2x32xf32>
    tpu.vector_store %arg11[%c0_32, %c0_33], %64 {strides = array<i32>} : memref<2x32xf32, #tpu.memory_space<vmem>>, vector<2x32xf32>,
    %cst_34 = arith.constant 5.000000e-01 : f32
    %73 = vector.broadcast %cst_34 : f32 to vector<2x32xf32>
    %74 = arith.mulf %73, %64 : vector<2x32xf32>
    %75 = math.exp %74 : vector<2x32xf32>
    %c0_35 = arith.constant 0 : index
    %c0_36 = arith.constant 0 : index
    %76 = vector.load %arg1[%c0_35, %c0_36] : memref<2x32xf32, #tpu.memory_space<vmem>>, vector<2x32xf32>
    %77 = arith.mulf %76, %75 : vector<2x32xf32>
    %78 = arith.addf %63, %77 : vector<2x32xf32>
    %c0_37 = arith.constant 0 : index
    %c128 = arith.constant 128 : index
    %79 = vector.load %arg8[%c0_37, %c128] : memref<1x512xf32, #tpu.memory_space<vmem>>, vector<1x96xf32>
    %c512 = arith.constant 512 : index
    %c0_38 = arith.constant 0 : index
    %80 = vector.load %arg7[%c512, %c0_38] : memref<640x96xbf16, #tpu.memory_space<vmem>>, vector<32x96xbf16>
    %81 = arith.truncf %70 : vector<2x32xf32> to vector<2x32xbf16>
    %cst_39 = arith.constant dense<0.000000e+00> : vector<2x96xf32>
    %82 = tpu.matmul %81, %80, %cst_39 {dimension_numbers = #tpu.dot_dimension_numbers<[1], [0], [0], [1], [0, 0, 1, 1], [], []>} : vector<2x32xbf16>, vector<32x96xbf16>, vector<2x96xf32> -> vector<2x96xf32>
    %c544 = arith.constant 544 : index
    %c0_40 = arith.constant 0 : index
    %83 = vector.load %arg7[%c544, %c0_40] : memref<640x96xbf16, #tpu.memory_space<vmem>>, vector<32x96xbf16>
    %84 = arith.truncf %78 : vector<2x32xf32> to vector<2x32xbf16>
    %cst_41 = arith.constant dense<0.000000e+00> : vector<2x96xf32>
    %85 = tpu.matmul %84, %83, %cst_41 {dimension_numbers = #tpu.dot_dimension_numbers<[1], [0], [0], [1], [0, 0, 1, 1], [], []>} : vector<2x32xbf16>, vector<32x96xbf16>, vector<2x96xf32> -> vector<2x96xf32>
    %86 = arith.addf %82, %85 : vector<2x96xf32>
    %87 = vector.broadcast %79 : vector<1x96xf32> to vector<2x96xf32>
    %88 = arith.addf %86, %87 : vector<2x96xf32>
    %89 = vector.extract_strided_slice %88 {offsets = [0, 64], sizes = [2, 32], strides = [1, 1]} : vector<2x96xf32> to vector<2x32xf32>
    %c576 = arith.constant 576 : index
    %c0_42 = arith.constant 0 : index
    %90 = vector.load %arg7[%c576, %c0_42] : memref<640x96xbf16, #tpu.memory_space<vmem>>, vector<32x96xbf16>
    %c0_43 = arith.constant 0 : index
    %c256 = arith.constant 256 : index
    %91 = vector.load %arg8[%c0_43, %c256] : memref<1x512xf32, #tpu.memory_space<vmem>>, vector<1x96xf32>
    %cst_44 = arith.constant 0.000000e+00 : f32
    %92 = vector.broadcast %cst_44 : f32 to vector<2x32xf32>
    %93 = arith.truncf %92 : vector<2x32xf32> to vector<2x32xbf16>
    %cst_45 = arith.constant dense<0.000000e+00> : vector<2x96xf32>
    %94 = tpu.matmul %93, %90, %cst_45 {dimension_numbers = #tpu.dot_dimension_numbers<[1], [0], [0], [1], [0, 0, 1, 1], [], []>} : vector<2x32xbf16>, vector<32x96xbf16>, vector<2x96xf32> -> vector<2x96xf32>
    %95 = vector.broadcast %91 : vector<1x96xf32> to vector<2x96xf32>
    %96 = arith.addf %94, %95 : vector<2x96xf32>
    %97 = arith.addf %88, %96 : vector<2x96xf32>
    %98 = vector.extract_strided_slice %97 {offsets = [0, 0], sizes = [2, 32], strides = [1, 1]} : vector<2x96xf32> to vector<2x32xf32>
    %99 = arith.negf %98 : vector<2x32xf32>
    %100 = math.exp %99 : vector<2x32xf32>
    %cst_46 = arith.constant 1.000000e+00 : f32
    %101 = vector.broadcast %cst_46 : f32 to vector<2x32xf32>
    %102 = arith.addf %101, %100 : vector<2x32xf32>
    %103 = arith.divf %101, %102 : vector<2x32xf32>
    %104 = vector.extract_strided_slice %97 {offsets = [0, 32], sizes = [2, 32], strides = [1, 1]} : vector<2x96xf32> to vector<2x32xf32>
    %105 = arith.negf %104 : vector<2x32xf32>
    %106 = math.exp %105 : vector<2x32xf32>
    %cst_47 = arith.constant 1.000000e+00 : f32
    %107 = vector.broadcast %cst_47 : f32 to vector<2x32xf32>
    %108 = arith.addf %107, %106 : vector<2x32xf32>
    %109 = arith.divf %107, %108 : vector<2x32xf32>
    %110 = vector.extract_strided_slice %96 {offsets = [0, 64], sizes = [2, 32], strides = [1, 1]} : vector<2x96xf32> to vector<2x32xf32>
    %111 = arith.mulf %103, %110 : vector<2x32xf32>
    %112 = arith.addf %89, %111 : vector<2x32xf32>
    %113 = math.tanh %112 : vector<2x32xf32>
    %cst_48 = arith.constant 1.000000e+00 : f32
    %114 = vector.broadcast %cst_48 : f32 to vector<2x32xf32>
    %115 = arith.subf %114, %109 : vector<2x32xf32>
    %116 = arith.mulf %115, %113 : vector<2x32xf32>
    %117 = arith.mulf %109, %92 : vector<2x32xf32>
    %118 = arith.addf %116, %117 : vector<2x32xf32>
    %c0_49 = arith.constant 0 : index
    %c0_50 = arith.constant 0 : index
    %119 = vector.load %arg16[%c0_49, %c0_50] : memref<16x32xf32, #tpu.memory_space<vmem>>, vector<2x32xf32>
    tpu.vector_store %arg16[%c0_49, %c0_50], %118 {strides = array<i32>} : memref<16x32xf32, #tpu.memory_space<vmem>>, vector<2x32xf32>,
    %120 = arith.truncf %118 : vector<2x32xf32> to vector<2x32xbf16>
    %cst_51 = arith.constant dense<0.000000e+00> : vector<2x96xf32>
    %121 = tpu.matmul %120, %90, %cst_51 {dimension_numbers = #tpu.dot_dimension_numbers<[1], [0], [0], [1], [0, 0, 1, 1], [], []>} : vector<2x32xbf16>, vector<32x96xbf16>, vector<2x96xf32> -> vector<2x96xf32>
    %122 = vector.broadcast %91 : vector<1x96xf32> to vector<2x96xf32>
    %123 = arith.addf %121, %122 : vector<2x96xf32>
    %124 = arith.addf %88, %123 : vector<2x96xf32>
    %125 = vector.extract_strided_slice %124 {offsets = [0, 0], sizes = [2, 32], strides = [1, 1]} : vector<2x96xf32> to vector<2x32xf32>
    %126 = arith.negf %125 : vector<2x32xf32>
    %127 = math.exp %126 : vector<2x32xf32>
    %cst_52 = arith.constant 1.000000e+00 : f32
    %128 = vector.broadcast %cst_52 : f32 to vector<2x32xf32>
    %129 = arith.addf %128, %127 : vector<2x32xf32>
    %130 = arith.divf %128, %129 : vector<2x32xf32>
    %131 = vector.extract_strided_slice %124 {offsets = [0, 32], sizes = [2, 32], strides = [1, 1]} : vector<2x96xf32> to vector<2x32xf32>
    %132 = arith.negf %131 : vector<2x32xf32>
    %133 = math.exp %132 : vector<2x32xf32>
    %cst_53 = arith.constant 1.000000e+00 : f32
    %134 = vector.broadcast %cst_53 : f32 to vector<2x32xf32>
    %135 = arith.addf %134, %133 : vector<2x32xf32>
    %136 = arith.divf %134, %135 : vector<2x32xf32>
    %137 = vector.extract_strided_slice %123 {offsets = [0, 64], sizes = [2, 32], strides = [1, 1]} : vector<2x96xf32> to vector<2x32xf32>
    %138 = arith.mulf %130, %137 : vector<2x32xf32>
    %139 = arith.addf %89, %138 : vector<2x32xf32>
    %140 = math.tanh %139 : vector<2x32xf32>
    %cst_54 = arith.constant 1.000000e+00 : f32
    %141 = vector.broadcast %cst_54 : f32 to vector<2x32xf32>
    %142 = arith.subf %141, %136 : vector<2x32xf32>
    %143 = arith.mulf %142, %140 : vector<2x32xf32>
    %144 = arith.mulf %136, %118 : vector<2x32xf32>
    %145 = arith.addf %143, %144 : vector<2x32xf32>
    %c2 = arith.constant 2 : index
    %c0_55 = arith.constant 0 : index
    %146 = vector.load %arg16[%c2, %c0_55] : memref<16x32xf32, #tpu.memory_space<vmem>>, vector<2x32xf32>
    tpu.vector_store %arg16[%c2, %c0_55], %145 {strides = array<i32>} : memref<16x32xf32, #tpu.memory_space<vmem>>, vector<2x32xf32>,
    %147 = arith.truncf %145 : vector<2x32xf32> to vector<2x32xbf16>
    %cst_56 = arith.constant dense<0.000000e+00> : vector<2x96xf32>
    %148 = tpu.matmul %147, %90, %cst_56 {dimension_numbers = #tpu.dot_dimension_numbers<[1], [0], [0], [1], [0, 0, 1, 1], [], []>} : vector<2x32xbf16>, vector<32x96xbf16>, vector<2x96xf32> -> vector<2x96xf32>
    %149 = vector.broadcast %91 : vector<1x96xf32> to vector<2x96xf32>
    %150 = arith.addf %148, %149 : vector<2x96xf32>
    %151 = arith.addf %88, %150 : vector<2x96xf32>
    %152 = vector.extract_strided_slice %151 {offsets = [0, 0], sizes = [2, 32], strides = [1, 1]} : vector<2x96xf32> to vector<2x32xf32>
    %153 = arith.negf %152 : vector<2x32xf32>
    %154 = math.exp %153 : vector<2x32xf32>
    %cst_57 = arith.constant 1.000000e+00 : f32
    %155 = vector.broadcast %cst_57 : f32 to vector<2x32xf32>
    %156 = arith.addf %155, %154 : vector<2x32xf32>
    %157 = arith.divf %155, %156 : vector<2x32xf32>
    %158 = vector.extract_strided_slice %151 {offsets = [0, 32], sizes = [2, 32], strides = [1, 1]} : vector<2x96xf32> to vector<2x32xf32>
    %159 = arith.negf %158 : vector<2x32xf32>
    %160 = math.exp %159 : vector<2x32xf32>
    %cst_58 = arith.constant 1.000000e+00 : f32
    %161 = vector.broadcast %cst_58 : f32 to vector<2x32xf32>
    %162 = arith.addf %161, %160 : vector<2x32xf32>
    %163 = arith.divf %161, %162 : vector<2x32xf32>
    %164 = vector.extract_strided_slice %150 {offsets = [0, 64], sizes = [2, 32], strides = [1, 1]} : vector<2x96xf32> to vector<2x32xf32>
    %165 = arith.mulf %157, %164 : vector<2x32xf32>
    %166 = arith.addf %89, %165 : vector<2x32xf32>
    %167 = math.tanh %166 : vector<2x32xf32>
    %cst_59 = arith.constant 1.000000e+00 : f32
    %168 = vector.broadcast %cst_59 : f32 to vector<2x32xf32>
    %169 = arith.subf %168, %163 : vector<2x32xf32>
    %170 = arith.mulf %169, %167 : vector<2x32xf32>
    %171 = arith.mulf %163, %145 : vector<2x32xf32>
    %172 = arith.addf %170, %171 : vector<2x32xf32>
    %c4 = arith.constant 4 : index
    %c0_60 = arith.constant 0 : index
    %173 = vector.load %arg16[%c4, %c0_60] : memref<16x32xf32, #tpu.memory_space<vmem>>, vector<2x32xf32>
    tpu.vector_store %arg16[%c4, %c0_60], %172 {strides = array<i32>} : memref<16x32xf32, #tpu.memory_space<vmem>>, vector<2x32xf32>,
    %174 = arith.truncf %172 : vector<2x32xf32> to vector<2x32xbf16>
    %cst_61 = arith.constant dense<0.000000e+00> : vector<2x96xf32>
    %175 = tpu.matmul %174, %90, %cst_61 {dimension_numbers = #tpu.dot_dimension_numbers<[1], [0], [0], [1], [0, 0, 1, 1], [], []>} : vector<2x32xbf16>, vector<32x96xbf16>, vector<2x96xf32> -> vector<2x96xf32>
    %176 = vector.broadcast %91 : vector<1x96xf32> to vector<2x96xf32>
    %177 = arith.addf %175, %176 : vector<2x96xf32>
    %178 = arith.addf %88, %177 : vector<2x96xf32>
    %179 = vector.extract_strided_slice %178 {offsets = [0, 0], sizes = [2, 32], strides = [1, 1]} : vector<2x96xf32> to vector<2x32xf32>
    %180 = arith.negf %179 : vector<2x32xf32>
    %181 = math.exp %180 : vector<2x32xf32>
    %cst_62 = arith.constant 1.000000e+00 : f32
    %182 = vector.broadcast %cst_62 : f32 to vector<2x32xf32>
    %183 = arith.addf %182, %181 : vector<2x32xf32>
    %184 = arith.divf %182, %183 : vector<2x32xf32>
    %185 = vector.extract_strided_slice %178 {offsets = [0, 32], sizes = [2, 32], strides = [1, 1]} : vector<2x96xf32> to vector<2x32xf32>
    %186 = arith.negf %185 : vector<2x32xf32>
    %187 = math.exp %186 : vector<2x32xf32>
    %cst_63 = arith.constant 1.000000e+00 : f32
    %188 = vector.broadcast %cst_63 : f32 to vector<2x32xf32>
    %189 = arith.addf %188, %187 : vector<2x32xf32>
    %190 = arith.divf %188, %189 : vector<2x32xf32>
    %191 = vector.extract_strided_slice %177 {offsets = [0, 64], sizes = [2, 32], strides = [1, 1]} : vector<2x96xf32> to vector<2x32xf32>
    %192 = arith.mulf %184, %191 : vector<2x32xf32>
    %193 = arith.addf %89, %192 : vector<2x32xf32>
    %194 = math.tanh %193 : vector<2x32xf32>
    %cst_64 = arith.constant 1.000000e+00 : f32
    %195 = vector.broadcast %cst_64 : f32 to vector<2x32xf32>
    %196 = arith.subf %195, %190 : vector<2x32xf32>
    %197 = arith.mulf %196, %194 : vector<2x32xf32>
    %198 = arith.mulf %190, %172 : vector<2x32xf32>
    %199 = arith.addf %197, %198 : vector<2x32xf32>
    %c6 = arith.constant 6 : index
    %c0_65 = arith.constant 0 : index
    %200 = vector.load %arg16[%c6, %c0_65] : memref<16x32xf32, #tpu.memory_space<vmem>>, vector<2x32xf32>
    tpu.vector_store %arg16[%c6, %c0_65], %199 {strides = array<i32>} : memref<16x32xf32, #tpu.memory_space<vmem>>, vector<2x32xf32>,
    %201 = arith.truncf %199 : vector<2x32xf32> to vector<2x32xbf16>
    %cst_66 = arith.constant dense<0.000000e+00> : vector<2x96xf32>
    %202 = tpu.matmul %201, %90, %cst_66 {dimension_numbers = #tpu.dot_dimension_numbers<[1], [0], [0], [1], [0, 0, 1, 1], [], []>} : vector<2x32xbf16>, vector<32x96xbf16>, vector<2x96xf32> -> vector<2x96xf32>
    %203 = vector.broadcast %91 : vector<1x96xf32> to vector<2x96xf32>
    %204 = arith.addf %202, %203 : vector<2x96xf32>
    %205 = arith.addf %88, %204 : vector<2x96xf32>
    %206 = vector.extract_strided_slice %205 {offsets = [0, 0], sizes = [2, 32], strides = [1, 1]} : vector<2x96xf32> to vector<2x32xf32>
    %207 = arith.negf %206 : vector<2x32xf32>
    %208 = math.exp %207 : vector<2x32xf32>
    %cst_67 = arith.constant 1.000000e+00 : f32
    %209 = vector.broadcast %cst_67 : f32 to vector<2x32xf32>
    %210 = arith.addf %209, %208 : vector<2x32xf32>
    %211 = arith.divf %209, %210 : vector<2x32xf32>
    %212 = vector.extract_strided_slice %205 {offsets = [0, 32], sizes = [2, 32], strides = [1, 1]} : vector<2x96xf32> to vector<2x32xf32>
    %213 = arith.negf %212 : vector<2x32xf32>
    %214 = math.exp %213 : vector<2x32xf32>
    %cst_68 = arith.constant 1.000000e+00 : f32
    %215 = vector.broadcast %cst_68 : f32 to vector<2x32xf32>
    %216 = arith.addf %215, %214 : vector<2x32xf32>
    %217 = arith.divf %215, %216 : vector<2x32xf32>
    %218 = vector.extract_strided_slice %204 {offsets = [0, 64], sizes = [2, 32], strides = [1, 1]} : vector<2x96xf32> to vector<2x32xf32>
    %219 = arith.mulf %211, %218 : vector<2x32xf32>
    %220 = arith.addf %89, %219 : vector<2x32xf32>
    %221 = math.tanh %220 : vector<2x32xf32>
    %cst_69 = arith.constant 1.000000e+00 : f32
    %222 = vector.broadcast %cst_69 : f32 to vector<2x32xf32>
    %223 = arith.subf %222, %217 : vector<2x32xf32>
    %224 = arith.mulf %223, %221 : vector<2x32xf32>
    %225 = arith.mulf %217, %199 : vector<2x32xf32>
    %226 = arith.addf %224, %225 : vector<2x32xf32>
    %c8 = arith.constant 8 : index
    %c0_70 = arith.constant 0 : index
    %227 = vector.load %arg16[%c8, %c0_70] : memref<16x32xf32, #tpu.memory_space<vmem>>, vector<2x32xf32>
    tpu.vector_store %arg16[%c8, %c0_70], %226 {strides = array<i32>} : memref<16x32xf32, #tpu.memory_space<vmem>>, vector<2x32xf32>,
    %228 = arith.truncf %226 : vector<2x32xf32> to vector<2x32xbf16>
    %cst_71 = arith.constant dense<0.000000e+00> : vector<2x96xf32>
    %229 = tpu.matmul %228, %90, %cst_71 {dimension_numbers = #tpu.dot_dimension_numbers<[1], [0], [0], [1], [0, 0, 1, 1], [], []>} : vector<2x32xbf16>, vector<32x96xbf16>, vector<2x96xf32> -> vector<2x96xf32>
    %230 = vector.broadcast %91 : vector<1x96xf32> to vector<2x96xf32>
    %231 = arith.addf %229, %230 : vector<2x96xf32>
    %232 = arith.addf %88, %231 : vector<2x96xf32>
    %233 = vector.extract_strided_slice %232 {offsets = [0, 0], sizes = [2, 32], strides = [1, 1]} : vector<2x96xf32> to vector<2x32xf32>
    %234 = arith.negf %233 : vector<2x32xf32>
    %235 = math.exp %234 : vector<2x32xf32>
    %cst_72 = arith.constant 1.000000e+00 : f32
    %236 = vector.broadcast %cst_72 : f32 to vector<2x32xf32>
    %237 = arith.addf %236, %235 : vector<2x32xf32>
    %238 = arith.divf %236, %237 : vector<2x32xf32>
    %239 = vector.extract_strided_slice %232 {offsets = [0, 32], sizes = [2, 32], strides = [1, 1]} : vector<2x96xf32> to vector<2x32xf32>
    %240 = arith.negf %239 : vector<2x32xf32>
    %241 = math.exp %240 : vector<2x32xf32>
    %cst_73 = arith.constant 1.000000e+00 : f32
    %242 = vector.broadcast %cst_73 : f32 to vector<2x32xf32>
    %243 = arith.addf %242, %241 : vector<2x32xf32>
    %244 = arith.divf %242, %243 : vector<2x32xf32>
    %245 = vector.extract_strided_slice %231 {offsets = [0, 64], sizes = [2, 32], strides = [1, 1]} : vector<2x96xf32> to vector<2x32xf32>
    %246 = arith.mulf %238, %245 : vector<2x32xf32>
    %247 = arith.addf %89, %246 : vector<2x32xf32>
    %248 = math.tanh %247 : vector<2x32xf32>
    %cst_74 = arith.constant 1.000000e+00 : f32
    %249 = vector.broadcast %cst_74 : f32 to vector<2x32xf32>
    %250 = arith.subf %249, %244 : vector<2x32xf32>
    %251 = arith.mulf %250, %248 : vector<2x32xf32>
    %252 = arith.mulf %244, %226 : vector<2x32xf32>
    %253 = arith.addf %251, %252 : vector<2x32xf32>
    %c10 = arith.constant 10 : index
    %c0_75 = arith.constant 0 : index
    %254 = vector.load %arg16[%c10, %c0_75] : memref<16x32xf32, #tpu.memory_space<vmem>>, vector<2x32xf32>
    tpu.vector_store %arg16[%c10, %c0_75], %253 {strides = array<i32>} : memref<16x32xf32, #tpu.memory_space<vmem>>, vector<2x32xf32>,
    %255 = arith.truncf %253 : vector<2x32xf32> to vector<2x32xbf16>
    %cst_76 = arith.constant dense<0.000000e+00> : vector<2x96xf32>
    %256 = tpu.matmul %255, %90, %cst_76 {dimension_numbers = #tpu.dot_dimension_numbers<[1], [0], [0], [1], [0, 0, 1, 1], [], []>} : vector<2x32xbf16>, vector<32x96xbf16>, vector<2x96xf32> -> vector<2x96xf32>
    %257 = vector.broadcast %91 : vector<1x96xf32> to vector<2x96xf32>
    %258 = arith.addf %256, %257 : vector<2x96xf32>
    %259 = arith.addf %88, %258 : vector<2x96xf32>
    %260 = vector.extract_strided_slice %259 {offsets = [0, 0], sizes = [2, 32], strides = [1, 1]} : vector<2x96xf32> to vector<2x32xf32>
    %261 = arith.negf %260 : vector<2x32xf32>
    %262 = math.exp %261 : vector<2x32xf32>
    %cst_77 = arith.constant 1.000000e+00 : f32
    %263 = vector.broadcast %cst_77 : f32 to vector<2x32xf32>
    %264 = arith.addf %263, %262 : vector<2x32xf32>
    %265 = arith.divf %263, %264 : vector<2x32xf32>
    %266 = vector.extract_strided_slice %259 {offsets = [0, 32], sizes = [2, 32], strides = [1, 1]} : vector<2x96xf32> to vector<2x32xf32>
    %267 = arith.negf %266 : vector<2x32xf32>
    %268 = math.exp %267 : vector<2x32xf32>
    %cst_78 = arith.constant 1.000000e+00 : f32
    %269 = vector.broadcast %cst_78 : f32 to vector<2x32xf32>
    %270 = arith.addf %269, %268 : vector<2x32xf32>
    %271 = arith.divf %269, %270 : vector<2x32xf32>
    %272 = vector.extract_strided_slice %258 {offsets = [0, 64], sizes = [2, 32], strides = [1, 1]} : vector<2x96xf32> to vector<2x32xf32>
    %273 = arith.mulf %265, %272 : vector<2x32xf32>
    %274 = arith.addf %89, %273 : vector<2x32xf32>
    %275 = math.tanh %274 : vector<2x32xf32>
    %cst_79 = arith.constant 1.000000e+00 : f32
    %276 = vector.broadcast %cst_79 : f32 to vector<2x32xf32>
    %277 = arith.subf %276, %271 : vector<2x32xf32>
    %278 = arith.mulf %277, %275 : vector<2x32xf32>
    %279 = arith.mulf %271, %253 : vector<2x32xf32>
    %280 = arith.addf %278, %279 : vector<2x32xf32>
    %c12 = arith.constant 12 : index
    %c0_80 = arith.constant 0 : index
    %281 = vector.load %arg16[%c12, %c0_80] : memref<16x32xf32, #tpu.memory_space<vmem>>, vector<2x32xf32>
    tpu.vector_store %arg16[%c12, %c0_80], %280 {strides = array<i32>} : memref<16x32xf32, #tpu.memory_space<vmem>>, vector<2x32xf32>,
    %282 = arith.truncf %280 : vector<2x32xf32> to vector<2x32xbf16>
    %cst_81 = arith.constant dense<0.000000e+00> : vector<2x96xf32>
    %283 = tpu.matmul %282, %90, %cst_81 {dimension_numbers = #tpu.dot_dimension_numbers<[1], [0], [0], [1], [0, 0, 1, 1], [], []>} : vector<2x32xbf16>, vector<32x96xbf16>, vector<2x96xf32> -> vector<2x96xf32>
    %284 = vector.broadcast %91 : vector<1x96xf32> to vector<2x96xf32>
    %285 = arith.addf %283, %284 : vector<2x96xf32>
    %286 = arith.addf %88, %285 : vector<2x96xf32>
    %287 = vector.extract_strided_slice %286 {offsets = [0, 0], sizes = [2, 32], strides = [1, 1]} : vector<2x96xf32> to vector<2x32xf32>
    %288 = arith.negf %287 : vector<2x32xf32>
    %289 = math.exp %288 : vector<2x32xf32>
    %cst_82 = arith.constant 1.000000e+00 : f32
    %290 = vector.broadcast %cst_82 : f32 to vector<2x32xf32>
    %291 = arith.addf %290, %289 : vector<2x32xf32>
    %292 = arith.divf %290, %291 : vector<2x32xf32>
    %293 = vector.extract_strided_slice %286 {offsets = [0, 32], sizes = [2, 32], strides = [1, 1]} : vector<2x96xf32> to vector<2x32xf32>
    %294 = arith.negf %293 : vector<2x32xf32>
    %295 = math.exp %294 : vector<2x32xf32>
    %cst_83 = arith.constant 1.000000e+00 : f32
    %296 = vector.broadcast %cst_83 : f32 to vector<2x32xf32>
    %297 = arith.addf %296, %295 : vector<2x32xf32>
    %298 = arith.divf %296, %297 : vector<2x32xf32>
    %299 = vector.extract_strided_slice %285 {offsets = [0, 64], sizes = [2, 32], strides = [1, 1]} : vector<2x96xf32> to vector<2x32xf32>
    %300 = arith.mulf %292, %299 : vector<2x32xf32>
    %301 = arith.addf %89, %300 : vector<2x32xf32>
    %302 = math.tanh %301 : vector<2x32xf32>
    %cst_84 = arith.constant 1.000000e+00 : f32
    %303 = vector.broadcast %cst_84 : f32 to vector<2x32xf32>
    %304 = arith.subf %303, %298 : vector<2x32xf32>
    %305 = arith.mulf %304, %302 : vector<2x32xf32>
    %306 = arith.mulf %298, %280 : vector<2x32xf32>
    %307 = arith.addf %305, %306 : vector<2x32xf32>
    %c14 = arith.constant 14 : index
    %c0_85 = arith.constant 0 : index
    %308 = vector.load %arg16[%c14, %c0_85] : memref<16x32xf32, #tpu.memory_space<vmem>>, vector<2x32xf32>
    tpu.vector_store %arg16[%c14, %c0_85], %307 {strides = array<i32>} : memref<16x32xf32, #tpu.memory_space<vmem>>, vector<2x32xf32>,
    %c608 = arith.constant 608 : index
    %c0_86 = arith.constant 0 : index
    %309 = vector.load %arg7[%c608, %c0_86] : memref<640x96xbf16, #tpu.memory_space<vmem>>, vector<32x96xbf16>
    %c0_87 = arith.constant 0 : index
    %c384 = arith.constant 384 : index
    %310 = vector.load %arg8[%c0_87, %c384] : memref<1x512xf32, #tpu.memory_space<vmem>>, vector<1x2xf32>
    %c0_88 = arith.constant 0 : index
    %c0_89 = arith.constant 0 : index
    %311 = vector.load %arg16[%c0_88, %c0_89] : memref<16x32xf32, #tpu.memory_space<vmem>>, vector<16x32xf32>
    %312 = arith.truncf %311 : vector<16x32xf32> to vector<16x32xbf16>
    %cst_90 = arith.constant dense<0.000000e+00> : vector<16x96xf32>
    %313 = tpu.matmul %312, %309, %cst_90 {dimension_numbers = #tpu.dot_dimension_numbers<[1], [0], [0], [1], [0, 0, 1, 1], [], []>} : vector<16x32xbf16>, vector<32x96xbf16>, vector<16x96xf32> -> vector<16x96xf32>
    %314 = vector.extract_strided_slice %313 {offsets = [0, 0], sizes = [16, 2], strides = [1, 1]} : vector<16x96xf32> to vector<16x2xf32>
    %315 = vector.broadcast %310 : vector<1x2xf32> to vector<16x2xf32>
    %316 = arith.addf %314, %315 : vector<16x2xf32>
    %317 = math.absf %316 : vector<16x2xf32>
    %cst_91 = arith.constant 1.000000e+00 : f32
    %318 = vector.broadcast %cst_91 : f32 to vector<16x2xf32>
    %319 = arith.addf %318, %317 : vector<16x2xf32>
    %320 = tpu.reciprocal %319 {approx = true} : vector<16x2xf32> -> vector<16x2xf32>
    %321 = arith.mulf %316, %320 : vector<16x2xf32>
    %cst_92 = arith.constant 5.000000e+00 : f32
    %322 = vector.broadcast %cst_92 : f32 to vector<16x2xf32>
    %323 = arith.mulf %322, %321 : vector<16x2xf32>
    %c0_93 = arith.constant 0 : index
    %c0_94 = arith.constant 0 : index
    %324 = vector.load %arg9[%c0_93, %c0_94] : memref<16x2xf32, #tpu.memory_space<vmem>>, vector<16x2xf32>
    tpu.vector_store %arg9[%c0_93, %c0_94], %323 {strides = array<i32>} : memref<16x2xf32, #tpu.memory_space<vmem>>, vector<16x2xf32>,
    return
  }
}

</mosaic_0001>

<llo_original>
// kernel: tpu_custom_call.1
$region0: #{tpu_custom_call.1}
  #allocation0 [shape = 'u32[]', space=smem, size = 0x4, offset = 0x4, fixed_abs, tag = 'smem constant byte address 0x4 - core index']
  #allocation1 [shape = 'u32[144,128]{1,0:T(1,128)}', space=vmem, size = 0x12000, scoped, tag = 'internal scratch']
  #allocation2 [shape = 'bf16[1024,2048]{1,0:T(16,128)(2,1)}', space=vmem, size = 0x400000, scoped, tag = 'scratch operand']
  #allocation3 [shape = 'bf16[2048,512]{1,0:T(16,128)(2,1)}', space=vmem, size = 0x200000, scoped, tag = 'scratch operand']
  #allocation4 [shape = 'bf16[512,512]{1,0:T(16,128)(2,1)}', space=vmem, size = 0x80000, scoped, tag = 'scratch operand']
  #allocation5 [shape = 's32[3]{0}', space=sflag, size = 0xc, scoped, tag = 'scratch operand']
  #allocation6 [shape = 'f32[16,32]{1,0:T(8,128)}', space=vmem, size = 0x2000, scoped, tag = 'scratch operand']
  #allocation19 [shape = 's32[]', space=sflag, size = 0x4, offset = 0, fixed_abs, tag = 'sflag constant byte address 0x0 - dummy sync flag']
  #allocation21 [shape = 's32[]', space=sflag, size = 0x4, offset = 0, fixed_abs, tag = 'sflag constant byte address 0x0 - dummy sync flag']
  #allocation23 [shape = 's32[]', space=sflag, size = 0x4, offset = 0, fixed_abs, tag = 'sflag constant byte address 0x0 - dummy sync flag']
  %s0 = inlined_call_operand.hbm [shape: f32[2,256], index: 0, kind: input, shape index: {}]
  %s1 = inlined_call_operand.hbm [shape: f32[2,32], index: 1, kind: input, shape index: {}]
  %s2 = inlined_call_operand.hbm [shape: bf16[256,1024], index: 2, kind: input, shape index: {}]
  %s3 = inlined_call_operand.hbm [shape: bf16[1024,2048], index: 3, kind: input, shape index: {}]
  %s4 = inlined_call_operand.hbm [shape: bf16[2048,512], index: 4, kind: input, shape index: {}]
  %s5 = inlined_call_operand.hbm [shape: bf16[512,512], index: 5, kind: input, shape index: {}]
  %s6 = inlined_call_operand.hbm [shape: f32[1,4096], index: 6, kind: input, shape index: {}]
  %s7 = inlined_call_operand.vmem [shape: bf16[640,96], index: 7, kind: input, shape index: {}]
  %s8 = inlined_call_operand.hbm [shape: f32[1,512], index: 8, kind: input, shape index: {}]
  %s9 = inlined_call_operand.vmem [shape: f32[16,2], index: 9, kind: output, shape index: {0}]
  %s10 = inlined_call_operand.hbm [shape: f32[2,32], index: 10, kind: output, shape index: {1}]
  %s11 = inlined_call_operand.hbm [shape: f32[2,32], index: 11, kind: output, shape index: {2}]
  %12 = xla_tuple %s9, %s10, %s11
  %s13 = sld [smem:[#allocation0]]
  $region70: #{tpu_custom_call.1} parent=0
    _
  %s15 = ssub.s32 1, %s13
  %s16 = scalar_select 0, %s15, %s13
  $region1: #{tpu_custom_call.1} parent=0
    #allocation7 [shape = 'u8[2048]{0}', space=vmem, size = 0x800, scoped, tag = 'input window, operand 0, single buffered']
    #allocation8 [shape = 's32[1]{0}', space=sflag, size = 0x4, scoped, tag = 'scoped memory for tpu_custom_call.1']
    #allocation9 [shape = 's32[1]{0}', space=sflag, size = 0x4, scoped, tag = 'scoped memory for tpu_custom_call.1']
    #allocation10 [shape = 'u8[1024]{0}', space=vmem, size = 0x400, scoped, tag = 'input window, operand 1, single buffered']
    #allocation11 [shape = 's32[1]{0}', space=sflag, size = 0x4, scoped, tag = 'scoped memory for tpu_custom_call.1']
    #allocation12 [shape = 'u8[524288]{0}', space=vmem, size = 0x80000, scoped, tag = 'input window, operand 2, single buffered']
    #allocation13 [shape = 'u8[16384]{0}', space=vmem, size = 0x4000, scoped, tag = 'input window, operand 6, single buffered']
    #allocation14 [shape = 's32[1]{0}', space=sflag, size = 0x4, scoped, tag = 'scoped memory for tpu_custom_call.1']
    #allocation15 [shape = 'u8[2048]{0}', space=vmem, size = 0x800, scoped, tag = 'input window, operand 8, single buffered']
    #allocation16 [shape = 'u8[1024]{0}', space=vmem, size = 0x400, scoped, tag = 'output window, operand 1, single buffered']
    #allocation17 [shape = 'u8[1024]{0}', space=vmem, size = 0x400, scoped, tag = 'output window, operand 2, single buffered']
    #allocation18 [shape = 's32[1]{0}', space=sflag, size = 0x4, scoped, tag = 'scoped memory for tpu_custom_call.1']
    #allocation20 [shape = 'u32[9]{0}', space=smem, size = 0x24, scoped, tag = 'DMA stride descriptor']
    #allocation22 [shape = 'u32[9]{0}', space=smem, size = 0x24, scoped, tag = 'DMA stride descriptor']
    #allocation24 [shape = 'u32[9]{0}', space=smem, size = 0x24, scoped, tag = 'DMA stride descriptor']
    %17 = vsyncpa [#allocation8], 0
    %18 = vsyncpa [#allocation11], 0
    %19 = vsyncpa [#allocation14], 0
    %20 = vsyncpa [#allocation9], 0
    %21 = vsyncpa [#allocation18], 0
    // Predicated region
    $region2: #{tpu_custom_call.1} parent=1 // pred_check
      _
    $region3: #{tpu_custom_call.1} parent=1 // pred_check_branch
      %23 = sbr.rel (0) target = $region5
    $region4: #{tpu_custom_call.1} parent=1 // pred_region
      %s25 = ssub.s32 64, 64
      %26 = vsyncadd [#allocation8], %s25
      %s28 = sshll.u32 [#allocation7], 4
      %s29 = int_to_ptr.vmem [resolvable:$true] %s28
      %31 = dma.hbm_to_vmem [thread:$0]  %s0, 64, %s29, [#allocation8]
    $region5: #{tpu_custom_call.1} parent=1 // pred_fallthru
      _
    // Predicated region
    $region6: #{tpu_custom_call.1} parent=1 // pred_check
      _
    $region7: #{tpu_custom_call.1} parent=1 // pred_check_branch
      %33 = sbr.rel (0) target = $region9
    $region8: #{tpu_custom_call.1} parent=1 // pred_region
      %s35 = ssub.s32 32, 32
      %36 = vsyncadd [#allocation11], %s35
      %s38 = sshll.u32 [#allocation10], 4
      %s39 = int_to_ptr.vmem [resolvable:$true] %s38
      %41 = dma.hbm_to_vmem [thread:$0]  %s1, 32, %s39, [#allocation11]
    $region9: #{tpu_custom_call.1} parent=1 // pred_fallthru
      _
    // Predicated region
    $region10: #{tpu_custom_call.1} parent=1 // pred_check
      _
    $region11: #{tpu_custom_call.1} parent=1 // pred_check_branch
      %43 = sbr.rel (0) target = $region13
    $region12: #{tpu_custom_call.1} parent=1 // pred_region
      %s45 = ssub.s32 16384, 16384
      %46 = vsyncadd [#allocation11], %s45
      %s47 = sshll.u32 [#allocation12], 4
      %s48 = int_to_ptr.vmem [resolvable:$true] %s47
      %53 = dma.hbm_to_vmem [thread:$0]  %s2, 16384, %s48, [#allocation11], 512, 512, 32
    $region13: #{tpu_custom_call.1} parent=1 // pred_fallthru
      _
    // Predicated region
    $region14: #{tpu_custom_call.1} parent=1 // pred_check
      _
    $region15: #{tpu_custom_call.1} parent=1 // pred_check_branch
      %55 = sbr.rel (0) target = $region17
    $region16: #{tpu_custom_call.1} parent=1 // pred_region
      %s57 = ssub.s32 512, 512
      %58 = vsyncadd [#allocation14], %s57
      %s60 = sshll.u32 [#allocation13], 4
      %s61 = int_to_ptr.vmem [resolvable:$true] %s60
      %63 = dma.hbm_to_vmem [thread:$0]  %s6, 512, %s61, [#allocation14]
    $region17: #{tpu_custom_call.1} parent=1 // pred_fallthru
      _
    // Predicated region
    $region18: #{tpu_custom_call.1} parent=1 // pred_check
      _
    $region19: #{tpu_custom_call.1} parent=1 // pred_check_branch
      %65 = sbr.rel (0) target = $region21
    $region20: #{tpu_custom_call.1} parent=1 // pred_region
      _
    $region21: #{tpu_custom_call.1} parent=1 // pred_fallthru
      _
    // Predicated region
    $region22: #{tpu_custom_call.1} parent=1 // pred_check
      _
    $region23: #{tpu_custom_call.1} parent=1 // pred_check_branch
      %67 = sbr.rel (0) target = $region25
    $region24: #{tpu_custom_call.1} parent=1 // pred_region
      %s69 = ssub.s32 64, 64
      %70 = vsyncadd [#allocation14], %s69
      %s72 = sshll.u32 [#allocation15], 4
      %s73 = int_to_ptr.vmem [resolvable:$true] %s72
      %75 = dma.hbm_to_vmem [thread:$0]  %s8, 64, %s73, [#allocation14]
    $region25: #{tpu_custom_call.1} parent=1 // pred_fallthru
      _
    // Predicated region
    $region26: #{tpu_custom_call.1} parent=1 // pred_check
      _
    $region27: #{tpu_custom_call.1} parent=1 // pred_check_branch
      %77 = sbr.rel (0) target = $region29
    $region28: #{tpu_custom_call.1} parent=1 // pred_region
      %78 = dma.done [#allocation8], 64
    $region29: #{tpu_custom_call.1} parent=1 // pred_fallthru
      _
    // Predicated region
    $region30: #{tpu_custom_call.1} parent=1 // pred_check
      _
    $region31: #{tpu_custom_call.1} parent=1 // pred_check_branch
      %80 = sbr.rel (0) target = $region33
    $region32: #{tpu_custom_call.1} parent=1 // pred_region
      %81 = dma.done [#allocation11], 32
    $region33: #{tpu_custom_call.1} parent=1 // pred_fallthru
      _
    // Predicated region
    $region34: #{tpu_custom_call.1} parent=1 // pred_check
      _
    $region35: #{tpu_custom_call.1} parent=1 // pred_check_branch
      %83 = sbr.rel (0) target = $region37
    $region36: #{tpu_custom_call.1} parent=1 // pred_region
      %84 = dma.done [#allocation11], 16384
    $region37: #{tpu_custom_call.1} parent=1 // pred_fallthru
      _
    // Predicated region
    $region38: #{tpu_custom_call.1} parent=1 // pred_check
      _
    $region39: #{tpu_custom_call.1} parent=1 // pred_check_branch
      %86 = sbr.rel (0) target = $region41
    $region40: #{tpu_custom_call.1} parent=1 // pred_region
      %87 = dma.done [#allocation14], 512
    $region41: #{tpu_custom_call.1} parent=1 // pred_fallthru
      _
    // Predicated region
    $region42: #{tpu_custom_call.1} parent=1 // pred_check
      _
    $region43: #{tpu_custom_call.1} parent=1 // pred_check_branch
      %89 = sbr.rel (0) target = $region45
    $region44: #{tpu_custom_call.1} parent=1 // pred_region
      %90 = dma.done [#allocation14], 64
    $region45: #{tpu_custom_call.1} parent=1 // pred_fallthru
      _
    %s93 = sshll.u32 1, 14
    %s94 = sxor.u32 4294967295, %s93
    %s96 = sld [smem:[#allocation0]]
    %s97 = sadd.s32 2, %s96
    %s99 = sshll.u32 7, 26
    %s100 = sxor.u32 4294967295, %s99
    %s101 = sand.u32 0, %s100
    %s102 = sshll.u32 %s97, 26
    %s103 = sor.u32 %s101, %s102
    %s104 = sshll.u32 [#allocation2], 4
    %s105 = int_to_ptr.vmem [resolvable:$true] %s104
    %108 = sst [smem:[#allocation20]] 2048
    %s109 = scalar_lea.smem [#allocation20], 1
    %110 = sst [smem:[%s109]] 2048
    %s111 = scalar_lea.smem [#allocation20], 2
    %112 = sst [smem:[%s111]] 16
    %s113 = scalar_lea.smem [#allocation20], 3
    %114 = sst [smem:[%s113]] 64
    %s115 = scalar_lea.smem [#allocation20], 4
    %116 = sst [smem:[%s115]] 128
    %s117 = scalar_lea.smem [#allocation20], 5
    %118 = sst [smem:[%s117]] 2
    %s119 = scalar_lea.smem [#allocation20], 6
    %120 = sst [smem:[%s119]] 1024
    %s121 = scalar_lea.smem [#allocation20], 7
    %122 = sst [smem:[%s121]] 64
    %s123 = scalar_lea.smem [#allocation20], 8
    %124 = sst [smem:[%s123]] 4
    %126 = dma.general %s3, 131072, %s105, [#allocation5], [#allocation19], [#allocation20], %s103, 0
    %s127 = scalar_lea.sflag [#allocation5], 1
    %s129 = sshll.u32 1, 14
    %s130 = sxor.u32 4294967295, %s129
    %s132 = sadd.s32 2, %s96
    %s134 = sshll.u32 7, 26
    %s135 = sxor.u32 4294967295, %s134
    %s136 = sand.u32 0, %s135
    %s137 = sshll.u32 %s132, 26
    %s138 = sor.u32 %s136, %s137
    %s139 = sshll.u32 [#allocation3], 4
    %s140 = int_to_ptr.vmem [resolvable:$true] %s139
    %143 = sst [smem:[#allocation22]] 512
    %s144 = scalar_lea.smem [#allocation22], 1
    %145 = sst [smem:[%s144]] 512
    %s146 = scalar_lea.smem [#allocation22], 2
    %147 = sst [smem:[%s146]] 4
    %s148 = scalar_lea.smem [#allocation22], 3
    %149 = sst [smem:[%s148]] 64
    %s150 = scalar_lea.smem [#allocation22], 4
    %151 = sst [smem:[%s150]] 128
    %s152 = scalar_lea.smem [#allocation22], 5
    %153 = sst [smem:[%s152]] 2
    %s154 = scalar_lea.smem [#allocation22], 6
    %155 = sst [smem:[%s154]] 256
    %s156 = scalar_lea.smem [#allocation22], 7
    %157 = sst [smem:[%s156]] 64
    %s158 = scalar_lea.smem [#allocation22], 8
    %159 = sst [smem:[%s158]] 4
    %161 = dma.general %s4, 65536, %s140, %s127, [#allocation21], [#allocation22], %s138, 0
    %s162 = scalar_lea.sflag [#allocation5], 2
    %s164 = sshll.u32 1, 14
    %s165 = sxor.u32 4294967295, %s164
    %s167 = sadd.s32 2, %s96
    %s169 = sshll.u32 7, 26
    %s170 = sxor.u32 4294967295, %s169
    %s171 = sand.u32 0, %s170
    %s172 = sshll.u32 %s167, 26
    %s173 = sor.u32 %s171, %s172
    %s174 = sshll.u32 [#allocation4], 4
    %s175 = int_to_ptr.vmem [resolvable:$true] %s174
    %178 = sst [smem:[#allocation24]] 512
    %s179 = scalar_lea.smem [#allocation24], 1
    %180 = sst [smem:[%s179]] 512
    %s181 = scalar_lea.smem [#allocation24], 2
    %182 = sst [smem:[%s181]] 4
    %s183 = scalar_lea.smem [#allocation24], 3
    %184 = sst [smem:[%s183]] 64
    %s185 = scalar_lea.smem [#allocation24], 4
    %186 = sst [smem:[%s185]] 128
    %s187 = scalar_lea.smem [#allocation24], 5
    %188 = sst [smem:[%s187]] 2
    %s189 = scalar_lea.smem [#allocation24], 6
    %190 = sst [smem:[%s189]] 256
    %s191 = scalar_lea.smem [#allocation24], 7
    %192 = sst [smem:[%s191]] 64
    %s193 = scalar_lea.smem [#allocation24], 8
    %194 = sst [smem:[%s193]] 4
    %196 = dma.general %s5, 16384, %s175, %s162, [#allocation23], [#allocation24], %s173, 0
    %v197 = vld [vmem:[#allocation7] sm:$0xf]
    %v198 = vld [vmem:[#allocation12] sm:$0xff]
    %v199 = vld [vmem:[#allocation12 + $0x8] sm:$0xff]
    %v200 = vld [vmem:[#allocation12 + $0x10] sm:$0xff]
    %v201 = vld [vmem:[#allocation12 + $0x18] sm:$0xff]
    %v202 = vld [vmem:[#allocation12 + $0x20] sm:$0xff]
    %v203 = vld [vmem:[#allocation12 + $0x28] sm:$0xff]
    %v204 = vld [vmem:[#allocation12 + $0x30] sm:$0xff]
    %v205 = vld [vmem:[#allocation12 + $0x38] sm:$0xff]
    %v206 = vld [vmem:[#allocation12 + $0x40] sm:$0xff]
    %v207 = vld [vmem:[#allocation12 + $0x48] sm:$0xff]
    %v208 = vld [vmem:[#allocation12 + $0x50] sm:$0xff]
    %v209 = vld [vmem:[#allocation12 + $0x58] sm:$0xff]
    %v210 = vld [vmem:[#allocation12 + $0x60] sm:$0xff]
    %v211 = vld [vmem:[#allocation12 + $0x68] sm:$0xff]
    %v212 = vld [vmem:[#allocation12 + $0x70] sm:$0xff]
    %v213 = vld [vmem:[#allocation12 + $0x78] sm:$0xff]
    %v214 = vld [vmem:[#allocation12 + $0x80] sm:$0xff]
    %v215 = vld [vmem:[#allocation12 + $0x88] sm:$0xff]
    %v216 = vld [vmem:[#allocation12 + $0x90] sm:$0xff]
    %v217 = vld [vmem:[#allocation12 + $0x98] sm:$0xff]
    %v218 = vld [vmem:[#allocation12 + $0xa0] sm:$0xff]
    %v219 = vld [vmem:[#allocation12 + $0xa8] sm:$0xff]
    %v220 = vld [vmem:[#allocation12 + $0xb0] sm:$0xff]
    %v221 = vld [vmem:[#allocation12 + $0xb8] sm:$0xff]
    %v222 = vld [vmem:[#allocation12 + $0xc0] sm:$0xff]
    %v223 = vld [vmem:[#allocation12 + $0xc8] sm:$0xff]
    %v224 = vld [vmem:[#allocation12 + $0xd0] sm:$0xff]
    %v225 = vld [vmem:[#allocation12 + $0xd8] sm:$0xff]
    %v226 = vld [vmem:[#allocation12 + $0xe0] sm:$0xff]
    %v227 = vld [vmem:[#allocation12 + $0xe8] sm:$0xff]
    %v228 = vld [vmem:[#allocation12 + $0xf0] sm:$0xff]
    %v229 = vld [vmem:[#allocation12 + $0xf8] sm:$0xff]
    %v230 = vld [vmem:[#allocation12 + $0x100] sm:$0xff]
    %v231 = vld [vmem:[#allocation12 + $0x108] sm:$0xff]
    %v232 = vld [vmem:[#allocation12 + $0x110] sm:$0xff]
    %v233 = vld [vmem:[#allocation12 + $0x118] sm:$0xff]
    %v234 = vld [vmem:[#allocation12 + $0x120] sm:$0xff]
    %v235 = vld [vmem:[#allocation12 + $0x128] sm:$0xff]
    %v236 = vld [vmem:[#allocation12 + $0x130] sm:$0xff]
    %v237 = vld [vmem:[#allocation12 + $0x138] sm:$0xff]
    %v238 = vld [vmem:[#allocation12 + $0x140] sm:$0xff]
    %v239 = vld [vmem:[#allocation12 + $0x148] sm:$0xff]
    %v240 = vld [vmem:[#allocation12 + $0x150] sm:$0xff]
    %v241 = vld [vmem:[#allocation12 + $0x158] sm:$0xff]
    %v242 = vld [vmem:[#allocation12 + $0x160] sm:$0xff]
    %v243 = vld [vmem:[#allocation12 + $0x168] sm:$0xff]
    %v244 = vld [vmem:[#allocation12 + $0x170] sm:$0xff]
    %v245 = vld [vmem:[#allocation12 + $0x178] sm:$0xff]
    %v246 = vld [vmem:[#allocation12 + $0x180] sm:$0xff]
    %v247 = vld [vmem:[#allocation12 + $0x188] sm:$0xff]
    %v248 = vld [vmem:[#allocation12 + $0x190] sm:$0xff]
    %v249 = vld [vmem:[#allocation12 + $0x198] sm:$0xff]
    %v250 = vld [vmem:[#allocation12 + $0x1a0] sm:$0xff]
    %v251 = vld [vmem:[#allocation12 + $0x1a8] sm:$0xff]
    %v252 = vld [vmem:[#allocation12 + $0x1b0] sm:$0xff]
    %v253 = vld [vmem:[#allocation12 + $0x1b8] sm:$0xff]
    %v254 = vld [vmem:[#allocation12 + $0x1c0] sm:$0xff]
    %v255 = vld [vmem:[#allocation12 + $0x1c8] sm:$0xff]
    %v256 = vld [vmem:[#allocation12 + $0x1d0] sm:$0xff]
    %v257 = vld [vmem:[#allocation12 + $0x1d8] sm:$0xff]
    %v258 = vld [vmem:[#allocation12 + $0x1e0] sm:$0xff]
    %v259 = vld [vmem:[#allocation12 + $0x1e8] sm:$0xff]
    %v260 = vld [vmem:[#allocation12 + $0x1f0] sm:$0xff]
    %v261 = vld [vmem:[#allocation12 + $0x1f8] sm:$0xff]
    %v262 = vld [vmem:[#allocation12 + $0x200] sm:$0xff]
    %v263 = vld [vmem:[#allocation12 + $0x208] sm:$0xff]
    %v264 = vld [vmem:[#allocation12 + $0x210] sm:$0xff]
    %v265 = vld [vmem:[#allocation12 + $0x218] sm:$0xff]
    %v266 = vld [vmem:[#allocation12 + $0x220] sm:$0xff]
    %v267 = vld [vmem:[#allocation12 + $0x228] sm:$0xff]
    %v268 = vld [vmem:[#allocation12 + $0x230] sm:$0xff]
    %v269 = vld [vmem:[#allocation12 + $0x238] sm:$0xff]
    %v270 = vld [vmem:[#allocation12 + $0x240] sm:$0xff]
    %v271 = vld [vmem:[#allocation12 + $0x248] sm:$0xff]
    %v272 = vld [vmem:[#allocation12 + $0x250] sm:$0xff]
    %v273 = vld [vmem:[#allocation12 + $0x258] sm:$0xff]
    %v274 = vld [vmem:[#allocation12 + $0x260] sm:$0xff]
    %v275 = vld [vmem:[#allocation12 + $0x268] sm:$0xff]
    %v276 = vld [vmem:[#allocation12 + $0x270] sm:$0xff]
    %v277 = vld [vmem:[#allocation12 + $0x278] sm:$0xff]
    %v278 = vld [vmem:[#allocation12 + $0x280] sm:$0xff]
    %v279 = vld [vmem:[#allocation12 + $0x288] sm:$0xff]
    %v280 = vld [vmem:[#allocation12 + $0x290] sm:$0xff]
    %v281 = vld [vmem:[#allocation12 + $0x298] sm:$0xff]
    %v282 = vld [vmem:[#allocation12 + $0x2a0] sm:$0xff]
    %v283 = vld [vmem:[#allocation12 + $0x2a8] sm:$0xff]
    %v284 = vld [vmem:[#allocation12 + $0x2b0] sm:$0xff]
    %v285 = vld [vmem:[#allocation12 + $0x2b8] sm:$0xff]
    %v286 = vld [vmem:[#allocation12 + $0x2c0] sm:$0xff]
    %v287 = vld [vmem:[#allocation12 + $0x2c8] sm:$0xff]
    %v288 = vld [vmem:[#allocation12 + $0x2d0] sm:$0xff]
    %v289 = vld [vmem:[#allocation12 + $0x2d8] sm:$0xff]
    %v290 = vld [vmem:[#allocation12 + $0x2e0] sm:$0xff]
    %v291 = vld [vmem:[#allocation12 + $0x2e8] sm:$0xff]
    %v292 = vld [vmem:[#allocation12 + $0x2f0] sm:$0xff]
    %v293 = vld [vmem:[#allocation12 + $0x2f8] sm:$0xff]
    %v294 = vld [vmem:[#allocation12 + $0x300] sm:$0xff]
    %v295 = vld [vmem:[#allocation12 + $0x308] sm:$0xff]
    %v296 = vld [vmem:[#allocation12 + $0x310] sm:$0xff]
    %v297 = vld [vmem:[#allocation12 + $0x318] sm:$0xff]
    %v298 = vld [vmem:[#allocation12 + $0x320] sm:$0xff]
    %v299 = vld [vmem:[#allocation12 + $0x328] sm:$0xff]
    %v300 = vld [vmem:[#allocation12 + $0x330] sm:$0xff]
    %v301 = vld [vmem:[#allocation12 + $0x338] sm:$0xff]
    %v302 = vld [vmem:[#allocation12 + $0x340] sm:$0xff]
    %v303 = vld [vmem:[#allocation12 + $0x348] sm:$0xff]
    %v304 = vld [vmem:[#allocation12 + $0x350] sm:$0xff]
    %v305 = vld [vmem:[#allocation12 + $0x358] sm:$0xff]
    %v306 = vld [vmem:[#allocation12 + $0x360] sm:$0xff]
    %v307 = vld [vmem:[#allocation12 + $0x368] sm:$0xff]
    %v308 = vld [vmem:[#allocation12 + $0x370] sm:$0xff]
    %v309 = vld [vmem:[#allocation12 + $0x378] sm:$0xff]
    %v310 = vld [vmem:[#allocation12 + $0x380] sm:$0xff]
    %v311 = vld [vmem:[#allocation12 + $0x388] sm:$0xff]
    %v312 = vld [vmem:[#allocation12 + $0x390] sm:$0xff]
    %v313 = vld [vmem:[#allocation12 + $0x398] sm:$0xff]
    %v314 = vld [vmem:[#allocation12 + $0x3a0] sm:$0xff]
    %v315 = vld [vmem:[#allocation12 + $0x3a8] sm:$0xff]
    %v316 = vld [vmem:[#allocation12 + $0x3b0] sm:$0xff]
    %v317 = vld [vmem:[#allocation12 + $0x3b8] sm:$0xff]
    %v318 = vld [vmem:[#allocation12 + $0x3c0] sm:$0xff]
    %v319 = vld [vmem:[#allocation12 + $0x3c8] sm:$0xff]
    %v320 = vld [vmem:[#allocation12 + $0x3d0] sm:$0xff]
    %v321 = vld [vmem:[#allocation12 + $0x3d8] sm:$0xff]
    %v322 = vld [vmem:[#allocation12 + $0x3e0] sm:$0xff]
    %v323 = vld [vmem:[#allocation12 + $0x3e8] sm:$0xff]
    %v324 = vld [vmem:[#allocation12 + $0x3f0] sm:$0xff]
    %v325 = vld [vmem:[#allocation12 + $0x3f8] sm:$0xff]
    %v328 = vunpack.c.l.s4 1983009808
    %v329 = vunpack.c.0.s8 %v328
    %v330 = vlaneseq
    %v331 = vshrl.u32 %v330, 7
    %v332 = vsub.s32 %v329, %v331
    %v333 = vrot.slane %v197, %v332
    %v334 = vcombine.high %v333, %v333
    %v337 = vpack.c.bf16 %v333, %v333
    %v338 = vpack.c.bf16 %v334, %v334
    %v339 = vld [vmem:[#allocation13] sm:$0xff]
    %v341 = vlaneseq
    %v342 = vshrl.u32 %v341, 7
    %v343 = vsub.s32 0, %v342
    %v344 = vrot.slane %v339, %v343
    %v345 = vlaneseq
    %v346 = vshrl.u32 %v345, 7
    %v347 = vsub.s32 1, %v346
    %v348 = vrot.slane %v339, %v347
    %v349 = vlaneseq
    %v350 = vshrl.u32 %v349, 7
    %v351 = vsub.s32 2, %v350
    %v352 = vrot.slane %v339, %v351
    %v353 = vlaneseq
    %v354 = vshrl.u32 %v353, 7
    %v355 = vsub.s32 3, %v354
    %v356 = vrot.slane %v339, %v355
    %v357 = vlaneseq
    %v358 = vshrl.u32 %v357, 7
    %v359 = vsub.s32 4, %v358
    %v360 = vrot.slane %v339, %v359
    %v361 = vlaneseq
    %v362 = vshrl.u32 %v361, 7
    %v363 = vsub.s32 5, %v362
    %v364 = vrot.slane %v339, %v363
    %v365 = vlaneseq
    %v366 = vshrl.u32 %v365, 7
    %v367 = vsub.s32 6, %v366
    %v368 = vrot.slane %v339, %v367
    %v369 = vlaneseq
    %v370 = vshrl.u32 %v369, 7
    %v371 = vsub.s32 7, %v370
    %v372 = vrot.slane %v339, %v371
    %v509 = vunpack.c.l.b16 %v198
    %v510 = vunpack.c.h.b16 %v198
    %v511 = vunpack.c.l.b16 %v199
    %v512 = vunpack.c.h.b16 %v199
    %v513 = vunpack.c.l.b16 %v200
    %v514 = vunpack.c.h.b16 %v200
    %v515 = vunpack.c.l.b16 %v201
    %v516 = vunpack.c.h.b16 %v201
    %v517 = vunpack.c.l.b16 %v202
    %v518 = vunpack.c.h.b16 %v202
    %v519 = vunpack.c.l.b16 %v203
    %v520 = vunpack.c.h.b16 %v203
    %v521 = vunpack.c.l.b16 %v204
    %v522 = vunpack.c.h.b16 %v204
    %v523 = vunpack.c.l.b16 %v205
    %v524 = vunpack.c.h.b16 %v205
    %v525 = vunpack.c.l.b16 %v206
    %v526 = vunpack.c.h.b16 %v206
    %v527 = vunpack.c.l.b16 %v207
    %v528 = vunpack.c.h.b16 %v207
    %v529 = vunpack.c.l.b16 %v208
    %v530 = vunpack.c.h.b16 %v208
    %v531 = vunpack.c.l.b16 %v209
    %v532 = vunpack.c.h.b16 %v209
    %v533 = vunpack.c.l.b16 %v210
    %v534 = vunpack.c.h.b16 %v210
    %v535 = vunpack.c.l.b16 %v211
    %v536 = vunpack.c.h.b16 %v211
    %v537 = vunpack.c.l.b16 %v212
    %v538 = vunpack.c.h.b16 %v212
    %v539 = vunpack.c.l.b16 %v213
    %v540 = vunpack.c.h.b16 %v213
    %v541 = vunpack.c.l.b16 %v214
    %v542 = vunpack.c.h.b16 %v214
    %v543 = vunpack.c.l.b16 %v215
    %v544 = vunpack.c.h.b16 %v215
    %v545 = vunpack.c.l.b16 %v216
    %v546 = vunpack.c.h.b16 %v216
    %v547 = vunpack.c.l.b16 %v217
    %v548 = vunpack.c.h.b16 %v217
    %v549 = vunpack.c.l.b16 %v218
    %v550 = vunpack.c.h.b16 %v218
    %v551 = vunpack.c.l.b16 %v219
    %v552 = vunpack.c.h.b16 %v219
    %v553 = vunpack.c.l.b16 %v220
    %v554 = vunpack.c.h.b16 %v220
    %v555 = vunpack.c.l.b16 %v221
    %v556 = vunpack.c.h.b16 %v221
    %v557 = vunpack.c.l.b16 %v222
    %v558 = vunpack.c.h.b16 %v222
    %v559 = vunpack.c.l.b16 %v223
    %v560 = vunpack.c.h.b16 %v223
    %v561 = vunpack.c.l.b16 %v224
    %v562 = vunpack.c.h.b16 %v224
    %v563 = vunpack.c.l.b16 %v225
    %v564 = vunpack.c.h.b16 %v225
    %v565 = vunpack.c.l.b16 %v226
    %v566 = vunpack.c.h.b16 %v226
    %v567 = vunpack.c.l.b16 %v227
    %v568 = vunpack.c.h.b16 %v227
    %v569 = vunpack.c.l.b16 %v228
    %v570 = vunpack.c.h.b16 %v228
    %v571 = vunpack.c.l.b16 %v229
    %v572 = vunpack.c.h.b16 %v229
    %v573 = vunpack.c.l.b16 %v230
    %v574 = vunpack.c.h.b16 %v230
    %v575 = vunpack.c.l.b16 %v231
    %v576 = vunpack.c.h.b16 %v231
    %v577 = vunpack.c.l.b16 %v232
    %v578 = vunpack.c.h.b16 %v232
    %v579 = vunpack.c.l.b16 %v233
    %v580 = vunpack.c.h.b16 %v233
    %v581 = vunpack.c.l.b16 %v234
    %v582 = vunpack.c.h.b16 %v234
    %v583 = vunpack.c.l.b16 %v235
    %v584 = vunpack.c.h.b16 %v235
    %v585 = vunpack.c.l.b16 %v236
    %v586 = vunpack.c.h.b16 %v236
    %v587 = vunpack.c.l.b16 %v237
    %v588 = vunpack.c.h.b16 %v237
    %v589 = vunpack.c.l.b16 %v238
    %v590 = vunpack.c.h.b16 %v238
    %v591 = vunpack.c.l.b16 %v239
    %v592 = vunpack.c.h.b16 %v239
    %v593 = vunpack.c.l.b16 %v240
    %v594 = vunpack.c.h.b16 %v240
    %v595 = vunpack.c.l.b16 %v241
    %v596 = vunpack.c.h.b16 %v241
    %v597 = vunpack.c.l.b16 %v242
    %v598 = vunpack.c.h.b16 %v242
    %v599 = vunpack.c.l.b16 %v243
    %v600 = vunpack.c.h.b16 %v243
    %v601 = vunpack.c.l.b16 %v244
    %v602 = vunpack.c.h.b16 %v244
    %v603 = vunpack.c.l.b16 %v245
    %v604 = vunpack.c.h.b16 %v245
    %v605 = vunpack.c.l.b16 %v246
    %v606 = vunpack.c.h.b16 %v246
    %v607 = vunpack.c.l.b16 %v247
    %v608 = vunpack.c.h.b16 %v247
    %v609 = vunpack.c.l.b16 %v248
    %v610 = vunpack.c.h.b16 %v248
    %v611 = vunpack.c.l.b16 %v249
    %v612 = vunpack.c.h.b16 %v249
    %v613 = vunpack.c.l.b16 %v250
    %v614 = vunpack.c.h.b16 %v250
    %v615 = vunpack.c.l.b16 %v251
    %v616 = vunpack.c.h.b16 %v251
    %v617 = vunpack.c.l.b16 %v252
    %v618 = vunpack.c.h.b16 %v252
    %v619 = vunpack.c.l.b16 %v253
    %v620 = vunpack.c.h.b16 %v253
    %v621 = vunpack.c.l.b16 %v254
    %v622 = vunpack.c.h.b16 %v254
    %v623 = vunpack.c.l.b16 %v255
    %v624 = vunpack.c.h.b16 %v255
    %v625 = vunpack.c.l.b16 %v256
    %v626 = vunpack.c.h.b16 %v256
    %v627 = vunpack.c.l.b16 %v257
    %v628 = vunpack.c.h.b16 %v257
    %v629 = vunpack.c.l.b16 %v258
    %v630 = vunpack.c.h.b16 %v258
    %v631 = vunpack.c.l.b16 %v259
    %v632 = vunpack.c.h.b16 %v259
    %v633 = vunpack.c.l.b16 %v260
    %v634 = vunpack.c.h.b16 %v260
    %v635 = vunpack.c.l.b16 %v261
    %v636 = vunpack.c.h.b16 %v261
    %v637 = vunpack.c.l.b16 %v262
    %v638 = vunpack.c.h.b16 %v262
    %v639 = vunpack.c.l.b16 %v263
    %v640 = vunpack.c.h.b16 %v263
    %v641 = vunpack.c.l.b16 %v264
    %v642 = vunpack.c.h.b16 %v264
    %v643 = vunpack.c.l.b16 %v265
    %v644 = vunpack.c.h.b16 %v265
    %v645 = vunpack.c.l.b16 %v266
    %v646 = vunpack.c.h.b16 %v266
    %v647 = vunpack.c.l.b16 %v267
    %v648 = vunpack.c.h.b16 %v267
    %v649 = vunpack.c.l.b16 %v268
    %v650 = vunpack.c.h.b16 %v268
    %v651 = vunpack.c.l.b16 %v269
    %v652 = vunpack.c.h.b16 %v269
    %v653 = vunpack.c.l.b16 %v270
    %v654 = vunpack.c.h.b16 %v270
    %v655 = vunpack.c.l.b16 %v271
    %v656 = vunpack.c.h.b16 %v271
    %v657 = vunpack.c.l.b16 %v272
    %v658 = vunpack.c.h.b16 %v272
    %v659 = vunpack.c.l.b16 %v273
    %v660 = vunpack.c.h.b16 %v273
    %v661 = vunpack.c.l.b16 %v274
    %v662 = vunpack.c.h.b16 %v274
    %v663 = vunpack.c.l.b16 %v275
    %v664 = vunpack.c.h.b16 %v275
    %v665 = vunpack.c.l.b16 %v276
    %v666 = vunpack.c.h.b16 %v276
    %v667 = vunpack.c.l.b16 %v277
    %v668 = vunpack.c.h.b16 %v277
    %v669 = vunpack.c.l.b16 %v278
    %v670 = vunpack.c.h.b16 %v278
    %v671 = vunpack.c.l.b16 %v279
    %v672 = vunpack.c.h.b16 %v279
    %v673 = vunpack.c.l.b16 %v280
    %v674 = vunpack.c.h.b16 %v280
    %v675 = vunpack.c.l.b16 %v281
    %v676 = vunpack.c.h.b16 %v281
    %v677 = vunpack.c.l.b16 %v282
    %v678 = vunpack.c.h.b16 %v282
    %v679 = vunpack.c.l.b16 %v283
    %v680 = vunpack.c.h.b16 %v283
    %v681 = vunpack.c.l.b16 %v284
    %v682 = vunpack.c.h.b16 %v284
    %v683 = vunpack.c.l.b16 %v285
    %v684 = vunpack.c.h.b16 %v285
    %v685 = vunpack.c.l.b16 %v286
    %v686 = vunpack.c.h.b16 %v286
    %v687 = vunpack.c.l.b16 %v287
    %v688 = vunpack.c.h.b16 %v287
    %v689 = vunpack.c.l.b16 %v288
    %v690 = vunpack.c.h.b16 %v288
    %v691 = vunpack.c.l.b16 %v289
    %v692 = vunpack.c.h.b16 %v289
    %v693 = vunpack.c.l.b16 %v290
    %v694 = vunpack.c.h.b16 %v290
    %v695 = vunpack.c.l.b16 %v291
    %v696 = vunpack.c.h.b16 %v291
    %v697 = vunpack.c.l.b16 %v292
    %v698 = vunpack.c.h.b16 %v292
    %v699 = vunpack.c.l.b16 %v293
    %v700 = vunpack.c.h.b16 %v293
    %v701 = vunpack.c.l.b16 %v294
    %v702 = vunpack.c.h.b16 %v294
    %v703 = vunpack.c.l.b16 %v295
    %v704 = vunpack.c.h.b16 %v295
    %v705 = vunpack.c.l.b16 %v296
    %v706 = vunpack.c.h.b16 %v296
    %v707 = vunpack.c.l.b16 %v297
    %v708 = vunpack.c.h.b16 %v297
    %v709 = vunpack.c.l.b16 %v298
    %v710 = vunpack.c.h.b16 %v298
    %v711 = vunpack.c.l.b16 %v299
    %v712 = vunpack.c.h.b16 %v299
    %v713 = vunpack.c.l.b16 %v300
    %v714 = vunpack.c.h.b16 %v300
    %v715 = vunpack.c.l.b16 %v301
    %v716 = vunpack.c.h.b16 %v301
    %v717 = vunpack.c.l.b16 %v302
    %v718 = vunpack.c.h.b16 %v302
    %v719 = vunpack.c.l.b16 %v303
    %v720 = vunpack.c.h.b16 %v303
    %v721 = vunpack.c.l.b16 %v304
    %v722 = vunpack.c.h.b16 %v304
    %v723 = vunpack.c.l.b16 %v305
    %v724 = vunpack.c.h.b16 %v305
    %v725 = vunpack.c.l.b16 %v306
    %v726 = vunpack.c.h.b16 %v306
    %v727 = vunpack.c.l.b16 %v307
    %v728 = vunpack.c.h.b16 %v307
    %v729 = vunpack.c.l.b16 %v308
    %v730 = vunpack.c.h.b16 %v308
    %v731 = vunpack.c.l.b16 %v309
    %v732 = vunpack.c.h.b16 %v309
    %v733 = vunpack.c.l.b16 %v310
    %v734 = vunpack.c.h.b16 %v310
    %v735 = vunpack.c.l.b16 %v311
    %v736 = vunpack.c.h.b16 %v311
    %v737 = vunpack.c.l.b16 %v312
    %v738 = vunpack.c.h.b16 %v312
    %v739 = vunpack.c.l.b16 %v313
    %v740 = vunpack.c.h.b16 %v313
    %v741 = vunpack.c.l.b16 %v314
    %v742 = vunpack.c.h.b16 %v314
    %v743 = vunpack.c.l.b16 %v315
    %v744 = vunpack.c.h.b16 %v315
    %v745 = vunpack.c.l.b16 %v316
    %v746 = vunpack.c.h.b16 %v316
    %v747 = vunpack.c.l.b16 %v317
    %v748 = vunpack.c.h.b16 %v317
    %v749 = vunpack.c.l.b16 %v318
    %v750 = vunpack.c.h.b16 %v318
    %v751 = vunpack.c.l.b16 %v319
    %v752 = vunpack.c.h.b16 %v319
    %v753 = vunpack.c.l.b16 %v320
    %v754 = vunpack.c.h.b16 %v320
    %v755 = vunpack.c.l.b16 %v321
    %v756 = vunpack.c.h.b16 %v321
    %v757 = vunpack.c.l.b16 %v322
    %v758 = vunpack.c.h.b16 %v322
    %v759 = vunpack.c.l.b16 %v323
    %v760 = vunpack.c.h.b16 %v323
    %v761 = vunpack.c.l.b16 %v324
    %v762 = vunpack.c.h.b16 %v324
    %v763 = vunpack.c.l.b16 %v325
    %v764 = vunpack.c.h.b16 %v325
    %v765 = vpack.c.b16 %v517, %v509
    %v766 = vpack.c.b16 %v518, %v510
    %v767 = vpack.c.b16 %v519, %v511
    %v768 = vpack.c.b16 %v520, %v512
    %v769 = vpack.c.b16 %v521, %v513
    %v770 = vpack.c.b16 %v522, %v514
    %v771 = vpack.c.b16 %v523, %v515
    %v772 = vpack.c.b16 %v524, %v516
    %v773 = vpack.c.b16 %v533, %v525
    %v774 = vpack.c.b16 %v534, %v526
    %v775 = vpack.c.b16 %v535, %v527
    %v776 = vpack.c.b16 %v536, %v528
    %v777 = vpack.c.b16 %v537, %v529
    %v778 = vpack.c.b16 %v538, %v530
    %v779 = vpack.c.b16 %v539, %v531
    %v780 = vpack.c.b16 %v540, %v532
    %v781 = vpack.c.b16 %v549, %v541
    %v782 = vpack.c.b16 %v550, %v542
    %v783 = vpack.c.b16 %v551, %v543
    %v784 = vpack.c.b16 %v552, %v544
    %v785 = vpack.c.b16 %v553, %v545
    %v786 = vpack.c.b16 %v554, %v546
    %v787 = vpack.c.b16 %v555, %v547
    %v788 = vpack.c.b16 %v556, %v548
    %v789 = vpack.c.b16 %v565, %v557
    %v790 = vpack.c.b16 %v566, %v558
    %v791 = vpack.c.b16 %v567, %v559
    %v792 = vpack.c.b16 %v568, %v560
    %v793 = vpack.c.b16 %v569, %v561
    %v794 = vpack.c.b16 %v570, %v562
    %v795 = vpack.c.b16 %v571, %v563
    %v796 = vpack.c.b16 %v572, %v564
    %v797 = vpack.c.b16 %v581, %v573
    %v798 = vpack.c.b16 %v582, %v574
    %v799 = vpack.c.b16 %v583, %v575
    %v800 = vpack.c.b16 %v584, %v576
    %v801 = vpack.c.b16 %v585, %v577
    %v802 = vpack.c.b16 %v586, %v578
    %v803 = vpack.c.b16 %v587, %v579
    %v804 = vpack.c.b16 %v588, %v580
    %v805 = vpack.c.b16 %v597, %v589
    %v806 = vpack.c.b16 %v598, %v590
    %v807 = vpack.c.b16 %v599, %v591
    %v808 = vpack.c.b16 %v600, %v592
    %v809 = vpack.c.b16 %v601, %v593
    %v810 = vpack.c.b16 %v602, %v594
    %v811 = vpack.c.b16 %v603, %v595
    %v812 = vpack.c.b16 %v604, %v596
    %v813 = vpack.c.b16 %v613, %v605
    %v814 = vpack.c.b16 %v614, %v606
    %v815 = vpack.c.b16 %v615, %v607
    %v816 = vpack.c.b16 %v616, %v608
    %v817 = vpack.c.b16 %v617, %v609
    %v818 = vpack.c.b16 %v618, %v610
    %v819 = vpack.c.b16 %v619, %v611
    %v820 = vpack.c.b16 %v620, %v612
    %v821 = vpack.c.b16 %v629, %v621
    %v822 = vpack.c.b16 %v630, %v622
    %v823 = vpack.c.b16 %v631, %v623
    %v824 = vpack.c.b16 %v632, %v624
    %v825 = vpack.c.b16 %v633, %v625
    %v826 = vpack.c.b16 %v634, %v626
    %v827 = vpack.c.b16 %v635, %v627
    %v828 = vpack.c.b16 %v636, %v628
    %v829 = vpack.c.b16 %v645, %v637
    %v830 = vpack.c.b16 %v646, %v638
    %v831 = vpack.c.b16 %v647, %v639
    %v832 = vpack.c.b16 %v648, %v640
    %v833 = vpack.c.b16 %v649, %v641
    %v834 = vpack.c.b16 %v650, %v642
    %v835 = vpack.c.b16 %v651, %v643
    %v836 = vpack.c.b16 %v652, %v644
    %v837 = vpack.c.b16 %v661, %v653
    %v838 = vpack.c.b16 %v662, %v654
    %v839 = vpack.c.b16 %v663, %v655
    %v840 = vpack.c.b16 %v664, %v656
    %v841 = vpack.c.b16 %v665, %v657
    %v842 = vpack.c.b16 %v666, %v658
    %v843 = vpack.c.b16 %v667, %v659
    %v844 = vpack.c.b16 %v668, %v660
    %v845 = vpack.c.b16 %v677, %v669
    %v846 = vpack.c.b16 %v678, %v670
    %v847 = vpack.c.b16 %v679, %v671
    %v848 = vpack.c.b16 %v680, %v672
    %v849 = vpack.c.b16 %v681, %v673
    %v850 = vpack.c.b16 %v682, %v674
    %v851 = vpack.c.b16 %v683, %v675
    %v852 = vpack.c.b16 %v684, %v676
    %v853 = vpack.c.b16 %v693, %v685
    %v854 = vpack.c.b16 %v694, %v686
    %v855 = vpack.c.b16 %v695, %v687
    %v856 = vpack.c.b16 %v696, %v688
    %v857 = vpack.c.b16 %v697, %v689
    %v858 = vpack.c.b16 %v698, %v690
    %v859 = vpack.c.b16 %v699, %v691
    %v860 = vpack.c.b16 %v700, %v692
    %v861 = vpack.c.b16 %v709, %v701
    %v862 = vpack.c.b16 %v710, %v702
    %v863 = vpack.c.b16 %v711, %v703
    %v864 = vpack.c.b16 %v712, %v704
    %v865 = vpack.c.b16 %v713, %v705
    %v866 = vpack.c.b16 %v714, %v706
    %v867 = vpack.c.b16 %v715, %v707
    %v868 = vpack.c.b16 %v716, %v708
    %v869 = vpack.c.b16 %v725, %v717
    %v870 = vpack.c.b16 %v726, %v718
    %v871 = vpack.c.b16 %v727, %v719
    %v872 = vpack.c.b16 %v728, %v720
    %v873 = vpack.c.b16 %v729, %v721
    %v874 = vpack.c.b16 %v730, %v722
    %v875 = vpack.c.b16 %v731, %v723
    %v876 = vpack.c.b16 %v732, %v724
    %v877 = vpack.c.b16 %v741, %v733
    %v878 = vpack.c.b16 %v742, %v734
    %v879 = vpack.c.b16 %v743, %v735
    %v880 = vpack.c.b16 %v744, %v736
    %v881 = vpack.c.b16 %v745, %v737
    %v882 = vpack.c.b16 %v746, %v738
    %v883 = vpack.c.b16 %v747, %v739
    %v884 = vpack.c.b16 %v748, %v740
    %v885 = vpack.c.b16 %v757, %v749
    %v886 = vpack.c.b16 %v758, %v750
    %v887 = vpack.c.b16 %v759, %v751
    %v888 = vpack.c.b16 %v760, %v752
    %v889 = vpack.c.b16 %v761, %v753
    %v890 = vpack.c.b16 %v762, %v754
    %v891 = vpack.c.b16 %v763, %v755
    %v892 = vpack.c.b16 %v764, %v756
    %1021 = vmatprep.subr.bf16.mxu0 %v766
    %1022 = vmatpush1.bf16.msra.mxu0 %v765
    %1023 = vmatprep.subr.bf16.mxu0 %v774
    %1024 = vmatpush1.bf16.msra.mxu0 %v773
    %1025 = vmatprep.subr.bf16.mxu0 %v782
    %1026 = vmatpush1.bf16.msra.mxu0 %v781
    %1027 = vmatprep.subr.bf16.mxu0 %v790
    %1028 = vmatpush1.bf16.msra.mxu0 %v789
    %1029 = vmatprep.subr.bf16.mxu0 %v798
    %1030 = vmatpush1.bf16.msra.mxu0 %v797
    %1031 = vmatprep.subr.bf16.mxu0 %v806
    %1032 = vmatpush1.bf16.msra.mxu0 %v805
    %1033 = vmatprep.subr.bf16.mxu0 %v814
    %1034 = vmatpush1.bf16.msra.mxu0 %v813
    %1035 = vmatprep.subr.bf16.mxu0 %v822
    %1036 = vmatpush1.bf16.msra.mxu0 %v821
    %1037 = vmatprep.subr.bf16.mxu0 %v830
    %1038 = vmatpush1.bf16.msra.mxu0 %v829
    %1039 = vmatprep.subr.bf16.mxu0 %v838
    %1040 = vmatpush1.bf16.msra.mxu0 %v837
    %1041 = vmatprep.subr.bf16.mxu0 %v846
    %1042 = vmatpush1.bf16.msra.mxu0 %v845
    %1043 = vmatprep.subr.bf16.mxu0 %v854
    %1044 = vmatpush1.bf16.msra.mxu0 %v853
    %1045 = vmatprep.subr.bf16.mxu0 %v862
    %1046 = vmatpush1.bf16.msra.mxu0 %v861
    %1047 = vmatprep.subr.bf16.mxu0 %v870
    %1048 = vmatpush1.bf16.msra.mxu0 %v869
    %1049 = vmatprep.subr.bf16.mxu0 %v878
    %1050 = vmatpush1.bf16.msra.mxu0 %v877
    %1051 = vmatprep.subr.bf16.mxu0 %v886
    %1052 = vmatpush1.bf16.msra.mxu0 %v885
    %1053 = vmatprep.mubr.bf16.mxu0 %v338
    %1054 = vmatmul.mubr.bf16.gmra.mrb[0].mxu0 %v337
    %v1055 = vpop.f32.mrb[0].mxu0
    %v1056 = vadd.f32 %v344, %v1055
    %v1057 = vpop.f32.mrb[0].mxu0
    %v1058 = vadd.f32 %v348, %v1057
    %v1059 = vpop.f32.mrb[0].mxu0
    %v1060 = vpop.f32.mrb[0].mxu0
    %1061 = vdwg.mxu0
    %1062 = vmatprep.subr.bf16.mxu0 %v768
    %1063 = vmatpush1.bf16.msra.mxu0 %v767
    %1064 = vmatprep.subr.bf16.mxu0 %v776
    %1065 = vmatpush1.bf16.msra.mxu0 %v775
    %1066 = vmatprep.subr.bf16.mxu0 %v784
    %1067 = vmatpush1.bf16.msra.mxu0 %v783
    %1068 = vmatprep.subr.bf16.mxu0 %v792
    %1069 = vmatpush1.bf16.msra.mxu0 %v791
    %1070 = vmatprep.subr.bf16.mxu0 %v800
    %1071 = vmatpush1.bf16.msra.mxu0 %v799
    %1072 = vmatprep.subr.bf16.mxu0 %v808
    %1073 = vmatpush1.bf16.msra.mxu0 %v807
    %1074 = vmatprep.subr.bf16.mxu0 %v816
    %1075 = vmatpush1.bf16.msra.mxu0 %v815
    %1076 = vmatprep.subr.bf16.mxu0 %v824
    %1077 = vmatpush1.bf16.msra.mxu0 %v823
    %1078 = vmatprep.subr.bf16.mxu0 %v832
    %1079 = vmatpush1.bf16.msra.mxu0 %v831
    %1080 = vmatprep.subr.bf16.mxu0 %v840
    %1081 = vmatpush1.bf16.msra.mxu0 %v839
    %1082 = vmatprep.subr.bf16.mxu0 %v848
    %1083 = vmatpush1.bf16.msra.mxu0 %v847
    %1084 = vmatprep.subr.bf16.mxu0 %v856
    %1085 = vmatpush1.bf16.msra.mxu0 %v855
    %1086 = vmatprep.subr.bf16.mxu0 %v864
    %1087 = vmatpush1.bf16.msra.mxu0 %v863
    %1088 = vmatprep.subr.bf16.mxu0 %v872
    %1089 = vmatpush1.bf16.msra.mxu0 %v871
    %1090 = vmatprep.subr.bf16.mxu0 %v880
    %1091 = vmatpush1.bf16.msra.mxu0 %v879
    %1092 = vmatprep.subr.bf16.mxu0 %v888
    %1093 = vmatpush1.bf16.msra.mxu0 %v887
    %1094 = vmatprep.mubr.bf16.mxu0 %v338
    %1095 = vmatmul.mubr.bf16.gmra.mrb[0].mxu0 %v337
    %v1096 = vpop.f32.mrb[0].mxu0
    %v1097 = vadd.f32 %v352, %v1096
    %v1098 = vpop.f32.mrb[0].mxu0
    %v1099 = vadd.f32 %v356, %v1098
    %v1100 = vpop.f32.mrb[0].mxu0
    %v1101 = vpop.f32.mrb[0].mxu0
    %1102 = vdwg.mxu0
    %1103 = vmatprep.subr.bf16.mxu0 %v770
    %1104 = vmatpush1.bf16.msra.mxu0 %v769
    %1105 = vmatprep.subr.bf16.mxu0 %v778
    %1106 = vmatpush1.bf16.msra.mxu0 %v777
    %1107 = vmatprep.subr.bf16.mxu0 %v786
    %1108 = vmatpush1.bf16.msra.mxu0 %v785
    %1109 = vmatprep.subr.bf16.mxu0 %v794
    %1110 = vmatpush1.bf16.msra.mxu0 %v793
    %1111 = vmatprep.subr.bf16.mxu0 %v802
    %1112 = vmatpush1.bf16.msra.mxu0 %v801
    %1113 = vmatprep.subr.bf16.mxu0 %v810
    %1114 = vmatpush1.bf16.msra.mxu0 %v809
    %1115 = vmatprep.subr.bf16.mxu0 %v818
    %1116 = vmatpush1.bf16.msra.mxu0 %v817
    %1117 = vmatprep.subr.bf16.mxu0 %v826
    %1118 = vmatpush1.bf16.msra.mxu0 %v825
    %1119 = vmatprep.subr.bf16.mxu0 %v834
    %1120 = vmatpush1.bf16.msra.mxu0 %v833
    %1121 = vmatprep.subr.bf16.mxu0 %v842
    %1122 = vmatpush1.bf16.msra.mxu0 %v841
    %1123 = vmatprep.subr.bf16.mxu0 %v850
    %1124 = vmatpush1.bf16.msra.mxu0 %v849
    %1125 = vmatprep.subr.bf16.mxu0 %v858
    %1126 = vmatpush1.bf16.msra.mxu0 %v857
    %1127 = vmatprep.subr.bf16.mxu0 %v866
    %1128 = vmatpush1.bf16.msra.mxu0 %v865
    %1129 = vmatprep.subr.bf16.mxu0 %v874
    %1130 = vmatpush1.bf16.msra.mxu0 %v873
    %1131 = vmatprep.subr.bf16.mxu0 %v882
    %1132 = vmatpush1.bf16.msra.mxu0 %v881
    %1133 = vmatprep.subr.bf16.mxu0 %v890
    %1134 = vmatpush1.bf16.msra.mxu0 %v889
    %1135 = vmatprep.mubr.bf16.mxu0 %v338
    %1136 = vmatmul.mubr.bf16.gmra.mrb[0].mxu0 %v337
    %v1137 = vpop.f32.mrb[0].mxu0
    %v1138 = vadd.f32 %v360, %v1137
    %v1139 = vpop.f32.mrb[0].mxu0
    %v1140 = vadd.f32 %v364, %v1139
    %v1141 = vpop.f32.mrb[0].mxu0
    %v1142 = vpop.f32.mrb[0].mxu0
    %1143 = vdwg.mxu0
    %1144 = vmatprep.subr.bf16.mxu0 %v772
    %1145 = vmatpush1.bf16.msra.mxu0 %v771
    %1146 = vmatprep.subr.bf16.mxu0 %v780
    %1147 = vmatpush1.bf16.msra.mxu0 %v779
    %1148 = vmatprep.subr.bf16.mxu0 %v788
    %1149 = vmatpush1.bf16.msra.mxu0 %v787
    %1150 = vmatprep.subr.bf16.mxu0 %v796
    %1151 = vmatpush1.bf16.msra.mxu0 %v795
    %1152 = vmatprep.subr.bf16.mxu0 %v804
    %1153 = vmatpush1.bf16.msra.mxu0 %v803
    %1154 = vmatprep.subr.bf16.mxu0 %v812
    %1155 = vmatpush1.bf16.msra.mxu0 %v811
    %1156 = vmatprep.subr.bf16.mxu0 %v820
    %1157 = vmatpush1.bf16.msra.mxu0 %v819
    %1158 = vmatprep.subr.bf16.mxu0 %v828
    %1159 = vmatpush1.bf16.msra.mxu0 %v827
    %1160 = vmatprep.subr.bf16.mxu0 %v836
    %1161 = vmatpush1.bf16.msra.mxu0 %v835
    %1162 = vmatprep.subr.bf16.mxu0 %v844
    %1163 = vmatpush1.bf16.msra.mxu0 %v843
    %1164 = vmatprep.subr.bf16.mxu0 %v852
    %1165 = vmatpush1.bf16.msra.mxu0 %v851
    %1166 = vmatprep.subr.bf16.mxu0 %v860
    %1167 = vmatpush1.bf16.msra.mxu0 %v859
    %1168 = vmatprep.subr.bf16.mxu0 %v868
    %1169 = vmatpush1.bf16.msra.mxu0 %v867
    %1170 = vmatprep.subr.bf16.mxu0 %v876
    %1171 = vmatpush1.bf16.msra.mxu0 %v875
    %1172 = vmatprep.subr.bf16.mxu0 %v884
    %1173 = vmatpush1.bf16.msra.mxu0 %v883
    %1174 = vmatprep.subr.bf16.mxu0 %v892
    %1175 = vmatpush1.bf16.msra.mxu0 %v891
    %1176 = vmatprep.mubr.bf16.mxu0 %v338
    %1177 = vmatmul.mubr.bf16.gmra.mrb[0].mxu0 %v337
    %v1178 = vpop.f32.mrb[0].mxu0
    %v1179 = vadd.f32 %v368, %v1178
    %v1180 = vpop.f32.mrb[0].mxu0
    %v1181 = vadd.f32 %v372, %v1180
    %v1182 = vpop.f32.mrb[0].mxu0
    %v1183 = vpop.f32.mrb[0].mxu0
    %1184 = vdwg.mxu0
    %v1185 = vand.u32 2147483647, %v1056
    %v1186 = vand.u32 2147483647, %v1058
    %v1187 = vand.u32 2147483647, %v1097
    %v1188 = vand.u32 2147483647, %v1099
    %v1189 = vand.u32 2147483647, %v1138
    %v1190 = vand.u32 2147483647, %v1140
    %v1191 = vand.u32 2147483647, %v1179
    %v1192 = vand.u32 2147483647, %v1181
    %v1193 = vadd.f32 %v1185, 1.0
    %v1194 = vadd.f32 %v1186, 1.0
    %v1195 = vadd.f32 %v1187, 1.0
    %v1196 = vadd.f32 %v1188, 1.0
    %v1197 = vadd.f32 %v1189, 1.0
    %v1198 = vadd.f32 %v1190, 1.0
    %v1199 = vadd.f32 %v1191, 1.0
    %v1200 = vadd.f32 %v1192, 1.0
    %v1201 = vrcp.pop %v1193
    %v1202 = vrcp.pop %v1194
    %v1203 = vrcp.pop %v1195
    %v1204 = vrcp.pop %v1196
    %v1205 = vrcp.pop %v1197
    %v1206 = vrcp.pop %v1198
    %v1207 = vrcp.pop %v1199
    %v1208 = vrcp.pop %v1200
    %v1209 = vmul.f32 %v1056, %v1201
    %v1210 = vmul.f32 %v1058, %v1202
    %v1211 = vmul.f32 %v1097, %v1203
    %v1212 = vmul.f32 %v1099, %v1204
    %v1213 = vmul.f32 %v1138, %v1205
    %v1214 = vmul.f32 %v1140, %v1206
    %v1215 = vmul.f32 %v1179, %v1207
    %v1216 = vmul.f32 %v1181, %v1208
    %s1217 = smul.u32 4, 128
    %s1218 = smul.u32 %s1217, 16
    %s1219 = sshll.u32 %s1218, 4
    %1220 = dma.done [#allocation5], %s1219
    %v1221 = vld [vmem:[#allocation2] sm:$0xff]
    %v1222 = vld [vmem:[#allocation2 + $0x8] sm:$0xff]
    %v1223 = vld [vmem:[#allocation2 + $0x10] sm:$0xff]
    %v1224 = vld [vmem:[#allocation2 + $0x18] sm:$0xff]
    %v1225 = vld [vmem:[#allocation2 + $0x20] sm:$0xff]
    %v1226 = vld [vmem:[#allocation2 + $0x28] sm:$0xff]
    %v1227 = vld [vmem:[#allocation2 + $0x30] sm:$0xff]
    %v1228 = vld [vmem:[#allocation2 + $0x38] sm:$0xff]
    %v1229 = vld [vmem:[#allocation2 + $0x40] sm:$0xff]
    %v1230 = vld [vmem:[#allocation2 + $0x48] sm:$0xff]
    %v1231 = vld [vmem:[#allocation2 + $0x50] sm:$0xff]
    %v1232 = vld [vmem:[#allocation2 + $0x58] sm:$0xff]
    %v1233 = vld [vmem:[#allocation2 + $0x60] sm:$0xff]
    %v1234 = vld [vmem:[#allocation2 + $0x68] sm:$0xff]
    %v1235 = vld [vmem:[#allocation2 + $0x70] sm:$0xff]
    %v1236 = vld [vmem:[#allocation2 + $0x78] sm:$0xff]
    %v1237 = vld [vmem:[#allocation2 + $0x80] sm:$0xff]
    %v1238 = vld [vmem:[#allocation2 + $0x88] sm:$0xff]
    %v1239 = vld [vmem:[#allocation2 + $0x90] sm:$0xff]
    %v1240 = vld [vmem:[#allocation2 + $0x98] sm:$0xff]
    %v1241 = vld [vmem:[#allocation2 + $0xa0] sm:$0xff]
    %v1242 = vld [vmem:[#allocation2 + $0xa8] sm:$0xff]
    %v1243 = vld [vmem:[#allocation2 + $0xb0] sm:$0xff]
    %v1244 = vld [vmem:[#allocation2 + $0xb8] sm:$0xff]
    %v1245 = vld [vmem:[#allocation2 + $0xc0] sm:$0xff]
    %v1246 = vld [vmem:[#allocation2 + $0xc8] sm:$0xff]
    %v1247 = vld [vmem:[#allocation2 + $0xd0] sm:$0xff]
    %v1248 = vld [vmem:[#allocation2 + $0xd8] sm:$0xff]
    %v1249 = vld [vmem:[#allocation2 + $0xe0] sm:$0xff]
    %v1250 = vld [vmem:[#allocation2 + $0xe8] sm:$0xff]
    %v1251 = vld [vmem:[#allocation2 + $0xf0] sm:$0xff]
    %v1252 = vld [vmem:[#allocation2 + $0xf8] sm:$0xff]
    %v1253 = vld [vmem:[#allocation2 + $0x100] sm:$0xff]
    %v1254 = vld [vmem:[#allocation2 + $0x108] sm:$0xff]
    %v1255 = vld [vmem:[#allocation2 + $0x110] sm:$0xff]
    %v1256 = vld [vmem:[#allocation2 + $0x118] sm:$0xff]
    %v1257 = vld [vmem:[#allocation2 + $0x120] sm:$0xff]
    %v1258 = vld [vmem:[#allocation2 + $0x128] sm:$0xff]
    %v1259 = vld [vmem:[#allocation2 + $0x130] sm:$0xff]
    %v1260 = vld [vmem:[#allocation2 + $0x138] sm:$0xff]
    %v1261 = vld [vmem:[#allocation2 + $0x140] sm:$0xff]
    %v1262 = vld [vmem:[#allocation2 + $0x148] sm:$0xff]
    %v1263 = vld [vmem:[#allocation2 + $0x150] sm:$0xff]
    %v1264 = vld [vmem:[#allocation2 + $0x158] sm:$0xff]
    %v1265 = vld [vmem:[#allocation2 + $0x160] sm:$0xff]
    %v1266 = vld [vmem:[#allocation2 + $0x168] sm:$0xff]
    %v1267 = vld [vmem:[#allocation2 + $0x170] sm:$0xff]
    %v1268 = vld [vmem:[#allocation2 + $0x178] sm:$0xff]
    %v1269 = vld [vmem:[#allocation2 + $0x180] sm:$0xff]
    %v1270 = vld [vmem:[#allocation2 + $0x188] sm:$0xff]
    %v1271 = vld [vmem:[#allocation2 + $0x190] sm:$0xff]
    %v1272 = vld [vmem:[#allocation2 + $0x198] sm:$0xff]
    %v1273 = vld [vmem:[#allocation2 + $0x1a0] sm:$0xff]
    %v1274 = vld [vmem:[#allocation2 + $0x1a8] sm:$0xff]
    %v1275 = vld [vmem:[#allocation2 + $0x1b0] sm:$0xff]
    %v1276 = vld [vmem:[#allocation2 + $0x1b8] sm:$0xff]
    %v1277 = vld [vmem:[#allocation2 + $0x1c0] sm:$0xff]
    %v1278 = vld [vmem:[#allocation2 + $0x1c8] sm:$0xff]
    %v1279 = vld [vmem:[#allocation2 + $0x1d0] sm:$0xff]
    %v1280 = vld [vmem:[#allocation2 + $0x1d8] sm:$0xff]
    %v1281 = vld [vmem:[#allocation2 + $0x1e0] sm:$0xff]
    %v1282 = vld [vmem:[#allocation2 + $0x1e8] sm:$0xff]
    %v1283 = vld [vmem:[#allocation2 + $0x1f0] sm:$0xff]
    %v1284 = vld [vmem:[#allocation2 + $0x1f8] sm:$0xff]
    %v1285 = vld [vmem:[#allocation2 + $0x200] sm:$0xff]
    %v1286 = vld [vmem:[#allocation2 + $0x208] sm:$0xff]
    %v1287 = vld [vmem:[#allocation2 + $0x210] sm:$0xff]
    %v1288 = vld [vmem:[#allocation2 + $0x218] sm:$0xff]
    %v1289 = vld [vmem:[#allocation2 + $0x220] sm:$0xff]
    %v1290 = vld [vmem:[#allocation2 + $0x228] sm:$0xff]
    %v1291 = vld [vmem:[#allocation2 + $0x230] sm:$0xff]
    %v1292 = vld [vmem:[#allocation2 + $0x238] sm:$0xff]
    %v1293 = vld [vmem:[#allocation2 + $0x240] sm:$0xff]
    %v1294 = vld [vmem:[#allocation2 + $0x248] sm:$0xff]
    %v1295 = vld [vmem:[#allocation2 + $0x250] sm:$0xff]
    %v1296 = vld [vmem:[#allocation2 + $0x258] sm:$0xff]
    %v1297 = vld [vmem:[#allocation2 + $0x260] sm:$0xff]
    %v1298 = vld [vmem:[#allocation2 + $0x268] sm:$0xff]
    %v1299 = vld [vmem:[#allocation2 + $0x270] sm:$0xff]
    %v1300 = vld [vmem:[#allocation2 + $0x278] sm:$0xff]
    %v1301 = vld [vmem:[#allocation2 + $0x280] sm:$0xff]
    %v1302 = vld [vmem:[#allocation2 + $0x288] sm:$0xff]
    %v1303 = vld [vmem:[#allocation2 + $0x290] sm:$0xff]
    %v1304 = vld [vmem:[#allocation2 + $0x298] sm:$0xff]
    %v1305 = vld [vmem:[#allocation2 + $0x2a0] sm:$0xff]
    %v1306 = vld [vmem:[#allocation2 + $0x2a8] sm:$0xff]
    %v1307 = vld [vmem:[#allocation2 + $0x2b0] sm:$0xff]
    %v1308 = vld [vmem:[#allocation2 + $0x2b8] sm:$0xff]
    %v1309 = vld [vmem:[#allocation2 + $0x2c0] sm:$0xff]
    %v1310 = vld [vmem:[#allocation2 + $0x2c8] sm:$0xff]
    %v1311 = vld [vmem:[#allocation2 + $0x2d0] sm:$0xff]
    %v1312 = vld [vmem:[#allocation2 + $0x2d8] sm:$0xff]
    %v1313 = vld [vmem:[#allocation2 + $0x2e0] sm:$0xff]
    %v1314 = vld [vmem:[#allocation2 + $0x2e8] sm:$0xff]
    %v1315 = vld [vmem:[#allocation2 + $0x2f0] sm:$0xff]
    %v1316 = vld [vmem:[#allocation2 + $0x2f8] sm:$0xff]
    %v1317 = vld [vmem:[#allocation2 + $0x300] sm:$0xff]
    %v1318 = vld [vmem:[#allocation2 + $0x308] sm:$0xff]
    %v1319 = vld [vmem:[#allocation2 + $0x310] sm:$0xff]
    %v1320 = vld [vmem:[#allocation2 + $0x318] sm:$0xff]
    %v1321 = vld [vmem:[#allocation2 + $0x320] sm:$0xff]
    %v1322 = vld [vmem:[#allocation2 + $0x328] sm:$0xff]
    %v1323 = vld [vmem:[#allocation2 + $0x330] sm:$0xff]
    %v1324 = vld [vmem:[#allocation2 + $0x338] sm:$0xff]
    %v1325 = vld [vmem:[#allocation2 + $0x340] sm:$0xff]
    %v1326 = vld [vmem:[#allocation2 + $0x348] sm:$0xff]
    %v1327 = vld [vmem:[#allocation2 + $0x350] sm:$0xff]
    %v1328 = vld [vmem:[#allocation2 + $0x358] sm:$0xff]
    %v1329 = vld [vmem:[#allocation2 + $0x360] sm:$0xff]
    %v1330 = vld [vmem:[#allocation2 + $0x368] sm:$0xff]
    %v1331 = vld [vmem:[#allocation2 + $0x370] sm:$0xff]
    %v1332 = vld [vmem:[#allocation2 + $0x378] sm:$0xff]
    %v1333 = vld [vmem:[#allocation2 + $0x380] sm:$0xff]
    %v1334 = vld [vmem:[#allocation2 + $0x388] sm:$0xff]
    %v1335 = vld [vmem:[#allocation2 + $0x390] sm:$0xff]
    %v1336 = vld [vmem:[#allocation2 + $0x398] sm:$0xff]
    %v1337 = vld [vmem:[#allocation2 + $0x3a0] sm:$0xff]
    %v1338 = vld [vmem:[#allocation2 + $0x3a8] sm:$0xff]
    %v1339 = vld [vmem:[#allocation2 + $0x3b0] sm:$0xff]
    %v1340 = vld [vmem:[#allocation2 + $0x3b8] sm:$0xff]
    %v1341 = vld [vmem:[#allocation2 + $0x3c0] sm:$0xff]
    %v1342 = vld [vmem:[#allocation2 + $0x3c8] sm:$0xff]
    %v1343 = vld [vmem:[#allocation2 + $0x3d0] sm:$0xff]
    %v1344 = vld [vmem:[#allocation2 + $0x3d8] sm:$0xff]
    %v1345 = vld [vmem:[#allocation2 + $0x3e0] sm:$0xff]
    %v1346 = vld [vmem:[#allocation2 + $0x3e8] sm:$0xff]
    %v1347 = vld [vmem:[#allocation2 + $0x3f0] sm:$0xff]
    %v1348 = vld [vmem:[#allocation2 + $0x3f8] sm:$0xff]
    %v1349 = vld [vmem:[#allocation2 + $0x400] sm:$0xff]
    %v1350 = vld [vmem:[#allocation2 + $0x408] sm:$0xff]
    %v1351 = vld [vmem:[#allocation2 + $0x410] sm:$0xff]
    %v1352 = vld [vmem:[#allocation2 + $0x418] sm:$0xff]
    %v1353 = vld [vmem:[#allocation2 + $0x420] sm:$0xff]
    %v1354 = vld [vmem:[#allocation2 + $0x428] sm:$0xff]
    %v1355 = vld [vmem:[#allocation2 + $0x430] sm:$0xff]
    %v1356 = vld [vmem:[#allocation2 + $0x438] sm:$0xff]
    %v1357 = vld [vmem:[#allocation2 + $0x440] sm:$0xff]
    %v1358 = vld [vmem:[#allocation2 + $0x448] sm:$0xff]
    %v1359 = vld [vmem:[#allocation2 + $0x450] sm:$0xff]
    %v1360 = vld [vmem:[#allocation2 + $0x458] sm:$0xff]
    %v1361 = vld [vmem:[#allocation2 + $0x460] sm:$0xff]
    %v1362 = vld [vmem:[#allocation2 + $0x468] sm:$0xff]
    %v1363 = vld [vmem:[#allocation2 + $0x470] sm:$0xff]
    %v1364 = vld [vmem:[#allocation2 + $0x478] sm:$0xff]
    %v1365 = vld [vmem:[#allocation2 + $0x480] sm:$0xff]
    %v1366 = vld [vmem:[#allocation2 + $0x488] sm:$0xff]
    %v1367 = vld [vmem:[#allocation2 + $0x490] sm:$0xff]
    %v1368 = vld [vmem:[#allocation2 + $0x498] sm:$0xff]
    %v1369 = vld [vmem:[#allocation2 + $0x4a0] sm:$0xff]
    %v1370 = vld [vmem:[#allocation2 + $0x4a8] sm:$0xff]
    %v1371 = vld [vmem:[#allocation2 + $0x4b0] sm:$0xff]
    %v1372 = vld [vmem:[#allocation2 + $0x4b8] sm:$0xff]
    %v1373 = vld [vmem:[#allocation2 + $0x4c0] sm:$0xff]
    %v1374 = vld [vmem:[#allocation2 + $0x4c8] sm:$0xff]
    %v1375 = vld [vmem:[#allocation2 + $0x4d0] sm:$0xff]
    %v1376 = vld [vmem:[#allocation2 + $0x4d8] sm:$0xff]
    %v1377 = vld [vmem:[#allocation2 + $0x4e0] sm:$0xff]
    %v1378 = vld [vmem:[#allocation2 + $0x4e8] sm:$0xff]
    %v1379 = vld [vmem:[#allocation2 + $0x4f0] sm:$0xff]
    %v1380 = vld [vmem:[#allocation2 + $0x4f8] sm:$0xff]
    %v1381 = vld [vmem:[#allocation2 + $0x500] sm:$0xff]
    %v1382 = vld [vmem:[#allocation2 + $0x508] sm:$0xff]
    %v1383 = vld [vmem:[#allocation2 + $0x510] sm:$0xff]
    %v1384 = vld [vmem:[#allocation2 + $0x518] sm:$0xff]
    %v1385 = vld [vmem:[#allocation2 + $0x520] sm:$0xff]
    %v1386 = vld [vmem:[#allocation2 + $0x528] sm:$0xff]
    %v1387 = vld [vmem:[#allocation2 + $0x530] sm:$0xff]
    %v1388 = vld [vmem:[#allocation2 + $0x538] sm:$0xff]
    %v1389 = vld [vmem:[#allocation2 + $0x540] sm:$0xff]
    %v1390 = vld [vmem:[#allocation2 + $0x548] sm:$0xff]
    %v1391 = vld [vmem:[#allocation2 + $0x550] sm:$0xff]
    %v1392 = vld [vmem:[#allocation2 + $0x558] sm:$0xff]
    %v1393 = vld [vmem:[#allocation2 + $0x560] sm:$0xff]
    %v1394 = vld [vmem:[#allocation2 + $0x568] sm:$0xff]
    %v1395 = vld [vmem:[#allocation2 + $0x570] sm:$0xff]
    %v1396 = vld [vmem:[#allocation2 + $0x578] sm:$0xff]
    %v1397 = vld [vmem:[#allocation2 + $0x580] sm:$0xff]
    %v1398 = vld [vmem:[#allocation2 + $0x588] sm:$0xff]
    %v1399 = vld [vmem:[#allocation2 + $0x590] sm:$0xff]
    %v1400 = vld [vmem:[#allocation2 + $0x598] sm:$0xff]
    %v1401 = vld [vmem:[#allocation2 + $0x5a0] sm:$0xff]
    %v1402 = vld [vmem:[#allocation2 + $0x5a8] sm:$0xff]
    %v1403 = vld [vmem:[#allocation2 + $0x5b0] sm:$0xff]
    %v1404 = vld [vmem:[#allocation2 + $0x5b8] sm:$0xff]
    %v1405 = vld [vmem:[#allocation2 + $0x5c0] sm:$0xff]
    %v1406 = vld [vmem:[#allocation2 + $0x5c8] sm:$0xff]
    %v1407 = vld [vmem:[#allocation2 + $0x5d0] sm:$0xff]
    %v1408 = vld [vmem:[#allocation2 + $0x5d8] sm:$0xff]
    %v1409 = vld [vmem:[#allocation2 + $0x5e0] sm:$0xff]
    %v1410 = vld [vmem:[#allocation2 + $0x5e8] sm:$0xff]
    %v1411 = vld [vmem:[#allocation2 + $0x5f0] sm:$0xff]
    %v1412 = vld [vmem:[#allocation2 + $0x5f8] sm:$0xff]
    %v1413 = vld [vmem:[#allocation2 + $0x600] sm:$0xff]
    %v1414 = vld [vmem:[#allocation2 + $0x608] sm:$0xff]
    %v1415 = vld [vmem:[#allocation2 + $0x610] sm:$0xff]
    %v1416 = vld [vmem:[#allocation2 + $0x618] sm:$0xff]
    %v1417 = vld [vmem:[#allocation2 + $0x620] sm:$0xff]
    %v1418 = vld [vmem:[#allocation2 + $0x628] sm:$0xff]
    %v1419 = vld [vmem:[#allocation2 + $0x630] sm:$0xff]
    %v1420 = vld [vmem:[#allocation2 + $0x638] sm:$0xff]
    %v1421 = vld [vmem:[#allocation2 + $0x640] sm:$0xff]
    %v1422 = vld [vmem:[#allocation2 + $0x648] sm:$0xff]
    %v1423 = vld [vmem:[#allocation2 + $0x650] sm:$0xff]
    %v1424 = vld [vmem:[#allocation2 + $0x658] sm:$0xff]
    %v1425 = vld [vmem:[#allocation2 + $0x660] sm:$0xff]
    %v1426 = vld [vmem:[#allocation2 + $0x668] sm:$0xff]
    %v1427 = vld [vmem:[#allocation2 + $0x670] sm:$0xff]
    %v1428 = vld [vmem:[#allocation2 + $0x678] sm:$0xff]
    %v1429 = vld [vmem:[#allocation2 + $0x680] sm:$0xff]
    %v1430 = vld [vmem:[#allocation2 + $0x688] sm:$0xff]
    %v1431 = vld [vmem:[#allocation2 + $0x690] sm:$0xff]
    %v1432 = vld [vmem:[#allocation2 + $0x698] sm:$0xff]
    %v1433 = vld [vmem:[#allocation2 + $0x6a0] sm:$0xff]
    %v1434 = vld [vmem:[#allocation2 + $0x6a8] sm:$0xff]
    %v1435 = vld [vmem:[#allocation2 + $0x6b0] sm:$0xff]
    %v1436 = vld [vmem:[#allocation2 + $0x6b8] sm:$0xff]
    %v1437 = vld [vmem:[#allocation2 + $0x6c0] sm:$0xff]
    %v1438 = vld [vmem:[#allocation2 + $0x6c8] sm:$0xff]
    %v1439 = vld [vmem:[#allocation2 + $0x6d0] sm:$0xff]
    %v1440 = vld [vmem:[#allocation2 + $0x6d8] sm:$0xff]
    %v1441 = vld [vmem:[#allocation2 + $0x6e0] sm:$0xff]
    %v1442 = vld [vmem:[#allocation2 + $0x6e8] sm:$0xff]
    %v1443 = vld [vmem:[#allocation2 + $0x6f0] sm:$0xff]
    %v1444 = vld [vmem:[#allocation2 + $0x6f8] sm:$0xff]
    %v1445 = vld [vmem:[#allocation2 + $0x700] sm:$0xff]
    %v1446 = vld [vmem:[#allocation2 + $0x708] sm:$0xff]
    %v1447 = vld [vmem:[#allocation2 + $0x710] sm:$0xff]
    %v1448 = vld [vmem:[#allocation2 + $0x718] sm:$0xff]
    %v1449 = vld [vmem:[#allocation2 + $0x720] sm:$0xff]
    %v1450 = vld [vmem:[#allocation2 + $0x728] sm:$0xff]
    %v1451 = vld [vmem:[#allocation2 + $0x730] sm:$0xff]
    %v1452 = vld [vmem:[#allocation2 + $0x738] sm:$0xff]
    %v1453 = vld [vmem:[#allocation2 + $0x740] sm:$0xff]
    %v1454 = vld [vmem:[#allocation2 + $0x748] sm:$0xff]
    %v1455 = vld [vmem:[#allocation2 + $0x750] sm:$0xff]
    %v1456 = vld [vmem:[#allocation2 + $0x758] sm:$0xff]
    %v1457 = vld [vmem:[#allocation2 + $0x760] sm:$0xff]
    %v1458 = vld [vmem:[#allocation2 + $0x768] sm:$0xff]
    %v1459 = vld [vmem:[#allocation2 + $0x770] sm:$0xff]
    %v1460 = vld [vmem:[#allocation2 + $0x778] sm:$0xff]
    %v1461 = vld [vmem:[#allocation2 + $0x780] sm:$0xff]
    %v1462 = vld [vmem:[#allocation2 + $0x788] sm:$0xff]
    %v1463 = vld [vmem:[#allocation2 + $0x790] sm:$0xff]
    %v1464 = vld [vmem:[#allocation2 + $0x798] sm:$0xff]
    %v1465 = vld [vmem:[#allocation2 + $0x7a0] sm:$0xff]
    %v1466 = vld [vmem:[#allocation2 + $0x7a8] sm:$0xff]
    %v1467 = vld [vmem:[#allocation2 + $0x7b0] sm:$0xff]
    %v1468 = vld [vmem:[#allocation2 + $0x7b8] sm:$0xff]
    %v1469 = vld [vmem:[#allocation2 + $0x7c0] sm:$0xff]
    %v1470 = vld [vmem:[#allocation2 + $0x7c8] sm:$0xff]
    %v1471 = vld [vmem:[#allocation2 + $0x7d0] sm:$0xff]
    %v1472 = vld [vmem:[#allocation2 + $0x7d8] sm:$0xff]
    %v1473 = vld [vmem:[#allocation2 + $0x7e0] sm:$0xff]
    %v1474 = vld [vmem:[#allocation2 + $0x7e8] sm:$0xff]
    %v1475 = vld [vmem:[#allocation2 + $0x7f0] sm:$0xff]
    %v1476 = vld [vmem:[#allocation2 + $0x7f8] sm:$0xff]
    %v1477 = vld [vmem:[#allocation2 + $0x800] sm:$0xff]
    %v1478 = vld [vmem:[#allocation2 + $0x808] sm:$0xff]
    %v1479 = vld [vmem:[#allocation2 + $0x810] sm:$0xff]
    %v1480 = vld [vmem:[#allocation2 + $0x818] sm:$0xff]
    %v1481 = vld [vmem:[#allocation2 + $0x820] sm:$0xff]
    %v1482 = vld [vmem:[#allocation2 + $0x828] sm:$0xff]
    %v1483 = vld [vmem:[#allocation2 + $0x830] sm:$0xff]
    %v1484 = vld [vmem:[#allocation2 + $0x838] sm:$0xff]
    %v1485 = vld [vmem:[#allocation2 + $0x840] sm:$0xff]
    %v1486 = vld [vmem:[#allocation2 + $0x848] sm:$0xff]
    %v1487 = vld [vmem:[#allocation2 + $0x850] sm:$0xff]
    %v1488 = vld [vmem:[#allocation2 + $0x858] sm:$0xff]
    %v1489 = vld [vmem:[#allocation2 + $0x860] sm:$0xff]
    %v1490 = vld [vmem:[#allocation2 + $0x868] sm:$0xff]
    %v1491 = vld [vmem:[#allocation2 + $0x870] sm:$0xff]
    %v1492 = vld [vmem:[#allocation2 + $0x878] sm:$0xff]
    %v1493 = vld [vmem:[#allocation2 + $0x880] sm:$0xff]
    %v1494 = vld [vmem:[#allocation2 + $0x888] sm:$0xff]
    %v1495 = vld [vmem:[#allocation2 + $0x890] sm:$0xff]
    %v1496 = vld [vmem:[#allocation2 + $0x898] sm:$0xff]
    %v1497 = vld [vmem:[#allocation2 + $0x8a0] sm:$0xff]
    %v1498 = vld [vmem:[#allocation2 + $0x8a8] sm:$0xff]
    %v1499 = vld [vmem:[#allocation2 + $0x8b0] sm:$0xff]
    %v1500 = vld [vmem:[#allocation2 + $0x8b8] sm:$0xff]
    %v1501 = vld [vmem:[#allocation2 + $0x8c0] sm:$0xff]
    %v1502 = vld [vmem:[#allocation2 + $0x8c8] sm:$0xff]
    %v1503 = vld [vmem:[#allocation2 + $0x8d0] sm:$0xff]
    %v1504 = vld [vmem:[#allocation2 + $0x8d8] sm:$0xff]
    %v1505 = vld [vmem:[#allocation2 + $0x8e0] sm:$0xff]
    %v1506 = vld [vmem:[#allocation2 + $0x8e8] sm:$0xff]
    %v1507 = vld [vmem:[#allocation2 + $0x8f0] sm:$0xff]
    %v1508 = vld [vmem:[#allocation2 + $0x8f8] sm:$0xff]
    %v1509 = vld [vmem:[#allocation2 + $0x900] sm:$0xff]
    %v1510 = vld [vmem:[#allocation2 + $0x908] sm:$0xff]
    %v1511 = vld [vmem:[#allocation2 + $0x910] sm:$0xff]
    %v1512 = vld [vmem:[#allocation2 + $0x918] sm:$0xff]
    %v1513 = vld [vmem:[#allocation2 + $0x920] sm:$0xff]
    %v1514 = vld [vmem:[#allocation2 + $0x928] sm:$0xff]
    %v1515 = vld [vmem:[#allocation2 + $0x930] sm:$0xff]
    %v1516 = vld [vmem:[#allocation2 + $0x938] sm:$0xff]
    %v1517 = vld [vmem:[#allocation2 + $0x940] sm:$0xff]
    %v1518 = vld [vmem:[#allocation2 + $0x948] sm:$0xff]
    %v1519 = vld [vmem:[#allocation2 + $0x950] sm:$0xff]
    %v1520 = vld [vmem:[#allocation2 + $0x958] sm:$0xff]
    %v1521 = vld [vmem:[#allocation2 + $0x960] sm:$0xff]
    %v1522 = vld [vmem:[#allocation2 + $0x968] sm:$0xff]
    %v1523 = vld [vmem:[#allocation2 + $0x970] sm:$0xff]
    %v1524 = vld [vmem:[#allocation2 + $0x978] sm:$0xff]
    %v1525 = vld [vmem:[#allocation2 + $0x980] sm:$0xff]
    %v1526 = vld [vmem:[#allocation2 + $0x988] sm:$0xff]
    %v1527 = vld [vmem:[#allocation2 + $0x990] sm:$0xff]
    %v1528 = vld [vmem:[#allocation2 + $0x998] sm:$0xff]
    %v1529 = vld [vmem:[#allocation2 + $0x9a0] sm:$0xff]
    %v1530 = vld [vmem:[#allocation2 + $0x9a8] sm:$0xff]
    %v1531 = vld [vmem:[#allocation2 + $0x9b0] sm:$0xff]
    %v1532 = vld [vmem:[#allocation2 + $0x9b8] sm:$0xff]
    %v1533 = vld [vmem:[#allocation2 + $0x9c0] sm:$0xff]
    %v1534 = vld [vmem:[#allocation2 + $0x9c8] sm:$0xff]
    %v1535 = vld [vmem:[#allocation2 + $0x9d0] sm:$0xff]
    %v1536 = vld [vmem:[#allocation2 + $0x9d8] sm:$0xff]
    %v1537 = vld [vmem:[#allocation2 + $0x9e0] sm:$0xff]
    %v1538 = vld [vmem:[#allocation2 + $0x9e8] sm:$0xff]
    %v1539 = vld [vmem:[#allocation2 + $0x9f0] sm:$0xff]
    %v1540 = vld [vmem:[#allocation2 + $0x9f8] sm:$0xff]
    %v1541 = vld [vmem:[#allocation2 + $0xa00] sm:$0xff]
    %v1542 = vld [vmem:[#allocation2 + $0xa08] sm:$0xff]
    %v1543 = vld [vmem:[#allocation2 + $0xa10] sm:$0xff]
    %v1544 = vld [vmem:[#allocation2 + $0xa18] sm:$0xff]
    %v1545 = vld [vmem:[#allocation2 + $0xa20] sm:$0xff]
    %v1546 = vld [vmem:[#allocation2 + $0xa28] sm:$0xff]
    %v1547 = vld [vmem:[#allocation2 + $0xa30] sm:$0xff]
    %v1548 = vld [vmem:[#allocation2 + $0xa38] sm:$0xff]
    %v1549 = vld [vmem:[#allocation2 + $0xa40] sm:$0xff]
    %v1550 = vld [vmem:[#allocation2 + $0xa48] sm:$0xff]
    %v1551 = vld [vmem:[#allocation2 + $0xa50] sm:$0xff]
    %v1552 = vld [vmem:[#allocation2 + $0xa58] sm:$0xff]
    %v1553 = vld [vmem:[#allocation2 + $0xa60] sm:$0xff]
    %v1554 = vld [vmem:[#allocation2 + $0xa68] sm:$0xff]
    %v1555 = vld [vmem:[#allocation2 + $0xa70] sm:$0xff]
    %v1556 = vld [vmem:[#allocation2 + $0xa78] sm:$0xff]
    %v1557 = vld [vmem:[#allocation2 + $0xa80] sm:$0xff]
    %v1558 = vld [vmem:[#allocation2 + $0xa88] sm:$0xff]
    %v1559 = vld [vmem:[#allocation2 + $0xa90] sm:$0xff]
    %v1560 = vld [vmem:[#allocation2 + $0xa98] sm:$0xff]
    %v1561 = vld [vmem:[#allocation2 + $0xaa0] sm:$0xff]
    %v1562 = vld [vmem:[#allocation2 + $0xaa8] sm:$0xff]
    %v1563 = vld [vmem:[#allocation2 + $0xab0] sm:$0xff]
    %v1564 = vld [vmem:[#allocation2 + $0xab8] sm:$0xff]
    %v1565 = vld [vmem:[#allocation2 + $0xac0] sm:$0xff]
    %v1566 = vld [vmem:[#allocation2 + $0xac8] sm:$0xff]
    %v1567 = vld [vmem:[#allocation2 + $0xad0] sm:$0xff]
    %v1568 = vld [vmem:[#allocation2 + $0xad8] sm:$0xff]
    %v1569 = vld [vmem:[#allocation2 + $0xae0] sm:$0xff]
    %v1570 = vld [vmem:[#allocation2 + $0xae8] sm:$0xff]
    %v1571 = vld [vmem:[#allocation2 + $0xaf0] sm:$0xff]
    %v1572 = vld [vmem:[#allocation2 + $0xaf8] sm:$0xff]
    %v1573 = vld [vmem:[#allocation2 + $0xb00] sm:$0xff]
    %v1574 = vld [vmem:[#allocation2 + $0xb08] sm:$0xff]
    %v1575 = vld [vmem:[#allocation2 + $0xb10] sm:$0xff]
    %v1576 = vld [vmem:[#allocation2 + $0xb18] sm:$0xff]
    %v1577 = vld [vmem:[#allocation2 + $0xb20] sm:$0xff]
    %v1578 = vld [vmem:[#allocation2 + $0xb28] sm:$0xff]
    %v1579 = vld [vmem:[#allocation2 + $0xb30] sm:$0xff]
    %v1580 = vld [vmem:[#allocation2 + $0xb38] sm:$0xff]
    %v1581 = vld [vmem:[#allocation2 + $0xb40] sm:$0xff]
    %v1582 = vld [vmem:[#allocation2 + $0xb48] sm:$0xff]
    %v1583 = vld [vmem:[#allocation2 + $0xb50] sm:$0xff]
    %v1584 = vld [vmem:[#allocation2 + $0xb58] sm:$0xff]
    %v1585 = vld [vmem:[#allocation2 + $0xb60] sm:$0xff]
    %v1586 = vld [vmem:[#allocation2 + $0xb68] sm:$0xff]
    %v1587 = vld [vmem:[#allocation2 + $0xb70] sm:$0xff]
    %v1588 = vld [vmem:[#allocation2 + $0xb78] sm:$0xff]
    %v1589 = vld [vmem:[#allocation2 + $0xb80] sm:$0xff]
    %v1590 = vld [vmem:[#allocation2 + $0xb88] sm:$0xff]
    %v1591 = vld [vmem:[#allocation2 + $0xb90] sm:$0xff]
    %v1592 = vld [vmem:[#allocation2 + $0xb98] sm:$0xff]
    %v1593 = vld [vmem:[#allocation2 + $0xba0] sm:$0xff]
    %v1594 = vld [vmem:[#allocation2 + $0xba8] sm:$0xff]
    %v1595 = vld [vmem:[#allocation2 + $0xbb0] sm:$0xff]
    %v1596 = vld [vmem:[#allocation2 + $0xbb8] sm:$0xff]
    %v1597 = vld [vmem:[#allocation2 + $0xbc0] sm:$0xff]
    %v1598 = vld [vmem:[#allocation2 + $0xbc8] sm:$0xff]
    %v1599 = vld [vmem:[#allocation2 + $0xbd0] sm:$0xff]
    %v1600 = vld [vmem:[#allocation2 + $0xbd8] sm:$0xff]
    %v1601 = vld [vmem:[#allocation2 + $0xbe0] sm:$0xff]
    %v1602 = vld [vmem:[#allocation2 + $0xbe8] sm:$0xff]
    %v1603 = vld [vmem:[#allocation2 + $0xbf0] sm:$0xff]
    %v1604 = vld [vmem:[#allocation2 + $0xbf8] sm:$0xff]
    %v1605 = vld [vmem:[#allocation2 + $0xc00] sm:$0xff]
    %v1606 = vld [vmem:[#allocation2 + $0xc08] sm:$0xff]
    %v1607 = vld [vmem:[#allocation2 + $0xc10] sm:$0xff]
    %v1608 = vld [vmem:[#allocation2 + $0xc18] sm:$0xff]
    %v1609 = vld [vmem:[#allocation2 + $0xc20] sm:$0xff]
    %v1610 = vld [vmem:[#allocation2 + $0xc28] sm:$0xff]
    %v1611 = vld [vmem:[#allocation2 + $0xc30] sm:$0xff]
    %v1612 = vld [vmem:[#allocation2 + $0xc38] sm:$0xff]
    %v1613 = vld [vmem:[#allocation2 + $0xc40] sm:$0xff]
    %v1614 = vld [vmem:[#allocation2 + $0xc48] sm:$0xff]
    %v1615 = vld [vmem:[#allocation2 + $0xc50] sm:$0xff]
    %v1616 = vld [vmem:[#allocation2 + $0xc58] sm:$0xff]
    %v1617 = vld [vmem:[#allocation2 + $0xc60] sm:$0xff]
    %v1618 = vld [vmem:[#allocation2 + $0xc68] sm:$0xff]
    %v1619 = vld [vmem:[#allocation2 + $0xc70] sm:$0xff]
    %v1620 = vld [vmem:[#allocation2 + $0xc78] sm:$0xff]
    %v1621 = vld [vmem:[#allocation2 + $0xc80] sm:$0xff]
    %v1622 = vld [vmem:[#allocation2 + $0xc88] sm:$0xff]
    %v1623 = vld [vmem:[#allocation2 + $0xc90] sm:$0xff]
    %v1624 = vld [vmem:[#allocation2 + $0xc98] sm:$0xff]
    %v1625 = vld [vmem:[#allocation2 + $0xca0] sm:$0xff]
    %v1626 = vld [vmem:[#allocation2 + $0xca8] sm:$0xff]
    %v1627 = vld [vmem:[#allocation2 + $0xcb0] sm:$0xff]
    %v1628 = vld [vmem:[#allocation2 + $0xcb8] sm:$0xff]
    %v1629 = vld [vmem:[#allocation2 + $0xcc0] sm:$0xff]
    %v1630 = vld [vmem:[#allocation2 + $0xcc8] sm:$0xff]
    %v1631 = vld [vmem:[#allocation2 + $0xcd0] sm:$0xff]
    %v1632 = vld [vmem:[#allocation2 + $0xcd8] sm:$0xff]
    %v1633 = vld [vmem:[#allocation2 + $0xce0] sm:$0xff]
    %v1634 = vld [vmem:[#allocation2 + $0xce8] sm:$0xff]
    %v1635 = vld [vmem:[#allocation2 + $0xcf0] sm:$0xff]
    %v1636 = vld [vmem:[#allocation2 + $0xcf8] sm:$0xff]
    %v1637 = vld [vmem:[#allocation2 + $0xd00] sm:$0xff]
    %v1638 = vld [vmem:[#allocation2 + $0xd08] sm:$0xff]
    %v1639 = vld [vmem:[#allocation2 + $0xd10] sm:$0xff]
    %v1640 = vld [vmem:[#allocation2 + $0xd18] sm:$0xff]
    %v1641 = vld [vmem:[#allocation2 + $0xd20] sm:$0xff]
    %v1642 = vld [vmem:[#allocation2 + $0xd28] sm:$0xff]
    %v1643 = vld [vmem:[#allocation2 + $0xd30] sm:$0xff]
    %v1644 = vld [vmem:[#allocation2 + $0xd38] sm:$0xff]
    %v1645 = vld [vmem:[#allocation2 + $0xd40] sm:$0xff]
    %v1646 = vld [vmem:[#allocation2 + $0xd48] sm:$0xff]
    %v1647 = vld [vmem:[#allocation2 + $0xd50] sm:$0xff]
    %v1648 = vld [vmem:[#allocation2 + $0xd58] sm:$0xff]
    %v1649 = vld [vmem:[#allocation2 + $0xd60] sm:$0xff]
    %v1650 = vld [vmem:[#allocation2 + $0xd68] sm:$0xff]
    %v1651 = vld [vmem:[#allocation2 + $0xd70] sm:$0xff]
    %v1652 = vld [vmem:[#allocation2 + $0xd78] sm:$0xff]
    %v1653 = vld [vmem:[#allocation2 + $0xd80] sm:$0xff]
    %v1654 = vld [vmem:[#allocation2 + $0xd88] sm:$0xff]
    %v1655 = vld [vmem:[#allocation2 + $0xd90] sm:$0xff]
    %v1656 = vld [vmem:[#allocation2 + $0xd98] sm:$0xff]
    %v1657 = vld [vmem:[#allocation2 + $0xda0] sm:$0xff]
    %v1658 = vld [vmem:[#allocation2 + $0xda8] sm:$0xff]
    %v1659 = vld [vmem:[#allocation2 + $0xdb0] sm:$0xff]
    %v1660 = vld [vmem:[#allocation2 + $0xdb8] sm:$0xff]
    %v1661 = vld [vmem:[#allocation2 + $0xdc0] sm:$0xff]
    %v1662 = vld [vmem:[#allocation2 + $0xdc8] sm:$0xff]
    %v1663 = vld [vmem:[#allocation2 + $0xdd0] sm:$0xff]
    %v1664 = vld [vmem:[#allocation2 + $0xdd8] sm:$0xff]
    %v1665 = vld [vmem:[#allocation2 + $0xde0] sm:$0xff]
    %v1666 = vld [vmem:[#allocation2 + $0xde8] sm:$0xff]
    %v1667 = vld [vmem:[#allocation2 + $0xdf0] sm:$0xff]
    %v1668 = vld [vmem:[#allocation2 + $0xdf8] sm:$0xff]
    %v1669 = vld [vmem:[#allocation2 + $0xe00] sm:$0xff]
    %v1670 = vld [vmem:[#allocation2 + $0xe08] sm:$0xff]
    %v1671 = vld [vmem:[#allocation2 + $0xe10] sm:$0xff]
    %v1672 = vld [vmem:[#allocation2 + $0xe18] sm:$0xff]
    %v1673 = vld [vmem:[#allocation2 + $0xe20] sm:$0xff]
    %v1674 = vld [vmem:[#allocation2 + $0xe28] sm:$0xff]
    %v1675 = vld [vmem:[#allocation2 + $0xe30] sm:$0xff]
    %v1676 = vld [vmem:[#allocation2 + $0xe38] sm:$0xff]
    %v1677 = vld [vmem:[#allocation2 + $0xe40] sm:$0xff]
    %v1678 = vld [vmem:[#allocation2 + $0xe48] sm:$0xff]
    %v1679 = vld [vmem:[#allocation2 + $0xe50] sm:$0xff]
    %v1680 = vld [vmem:[#allocation2 + $0xe58] sm:$0xff]
    %v1681 = vld [vmem:[#allocation2 + $0xe60] sm:$0xff]
    %v1682 = vld [vmem:[#allocation2 + $0xe68] sm:$0xff]
    %v1683 = vld [vmem:[#allocation2 + $0xe70] sm:$0xff]
    %v1684 = vld [vmem:[#allocation2 + $0xe78] sm:$0xff]
    %v1685 = vld [vmem:[#allocation2 + $0xe80] sm:$0xff]
    %v1686 = vld [vmem:[#allocation2 + $0xe88] sm:$0xff]
    %v1687 = vld [vmem:[#allocation2 + $0xe90] sm:$0xff]
    %v1688 = vld [vmem:[#allocation2 + $0xe98] sm:$0xff]
    %v1689 = vld [vmem:[#allocation2 + $0xea0] sm:$0xff]
    %v1690 = vld [vmem:[#allocation2 + $0xea8] sm:$0xff]
    %v1691 = vld [vmem:[#allocation2 + $0xeb0] sm:$0xff]
    %v1692 = vld [vmem:[#allocation2 + $0xeb8] sm:$0xff]
    %v1693 = vld [vmem:[#allocation2 + $0xec0] sm:$0xff]
    %v1694 = vld [vmem:[#allocation2 + $0xec8] sm:$0xff]
    %v1695 = vld [vmem:[#allocation2 + $0xed0] sm:$0xff]
    %v1696 = vld [vmem:[#allocation2 + $0xed8] sm:$0xff]
    %v1697 = vld [vmem:[#allocation2 + $0xee0] sm:$0xff]
    %v1698 = vld [vmem:[#allocation2 + $0xee8] sm:$0xff]
    %v1699 = vld [vmem:[#allocation2 + $0xef0] sm:$0xff]
    %v1700 = vld [vmem:[#allocation2 + $0xef8] sm:$0xff]
    %v1701 = vld [vmem:[#allocation2 + $0xf00] sm:$0xff]
    %v1702 = vld [vmem:[#allocation2 + $0xf08] sm:$0xff]
    %v1703 = vld [vmem:[#allocation2 + $0xf10] sm:$0xff]
    %v1704 = vld [vmem:[#allocation2 + $0xf18] sm:$0xff]
    %v1705 = vld [vmem:[#allocation2 + $0xf20] sm:$0xff]
    %v1706 = vld [vmem:[#allocation2 + $0xf28] sm:$0xff]
    %v1707 = vld [vmem:[#allocation2 + $0xf30] sm:$0xff]
    %v1708 = vld [vmem:[#allocation2 + $0xf38] sm:$0xff]
    %v1709 = vld [vmem:[#allocation2 + $0xf40] sm:$0xff]
    %v1710 = vld [vmem:[#allocation2 + $0xf48] sm:$0xff]
    %v1711 = vld [vmem:[#allocation2 + $0xf50] sm:$0xff]
    %v1712 = vld [vmem:[#allocation2 + $0xf58] sm:$0xff]
    %v1713 = vld [vmem:[#allocation2 + $0xf60] sm:$0xff]
    %v1714 = vld [vmem:[#allocation2 + $0xf68] sm:$0xff]
    %v1715 = vld [vmem:[#allocation2 + $0xf70] sm:$0xff]
    %v1716 = vld [vmem:[#allocation2 + $0xf78] sm:$0xff]
    %v1717 = vld [vmem:[#allocation2 + $0xf80] sm:$0xff]
    %v1718 = vld [vmem:[#allocation2 + $0xf88] sm:$0xff]
    %v1719 = vld [vmem:[#allocation2 + $0xf90] sm:$0xff]
    %v1720 = vld [vmem:[#allocation2 + $0xf98] sm:$0xff]
    %v1721 = vld [vmem:[#allocation2 + $0xfa0] sm:$0xff]
    %v1722 = vld [vmem:[#allocation2 + $0xfa8] sm:$0xff]
    %v1723 = vld [vmem:[#allocation2 + $0xfb0] sm:$0xff]
    %v1724 = vld [vmem:[#allocation2 + $0xfb8] sm:$0xff]
    %v1725 = vld [vmem:[#allocation2 + $0xfc0] sm:$0xff]
    %v1726 = vld [vmem:[#allocation2 + $0xfc8] sm:$0xff]
    %v1727 = vld [vmem:[#allocation2 + $0xfd0] sm:$0xff]
    %v1728 = vld [vmem:[#allocation2 + $0xfd8] sm:$0xff]
    %v1729 = vld [vmem:[#allocation2 + $0xfe0] sm:$0xff]
    %v1730 = vld [vmem:[#allocation2 + $0xfe8] sm:$0xff]
    %v1731 = vld [vmem:[#allocation2 + $0xff0] sm:$0xff]
    %v1732 = vld [vmem:[#allocation2 + $0xff8] sm:$0xff]
    %v1733 = vld [vmem:[#allocation2 + $0x1000] sm:$0xff]
    %v1734 = vld [vmem:[#allocation2 + $0x1008] sm:$0xff]
    %v1735 = vld [vmem:[#allocation2 + $0x1010] sm:$0xff]
    %v1736 = vld [vmem:[#allocation2 + $0x1018] sm:$0xff]
    %v1737 = vld [vmem:[#allocation2 + $0x1020] sm:$0xff]
    %v1738 = vld [vmem:[#allocation2 + $0x1028] sm:$0xff]
    %v1739 = vld [vmem:[#allocation2 + $0x1030] sm:$0xff]
    %v1740 = vld [vmem:[#allocation2 + $0x1038] sm:$0xff]
    %v1741 = vld [vmem:[#allocation2 + $0x1040] sm:$0xff]
    %v1742 = vld [vmem:[#allocation2 + $0x1048] sm:$0xff]
    %v1743 = vld [vmem:[#allocation2 + $0x1050] sm:$0xff]
    %v1744 = vld [vmem:[#allocation2 + $0x1058] sm:$0xff]
    %v1745 = vld [vmem:[#allocation2 + $0x1060] sm:$0xff]
    %v1746 = vld [vmem:[#allocation2 + $0x1068] sm:$0xff]
    %v1747 = vld [vmem:[#allocation2 + $0x1070] sm:$0xff]
    %v1748 = vld [vmem:[#allocation2 + $0x1078] sm:$0xff]
    %v1749 = vld [vmem:[#allocation2 + $0x1080] sm:$0xff]
    %v1750 = vld [vmem:[#allocation2 + $0x1088] sm:$0xff]
    %v1751 = vld [vmem:[#allocation2 + $0x1090] sm:$0xff]
    %v1752 = vld [vmem:[#allocation2 + $0x1098] sm:$0xff]
    %v1753 = vld [vmem:[#allocation2 + $0x10a0] sm:$0xff]
    %v1754 = vld [vmem:[#allocation2 + $0x10a8] sm:$0xff]
    %v1755 = vld [vmem:[#allocation2 + $0x10b0] sm:$0xff]
    %v1756 = vld [vmem:[#allocation2 + $0x10b8] sm:$0xff]
    %v1757 = vld [vmem:[#allocation2 + $0x10c0] sm:$0xff]
    %v1758 = vld [vmem:[#allocation2 + $0x10c8] sm:$0xff]
    %v1759 = vld [vmem:[#allocation2 + $0x10d0] sm:$0xff]
    %v1760 = vld [vmem:[#allocation2 + $0x10d8] sm:$0xff]
    %v1761 = vld [vmem:[#allocation2 + $0x10e0] sm:$0xff]
    %v1762 = vld [vmem:[#allocation2 + $0x10e8] sm:$0xff]
    %v1763 = vld [vmem:[#allocation2 + $0x10f0] sm:$0xff]
    %v1764 = vld [vmem:[#allocation2 + $0x10f8] sm:$0xff]
    %v1765 = vld [vmem:[#allocation2 + $0x1100] sm:$0xff]
    %v1766 = vld [vmem:[#allocation2 + $0x1108] sm:$0xff]
    %v1767 = vld [vmem:[#allocation2 + $0x1110] sm:$0xff]
    %v1768 = vld [vmem:[#allocation2 + $0x1118] sm:$0xff]
    %v1769 = vld [vmem:[#allocation2 + $0x1120] sm:$0xff]
    %v1770 = vld [vmem:[#allocation2 + $0x1128] sm:$0xff]
    %v1771 = vld [vmem:[#allocation2 + $0x1130] sm:$0xff]
    %v1772 = vld [vmem:[#allocation2 + $0x1138] sm:$0xff]
    %v1773 = vld [vmem:[#allocation2 + $0x1140] sm:$0xff]
    %v1774 = vld [vmem:[#allocation2 + $0x1148] sm:$0xff]
    %v1775 = vld [vmem:[#allocation2 + $0x1150] sm:$0xff]
    %v1776 = vld [vmem:[#allocation2 + $0x1158] sm:$0xff]
    %v1777 = vld [vmem:[#allocation2 + $0x1160] sm:$0xff]
    %v1778 = vld [vmem:[#allocation2 + $0x1168] sm:$0xff]
    %v1779 = vld [vmem:[#allocation2 + $0x1170] sm:$0xff]
    %v1780 = vld [vmem:[#allocation2 + $0x1178] sm:$0xff]
    %v1781 = vld [vmem:[#allocation2 + $0x1180] sm:$0xff]
    %v1782 = vld [vmem:[#allocation2 + $0x1188] sm:$0xff]
    %v1783 = vld [vmem:[#allocation2 + $0x1190] sm:$0xff]
    %v1784 = vld [vmem:[#allocation2 + $0x1198] sm:$0xff]
    %v1785 = vld [vmem:[#allocation2 + $0x11a0] sm:$0xff]
    %v1786 = vld [vmem:[#allocation2 + $0x11a8] sm:$0xff]
    %v1787 = vld [vmem:[#allocation2 + $0x11b0] sm:$0xff]
    %v1788 = vld [vmem:[#allocation2 + $0x11b8] sm:$0xff]
    %v1789 = vld [vmem:[#allocation2 + $0x11c0] sm:$0xff]
    %v1790 = vld [vmem:[#allocation2 + $0x11c8] sm:$0xff]
    %v1791 = vld [vmem:[#allocation2 + $0x11d0] sm:$0xff]
    %v1792 = vld [vmem:[#allocation2 + $0x11d8] sm:$0xff]
    %v1793 = vld [vmem:[#allocation2 + $0x11e0] sm:$0xff]
    %v1794 = vld [vmem:[#allocation2 + $0x11e8] sm:$0xff]
    %v1795 = vld [vmem:[#allocation2 + $0x11f0] sm:$0xff]
    %v1796 = vld [vmem:[#allocation2 + $0x11f8] sm:$0xff]
    %v1797 = vld [vmem:[#allocation2 + $0x1200] sm:$0xff]
    %v1798 = vld [vmem:[#allocation2 + $0x1208] sm:$0xff]
    %v1799 = vld [vmem:[#allocation2 + $0x1210] sm:$0xff]
    %v1800 = vld [vmem:[#allocation2 + $0x1218] sm:$0xff]
    %v1801 = vld [vmem:[#allocation2 + $0x1220] sm:$0xff]
    %v1802 = vld [vmem:[#allocation2 + $0x1228] sm:$0xff]
    %v1803 = vld [vmem:[#allocation2 + $0x1230] sm:$0xff]
    %v1804 = vld [vmem:[#allocation2 + $0x1238] sm:$0xff]
    %v1805 = vld [vmem:[#allocation2 + $0x1240] sm:$0xff]
    %v1806 = vld [vmem:[#allocation2 + $0x1248] sm:$0xff]
    %v1807 = vld [vmem:[#allocation2 + $0x1250] sm:$0xff]
    %v1808 = vld [vmem:[#allocation2 + $0x1258] sm:$0xff]
    %v1809 = vld [vmem:[#allocation2 + $0x1260] sm:$0xff]
    %v1810 = vld [vmem:[#allocation2 + $0x1268] sm:$0xff]
    %v1811 = vld [vmem:[#allocation2 + $0x1270] sm:$0xff]
    %v1812 = vld [vmem:[#allocation2 + $0x1278] sm:$0xff]
    %v1813 = vld [vmem:[#allocation2 + $0x1280] sm:$0xff]
    %v1814 = vld [vmem:[#allocation2 + $0x1288] sm:$0xff]
    %v1815 = vld [vmem:[#allocation2 + $0x1290] sm:$0xff]
    %v1816 = vld [vmem:[#allocation2 + $0x1298] sm:$0xff]
    %v1817 = vld [vmem:[#allocation2 + $0x12a0] sm:$0xff]
    %v1818 = vld [vmem:[#allocation2 + $0x12a8] sm:$0xff]
    %v1819 = vld [vmem:[#allocation2 + $0x12b0] sm:$0xff]
    %v1820 = vld [vmem:[#allocation2 + $0x12b8] sm:$0xff]
    %v1821 = vld [vmem:[#allocation2 + $0x12c0] sm:$0xff]
    %v1822 = vld [vmem:[#allocation2 + $0x12c8] sm:$0xff]
    %v1823 = vld [vmem:[#allocation2 + $0x12d0] sm:$0xff]
    %v1824 = vld [vmem:[#allocation2 + $0x12d8] sm:$0xff]
    %v1825 = vld [vmem:[#allocation2 + $0x12e0] sm:$0xff]
    %v1826 = vld [vmem:[#allocation2 + $0x12e8] sm:$0xff]
    %v1827 = vld [vmem:[#allocation2 + $0x12f0] sm:$0xff]
    %v1828 = vld [vmem:[#allocation2 + $0x12f8] sm:$0xff]
    %v1829 = vld [vmem:[#allocation2 + $0x1300] sm:$0xff]
    %v1830 = vld [vmem:[#allocation2 + $0x1308] sm:$0xff]
    %v1831 = vld [vmem:[#allocation2 + $0x1310] sm:$0xff]
    %v1832 = vld [vmem:[#allocation2 + $0x1318] sm:$0xff]
    %v1833 = vld [vmem:[#allocation2 + $0x1320] sm:$0xff]
    %v1834 = vld [vmem:[#allocation2 + $0x1328] sm:$0xff]
    %v1835 = vld [vmem:[#allocation2 + $0x1330] sm:$0xff]
    %v1836 = vld [vmem:[#allocation2 + $0x1338] sm:$0xff]
    %v1837 = vld [vmem:[#allocation2 + $0x1340] sm:$0xff]
    %v1838 = vld [vmem:[#allocation2 + $0x1348] sm:$0xff]
    %v1839 = vld [vmem:[#allocation2 + $0x1350] sm:$0xff]
    %v1840 = vld [vmem:[#allocation2 + $0x1358] sm:$0xff]
    %v1841 = vld [vmem:[#allocation2 + $0x1360] sm:$0xff]
    %v1842 = vld [vmem:[#allocation2 + $0x1368] sm:$0xff]
    %v1843 = vld [vmem:[#allocation2 + $0x1370] sm:$0xff]
    %v1844 = vld [vmem:[#allocation2 + $0x1378] sm:$0xff]
    %v1845 = vld [vmem:[#allocation2 + $0x1380] sm:$0xff]
    %v1846 = vld [vmem:[#allocation2 + $0x1388] sm:$0xff]
    %v1847 = vld [vmem:[#allocation2 + $0x1390] sm:$0xff]
    %v1848 = vld [vmem:[#allocation2 + $0x1398] sm:$0xff]
    %v1849 = vld [vmem:[#allocation2 + $0x13a0] sm:$0xff]
    %v1850 = vld [vmem:[#allocation2 + $0x13a8] sm:$0xff]
    %v1851 = vld [vmem:[#allocation2 + $0x13b0] sm:$0xff]
    %v1852 = vld [vmem:[#allocation2 + $0x13b8] sm:$0xff]
    %v1853 = vld [vmem:[#allocation2 + $0x13c0] sm:$0xff]
    %v1854 = vld [vmem:[#allocation2 + $0x13c8] sm:$0xff]
    %v1855 = vld [vmem:[#allocation2 + $0x13d0] sm:$0xff]
    %v1856 = vld [vmem:[#allocation2 + $0x13d8] sm:$0xff]
    %v1857 = vld [vmem:[#allocation2 + $0x13e0] sm:$0xff]
    %v1858 = vld [vmem:[#allocation2 + $0x13e8] sm:$0xff]
    %v1859 = vld [vmem:[#allocation2 + $0x13f0] sm:$0xff]
    %v1860 = vld [vmem:[#allocation2 + $0x13f8] sm:$0xff]
    %v1861 = vld [vmem:[#allocation2 + $0x1400] sm:$0xff]
    %v1862 = vld [vmem:[#allocation2 + $0x1408] sm:$0xff]
    %v1863 = vld [vmem:[#allocation2 + $0x1410] sm:$0xff]
    %v1864 = vld [vmem:[#allocation2 + $0x1418] sm:$0xff]
    %v1865 = vld [vmem:[#allocation2 + $0x1420] sm:$0xff]
    %v1866 = vld [vmem:[#allocation2 + $0x1428] sm:$0xff]
    %v1867 = vld [vmem:[#allocation2 + $0x1430] sm:$0xff]
    %v1868 = vld [vmem:[#allocation2 + $0x1438] sm:$0xff]
    %v1869 = vld [vmem:[#allocation2 + $0x1440] sm:$0xff]
    %v1870 = vld [vmem:[#allocation2 + $0x1448] sm:$0xff]
    %v1871 = vld [vmem:[#allocation2 + $0x1450] sm:$0xff]
    %v1872 = vld [vmem:[#allocation2 + $0x1458] sm:$0xff]
    %v1873 = vld [vmem:[#allocation2 + $0x1460] sm:$0xff]
    %v1874 = vld [vmem:[#allocation2 + $0x1468] sm:$0xff]
    %v1875 = vld [vmem:[#allocation2 + $0x1470] sm:$0xff]
    %v1876 = vld [vmem:[#allocation2 + $0x1478] sm:$0xff]
    %v1877 = vld [vmem:[#allocation2 + $0x1480] sm:$0xff]
    %v1878 = vld [vmem:[#allocation2 + $0x1488] sm:$0xff]
    %v1879 = vld [vmem:[#allocation2 + $0x1490] sm:$0xff]
    %v1880 = vld [vmem:[#allocation2 + $0x1498] sm:$0xff]
    %v1881 = vld [vmem:[#allocation2 + $0x14a0] sm:$0xff]
    %v1882 = vld [vmem:[#allocation2 + $0x14a8] sm:$0xff]
    %v1883 = vld [vmem:[#allocation2 + $0x14b0] sm:$0xff]
    %v1884 = vld [vmem:[#allocation2 + $0x14b8] sm:$0xff]
    %v1885 = vld [vmem:[#allocation2 + $0x14c0] sm:$0xff]
    %v1886 = vld [vmem:[#allocation2 + $0x14c8] sm:$0xff]
    %v1887 = vld [vmem:[#allocation2 + $0x14d0] sm:$0xff]
    %v1888 = vld [vmem:[#allocation2 + $0x14d8] sm:$0xff]
    %v1889 = vld [vmem:[#allocation2 + $0x14e0] sm:$0xff]
    %v1890 = vld [vmem:[#allocation2 + $0x14e8] sm:$0xff]
    %v1891 = vld [vmem:[#allocation2 + $0x14f0] sm:$0xff]
    %v1892 = vld [vmem:[#allocation2 + $0x14f8] sm:$0xff]
    %v1893 = vld [vmem:[#allocation2 + $0x1500] sm:$0xff]
    %v1894 = vld [vmem:[#allocation2 + $0x1508] sm:$0xff]
    %v1895 = vld [vmem:[#allocation2 + $0x1510] sm:$0xff]
    %v1896 = vld [vmem:[#allocation2 + $0x1518] sm:$0xff]
    %v1897 = vld [vmem:[#allocation2 + $0x1520] sm:$0xff]
    %v1898 = vld [vmem:[#allocation2 + $0x1528] sm:$0xff]
    %v1899 = vld [vmem:[#allocation2 + $0x1530] sm:$0xff]
    %v1900 = vld [vmem:[#allocation2 + $0x1538] sm:$0xff]
    %v1901 = vld [vmem:[#allocation2 + $0x1540] sm:$0xff]
    %v1902 = vld [vmem:[#allocation2 + $0x1548] sm:$0xff]
    %v1903 = vld [vmem:[#allocation2 + $0x1550] sm:$0xff]
    %v1904 = vld [vmem:[#allocation2 + $0x1558] sm:$0xff]
    %v1905 = vld [vmem:[#allocation2 + $0x1560] sm:$0xff]
    %v1906 = vld [vmem:[#allocation2 + $0x1568] sm:$0xff]
    %v1907 = vld [vmem:[#allocation2 + $0x1570] sm:$0xff]
    %v1908 = vld [vmem:[#allocation2 + $0x1578] sm:$0xff]
    %v1909 = vld [vmem:[#allocation2 + $0x1580] sm:$0xff]
    %v1910 = vld [vmem:[#allocation2 + $0x1588] sm:$0xff]
    %v1911 = vld [vmem:[#allocation2 + $0x1590] sm:$0xff]
    %v1912 = vld [vmem:[#allocation2 + $0x1598] sm:$0xff]
    %v1913 = vld [vmem:[#allocation2 + $0x15a0] sm:$0xff]
    %v1914 = vld [vmem:[#allocation2 + $0x15a8] sm:$0xff]
    %v1915 = vld [vmem:[#allocation2 + $0x15b0] sm:$0xff]
    %v1916 = vld [vmem:[#allocation2 + $0x15b8] sm:$0xff]
    %v1917 = vld [vmem:[#allocation2 + $0x15c0] sm:$0xff]
    %v1918 = vld [vmem:[#allocation2 + $0x15c8] sm:$0xff]
    %v1919 = vld [vmem:[#allocation2 + $0x15d0] sm:$0xff]
    %v1920 = vld [vmem:[#allocation2 + $0x15d8] sm:$0xff]
    %v1921 = vld [vmem:[#allocation2 + $0x15e0] sm:$0xff]
    %v1922 = vld [vmem:[#allocation2 + $0x15e8] sm:$0xff]
    %v1923 = vld [vmem:[#allocation2 + $0x15f0] sm:$0xff]
    %v1924 = vld [vmem:[#allocation2 + $0x15f8] sm:$0xff]
    %v1925 = vld [vmem:[#allocation2 + $0x1600] sm:$0xff]
    %v1926 = vld [vmem:[#allocation2 + $0x1608] sm:$0xff]
    %v1927 = vld [vmem:[#allocation2 + $0x1610] sm:$0xff]
    %v1928 = vld [vmem:[#allocation2 + $0x1618] sm:$0xff]
    %v1929 = vld [vmem:[#allocation2 + $0x1620] sm:$0xff]
    %v1930 = vld [vmem:[#allocation2 + $0x1628] sm:$0xff]
    %v1931 = vld [vmem:[#allocation2 + $0x1630] sm:$0xff]
    %v1932 = vld [vmem:[#allocation2 + $0x1638] sm:$0xff]
    %v1933 = vld [vmem:[#allocation2 + $0x1640] sm:$0xff]
    %v1934 = vld [vmem:[#allocation2 + $0x1648] sm:$0xff]
    %v1935 = vld [vmem:[#allocation2 + $0x1650] sm:$0xff]
    %v1936 = vld [vmem:[#allocation2 + $0x1658] sm:$0xff]
    %v1937 = vld [vmem:[#allocation2 + $0x1660] sm:$0xff]
    %v1938 = vld [vmem:[#allocation2 + $0x1668] sm:$0xff]
    %v1939 = vld [vmem:[#allocation2 + $0x1670] sm:$0xff]
    %v1940 = vld [vmem:[#allocation2 + $0x1678] sm:$0xff]
    %v1941 = vld [vmem:[#allocation2 + $0x1680] sm:$0xff]
    %v1942 = vld [vmem:[#allocation2 + $0x1688] sm:$0xff]
    %v1943 = vld [vmem:[#allocation2 + $0x1690] sm:$0xff]
    %v1944 = vld [vmem:[#allocation2 + $0x1698] sm:$0xff]
    %v1945 = vld [vmem:[#allocation2 + $0x16a0] sm:$0xff]
    %v1946 = vld [vmem:[#allocation2 + $0x16a8] sm:$0xff]
    %v1947 = vld [vmem:[#allocation2 + $0x16b0] sm:$0xff]
    %v1948 = vld [vmem:[#allocation2 + $0x16b8] sm:$0xff]
    %v1949 = vld [vmem:[#allocation2 + $0x16c0] sm:$0xff]
    %v1950 = vld [vmem:[#allocation2 + $0x16c8] sm:$0xff]
    %v1951 = vld [vmem:[#allocation2 + $0x16d0] sm:$0xff]
    %v1952 = vld [vmem:[#allocation2 + $0x16d8] sm:$0xff]
    %v1953 = vld [vmem:[#allocation2 + $0x16e0] sm:$0xff]
    %v1954 = vld [vmem:[#allocation2 + $0x16e8] sm:$0xff]
    %v1955 = vld [vmem:[#allocation2 + $0x16f0] sm:$0xff]
    %v1956 = vld [vmem:[#allocation2 + $0x16f8] sm:$0xff]
    %v1957 = vld [vmem:[#allocation2 + $0x1700] sm:$0xff]
    %v1958 = vld [vmem:[#allocation2 + $0x1708] sm:$0xff]
    %v1959 = vld [vmem:[#allocation2 + $0x1710] sm:$0xff]
    %v1960 = vld [vmem:[#allocation2 + $0x1718] sm:$0xff]
    %v1961 = vld [vmem:[#allocation2 + $0x1720] sm:$0xff]
    %v1962 = vld [vmem:[#allocation2 + $0x1728] sm:$0xff]
    %v1963 = vld [vmem:[#allocation2 + $0x1730] sm:$0xff]
    %v1964 = vld [vmem:[#allocation2 + $0x1738] sm:$0xff]
    %v1965 = vld [vmem:[#allocation2 + $0x1740] sm:$0xff]
    %v1966 = vld [vmem:[#allocation2 + $0x1748] sm:$0xff]
    %v1967 = vld [vmem:[#allocation2 + $0x1750] sm:$0xff]
    %v1968 = vld [vmem:[#allocation2 + $0x1758] sm:$0xff]
    %v1969 = vld [vmem:[#allocation2 + $0x1760] sm:$0xff]
    %v1970 = vld [vmem:[#allocation2 + $0x1768] sm:$0xff]
    %v1971 = vld [vmem:[#allocation2 + $0x1770] sm:$0xff]
    %v1972 = vld [vmem:[#allocation2 + $0x1778] sm:$0xff]
    %v1973 = vld [vmem:[#allocation2 + $0x1780] sm:$0xff]
    %v1974 = vld [vmem:[#allocation2 + $0x1788] sm:$0xff]
    %v1975 = vld [vmem:[#allocation2 + $0x1790] sm:$0xff]
    %v1976 = vld [vmem:[#allocation2 + $0x1798] sm:$0xff]
    %v1977 = vld [vmem:[#allocation2 + $0x17a0] sm:$0xff]
    %v1978 = vld [vmem:[#allocation2 + $0x17a8] sm:$0xff]
    %v1979 = vld [vmem:[#allocation2 + $0x17b0] sm:$0xff]
    %v1980 = vld [vmem:[#allocation2 + $0x17b8] sm:$0xff]
    %v1981 = vld [vmem:[#allocation2 + $0x17c0] sm:$0xff]
    %v1982 = vld [vmem:[#allocation2 + $0x17c8] sm:$0xff]
    %v1983 = vld [vmem:[#allocation2 + $0x17d0] sm:$0xff]
    %v1984 = vld [vmem:[#allocation2 + $0x17d8] sm:$0xff]
    %v1985 = vld [vmem:[#allocation2 + $0x17e0] sm:$0xff]
    %v1986 = vld [vmem:[#allocation2 + $0x17e8] sm:$0xff]
    %v1987 = vld [vmem:[#allocation2 + $0x17f0] sm:$0xff]
    %v1988 = vld [vmem:[#allocation2 + $0x17f8] sm:$0xff]
    %v1989 = vld [vmem:[#allocation2 + $0x1800] sm:$0xff]
    %v1990 = vld [vmem:[#allocation2 + $0x1808] sm:$0xff]
    %v1991 = vld [vmem:[#allocation2 + $0x1810] sm:$0xff]
    %v1992 = vld [vmem:[#allocation2 + $0x1818] sm:$0xff]
    %v1993 = vld [vmem:[#allocation2 + $0x1820] sm:$0xff]
    %v1994 = vld [vmem:[#allocation2 + $0x1828] sm:$0xff]
    %v1995 = vld [vmem:[#allocation2 + $0x1830] sm:$0xff]
    %v1996 = vld [vmem:[#allocation2 + $0x1838] sm:$0xff]
    %v1997 = vld [vmem:[#allocation2 + $0x1840] sm:$0xff]
    %v1998 = vld [vmem:[#allocation2 + $0x1848] sm:$0xff]
    %v1999 = vld [vmem:[#allocation2 + $0x1850] sm:$0xff]
    %v2000 = vld [vmem:[#allocation2 + $0x1858] sm:$0xff]
    %v2001 = vld [vmem:[#allocation2 + $0x1860] sm:$0xff]
    %v2002 = vld [vmem:[#allocation2 + $0x1868] sm:$0xff]
    %v2003 = vld [vmem:[#allocation2 + $0x1870] sm:$0xff]
    %v2004 = vld [vmem:[#allocation2 + $0x1878] sm:$0xff]
    %v2005 = vld [vmem:[#allocation2 + $0x1880] sm:$0xff]
    %v2006 = vld [vmem:[#allocation2 + $0x1888] sm:$0xff]
    %v2007 = vld [vmem:[#allocation2 + $0x1890] sm:$0xff]
    %v2008 = vld [vmem:[#allocation2 + $0x1898] sm:$0xff]
    %v2009 = vld [vmem:[#allocation2 + $0x18a0] sm:$0xff]
    %v2010 = vld [vmem:[#allocation2 + $0x18a8] sm:$0xff]
    %v2011 = vld [vmem:[#allocation2 + $0x18b0] sm:$0xff]
    %v2012 = vld [vmem:[#allocation2 + $0x18b8] sm:$0xff]
    %v2013 = vld [vmem:[#allocation2 + $0x18c0] sm:$0xff]
    %v2014 = vld [vmem:[#allocation2 + $0x18c8] sm:$0xff]
    %v2015 = vld [vmem:[#allocation2 + $0x18d0] sm:$0xff]
    %v2016 = vld [vmem:[#allocation2 + $0x18d8] sm:$0xff]
    %v2017 = vld [vmem:[#allocation2 + $0x18e0] sm:$0xff]
    %v2018 = vld [vmem:[#allocation2 + $0x18e8] sm:$0xff]
    %v2019 = vld [vmem:[#allocation2 + $0x18f0] sm:$0xff]
    %v2020 = vld [vmem:[#allocation2 + $0x18f8] sm:$0xff]
    %v2021 = vld [vmem:[#allocation2 + $0x1900] sm:$0xff]
    %v2022 = vld [vmem:[#allocation2 + $0x1908] sm:$0xff]
    %v2023 = vld [vmem:[#allocation2 + $0x1910] sm:$0xff]
    %v2024 = vld [vmem:[#allocation2 + $0x1918] sm:$0xff]
    %v2025 = vld [vmem:[#allocation2 + $0x1920] sm:$0xff]
    %v2026 = vld [vmem:[#allocation2 + $0x1928] sm:$0xff]
    %v2027 = vld [vmem:[#allocation2 + $0x1930] sm:$0xff]
    %v2028 = vld [vmem:[#allocation2 + $0x1938] sm:$0xff]
    %v2029 = vld [vmem:[#allocation2 + $0x1940] sm:$0xff]
    %v2030 = vld [vmem:[#allocation2 + $0x1948] sm:$0xff]
    %v2031 = vld [vmem:[#allocation2 + $0x1950] sm:$0xff]
    %v2032 = vld [vmem:[#allocation2 + $0x1958] sm:$0xff]
    %v2033 = vld [vmem:[#allocation2 + $0x1960] sm:$0xff]
    %v2034 = vld [vmem:[#allocation2 + $0x1968] sm:$0xff]
    %v2035 = vld [vmem:[#allocation2 + $0x1970] sm:$0xff]
    %v2036 = vld [vmem:[#allocation2 + $0x1978] sm:$0xff]
    %v2037 = vld [vmem:[#allocation2 + $0x1980] sm:$0xff]
    %v2038 = vld [vmem:[#allocation2 + $0x1988] sm:$0xff]
    %v2039 = vld [vmem:[#allocation2 + $0x1990] sm:$0xff]
    %v2040 = vld [vmem:[#allocation2 + $0x1998] sm:$0xff]
    %v2041 = vld [vmem:[#allocation2 + $0x19a0] sm:$0xff]
    %v2042 = vld [vmem:[#allocation2 + $0x19a8] sm:$0xff]
    %v2043 = vld [vmem:[#allocation2 + $0x19b0] sm:$0xff]
    %v2044 = vld [vmem:[#allocation2 + $0x19b8] sm:$0xff]
    %v2045 = vld [vmem:[#allocation2 + $0x19c0] sm:$0xff]
    %v2046 = vld [vmem:[#allocation2 + $0x19c8] sm:$0xff]
    %v2047 = vld [vmem:[#allocation2 + $0x19d0] sm:$0xff]
    %v2048 = vld [vmem:[#allocation2 + $0x19d8] sm:$0xff]
    %v2049 = vld [vmem:[#allocation2 + $0x19e0] sm:$0xff]
    %v2050 = vld [vmem:[#allocation2 + $0x19e8] sm:$0xff]
    %v2051 = vld [vmem:[#allocation2 + $0x19f0] sm:$0xff]
    %v2052 = vld [vmem:[#allocation2 + $0x19f8] sm:$0xff]
    %v2053 = vld [vmem:[#allocation2 + $0x1a00] sm:$0xff]
    %v2054 = vld [vmem:[#allocation2 + $0x1a08] sm:$0xff]
    %v2055 = vld [vmem:[#allocation2 + $0x1a10] sm:$0xff]
    %v2056 = vld [vmem:[#allocation2 + $0x1a18] sm:$0xff]
    %v2057 = vld [vmem:[#allocation2 + $0x1a20] sm:$0xff]
    %v2058 = vld [vmem:[#allocation2 + $0x1a28] sm:$0xff]
    %v2059 = vld [vmem:[#allocation2 + $0x1a30] sm:$0xff]
    %v2060 = vld [vmem:[#allocation2 + $0x1a38] sm:$0xff]
    %v2061 = vld [vmem:[#allocation2 + $0x1a40] sm:$0xff]
    %v2062 = vld [vmem:[#allocation2 + $0x1a48] sm:$0xff]
    %v2063 = vld [vmem:[#allocation2 + $0x1a50] sm:$0xff]
    %v2064 = vld [vmem:[#allocation2 + $0x1a58] sm:$0xff]
    %v2065 = vld [vmem:[#allocation2 + $0x1a60] sm:$0xff]
    %v2066 = vld [vmem:[#allocation2 + $0x1a68] sm:$0xff]
    %v2067 = vld [vmem:[#allocation2 + $0x1a70] sm:$0xff]
    %v2068 = vld [vmem:[#allocation2 + $0x1a78] sm:$0xff]
    %v2069 = vld [vmem:[#allocation2 + $0x1a80] sm:$0xff]
    %v2070 = vld [vmem:[#allocation2 + $0x1a88] sm:$0xff]
    %v2071 = vld [vmem:[#allocation2 + $0x1a90] sm:$0xff]
    %v2072 = vld [vmem:[#allocation2 + $0x1a98] sm:$0xff]
    %v2073 = vld [vmem:[#allocation2 + $0x1aa0] sm:$0xff]
    %v2074 = vld [vmem:[#allocation2 + $0x1aa8] sm:$0xff]
    %v2075 = vld [vmem:[#allocation2 + $0x1ab0] sm:$0xff]
    %v2076 = vld [vmem:[#allocation2 + $0x1ab8] sm:$0xff]
    %v2077 = vld [vmem:[#allocation2 + $0x1ac0] sm:$0xff]
    %v2078 = vld [vmem:[#allocation2 + $0x1ac8] sm:$0xff]
    %v2079 = vld [vmem:[#allocation2 + $0x1ad0] sm:$0xff]
    %v2080 = vld [vmem:[#allocation2 + $0x1ad8] sm:$0xff]
    %v2081 = vld [vmem:[#allocation2 + $0x1ae0] sm:$0xff]
    %v2082 = vld [vmem:[#allocation2 + $0x1ae8] sm:$0xff]
    %v2083 = vld [vmem:[#allocation2 + $0x1af0] sm:$0xff]
    %v2084 = vld [vmem:[#allocation2 + $0x1af8] sm:$0xff]
    %v2085 = vld [vmem:[#allocation2 + $0x1b00] sm:$0xff]
    %v2086 = vld [vmem:[#allocation2 + $0x1b08] sm:$0xff]
    %v2087 = vld [vmem:[#allocation2 + $0x1b10] sm:$0xff]
    %v2088 = vld [vmem:[#allocation2 + $0x1b18] sm:$0xff]
    %v2089 = vld [vmem:[#allocation2 + $0x1b20] sm:$0xff]
    %v2090 = vld [vmem:[#allocation2 + $0x1b28] sm:$0xff]
    %v2091 = vld [vmem:[#allocation2 + $0x1b30] sm:$0xff]
    %v2092 = vld [vmem:[#allocation2 + $0x1b38] sm:$0xff]
    %v2093 = vld [vmem:[#allocation2 + $0x1b40] sm:$0xff]
    %v2094 = vld [vmem:[#allocation2 + $0x1b48] sm:$0xff]
    %v2095 = vld [vmem:[#allocation2 + $0x1b50] sm:$0xff]
    %v2096 = vld [vmem:[#allocation2 + $0x1b58] sm:$0xff]
    %v2097 = vld [vmem:[#allocation2 + $0x1b60] sm:$0xff]
    %v2098 = vld [vmem:[#allocation2 + $0x1b68] sm:$0xff]
    %v2099 = vld [vmem:[#allocation2 + $0x1b70] sm:$0xff]
    %v2100 = vld [vmem:[#allocation2 + $0x1b78] sm:$0xff]
    %v2101 = vld [vmem:[#allocation2 + $0x1b80] sm:$0xff]
    %v2102 = vld [vmem:[#allocation2 + $0x1b88] sm:$0xff]
    %v2103 = vld [vmem:[#allocation2 + $0x1b90] sm:$0xff]
    %v2104 = vld [vmem:[#allocation2 + $0x1b98] sm:$0xff]
    %v2105 = vld [vmem:[#allocation2 + $0x1ba0] sm:$0xff]
    %v2106 = vld [vmem:[#allocation2 + $0x1ba8] sm:$0xff]
    %v2107 = vld [vmem:[#allocation2 + $0x1bb0] sm:$0xff]
    %v2108 = vld [vmem:[#allocation2 + $0x1bb8] sm:$0xff]
    %v2109 = vld [vmem:[#allocation2 + $0x1bc0] sm:$0xff]
    %v2110 = vld [vmem:[#allocation2 + $0x1bc8] sm:$0xff]
    %v2111 = vld [vmem:[#allocation2 + $0x1bd0] sm:$0xff]
    %v2112 = vld [vmem:[#allocation2 + $0x1bd8] sm:$0xff]
    %v2113 = vld [vmem:[#allocation2 + $0x1be0] sm:$0xff]
    %v2114 = vld [vmem:[#allocation2 + $0x1be8] sm:$0xff]
    %v2115 = vld [vmem:[#allocation2 + $0x1bf0] sm:$0xff]
    %v2116 = vld [vmem:[#allocation2 + $0x1bf8] sm:$0xff]
    %v2117 = vld [vmem:[#allocation2 + $0x1c00] sm:$0xff]
    %v2118 = vld [vmem:[#allocation2 + $0x1c08] sm:$0xff]
    %v2119 = vld [vmem:[#allocation2 + $0x1c10] sm:$0xff]
    %v2120 = vld [vmem:[#allocation2 + $0x1c18] sm:$0xff]
    %v2121 = vld [vmem:[#allocation2 + $0x1c20] sm:$0xff]
    %v2122 = vld [vmem:[#allocation2 + $0x1c28] sm:$0xff]
    %v2123 = vld [vmem:[#allocation2 + $0x1c30] sm:$0xff]
    %v2124 = vld [vmem:[#allocation2 + $0x1c38] sm:$0xff]
    %v2125 = vld [vmem:[#allocation2 + $0x1c40] sm:$0xff]
    %v2126 = vld [vmem:[#allocation2 + $0x1c48] sm:$0xff]
    %v2127 = vld [vmem:[#allocation2 + $0x1c50] sm:$0xff]
    %v2128 = vld [vmem:[#allocation2 + $0x1c58] sm:$0xff]
    %v2129 = vld [vmem:[#allocation2 + $0x1c60] sm:$0xff]
    %v2130 = vld [vmem:[#allocation2 + $0x1c68] sm:$0xff]
    %v2131 = vld [vmem:[#allocation2 + $0x1c70] sm:$0xff]
    %v2132 = vld [vmem:[#allocation2 + $0x1c78] sm:$0xff]
    %v2133 = vld [vmem:[#allocation2 + $0x1c80] sm:$0xff]
    %v2134 = vld [vmem:[#allocation2 + $0x1c88] sm:$0xff]
    %v2135 = vld [vmem:[#allocation2 + $0x1c90] sm:$0xff]
    %v2136 = vld [vmem:[#allocation2 + $0x1c98] sm:$0xff]
    %v2137 = vld [vmem:[#allocation2 + $0x1ca0] sm:$0xff]
    %v2138 = vld [vmem:[#allocation2 + $0x1ca8] sm:$0xff]
    %v2139 = vld [vmem:[#allocation2 + $0x1cb0] sm:$0xff]
    %v2140 = vld [vmem:[#allocation2 + $0x1cb8] sm:$0xff]
    %v2141 = vld [vmem:[#allocation2 + $0x1cc0] sm:$0xff]
    %v2142 = vld [vmem:[#allocation2 + $0x1cc8] sm:$0xff]
    %v2143 = vld [vmem:[#allocation2 + $0x1cd0] sm:$0xff]
    %v2144 = vld [vmem:[#allocation2 + $0x1cd8] sm:$0xff]
    %v2145 = vld [vmem:[#allocation2 + $0x1ce0] sm:$0xff]
    %v2146 = vld [vmem:[#allocation2 + $0x1ce8] sm:$0xff]
    %v2147 = vld [vmem:[#allocation2 + $0x1cf0] sm:$0xff]
    %v2148 = vld [vmem:[#allocation2 + $0x1cf8] sm:$0xff]
    %v2149 = vld [vmem:[#allocation2 + $0x1d00] sm:$0xff]
    %v2150 = vld [vmem:[#allocation2 + $0x1d08] sm:$0xff]
    %v2151 = vld [vmem:[#allocation2 + $0x1d10] sm:$0xff]
    %v2152 = vld [vmem:[#allocation2 + $0x1d18] sm:$0xff]
    %v2153 = vld [vmem:[#allocation2 + $0x1d20] sm:$0xff]
    %v2154 = vld [vmem:[#allocation2 + $0x1d28] sm:$0xff]
    %v2155 = vld [vmem:[#allocation2 + $0x1d30] sm:$0xff]
    %v2156 = vld [vmem:[#allocation2 + $0x1d38] sm:$0xff]
    %v2157 = vld [vmem:[#allocation2 + $0x1d40] sm:$0xff]
    %v2158 = vld [vmem:[#allocation2 + $0x1d48] sm:$0xff]
    %v2159 = vld [vmem:[#allocation2 + $0x1d50] sm:$0xff]
    %v2160 = vld [vmem:[#allocation2 + $0x1d58] sm:$0xff]
    %v2161 = vld [vmem:[#allocation2 + $0x1d60] sm:$0xff]
    %v2162 = vld [vmem:[#allocation2 + $0x1d68] sm:$0xff]
    %v2163 = vld [vmem:[#allocation2 + $0x1d70] sm:$0xff]
    %v2164 = vld [vmem:[#allocation2 + $0x1d78] sm:$0xff]
    %v2165 = vld [vmem:[#allocation2 + $0x1d80] sm:$0xff]
    %v2166 = vld [vmem:[#allocation2 + $0x1d88] sm:$0xff]
    %v2167 = vld [vmem:[#allocation2 + $0x1d90] sm:$0xff]
    %v2168 = vld [vmem:[#allocation2 + $0x1d98] sm:$0xff]
    %v2169 = vld [vmem:[#allocation2 + $0x1da0] sm:$0xff]
    %v2170 = vld [vmem:[#allocation2 + $0x1da8] sm:$0xff]
    %v2171 = vld [vmem:[#allocation2 + $0x1db0] sm:$0xff]
    %v2172 = vld [vmem:[#allocation2 + $0x1db8] sm:$0xff]
    %v2173 = vld [vmem:[#allocation2 + $0x1dc0] sm:$0xff]
    %v2174 = vld [vmem:[#allocation2 + $0x1dc8] sm:$0xff]
    %v2175 = vld [vmem:[#allocation2 + $0x1dd0] sm:$0xff]
    %v2176 = vld [vmem:[#allocation2 + $0x1dd8] sm:$0xff]
    %v2177 = vld [vmem:[#allocation2 + $0x1de0] sm:$0xff]
    %v2178 = vld [vmem:[#allocation2 + $0x1de8] sm:$0xff]
    %v2179 = vld [vmem:[#allocation2 + $0x1df0] sm:$0xff]
    %v2180 = vld [vmem:[#allocation2 + $0x1df8] sm:$0xff]
    %v2181 = vld [vmem:[#allocation2 + $0x1e00] sm:$0xff]
    %v2182 = vld [vmem:[#allocation2 + $0x1e08] sm:$0xff]
    %v2183 = vld [vmem:[#allocation2 + $0x1e10] sm:$0xff]
    %v2184 = vld [vmem:[#allocation2 + $0x1e18] sm:$0xff]
    %v2185 = vld [vmem:[#allocation2 + $0x1e20] sm:$0xff]
    %v2186 = vld [vmem:[#allocation2 + $0x1e28] sm:$0xff]
    %v2187 = vld [vmem:[#allocation2 + $0x1e30] sm:$0xff]
    %v2188 = vld [vmem:[#allocation2 + $0x1e38] sm:$0xff]
    %v2189 = vld [vmem:[#allocation2 + $0x1e40] sm:$0xff]
    %v2190 = vld [vmem:[#allocation2 + $0x1e48] sm:$0xff]
    %v2191 = vld [vmem:[#allocation2 + $0x1e50] sm:$0xff]
    %v2192 = vld [vmem:[#allocation2 + $0x1e58] sm:$0xff]
    %v2193 = vld [vmem:[#allocation2 + $0x1e60] sm:$0xff]
    %v2194 = vld [vmem:[#allocation2 + $0x1e68] sm:$0xff]
    %v2195 = vld [vmem:[#allocation2 + $0x1e70] sm:$0xff]
    %v2196 = vld [vmem:[#allocation2 + $0x1e78] sm:$0xff]
    %v2197 = vld [vmem:[#allocation2 + $0x1e80] sm:$0xff]
    %v2198 = vld [vmem:[#allocation2 + $0x1e88] sm:$0xff]
    %v2199 = vld [vmem:[#allocation2 + $0x1e90] sm:$0xff]
    %v2200 = vld [vmem:[#allocation2 + $0x1e98] sm:$0xff]
    %v2201 = vld [vmem:[#allocation2 + $0x1ea0] sm:$0xff]
    %v2202 = vld [vmem:[#allocation2 + $0x1ea8] sm:$0xff]
    %v2203 = vld [vmem:[#allocation2 + $0x1eb0] sm:$0xff]
    %v2204 = vld [vmem:[#allocation2 + $0x1eb8] sm:$0xff]
    %v2205 = vld [vmem:[#allocation2 + $0x1ec0] sm:$0xff]
    %v2206 = vld [vmem:[#allocation2 + $0x1ec8] sm:$0xff]
    %v2207 = vld [vmem:[#allocation2 + $0x1ed0] sm:$0xff]
    %v2208 = vld [vmem:[#allocation2 + $0x1ed8] sm:$0xff]
    %v2209 = vld [vmem:[#allocation2 + $0x1ee0] sm:$0xff]
    %v2210 = vld [vmem:[#allocation2 + $0x1ee8] sm:$0xff]
    %v2211 = vld [vmem:[#allocation2 + $0x1ef0] sm:$0xff]
    %v2212 = vld [vmem:[#allocation2 + $0x1ef8] sm:$0xff]
    %v2213 = vld [vmem:[#allocation2 + $0x1f00] sm:$0xff]
    %v2214 = vld [vmem:[#allocation2 + $0x1f08] sm:$0xff]
    %v2215 = vld [vmem:[#allocation2 + $0x1f10] sm:$0xff]
    %v2216 = vld [vmem:[#allocation2 + $0x1f18] sm:$0xff]
    %v2217 = vld [vmem:[#allocation2 + $0x1f20] sm:$0xff]
    %v2218 = vld [vmem:[#allocation2 + $0x1f28] sm:$0xff]
    %v2219 = vld [vmem:[#allocation2 + $0x1f30] sm:$0xff]
    %v2220 = vld [vmem:[#allocation2 + $0x1f38] sm:$0xff]
    %v2221 = vld [vmem:[#allocation2 + $0x1f40] sm:$0xff]
    %v2222 = vld [vmem:[#allocation2 + $0x1f48] sm:$0xff]
    %v2223 = vld [vmem:[#allocation2 + $0x1f50] sm:$0xff]
    %v2224 = vld [vmem:[#allocation2 + $0x1f58] sm:$0xff]
    %v2225 = vld [vmem:[#allocation2 + $0x1f60] sm:$0xff]
    %v2226 = vld [vmem:[#allocation2 + $0x1f68] sm:$0xff]
    %v2227 = vld [vmem:[#allocation2 + $0x1f70] sm:$0xff]
    %v2228 = vld [vmem:[#allocation2 + $0x1f78] sm:$0xff]
    %v2229 = vld [vmem:[#allocation2 + $0x1f80] sm:$0xff]
    %v2230 = vld [vmem:[#allocation2 + $0x1f88] sm:$0xff]
    %v2231 = vld [vmem:[#allocation2 + $0x1f90] sm:$0xff]
    %v2232 = vld [vmem:[#allocation2 + $0x1f98] sm:$0xff]
    %v2233 = vld [vmem:[#allocation2 + $0x1fa0] sm:$0xff]
    %v2234 = vld [vmem:[#allocation2 + $0x1fa8] sm:$0xff]
    %v2235 = vld [vmem:[#allocation2 + $0x1fb0] sm:$0xff]
    %v2236 = vld [vmem:[#allocation2 + $0x1fb8] sm:$0xff]
    %v2237 = vld [vmem:[#allocation2 + $0x1fc0] sm:$0xff]
    %v2238 = vld [vmem:[#allocation2 + $0x1fc8] sm:$0xff]
    %v2239 = vld [vmem:[#allocation2 + $0x1fd0] sm:$0xff]
    %v2240 = vld [vmem:[#allocation2 + $0x1fd8] sm:$0xff]
    %v2241 = vld [vmem:[#allocation2 + $0x1fe0] sm:$0xff]
    %v2242 = vld [vmem:[#allocation2 + $0x1fe8] sm:$0xff]
    %v2243 = vld [vmem:[#allocation2 + $0x1ff0] sm:$0xff]
    %v2244 = vld [vmem:[#allocation2 + $0x1ff8] sm:$0xff]
    %v2245 = vpack.c.bf16 %v1209, %v1209
    %v2246 = vpack.c.bf16 %v1210, %v1210
    %v2247 = vpack.c.bf16 %v1211, %v1211
    %v2248 = vpack.c.bf16 %v1212, %v1212
    %v2249 = vpack.c.bf16 %v1213, %v1213
    %v2250 = vpack.c.bf16 %v1214, %v1214
    %v2251 = vpack.c.bf16 %v1215, %v1215
    %v2252 = vpack.c.bf16 %v1216, %v1216
    %v2253 = vld [vmem:[#allocation13 + $0x8] sm:$0xff]
    %v2254 = vld [vmem:[#allocation13 + $0x10] sm:$0xff]
    %v2257 = vlaneseq
    %v2258 = vshrl.u32 %v2257, 7
    %v2259 = vsub.s32 0, %v2258
    %v2260 = vrot.slane %v2253, %v2259
    %v2261 = vlaneseq
    %v2262 = vshrl.u32 %v2261, 7
    %v2263 = vsub.s32 1, %v2262
    %v2264 = vrot.slane %v2253, %v2263
    %v2265 = vlaneseq
    %v2266 = vshrl.u32 %v2265, 7
    %v2267 = vsub.s32 2, %v2266
    %v2268 = vrot.slane %v2253, %v2267
    %v2269 = vlaneseq
    %v2270 = vshrl.u32 %v2269, 7
    %v2271 = vsub.s32 3, %v2270
    %v2272 = vrot.slane %v2253, %v2271
    %v2273 = vlaneseq
    %v2274 = vshrl.u32 %v2273, 7
    %v2275 = vsub.s32 4, %v2274
    %v2276 = vrot.slane %v2253, %v2275
    %v2277 = vlaneseq
    %v2278 = vshrl.u32 %v2277, 7
    %v2279 = vsub.s32 5, %v2278
    %v2280 = vrot.slane %v2253, %v2279
    %v2281 = vlaneseq
    %v2282 = vshrl.u32 %v2281, 7
    %v2283 = vsub.s32 6, %v2282
    %v2284 = vrot.slane %v2253, %v2283
    %v2285 = vlaneseq
    %v2286 = vshrl.u32 %v2285, 7
    %v2287 = vsub.s32 7, %v2286
    %v2288 = vrot.slane %v2253, %v2287
    %v2289 = vlaneseq
    %v2290 = vshrl.u32 %v2289, 7
    %v2291 = vsub.s32 0, %v2290
    %v2292 = vrot.slane %v2254, %v2291
    %v2293 = vlaneseq
    %v2294 = vshrl.u32 %v2293, 7
    %v2295 = vsub.s32 1, %v2294
    %v2296 = vrot.slane %v2254, %v2295
    %v2297 = vlaneseq
    %v2298 = vshrl.u32 %v2297, 7
    %v2299 = vsub.s32 2, %v2298
    %v2300 = vrot.slane %v2254, %v2299
    %v2301 = vlaneseq
    %v2302 = vshrl.u32 %v2301, 7
    %v2303 = vsub.s32 3, %v2302
    %v2304 = vrot.slane %v2254, %v2303
    %v2305 = vlaneseq
    %v2306 = vshrl.u32 %v2305, 7
    %v2307 = vsub.s32 4, %v2306
    %v2308 = vrot.slane %v2254, %v2307
    %v2309 = vlaneseq
    %v2310 = vshrl.u32 %v2309, 7
    %v2311 = vsub.s32 5, %v2310
    %v2312 = vrot.slane %v2254, %v2311
    %v2313 = vlaneseq
    %v2314 = vshrl.u32 %v2313, 7
    %v2315 = vsub.s32 6, %v2314
    %v2316 = vrot.slane %v2254, %v2315
    %v2317 = vlaneseq
    %v2318 = vshrl.u32 %v2317, 7
    %v2319 = vsub.s32 7, %v2318
    %v2320 = vrot.slane %v2254, %v2319
    %2337 = vmatprep.subr.bf16.mxu0 %v1222
    %2338 = vmatpush1.bf16.msra.mxu0 %v1221
    %2339 = vmatprep.subr.bf16.mxu0 %v1238
    %2340 = vmatpush1.bf16.msra.mxu0 %v1237
    %2341 = vmatprep.subr.bf16.mxu0 %v1254
    %2342 = vmatpush1.bf16.msra.mxu0 %v1253
    %2343 = vmatprep.subr.bf16.mxu0 %v1270
    %2344 = vmatpush1.bf16.msra.mxu0 %v1269
    %2345 = vmatprep.subr.bf16.mxu0 %v1286
    %2346 = vmatpush1.bf16.msra.mxu0 %v1285
    %2347 = vmatprep.subr.bf16.mxu0 %v1302
    %2348 = vmatpush1.bf16.msra.mxu0 %v1301
    %2349 = vmatprep.subr.bf16.mxu0 %v1318
    %2350 = vmatpush1.bf16.msra.mxu0 %v1317
    %2351 = vmatprep.subr.bf16.mxu0 %v1334
    %2352 = vmatpush1.bf16.msra.mxu0 %v1333
    %2353 = vmatprep.subr.bf16.mxu0 %v1350
    %2354 = vmatpush1.bf16.msra.mxu0 %v1349
    %2355 = vmatprep.subr.bf16.mxu0 %v1366
    %2356 = vmatpush1.bf16.msra.mxu0 %v1365
    %2357 = vmatprep.subr.bf16.mxu0 %v1382
    %2358 = vmatpush1.bf16.msra.mxu0 %v1381
    %2359 = vmatprep.subr.bf16.mxu0 %v1398
    %2360 = vmatpush1.bf16.msra.mxu0 %v1397
    %2361 = vmatprep.subr.bf16.mxu0 %v1414
    %2362 = vmatpush1.bf16.msra.mxu0 %v1413
    %2363 = vmatprep.subr.bf16.mxu0 %v1430
    %2364 = vmatpush1.bf16.msra.mxu0 %v1429
    %2365 = vmatprep.subr.bf16.mxu0 %v1446
    %2366 = vmatpush1.bf16.msra.mxu0 %v1445
    %2367 = vmatprep.subr.bf16.mxu0 %v1462
    %2368 = vmatpush1.bf16.msra.mxu0 %v1461
    %2369 = vmatprep.mubr.bf16.mxu0 %v2246
    %2370 = vmatmul.mubr.bf16.gmra.mrb[0].mxu0 %v2245
    %v2371 = vpop.f32.mrb[0].mxu0
    %v2372 = vadd.f32 %v2260, %v2371
    %v2373 = vpop.f32.mrb[0].mxu0
    %v2374 = vadd.f32 %v2264, %v2373
    %v2375 = vpop.f32.mrb[0].mxu0
    %v2376 = vpop.f32.mrb[0].mxu0
    %2377 = vdwg.mxu0
    %2378 = vmatprep.subr.bf16.mxu0 %v1478
    %2379 = vmatpush1.bf16.msra.mxu0 %v1477
    %2380 = vmatprep.subr.bf16.mxu0 %v1494
    %2381 = vmatpush1.bf16.msra.mxu0 %v1493
    %2382 = vmatprep.subr.bf16.mxu0 %v1510
    %2383 = vmatpush1.bf16.msra.mxu0 %v1509
    %2384 = vmatprep.subr.bf16.mxu0 %v1526
    %2385 = vmatpush1.bf16.msra.mxu0 %v1525
    %2386 = vmatprep.subr.bf16.mxu0 %v1542
    %2387 = vmatpush1.bf16.msra.mxu0 %v1541
    %2388 = vmatprep.subr.bf16.mxu0 %v1558
    %2389 = vmatpush1.bf16.msra.mxu0 %v1557
    %2390 = vmatprep.subr.bf16.mxu0 %v1574
    %2391 = vmatpush1.bf16.msra.mxu0 %v1573
    %2392 = vmatprep.subr.bf16.mxu0 %v1590
    %2393 = vmatpush1.bf16.msra.mxu0 %v1589
    %2394 = vmatprep.subr.bf16.mxu0 %v1606
    %2395 = vmatpush1.bf16.msra.mxu0 %v1605
    %2396 = vmatprep.subr.bf16.mxu0 %v1622
    %2397 = vmatpush1.bf16.msra.mxu0 %v1621
    %2398 = vmatprep.subr.bf16.mxu0 %v1638
    %2399 = vmatpush1.bf16.msra.mxu0 %v1637
    %2400 = vmatprep.subr.bf16.mxu0 %v1654
    %2401 = vmatpush1.bf16.msra.mxu0 %v1653
    %2402 = vmatprep.subr.bf16.mxu0 %v1670
    %2403 = vmatpush1.bf16.msra.mxu0 %v1669
    %2404 = vmatprep.subr.bf16.mxu0 %v1686
    %2405 = vmatpush1.bf16.msra.mxu0 %v1685
    %2406 = vmatprep.subr.bf16.mxu0 %v1702
    %2407 = vmatpush1.bf16.msra.mxu0 %v1701
    %2408 = vmatprep.subr.bf16.mxu0 %v1718
    %2409 = vmatpush1.bf16.msra.mxu0 %v1717
    %2410 = vmatprep.mubr.bf16.mxu0 %v2248
    %2411 = vmatmul.mubr.bf16.gmra.mrb[0].mxu0 %v2247
    %v2412 = vpop.f32.mrb[0].mxu0
    %v2413 = vadd.f32 %v2372, %v2412
    %v2414 = vpop.f32.mrb[0].mxu0
    %v2415 = vadd.f32 %v2374, %v2414
    %v2416 = vpop.f32.mrb[0].mxu0
    %v2417 = vpop.f32.mrb[0].mxu0
    %2418 = vdwg.mxu0
    %2419 = vmatprep.subr.bf16.mxu0 %v1734
    %2420 = vmatpush1.bf16.msra.mxu0 %v1733
    %2421 = vmatprep.subr.bf16.mxu0 %v1750
    %2422 = vmatpush1.bf16.msra.mxu0 %v1749
    %2423 = vmatprep.subr.bf16.mxu0 %v1766
    %2424 = vmatpush1.bf16.msra.mxu0 %v1765
    %2425 = vmatprep.subr.bf16.mxu0 %v1782
    %2426 = vmatpush1.bf16.msra.mxu0 %v1781
    %2427 = vmatprep.subr.bf16.mxu0 %v1798
    %2428 = vmatpush1.bf16.msra.mxu0 %v1797
    %2429 = vmatprep.subr.bf16.mxu0 %v1814
    %2430 = vmatpush1.bf16.msra.mxu0 %v1813
    %2431 = vmatprep.subr.bf16.mxu0 %v1830
    %2432 = vmatpush1.bf16.msra.mxu0 %v1829
    %2433 = vmatprep.subr.bf16.mxu0 %v1846
    %2434 = vmatpush1.bf16.msra.mxu0 %v1845
    %2435 = vmatprep.subr.bf16.mxu0 %v1862
    %2436 = vmatpush1.bf16.msra.mxu0 %v1861
    %2437 = vmatprep.subr.bf16.mxu0 %v1878
    %2438 = vmatpush1.bf16.msra.mxu0 %v1877
    %2439 = vmatprep.subr.bf16.mxu0 %v1894
    %2440 = vmatpush1.bf16.msra.mxu0 %v1893
    %2441 = vmatprep.subr.bf16.mxu0 %v1910
    %2442 = vmatpush1.bf16.msra.mxu0 %v1909
    %2443 = vmatprep.subr.bf16.mxu0 %v1926
    %2444 = vmatpush1.bf16.msra.mxu0 %v1925
    %2445 = vmatprep.subr.bf16.mxu0 %v1942
    %2446 = vmatpush1.bf16.msra.mxu0 %v1941
    %2447 = vmatprep.subr.bf16.mxu0 %v1958
    %2448 = vmatpush1.bf16.msra.mxu0 %v1957
    %2449 = vmatprep.subr.bf16.mxu0 %v1974
    %2450 = vmatpush1.bf16.msra.mxu0 %v1973
    %2451 = vmatprep.mubr.bf16.mxu0 %v2250
    %2452 = vmatmul.mubr.bf16.gmra.mrb[0].mxu0 %v2249
    %v2453 = vpop.f32.mrb[0].mxu0
    %v2454 = vadd.f32 %v2413, %v2453
    %v2455 = vpop.f32.mrb[0].mxu0
    %v2456 = vadd.f32 %v2415, %v2455
    %v2457 = vpop.f32.mrb[0].mxu0
    %v2458 = vpop.f32.mrb[0].mxu0
    %2459 = vdwg.mxu0
    %2460 = vmatprep.subr.bf16.mxu0 %v1990
    %2461 = vmatpush1.bf16.msra.mxu0 %v1989
    %2462 = vmatprep.subr.bf16.mxu0 %v2006
    %2463 = vmatpush1.bf16.msra.mxu0 %v2005
    %2464 = vmatprep.subr.bf16.mxu0 %v2022
    %2465 = vmatpush1.bf16.msra.mxu0 %v2021
    %2466 = vmatprep.subr.bf16.mxu0 %v2038
    %2467 = vmatpush1.bf16.msra.mxu0 %v2037
    %2468 = vmatprep.subr.bf16.mxu0 %v2054
    %2469 = vmatpush1.bf16.msra.mxu0 %v2053
    %2470 = vmatprep.subr.bf16.mxu0 %v2070
    %2471 = vmatpush1.bf16.msra.mxu0 %v2069
    %2472 = vmatprep.subr.bf16.mxu0 %v2086
    %2473 = vmatpush1.bf16.msra.mxu0 %v2085
    %2474 = vmatprep.subr.bf16.mxu0 %v2102
    %2475 = vmatpush1.bf16.msra.mxu0 %v2101
    %2476 = vmatprep.subr.bf16.mxu0 %v2118
    %2477 = vmatpush1.bf16.msra.mxu0 %v2117
    %2478 = vmatprep.subr.bf16.mxu0 %v2134
    %2479 = vmatpush1.bf16.msra.mxu0 %v2133
    %2480 = vmatprep.subr.bf16.mxu0 %v2150
    %2481 = vmatpush1.bf16.msra.mxu0 %v2149
    %2482 = vmatprep.subr.bf16.mxu0 %v2166
    %2483 = vmatpush1.bf16.msra.mxu0 %v2165
    %2484 = vmatprep.subr.bf16.mxu0 %v2182
    %2485 = vmatpush1.bf16.msra.mxu0 %v2181
    %2486 = vmatprep.subr.bf16.mxu0 %v2198
    %2487 = vmatpush1.bf16.msra.mxu0 %v2197
    %2488 = vmatprep.subr.bf16.mxu0 %v2214
    %2489 = vmatpush1.bf16.msra.mxu0 %v2213
    %2490 = vmatprep.subr.bf16.mxu0 %v2230
    %2491 = vmatpush1.bf16.msra.mxu0 %v2229
    %2492 = vmatprep.mubr.bf16.mxu0 %v2252
    %2493 = vmatmul.mubr.bf16.gmra.mrb[0].mxu0 %v2251
    %v2494 = vpop.f32.mrb[0].mxu0
    %v2495 = vadd.f32 %v2454, %v2494
    %v2496 = vpop.f32.mrb[0].mxu0
    %v2497 = vadd.f32 %v2456, %v2496
    %v2498 = vpop.f32.mrb[0].mxu0
    %v2499 = vpop.f32.mrb[0].mxu0
    %2500 = vdwg.mxu0
    %2501 = vmatprep.subr.bf16.mxu0 %v1224
    %2502 = vmatpush1.bf16.msra.mxu0 %v1223
    %2503 = vmatprep.subr.bf16.mxu0 %v1240
    %2504 = vmatpush1.bf16.msra.mxu0 %v1239
    %2505 = vmatprep.subr.bf16.mxu0 %v1256
    %2506 = vmatpush1.bf16.msra.mxu0 %v1255
    %2507 = vmatprep.subr.bf16.mxu0 %v1272
    %2508 = vmatpush1.bf16.msra.mxu0 %v1271
    %2509 = vmatprep.subr.bf16.mxu0 %v1288
    %2510 = vmatpush1.bf16.msra.mxu0 %v1287
    %2511 = vmatprep.subr.bf16.mxu0 %v1304
    %2512 = vmatpush1.bf16.msra.mxu0 %v1303
    %2513 = vmatprep.subr.bf16.mxu0 %v1320
    %2514 = vmatpush1.bf16.msra.mxu0 %v1319
    %2515 = vmatprep.subr.bf16.mxu0 %v1336
    %2516 = vmatpush1.bf16.msra.mxu0 %v1335
    %2517 = vmatprep.subr.bf16.mxu0 %v1352
    %2518 = vmatpush1.bf16.msra.mxu0 %v1351
    %2519 = vmatprep.subr.bf16.mxu0 %v1368
    %2520 = vmatpush1.bf16.msra.mxu0 %v1367
    %2521 = vmatprep.subr.bf16.mxu0 %v1384
    %2522 = vmatpush1.bf16.msra.mxu0 %v1383
    %2523 = vmatprep.subr.bf16.mxu0 %v1400
    %2524 = vmatpush1.bf16.msra.mxu0 %v1399
    %2525 = vmatprep.subr.bf16.mxu0 %v1416
    %2526 = vmatpush1.bf16.msra.mxu0 %v1415
    %2527 = vmatprep.subr.bf16.mxu0 %v1432
    %2528 = vmatpush1.bf16.msra.mxu0 %v1431
    %2529 = vmatprep.subr.bf16.mxu0 %v1448
    %2530 = vmatpush1.bf16.msra.mxu0 %v1447
    %2531 = vmatprep.subr.bf16.mxu0 %v1464
    %2532 = vmatpush1.bf16.msra.mxu0 %v1463
    %2533 = vmatprep.mubr.bf16.mxu0 %v2246
    %2534 = vmatmul.mubr.bf16.gmra.mrb[0].mxu0 %v2245
    %v2535 = vpop.f32.mrb[0].mxu0
    %v2536 = vadd.f32 %v2268, %v2535
    %v2537 = vpop.f32.mrb[0].mxu0
    %v2538 = vadd.f32 %v2272, %v2537
    %v2539 = vpop.f32.mrb[0].mxu0
    %v2540 = vpop.f32.mrb[0].mxu0
    %2541 = vdwg.mxu0
    %2542 = vmatprep.subr.bf16.mxu0 %v1480
    %2543 = vmatpush1.bf16.msra.mxu0 %v1479
    %2544 = vmatprep.subr.bf16.mxu0 %v1496
    %2545 = vmatpush1.bf16.msra.mxu0 %v1495
    %2546 = vmatprep.subr.bf16.mxu0 %v1512
    %2547 = vmatpush1.bf16.msra.mxu0 %v1511
    %2548 = vmatprep.subr.bf16.mxu0 %v1528
    %2549 = vmatpush1.bf16.msra.mxu0 %v1527
    %2550 = vmatprep.subr.bf16.mxu0 %v1544
    %2551 = vmatpush1.bf16.msra.mxu0 %v1543
    %2552 = vmatprep.subr.bf16.mxu0 %v1560
    %2553 = vmatpush1.bf16.msra.mxu0 %v1559
    %2554 = vmatprep.subr.bf16.mxu0 %v1576
    %2555 = vmatpush1.bf16.msra.mxu0 %v1575
    %2556 = vmatprep.subr.bf16.mxu0 %v1592
    %2557 = vmatpush1.bf16.msra.mxu0 %v1591
    %2558 = vmatprep.subr.bf16.mxu0 %v1608
    %2559 = vmatpush1.bf16.msra.mxu0 %v1607
    %2560 = vmatprep.subr.bf16.mxu0 %v1624
    %2561 = vmatpush1.bf16.msra.mxu0 %v1623
    %2562 = vmatprep.subr.bf16.mxu0 %v1640
    %2563 = vmatpush1.bf16.msra.mxu0 %v1639
    %2564 = vmatprep.subr.bf16.mxu0 %v1656
    %2565 = vmatpush1.bf16.msra.mxu0 %v1655
    %2566 = vmatprep.subr.bf16.mxu0 %v1672
    %2567 = vmatpush1.bf16.msra.mxu0 %v1671
    %2568 = vmatprep.subr.bf16.mxu0 %v1688
    %2569 = vmatpush1.bf16.msra.mxu0 %v1687
    %2570 = vmatprep.subr.bf16.mxu0 %v1704
    %2571 = vmatpush1.bf16.msra.mxu0 %v1703
    %2572 = vmatprep.subr.bf16.mxu0 %v1720
    %2573 = vmatpush1.bf16.msra.mxu0 %v1719
    %2574 = vmatprep.mubr.bf16.mxu0 %v2248
    %2575 = vmatmul.mubr.bf16.gmra.mrb[0].mxu0 %v2247
    %v2576 = vpop.f32.mrb[0].mxu0
    %v2577 = vadd.f32 %v2536, %v2576
    %v2578 = vpop.f32.mrb[0].mxu0
    %v2579 = vadd.f32 %v2538, %v2578
    %v2580 = vpop.f32.mrb[0].mxu0
    %v2581 = vpop.f32.mrb[0].mxu0
    %2582 = vdwg.mxu0
    %2583 = vmatprep.subr.bf16.mxu0 %v1736
    %2584 = vmatpush1.bf16.msra.mxu0 %v1735
    %2585 = vmatprep.subr.bf16.mxu0 %v1752
    %2586 = vmatpush1.bf16.msra.mxu0 %v1751
    %2587 = vmatprep.subr.bf16.mxu0 %v1768
    %2588 = vmatpush1.bf16.msra.mxu0 %v1767
    %2589 = vmatprep.subr.bf16.mxu0 %v1784
    %2590 = vmatpush1.bf16.msra.mxu0 %v1783
    %2591 = vmatprep.subr.bf16.mxu0 %v1800
    %2592 = vmatpush1.bf16.msra.mxu0 %v1799
    %2593 = vmatprep.subr.bf16.mxu0 %v1816
    %2594 = vmatpush1.bf16.msra.mxu0 %v1815
    %2595 = vmatprep.subr.bf16.mxu0 %v1832
    %2596 = vmatpush1.bf16.msra.mxu0 %v1831
    %2597 = vmatprep.subr.bf16.mxu0 %v1848
    %2598 = vmatpush1.bf16.msra.mxu0 %v1847
    %2599 = vmatprep.subr.bf16.mxu0 %v1864
    %2600 = vmatpush1.bf16.msra.mxu0 %v1863
    %2601 = vmatprep.subr.bf16.mxu0 %v1880
    %2602 = vmatpush1.bf16.msra.mxu0 %v1879
    %2603 = vmatprep.subr.bf16.mxu0 %v1896
    %2604 = vmatpush1.bf16.msra.mxu0 %v1895
    %2605 = vmatprep.subr.bf16.mxu0 %v1912
    %2606 = vmatpush1.bf16.msra.mxu0 %v1911
    %2607 = vmatprep.subr.bf16.mxu0 %v1928
    %2608 = vmatpush1.bf16.msra.mxu0 %v1927
    %2609 = vmatprep.subr.bf16.mxu0 %v1944
    %2610 = vmatpush1.bf16.msra.mxu0 %v1943
    %2611 = vmatprep.subr.bf16.mxu0 %v1960
    %2612 = vmatpush1.bf16.msra.mxu0 %v1959
    %2613 = vmatprep.subr.bf16.mxu0 %v1976
    %2614 = vmatpush1.bf16.msra.mxu0 %v1975
    %2615 = vmatprep.mubr.bf16.mxu0 %v2250
    %2616 = vmatmul.mubr.bf16.gmra.mrb[0].mxu0 %v2249
    %v2617 = vpop.f32.mrb[0].mxu0
    %v2618 = vadd.f32 %v2577, %v2617
    %v2619 = vpop.f32.mrb[0].mxu0
    %v2620 = vadd.f32 %v2579, %v2619
    %v2621 = vpop.f32.mrb[0].mxu0
    %v2622 = vpop.f32.mrb[0].mxu0
    %2623 = vdwg.mxu0
    %2624 = vmatprep.subr.bf16.mxu0 %v1992
    %2625 = vmatpush1.bf16.msra.mxu0 %v1991
    %2626 = vmatprep.subr.bf16.mxu0 %v2008
    %2627 = vmatpush1.bf16.msra.mxu0 %v2007
    %2628 = vmatprep.subr.bf16.mxu0 %v2024
    %2629 = vmatpush1.bf16.msra.mxu0 %v2023
    %2630 = vmatprep.subr.bf16.mxu0 %v2040
    %2631 = vmatpush1.bf16.msra.mxu0 %v2039
    %2632 = vmatprep.subr.bf16.mxu0 %v2056
    %2633 = vmatpush1.bf16.msra.mxu0 %v2055
    %2634 = vmatprep.subr.bf16.mxu0 %v2072
    %2635 = vmatpush1.bf16.msra.mxu0 %v2071
    %2636 = vmatprep.subr.bf16.mxu0 %v2088
    %2637 = vmatpush1.bf16.msra.mxu0 %v2087
    %2638 = vmatprep.subr.bf16.mxu0 %v2104
    %2639 = vmatpush1.bf16.msra.mxu0 %v2103
    %2640 = vmatprep.subr.bf16.mxu0 %v2120
    %2641 = vmatpush1.bf16.msra.mxu0 %v2119
    %2642 = vmatprep.subr.bf16.mxu0 %v2136
    %2643 = vmatpush1.bf16.msra.mxu0 %v2135
    %2644 = vmatprep.subr.bf16.mxu0 %v2152
    %2645 = vmatpush1.bf16.msra.mxu0 %v2151
    %2646 = vmatprep.subr.bf16.mxu0 %v2168
    %2647 = vmatpush1.bf16.msra.mxu0 %v2167
    %2648 = vmatprep.subr.bf16.mxu0 %v2184
    %2649 = vmatpush1.bf16.msra.mxu0 %v2183
    %2650 = vmatprep.subr.bf16.mxu0 %v2200
    %2651 = vmatpush1.bf16.msra.mxu0 %v2199
    %2652 = vmatprep.subr.bf16.mxu0 %v2216
    %2653 = vmatpush1.bf16.msra.mxu0 %v2215
    %2654 = vmatprep.subr.bf16.mxu0 %v2232
    %2655 = vmatpush1.bf16.msra.mxu0 %v2231
    %2656 = vmatprep.mubr.bf16.mxu0 %v2252
    %2657 = vmatmul.mubr.bf16.gmra.mrb[0].mxu0 %v2251
    %v2658 = vpop.f32.mrb[0].mxu0
    %v2659 = vadd.f32 %v2618, %v2658
    %v2660 = vpop.f32.mrb[0].mxu0
    %v2661 = vadd.f32 %v2620, %v2660
    %v2662 = vpop.f32.mrb[0].mxu0
    %v2663 = vpop.f32.mrb[0].mxu0
    %2664 = vdwg.mxu0
    %2665 = vmatprep.subr.bf16.mxu0 %v1226
    %2666 = vmatpush1.bf16.msra.mxu0 %v1225
    %2667 = vmatprep.subr.bf16.mxu0 %v1242
    %2668 = vmatpush1.bf16.msra.mxu0 %v1241
    %2669 = vmatprep.subr.bf16.mxu0 %v1258
    %2670 = vmatpush1.bf16.msra.mxu0 %v1257
    %2671 = vmatprep.subr.bf16.mxu0 %v1274
    %2672 = vmatpush1.bf16.msra.mxu0 %v1273
    %2673 = vmatprep.subr.bf16.mxu0 %v1290
    %2674 = vmatpush1.bf16.msra.mxu0 %v1289
    %2675 = vmatprep.subr.bf16.mxu0 %v1306
    %2676 = vmatpush1.bf16.msra.mxu0 %v1305
    %2677 = vmatprep.subr.bf16.mxu0 %v1322
    %2678 = vmatpush1.bf16.msra.mxu0 %v1321
    %2679 = vmatprep.subr.bf16.mxu0 %v1338
    %2680 = vmatpush1.bf16.msra.mxu0 %v1337
    %2681 = vmatprep.subr.bf16.mxu0 %v1354
    %2682 = vmatpush1.bf16.msra.mxu0 %v1353
    %2683 = vmatprep.subr.bf16.mxu0 %v1370
    %2684 = vmatpush1.bf16.msra.mxu0 %v1369
    %2685 = vmatprep.subr.bf16.mxu0 %v1386
    %2686 = vmatpush1.bf16.msra.mxu0 %v1385
    %2687 = vmatprep.subr.bf16.mxu0 %v1402
    %2688 = vmatpush1.bf16.msra.mxu0 %v1401
    %2689 = vmatprep.subr.bf16.mxu0 %v1418
    %2690 = vmatpush1.bf16.msra.mxu0 %v1417
    %2691 = vmatprep.subr.bf16.mxu0 %v1434
    %2692 = vmatpush1.bf16.msra.mxu0 %v1433
    %2693 = vmatprep.subr.bf16.mxu0 %v1450
    %2694 = vmatpush1.bf16.msra.mxu0 %v1449
    %2695 = vmatprep.subr.bf16.mxu0 %v1466
    %2696 = vmatpush1.bf16.msra.mxu0 %v1465
    %2697 = vmatprep.mubr.bf16.mxu0 %v2246
    %2698 = vmatmul.mubr.bf16.gmra.mrb[0].mxu0 %v2245
    %v2699 = vpop.f32.mrb[0].mxu0
    %v2700 = vadd.f32 %v2276, %v2699
    %v2701 = vpop.f32.mrb[0].mxu0
    %v2702 = vadd.f32 %v2280, %v2701
    %v2703 = vpop.f32.mrb[0].mxu0
    %v2704 = vpop.f32.mrb[0].mxu0
    %2705 = vdwg.mxu0
    %2706 = vmatprep.subr.bf16.mxu0 %v1482
    %2707 = vmatpush1.bf16.msra.mxu0 %v1481
    %2708 = vmatprep.subr.bf16.mxu0 %v1498
    %2709 = vmatpush1.bf16.msra.mxu0 %v1497
    %2710 = vmatprep.subr.bf16.mxu0 %v1514
    %2711 = vmatpush1.bf16.msra.mxu0 %v1513
    %2712 = vmatprep.subr.bf16.mxu0 %v1530
    %2713 = vmatpush1.bf16.msra.mxu0 %v1529
    %2714 = vmatprep.subr.bf16.mxu0 %v1546
    %2715 = vmatpush1.bf16.msra.mxu0 %v1545
    %2716 = vmatprep.subr.bf16.mxu0 %v1562
    %2717 = vmatpush1.bf16.msra.mxu0 %v1561
    %2718 = vmatprep.subr.bf16.mxu0 %v1578
    %2719 = vmatpush1.bf16.msra.mxu0 %v1577
    %2720 = vmatprep.subr.bf16.mxu0 %v1594
    %2721 = vmatpush1.bf16.msra.mxu0 %v1593
    %2722 = vmatprep.subr.bf16.mxu0 %v1610
    %2723 = vmatpush1.bf16.msra.mxu0 %v1609
    %2724 = vmatprep.subr.bf16.mxu0 %v1626
    %2725 = vmatpush1.bf16.msra.mxu0 %v1625
    %2726 = vmatprep.subr.bf16.mxu0 %v1642
    %2727 = vmatpush1.bf16.msra.mxu0 %v1641
    %2728 = vmatprep.subr.bf16.mxu0 %v1658
    %2729 = vmatpush1.bf16.msra.mxu0 %v1657
    %2730 = vmatprep.subr.bf16.mxu0 %v1674
    %2731 = vmatpush1.bf16.msra.mxu0 %v1673
    %2732 = vmatprep.subr.bf16.mxu0 %v1690
    %2733 = vmatpush1.bf16.msra.mxu0 %v1689
    %2734 = vmatprep.subr.bf16.mxu0 %v1706
    %2735 = vmatpush1.bf16.msra.mxu0 %v1705
    %2736 = vmatprep.subr.bf16.mxu0 %v1722
    %2737 = vmatpush1.bf16.msra.mxu0 %v1721
    %2738 = vmatprep.mubr.bf16.mxu0 %v2248
    %2739 = vmatmul.mubr.bf16.gmra.mrb[0].mxu0 %v2247
    %v2740 = vpop.f32.mrb[0].mxu0
    %v2741 = vadd.f32 %v2700, %v2740
    %v2742 = vpop.f32.mrb[0].mxu0
    %v2743 = vadd.f32 %v2702, %v2742
    %v2744 = vpop.f32.mrb[0].mxu0
    %v2745 = vpop.f32.mrb[0].mxu0
    %2746 = vdwg.mxu0
    %2747 = vmatprep.subr.bf16.mxu0 %v1738
    %2748 = vmatpush1.bf16.msra.mxu0 %v1737
    %2749 = vmatprep.subr.bf16.mxu0 %v1754
    %2750 = vmatpush1.bf16.msra.mxu0 %v1753
    %2751 = vmatprep.subr.bf16.mxu0 %v1770
    %2752 = vmatpush1.bf16.msra.mxu0 %v1769
    %2753 = vmatprep.subr.bf16.mxu0 %v1786
    %2754 = vmatpush1.bf16.msra.mxu0 %v1785
    %2755 = vmatprep.subr.bf16.mxu0 %v1802
    %2756 = vmatpush1.bf16.msra.mxu0 %v1801
    %2757 = vmatprep.subr.bf16.mxu0 %v1818
    %2758 = vmatpush1.bf16.msra.mxu0 %v1817
    %2759 = vmatprep.subr.bf16.mxu0 %v1834
    %2760 = vmatpush1.bf16.msra.mxu0 %v1833
    %2761 = vmatprep.subr.bf16.mxu0 %v1850
    %2762 = vmatpush1.bf16.msra.mxu0 %v1849
    %2763 = vmatprep.subr.bf16.mxu0 %v1866
    %2764 = vmatpush1.bf16.msra.mxu0 %v1865
    %2765 = vmatprep.subr.bf16.mxu0 %v1882
    %2766 = vmatpush1.bf16.msra.mxu0 %v1881
    %2767 = vmatprep.subr.bf16.mxu0 %v1898
    %2768 = vmatpush1.bf16.msra.mxu0 %v1897
    %2769 = vmatprep.subr.bf16.mxu0 %v1914
    %2770 = vmatpush1.bf16.msra.mxu0 %v1913
    %2771 = vmatprep.subr.bf16.mxu0 %v1930
    %2772 = vmatpush1.bf16.msra.mxu0 %v1929
    %2773 = vmatprep.subr.bf16.mxu0 %v1946
    %2774 = vmatpush1.bf16.msra.mxu0 %v1945
    %2775 = vmatprep.subr.bf16.mxu0 %v1962
    %2776 = vmatpush1.bf16.msra.mxu0 %v1961
    %2777 = vmatprep.subr.bf16.mxu0 %v1978
    %2778 = vmatpush1.bf16.msra.mxu0 %v1977
    %2779 = vmatprep.mubr.bf16.mxu0 %v2250
    %2780 = vmatmul.mubr.bf16.gmra.mrb[0].mxu0 %v2249
    %v2781 = vpop.f32.mrb[0].mxu0
    %v2782 = vadd.f32 %v2741, %v2781
    %v2783 = vpop.f32.mrb[0].mxu0
    %v2784 = vadd.f32 %v2743, %v2783
    %v2785 = vpop.f32.mrb[0].mxu0
    %v2786 = vpop.f32.mrb[0].mxu0
    %2787 = vdwg.mxu0
    %2788 = vmatprep.subr.bf16.mxu0 %v1994
    %2789 = vmatpush1.bf16.msra.mxu0 %v1993
    %2790 = vmatprep.subr.bf16.mxu0 %v2010
    %2791 = vmatpush1.bf16.msra.mxu0 %v2009
    %2792 = vmatprep.subr.bf16.mxu0 %v2026
    %2793 = vmatpush1.bf16.msra.mxu0 %v2025
    %2794 = vmatprep.subr.bf16.mxu0 %v2042
    %2795 = vmatpush1.bf16.msra.mxu0 %v2041
    %2796 = vmatprep.subr.bf16.mxu0 %v2058
    %2797 = vmatpush1.bf16.msra.mxu0 %v2057
    %2798 = vmatprep.subr.bf16.mxu0 %v2074
    %2799 = vmatpush1.bf16.msra.mxu0 %v2073
    %2800 = vmatprep.subr.bf16.mxu0 %v2090
    %2801 = vmatpush1.bf16.msra.mxu0 %v2089
    %2802 = vmatprep.subr.bf16.mxu0 %v2106
    %2803 = vmatpush1.bf16.msra.mxu0 %v2105
    %2804 = vmatprep.subr.bf16.mxu0 %v2122
    %2805 = vmatpush1.bf16.msra.mxu0 %v2121
    %2806 = vmatprep.subr.bf16.mxu0 %v2138
    %2807 = vmatpush1.bf16.msra.mxu0 %v2137
    %2808 = vmatprep.subr.bf16.mxu0 %v2154
    %2809 = vmatpush1.bf16.msra.mxu0 %v2153
    %2810 = vmatprep.subr.bf16.mxu0 %v2170
    %2811 = vmatpush1.bf16.msra.mxu0 %v2169
    %2812 = vmatprep.subr.bf16.mxu0 %v2186
    %2813 = vmatpush1.bf16.msra.mxu0 %v2185
    %2814 = vmatprep.subr.bf16.mxu0 %v2202
    %2815 = vmatpush1.bf16.msra.mxu0 %v2201
    %2816 = vmatprep.subr.bf16.mxu0 %v2218
    %2817 = vmatpush1.bf16.msra.mxu0 %v2217
    %2818 = vmatprep.subr.bf16.mxu0 %v2234
    %2819 = vmatpush1.bf16.msra.mxu0 %v2233
    %2820 = vmatprep.mubr.bf16.mxu0 %v2252
    %2821 = vmatmul.mubr.bf16.gmra.mrb[0].mxu0 %v2251
    %v2822 = vpop.f32.mrb[0].mxu0
    %v2823 = vadd.f32 %v2782, %v2822
    %v2824 = vpop.f32.mrb[0].mxu0
    %v2825 = vadd.f32 %v2784, %v2824
    %v2826 = vpop.f32.mrb[0].mxu0
    %v2827 = vpop.f32.mrb[0].mxu0
    %2828 = vdwg.mxu0
    %2829 = vmatprep.subr.bf16.mxu0 %v1228
    %2830 = vmatpush1.bf16.msra.mxu0 %v1227
    %2831 = vmatprep.subr.bf16.mxu0 %v1244
    %2832 = vmatpush1.bf16.msra.mxu0 %v1243
    %2833 = vmatprep.subr.bf16.mxu0 %v1260
    %2834 = vmatpush1.bf16.msra.mxu0 %v1259
    %2835 = vmatprep.subr.bf16.mxu0 %v1276
    %2836 = vmatpush1.bf16.msra.mxu0 %v1275
    %2837 = vmatprep.subr.bf16.mxu0 %v1292
    %2838 = vmatpush1.bf16.msra.mxu0 %v1291
    %2839 = vmatprep.subr.bf16.mxu0 %v1308
    %2840 = vmatpush1.bf16.msra.mxu0 %v1307
    %2841 = vmatprep.subr.bf16.mxu0 %v1324
    %2842 = vmatpush1.bf16.msra.mxu0 %v1323
    %2843 = vmatprep.subr.bf16.mxu0 %v1340
    %2844 = vmatpush1.bf16.msra.mxu0 %v1339
    %2845 = vmatprep.subr.bf16.mxu0 %v1356
    %2846 = vmatpush1.bf16.msra.mxu0 %v1355
    %2847 = vmatprep.subr.bf16.mxu0 %v1372
    %2848 = vmatpush1.bf16.msra.mxu0 %v1371
    %2849 = vmatprep.subr.bf16.mxu0 %v1388
    %2850 = vmatpush1.bf16.msra.mxu0 %v1387
    %2851 = vmatprep.subr.bf16.mxu0 %v1404
    %2852 = vmatpush1.bf16.msra.mxu0 %v1403
    %2853 = vmatprep.subr.bf16.mxu0 %v1420
    %2854 = vmatpush1.bf16.msra.mxu0 %v1419
    %2855 = vmatprep.subr.bf16.mxu0 %v1436
    %2856 = vmatpush1.bf16.msra.mxu0 %v1435
    %2857 = vmatprep.subr.bf16.mxu0 %v1452
    %2858 = vmatpush1.bf16.msra.mxu0 %v1451
    %2859 = vmatprep.subr.bf16.mxu0 %v1468
    %2860 = vmatpush1.bf16.msra.mxu0 %v1467
    %2861 = vmatprep.mubr.bf16.mxu0 %v2246
    %2862 = vmatmul.mubr.bf16.gmra.mrb[0].mxu0 %v2245
    %v2863 = vpop.f32.mrb[0].mxu0
    %v2864 = vadd.f32 %v2284, %v2863
    %v2865 = vpop.f32.mrb[0].mxu0
    %v2866 = vadd.f32 %v2288, %v2865
    %v2867 = vpop.f32.mrb[0].mxu0
    %v2868 = vpop.f32.mrb[0].mxu0
    %2869 = vdwg.mxu0
    %2870 = vmatprep.subr.bf16.mxu0 %v1484
    %2871 = vmatpush1.bf16.msra.mxu0 %v1483
    %2872 = vmatprep.subr.bf16.mxu0 %v1500
    %2873 = vmatpush1.bf16.msra.mxu0 %v1499
    %2874 = vmatprep.subr.bf16.mxu0 %v1516
    %2875 = vmatpush1.bf16.msra.mxu0 %v1515
    %2876 = vmatprep.subr.bf16.mxu0 %v1532
    %2877 = vmatpush1.bf16.msra.mxu0 %v1531
    %2878 = vmatprep.subr.bf16.mxu0 %v1548
    %2879 = vmatpush1.bf16.msra.mxu0 %v1547
    %2880 = vmatprep.subr.bf16.mxu0 %v1564
    %2881 = vmatpush1.bf16.msra.mxu0 %v1563
    %2882 = vmatprep.subr.bf16.mxu0 %v1580
    %2883 = vmatpush1.bf16.msra.mxu0 %v1579
    %2884 = vmatprep.subr.bf16.mxu0 %v1596
    %2885 = vmatpush1.bf16.msra.mxu0 %v1595
    %2886 = vmatprep.subr.bf16.mxu0 %v1612
    %2887 = vmatpush1.bf16.msra.mxu0 %v1611
    %2888 = vmatprep.subr.bf16.mxu0 %v1628
    %2889 = vmatpush1.bf16.msra.mxu0 %v1627
    %2890 = vmatprep.subr.bf16.mxu0 %v1644
    %2891 = vmatpush1.bf16.msra.mxu0 %v1643
    %2892 = vmatprep.subr.bf16.mxu0 %v1660
    %2893 = vmatpush1.bf16.msra.mxu0 %v1659
    %2894 = vmatprep.subr.bf16.mxu0 %v1676
    %2895 = vmatpush1.bf16.msra.mxu0 %v1675
    %2896 = vmatprep.subr.bf16.mxu0 %v1692
    %2897 = vmatpush1.bf16.msra.mxu0 %v1691
    %2898 = vmatprep.subr.bf16.mxu0 %v1708
    %2899 = vmatpush1.bf16.msra.mxu0 %v1707
    %2900 = vmatprep.subr.bf16.mxu0 %v1724
    %2901 = vmatpush1.bf16.msra.mxu0 %v1723
    %2902 = vmatprep.mubr.bf16.mxu0 %v2248
    %2903 = vmatmul.mubr.bf16.gmra.mrb[0].mxu0 %v2247
    %v2904 = vpop.f32.mrb[0].mxu0
    %v2905 = vadd.f32 %v2864, %v2904
    %v2906 = vpop.f32.mrb[0].mxu0
    %v2907 = vadd.f32 %v2866, %v2906
    %v2908 = vpop.f32.mrb[0].mxu0
    %v2909 = vpop.f32.mrb[0].mxu0
    %2910 = vdwg.mxu0
    %2911 = vmatprep.subr.bf16.mxu0 %v1740
    %2912 = vmatpush1.bf16.msra.mxu0 %v1739
    %2913 = vmatprep.subr.bf16.mxu0 %v1756
    %2914 = vmatpush1.bf16.msra.mxu0 %v1755
    %2915 = vmatprep.subr.bf16.mxu0 %v1772
    %2916 = vmatpush1.bf16.msra.mxu0 %v1771
    %2917 = vmatprep.subr.bf16.mxu0 %v1788
    %2918 = vmatpush1.bf16.msra.mxu0 %v1787
    %2919 = vmatprep.subr.bf16.mxu0 %v1804
    %2920 = vmatpush1.bf16.msra.mxu0 %v1803
    %2921 = vmatprep.subr.bf16.mxu0 %v1820
    %2922 = vmatpush1.bf16.msra.mxu0 %v1819
    %2923 = vmatprep.subr.bf16.mxu0 %v1836
    %2924 = vmatpush1.bf16.msra.mxu0 %v1835
    %2925 = vmatprep.subr.bf16.mxu0 %v1852
    %2926 = vmatpush1.bf16.msra.mxu0 %v1851
    %2927 = vmatprep.subr.bf16.mxu0 %v1868
    %2928 = vmatpush1.bf16.msra.mxu0 %v1867
    %2929 = vmatprep.subr.bf16.mxu0 %v1884
    %2930 = vmatpush1.bf16.msra.mxu0 %v1883
    %2931 = vmatprep.subr.bf16.mxu0 %v1900
    %2932 = vmatpush1.bf16.msra.mxu0 %v1899
    %2933 = vmatprep.subr.bf16.mxu0 %v1916
    %2934 = vmatpush1.bf16.msra.mxu0 %v1915
    %2935 = vmatprep.subr.bf16.mxu0 %v1932
    %2936 = vmatpush1.bf16.msra.mxu0 %v1931
    %2937 = vmatprep.subr.bf16.mxu0 %v1948
    %2938 = vmatpush1.bf16.msra.mxu0 %v1947
    %2939 = vmatprep.subr.bf16.mxu0 %v1964
    %2940 = vmatpush1.bf16.msra.mxu0 %v1963
    %2941 = vmatprep.subr.bf16.mxu0 %v1980
    %2942 = vmatpush1.bf16.msra.mxu0 %v1979
    %2943 = vmatprep.mubr.bf16.mxu0 %v2250
    %2944 = vmatmul.mubr.bf16.gmra.mrb[0].mxu0 %v2249
    %v2945 = vpop.f32.mrb[0].mxu0
    %v2946 = vadd.f32 %v2905, %v2945
    %v2947 = vpop.f32.mrb[0].mxu0
    %v2948 = vadd.f32 %v2907, %v2947
    %v2949 = vpop.f32.mrb[0].mxu0
    %v2950 = vpop.f32.mrb[0].mxu0
    %2951 = vdwg.mxu0
    %2952 = vmatprep.subr.bf16.mxu0 %v1996
    %2953 = vmatpush1.bf16.msra.mxu0 %v1995
    %2954 = vmatprep.subr.bf16.mxu0 %v2012
    %2955 = vmatpush1.bf16.msra.mxu0 %v2011
    %2956 = vmatprep.subr.bf16.mxu0 %v2028
    %2957 = vmatpush1.bf16.msra.mxu0 %v2027
    %2958 = vmatprep.subr.bf16.mxu0 %v2044
    %2959 = vmatpush1.bf16.msra.mxu0 %v2043
    %2960 = vmatprep.subr.bf16.mxu0 %v2060
    %2961 = vmatpush1.bf16.msra.mxu0 %v2059
    %2962 = vmatprep.subr.bf16.mxu0 %v2076
    %2963 = vmatpush1.bf16.msra.mxu0 %v2075
    %2964 = vmatprep.subr.bf16.mxu0 %v2092
    %2965 = vmatpush1.bf16.msra.mxu0 %v2091
    %2966 = vmatprep.subr.bf16.mxu0 %v2108
    %2967 = vmatpush1.bf16.msra.mxu0 %v2107
    %2968 = vmatprep.subr.bf16.mxu0 %v2124
    %2969 = vmatpush1.bf16.msra.mxu0 %v2123
    %2970 = vmatprep.subr.bf16.mxu0 %v2140
    %2971 = vmatpush1.bf16.msra.mxu0 %v2139
    %2972 = vmatprep.subr.bf16.mxu0 %v2156
    %2973 = vmatpush1.bf16.msra.mxu0 %v2155
    %2974 = vmatprep.subr.bf16.mxu0 %v2172
    %2975 = vmatpush1.bf16.msra.mxu0 %v2171
    %2976 = vmatprep.subr.bf16.mxu0 %v2188
    %2977 = vmatpush1.bf16.msra.mxu0 %v2187
    %2978 = vmatprep.subr.bf16.mxu0 %v2204
    %2979 = vmatpush1.bf16.msra.mxu0 %v2203
    %2980 = vmatprep.subr.bf16.mxu0 %v2220
    %2981 = vmatpush1.bf16.msra.mxu0 %v2219
    %2982 = vmatprep.subr.bf16.mxu0 %v2236
    %2983 = vmatpush1.bf16.msra.mxu0 %v2235
    %2984 = vmatprep.mubr.bf16.mxu0 %v2252
    %2985 = vmatmul.mubr.bf16.gmra.mrb[0].mxu0 %v2251
    %v2986 = vpop.f32.mrb[0].mxu0
    %v2987 = vadd.f32 %v2946, %v2986
    %v2988 = vpop.f32.mrb[0].mxu0
    %v2989 = vadd.f32 %v2948, %v2988
    %v2990 = vpop.f32.mrb[0].mxu0
    %v2991 = vpop.f32.mrb[0].mxu0
    %2992 = vdwg.mxu0
    %2993 = vmatprep.subr.bf16.mxu0 %v1230
    %2994 = vmatpush1.bf16.msra.mxu0 %v1229
    %2995 = vmatprep.subr.bf16.mxu0 %v1246
    %2996 = vmatpush1.bf16.msra.mxu0 %v1245
    %2997 = vmatprep.subr.bf16.mxu0 %v1262
    %2998 = vmatpush1.bf16.msra.mxu0 %v1261
    %2999 = vmatprep.subr.bf16.mxu0 %v1278
    %3000 = vmatpush1.bf16.msra.mxu0 %v1277
    %3001 = vmatprep.subr.bf16.mxu0 %v1294
    %3002 = vmatpush1.bf16.msra.mxu0 %v1293
    %3003 = vmatprep.subr.bf16.mxu0 %v1310
    %3004 = vmatpush1.bf16.msra.mxu0 %v1309
    %3005 = vmatprep.subr.bf16.mxu0 %v1326
    %3006 = vmatpush1.bf16.msra.mxu0 %v1325
    %3007 = vmatprep.subr.bf16.mxu0 %v1342
    %3008 = vmatpush1.bf16.msra.mxu0 %v1341
    %3009 = vmatprep.subr.bf16.mxu0 %v1358
    %3010 = vmatpush1.bf16.msra.mxu0 %v1357
    %3011 = vmatprep.subr.bf16.mxu0 %v1374
    %3012 = vmatpush1.bf16.msra.mxu0 %v1373
    %3013 = vmatprep.subr.bf16.mxu0 %v1390
    %3014 = vmatpush1.bf16.msra.mxu0 %v1389
    %3015 = vmatprep.subr.bf16.mxu0 %v1406
    %3016 = vmatpush1.bf16.msra.mxu0 %v1405
    %3017 = vmatprep.subr.bf16.mxu0 %v1422
    %3018 = vmatpush1.bf16.msra.mxu0 %v1421
    %3019 = vmatprep.subr.bf16.mxu0 %v1438
    %3020 = vmatpush1.bf16.msra.mxu0 %v1437
    %3021 = vmatprep.subr.bf16.mxu0 %v1454
    %3022 = vmatpush1.bf16.msra.mxu0 %v1453
    %3023 = vmatprep.subr.bf16.mxu0 %v1470
    %3024 = vmatpush1.bf16.msra.mxu0 %v1469
    %3025 = vmatprep.mubr.bf16.mxu0 %v2246
    %3026 = vmatmul.mubr.bf16.gmra.mrb[0].mxu0 %v2245
    %v3027 = vpop.f32.mrb[0].mxu0
    %v3028 = vadd.f32 %v2292, %v3027
    %v3029 = vpop.f32.mrb[0].mxu0
    %v3030 = vadd.f32 %v2296, %v3029
    %v3031 = vpop.f32.mrb[0].mxu0
    %v3032 = vpop.f32.mrb[0].mxu0
    %3033 = vdwg.mxu0
    %3034 = vmatprep.subr.bf16.mxu0 %v1486
    %3035 = vmatpush1.bf16.msra.mxu0 %v1485
    %3036 = vmatprep.subr.bf16.mxu0 %v1502
    %3037 = vmatpush1.bf16.msra.mxu0 %v1501
    %3038 = vmatprep.subr.bf16.mxu0 %v1518
    %3039 = vmatpush1.bf16.msra.mxu0 %v1517
    %3040 = vmatprep.subr.bf16.mxu0 %v1534
    %3041 = vmatpush1.bf16.msra.mxu0 %v1533
    %3042 = vmatprep.subr.bf16.mxu0 %v1550
    %3043 = vmatpush1.bf16.msra.mxu0 %v1549
    %3044 = vmatprep.subr.bf16.mxu0 %v1566
    %3045 = vmatpush1.bf16.msra.mxu0 %v1565
    %3046 = vmatprep.subr.bf16.mxu0 %v1582
    %3047 = vmatpush1.bf16.msra.mxu0 %v1581
    %3048 = vmatprep.subr.bf16.mxu0 %v1598
    %3049 = vmatpush1.bf16.msra.mxu0 %v1597
    %3050 = vmatprep.subr.bf16.mxu0 %v1614
    %3051 = vmatpush1.bf16.msra.mxu0 %v1613
    %3052 = vmatprep.subr.bf16.mxu0 %v1630
    %3053 = vmatpush1.bf16.msra.mxu0 %v1629
    %3054 = vmatprep.subr.bf16.mxu0 %v1646
    %3055 = vmatpush1.bf16.msra.mxu0 %v1645
    %3056 = vmatprep.subr.bf16.mxu0 %v1662
    %3057 = vmatpush1.bf16.msra.mxu0 %v1661
    %3058 = vmatprep.subr.bf16.mxu0 %v1678
    %3059 = vmatpush1.bf16.msra.mxu0 %v1677
    %3060 = vmatprep.subr.bf16.mxu0 %v1694
    %3061 = vmatpush1.bf16.msra.mxu0 %v1693
    %3062 = vmatprep.subr.bf16.mxu0 %v1710
    %3063 = vmatpush1.bf16.msra.mxu0 %v1709
    %3064 = vmatprep.subr.bf16.mxu0 %v1726
    %3065 = vmatpush1.bf16.msra.mxu0 %v1725
    %3066 = vmatprep.mubr.bf16.mxu0 %v2248
    %3067 = vmatmul.mubr.bf16.gmra.mrb[0].mxu0 %v2247
    %v3068 = vpop.f32.mrb[0].mxu0
    %v3069 = vadd.f32 %v3028, %v3068
    %v3070 = vpop.f32.mrb[0].mxu0
    %v3071 = vadd.f32 %v3030, %v3070
    %v3072 = vpop.f32.mrb[0].mxu0
    %v3073 = vpop.f32.mrb[0].mxu0
    %3074 = vdwg.mxu0
    %3075 = vmatprep.subr.bf16.mxu0 %v1742
    %3076 = vmatpush1.bf16.msra.mxu0 %v1741
    %3077 = vmatprep.subr.bf16.mxu0 %v1758
    %3078 = vmatpush1.bf16.msra.mxu0 %v1757
    %3079 = vmatprep.subr.bf16.mxu0 %v1774
    %3080 = vmatpush1.bf16.msra.mxu0 %v1773
    %3081 = vmatprep.subr.bf16.mxu0 %v1790
    %3082 = vmatpush1.bf16.msra.mxu0 %v1789
    %3083 = vmatprep.subr.bf16.mxu0 %v1806
    %3084 = vmatpush1.bf16.msra.mxu0 %v1805
    %3085 = vmatprep.subr.bf16.mxu0 %v1822
    %3086 = vmatpush1.bf16.msra.mxu0 %v1821
    %3087 = vmatprep.subr.bf16.mxu0 %v1838
    %3088 = vmatpush1.bf16.msra.mxu0 %v1837
    %3089 = vmatprep.subr.bf16.mxu0 %v1854
    %3090 = vmatpush1.bf16.msra.mxu0 %v1853
    %3091 = vmatprep.subr.bf16.mxu0 %v1870
    %3092 = vmatpush1.bf16.msra.mxu0 %v1869
    %3093 = vmatprep.subr.bf16.mxu0 %v1886
    %3094 = vmatpush1.bf16.msra.mxu0 %v1885
    %3095 = vmatprep.subr.bf16.mxu0 %v1902
    %3096 = vmatpush1.bf16.msra.mxu0 %v1901
    %3097 = vmatprep.subr.bf16.mxu0 %v1918
    %3098 = vmatpush1.bf16.msra.mxu0 %v1917
    %3099 = vmatprep.subr.bf16.mxu0 %v1934
    %3100 = vmatpush1.bf16.msra.mxu0 %v1933
    %3101 = vmatprep.subr.bf16.mxu0 %v1950
    %3102 = vmatpush1.bf16.msra.mxu0 %v1949
    %3103 = vmatprep.subr.bf16.mxu0 %v1966
    %3104 = vmatpush1.bf16.msra.mxu0 %v1965
    %3105 = vmatprep.subr.bf16.mxu0 %v1982
    %3106 = vmatpush1.bf16.msra.mxu0 %v1981
    %3107 = vmatprep.mubr.bf16.mxu0 %v2250
    %3108 = vmatmul.mubr.bf16.gmra.mrb[0].mxu0 %v2249
    %v3109 = vpop.f32.mrb[0].mxu0
    %v3110 = vadd.f32 %v3069, %v3109
    %v3111 = vpop.f32.mrb[0].mxu0
    %v3112 = vadd.f32 %v3071, %v3111
    %v3113 = vpop.f32.mrb[0].mxu0
    %v3114 = vpop.f32.mrb[0].mxu0
    %3115 = vdwg.mxu0
    %3116 = vmatprep.subr.bf16.mxu0 %v1998
    %3117 = vmatpush1.bf16.msra.mxu0 %v1997
    %3118 = vmatprep.subr.bf16.mxu0 %v2014
    %3119 = vmatpush1.bf16.msra.mxu0 %v2013
    %3120 = vmatprep.subr.bf16.mxu0 %v2030
    %3121 = vmatpush1.bf16.msra.mxu0 %v2029
    %3122 = vmatprep.subr.bf16.mxu0 %v2046
    %3123 = vmatpush1.bf16.msra.mxu0 %v2045
    %3124 = vmatprep.subr.bf16.mxu0 %v2062
    %3125 = vmatpush1.bf16.msra.mxu0 %v2061
    %3126 = vmatprep.subr.bf16.mxu0 %v2078
    %3127 = vmatpush1.bf16.msra.mxu0 %v2077
    %3128 = vmatprep.subr.bf16.mxu0 %v2094
    %3129 = vmatpush1.bf16.msra.mxu0 %v2093
    %3130 = vmatprep.subr.bf16.mxu0 %v2110
    %3131 = vmatpush1.bf16.msra.mxu0 %v2109
    %3132 = vmatprep.subr.bf16.mxu0 %v2126
    %3133 = vmatpush1.bf16.msra.mxu0 %v2125
    %3134 = vmatprep.subr.bf16.mxu0 %v2142
    %3135 = vmatpush1.bf16.msra.mxu0 %v2141
    %3136 = vmatprep.subr.bf16.mxu0 %v2158
    %3137 = vmatpush1.bf16.msra.mxu0 %v2157
    %3138 = vmatprep.subr.bf16.mxu0 %v2174
    %3139 = vmatpush1.bf16.msra.mxu0 %v2173
    %3140 = vmatprep.subr.bf16.mxu0 %v2190
    %3141 = vmatpush1.bf16.msra.mxu0 %v2189
    %3142 = vmatprep.subr.bf16.mxu0 %v2206
    %3143 = vmatpush1.bf16.msra.mxu0 %v2205
    %3144 = vmatprep.subr.bf16.mxu0 %v2222
    %3145 = vmatpush1.bf16.msra.mxu0 %v2221
    %3146 = vmatprep.subr.bf16.mxu0 %v2238
    %3147 = vmatpush1.bf16.msra.mxu0 %v2237
    %3148 = vmatprep.mubr.bf16.mxu0 %v2252
    %3149 = vmatmul.mubr.bf16.gmra.mrb[0].mxu0 %v2251
    %v3150 = vpop.f32.mrb[0].mxu0
    %v3151 = vadd.f32 %v3110, %v3150
    %v3152 = vpop.f32.mrb[0].mxu0
    %v3153 = vadd.f32 %v3112, %v3152
    %v3154 = vpop.f32.mrb[0].mxu0
    %v3155 = vpop.f32.mrb[0].mxu0
    %3156 = vdwg.mxu0
    %3157 = vmatprep.subr.bf16.mxu0 %v1232
    %3158 = vmatpush1.bf16.msra.mxu0 %v1231
    %3159 = vmatprep.subr.bf16.mxu0 %v1248
    %3160 = vmatpush1.bf16.msra.mxu0 %v1247
    %3161 = vmatprep.subr.bf16.mxu0 %v1264
    %3162 = vmatpush1.bf16.msra.mxu0 %v1263
    %3163 = vmatprep.subr.bf16.mxu0 %v1280
    %3164 = vmatpush1.bf16.msra.mxu0 %v1279
    %3165 = vmatprep.subr.bf16.mxu0 %v1296
    %3166 = vmatpush1.bf16.msra.mxu0 %v1295
    %3167 = vmatprep.subr.bf16.mxu0 %v1312
    %3168 = vmatpush1.bf16.msra.mxu0 %v1311
    %3169 = vmatprep.subr.bf16.mxu0 %v1328
    %3170 = vmatpush1.bf16.msra.mxu0 %v1327
    %3171 = vmatprep.subr.bf16.mxu0 %v1344
    %3172 = vmatpush1.bf16.msra.mxu0 %v1343
    %3173 = vmatprep.subr.bf16.mxu0 %v1360
    %3174 = vmatpush1.bf16.msra.mxu0 %v1359
    %3175 = vmatprep.subr.bf16.mxu0 %v1376
    %3176 = vmatpush1.bf16.msra.mxu0 %v1375
    %3177 = vmatprep.subr.bf16.mxu0 %v1392
    %3178 = vmatpush1.bf16.msra.mxu0 %v1391
    %3179 = vmatprep.subr.bf16.mxu0 %v1408
    %3180 = vmatpush1.bf16.msra.mxu0 %v1407
    %3181 = vmatprep.subr.bf16.mxu0 %v1424
    %3182 = vmatpush1.bf16.msra.mxu0 %v1423
    %3183 = vmatprep.subr.bf16.mxu0 %v1440
    %3184 = vmatpush1.bf16.msra.mxu0 %v1439
    %3185 = vmatprep.subr.bf16.mxu0 %v1456
    %3186 = vmatpush1.bf16.msra.mxu0 %v1455
    %3187 = vmatprep.subr.bf16.mxu0 %v1472
    %3188 = vmatpush1.bf16.msra.mxu0 %v1471
    %3189 = vmatprep.mubr.bf16.mxu0 %v2246
    %3190 = vmatmul.mubr.bf16.gmra.mrb[0].mxu0 %v2245
    %v3191 = vpop.f32.mrb[0].mxu0
    %v3192 = vadd.f32 %v2300, %v3191
    %v3193 = vpop.f32.mrb[0].mxu0
    %v3194 = vadd.f32 %v2304, %v3193
    %v3195 = vpop.f32.mrb[0].mxu0
    %v3196 = vpop.f32.mrb[0].mxu0
    %3197 = vdwg.mxu0
    %3198 = vmatprep.subr.bf16.mxu0 %v1488
    %3199 = vmatpush1.bf16.msra.mxu0 %v1487
    %3200 = vmatprep.subr.bf16.mxu0 %v1504
    %3201 = vmatpush1.bf16.msra.mxu0 %v1503
    %3202 = vmatprep.subr.bf16.mxu0 %v1520
    %3203 = vmatpush1.bf16.msra.mxu0 %v1519
    %3204 = vmatprep.subr.bf16.mxu0 %v1536
    %3205 = vmatpush1.bf16.msra.mxu0 %v1535
    %3206 = vmatprep.subr.bf16.mxu0 %v1552
    %3207 = vmatpush1.bf16.msra.mxu0 %v1551
    %3208 = vmatprep.subr.bf16.mxu0 %v1568
    %3209 = vmatpush1.bf16.msra.mxu0 %v1567
    %3210 = vmatprep.subr.bf16.mxu0 %v1584
    %3211 = vmatpush1.bf16.msra.mxu0 %v1583
    %3212 = vmatprep.subr.bf16.mxu0 %v1600
    %3213 = vmatpush1.bf16.msra.mxu0 %v1599
    %3214 = vmatprep.subr.bf16.mxu0 %v1616
    %3215 = vmatpush1.bf16.msra.mxu0 %v1615
    %3216 = vmatprep.subr.bf16.mxu0 %v1632
    %3217 = vmatpush1.bf16.msra.mxu0 %v1631
    %3218 = vmatprep.subr.bf16.mxu0 %v1648
    %3219 = vmatpush1.bf16.msra.mxu0 %v1647
    %3220 = vmatprep.subr.bf16.mxu0 %v1664
    %3221 = vmatpush1.bf16.msra.mxu0 %v1663
    %3222 = vmatprep.subr.bf16.mxu0 %v1680
    %3223 = vmatpush1.bf16.msra.mxu0 %v1679
    %3224 = vmatprep.subr.bf16.mxu0 %v1696
    %3225 = vmatpush1.bf16.msra.mxu0 %v1695
    %3226 = vmatprep.subr.bf16.mxu0 %v1712
    %3227 = vmatpush1.bf16.msra.mxu0 %v1711
    %3228 = vmatprep.subr.bf16.mxu0 %v1728
    %3229 = vmatpush1.bf16.msra.mxu0 %v1727
    %3230 = vmatprep.mubr.bf16.mxu0 %v2248
    %3231 = vmatmul.mubr.bf16.gmra.mrb[0].mxu0 %v2247
    %v3232 = vpop.f32.mrb[0].mxu0
    %v3233 = vadd.f32 %v3192, %v3232
    %v3234 = vpop.f32.mrb[0].mxu0
    %v3235 = vadd.f32 %v3194, %v3234
    %v3236 = vpop.f32.mrb[0].mxu0
    %v3237 = vpop.f32.mrb[0].mxu0
    %3238 = vdwg.mxu0
    %3239 = vmatprep.subr.bf16.mxu0 %v1744
    %3240 = vmatpush1.bf16.msra.mxu0 %v1743
    %3241 = vmatprep.subr.bf16.mxu0 %v1760
    %3242 = vmatpush1.bf16.msra.mxu0 %v1759
    %3243 = vmatprep.subr.bf16.mxu0 %v1776
    %3244 = vmatpush1.bf16.msra.mxu0 %v1775
    %3245 = vmatprep.subr.bf16.mxu0 %v1792
    %3246 = vmatpush1.bf16.msra.mxu0 %v1791
    %3247 = vmatprep.subr.bf16.mxu0 %v1808
    %3248 = vmatpush1.bf16.msra.mxu0 %v1807
    %3249 = vmatprep.subr.bf16.mxu0 %v1824
    %3250 = vmatpush1.bf16.msra.mxu0 %v1823
    %3251 = vmatprep.subr.bf16.mxu0 %v1840
    %3252 = vmatpush1.bf16.msra.mxu0 %v1839
    %3253 = vmatprep.subr.bf16.mxu0 %v1856
    %3254 = vmatpush1.bf16.msra.mxu0 %v1855
    %3255 = vmatprep.subr.bf16.mxu0 %v1872
    %3256 = vmatpush1.bf16.msra.mxu0 %v1871
    %3257 = vmatprep.subr.bf16.mxu0 %v1888
    %3258 = vmatpush1.bf16.msra.mxu0 %v1887
    %3259 = vmatprep.subr.bf16.mxu0 %v1904
    %3260 = vmatpush1.bf16.msra.mxu0 %v1903
    %3261 = vmatprep.subr.bf16.mxu0 %v1920
    %3262 = vmatpush1.bf16.msra.mxu0 %v1919
    %3263 = vmatprep.subr.bf16.mxu0 %v1936
    %3264 = vmatpush1.bf16.msra.mxu0 %v1935
    %3265 = vmatprep.subr.bf16.mxu0 %v1952
    %3266 = vmatpush1.bf16.msra.mxu0 %v1951
    %3267 = vmatprep.subr.bf16.mxu0 %v1968
    %3268 = vmatpush1.bf16.msra.mxu0 %v1967
    %3269 = vmatprep.subr.bf16.mxu0 %v1984
    %3270 = vmatpush1.bf16.msra.mxu0 %v1983
    %3271 = vmatprep.mubr.bf16.mxu0 %v2250
    %3272 = vmatmul.mubr.bf16.gmra.mrb[0].mxu0 %v2249
    %v3273 = vpop.f32.mrb[0].mxu0
    %v3274 = vadd.f32 %v3233, %v3273
    %v3275 = vpop.f32.mrb[0].mxu0
    %v3276 = vadd.f32 %v3235, %v3275
    %v3277 = vpop.f32.mrb[0].mxu0
    %v3278 = vpop.f32.mrb[0].mxu0
    %3279 = vdwg.mxu0
    %3280 = vmatprep.subr.bf16.mxu0 %v2000
    %3281 = vmatpush1.bf16.msra.mxu0 %v1999
    %3282 = vmatprep.subr.bf16.mxu0 %v2016
    %3283 = vmatpush1.bf16.msra.mxu0 %v2015
    %3284 = vmatprep.subr.bf16.mxu0 %v2032
    %3285 = vmatpush1.bf16.msra.mxu0 %v2031
    %3286 = vmatprep.subr.bf16.mxu0 %v2048
    %3287 = vmatpush1.bf16.msra.mxu0 %v2047
    %3288 = vmatprep.subr.bf16.mxu0 %v2064
    %3289 = vmatpush1.bf16.msra.mxu0 %v2063
    %3290 = vmatprep.subr.bf16.mxu0 %v2080
    %3291 = vmatpush1.bf16.msra.mxu0 %v2079
    %3292 = vmatprep.subr.bf16.mxu0 %v2096
    %3293 = vmatpush1.bf16.msra.mxu0 %v2095
    %3294 = vmatprep.subr.bf16.mxu0 %v2112
    %3295 = vmatpush1.bf16.msra.mxu0 %v2111
    %3296 = vmatprep.subr.bf16.mxu0 %v2128
    %3297 = vmatpush1.bf16.msra.mxu0 %v2127
    %3298 = vmatprep.subr.bf16.mxu0 %v2144
    %3299 = vmatpush1.bf16.msra.mxu0 %v2143
    %3300 = vmatprep.subr.bf16.mxu0 %v2160
    %3301 = vmatpush1.bf16.msra.mxu0 %v2159
    %3302 = vmatprep.subr.bf16.mxu0 %v2176
    %3303 = vmatpush1.bf16.msra.mxu0 %v2175
    %3304 = vmatprep.subr.bf16.mxu0 %v2192
    %3305 = vmatpush1.bf16.msra.mxu0 %v2191
    %3306 = vmatprep.subr.bf16.mxu0 %v2208
    %3307 = vmatpush1.bf16.msra.mxu0 %v2207
    %3308 = vmatprep.subr.bf16.mxu0 %v2224
    %3309 = vmatpush1.bf16.msra.mxu0 %v2223
    %3310 = vmatprep.subr.bf16.mxu0 %v2240
    %3311 = vmatpush1.bf16.msra.mxu0 %v2239
    %3312 = vmatprep.mubr.bf16.mxu0 %v2252
    %3313 = vmatmul.mubr.bf16.gmra.mrb[0].mxu0 %v2251
    %v3314 = vpop.f32.mrb[0].mxu0
    %v3315 = vadd.f32 %v3274, %v3314
    %v3316 = vpop.f32.mrb[0].mxu0
    %v3317 = vadd.f32 %v3276, %v3316
    %v3318 = vpop.f32.mrb[0].mxu0
    %v3319 = vpop.f32.mrb[0].mxu0
    %3320 = vdwg.mxu0
    %3321 = vmatprep.subr.bf16.mxu0 %v1234
    %3322 = vmatpush1.bf16.msra.mxu0 %v1233
    %3323 = vmatprep.subr.bf16.mxu0 %v1250
    %3324 = vmatpush1.bf16.msra.mxu0 %v1249
    %3325 = vmatprep.subr.bf16.mxu0 %v1266
    %3326 = vmatpush1.bf16.msra.mxu0 %v1265
    %3327 = vmatprep.subr.bf16.mxu0 %v1282
    %3328 = vmatpush1.bf16.msra.mxu0 %v1281
    %3329 = vmatprep.subr.bf16.mxu0 %v1298
    %3330 = vmatpush1.bf16.msra.mxu0 %v1297
    %3331 = vmatprep.subr.bf16.mxu0 %v1314
    %3332 = vmatpush1.bf16.msra.mxu0 %v1313
    %3333 = vmatprep.subr.bf16.mxu0 %v1330
    %3334 = vmatpush1.bf16.msra.mxu0 %v1329
    %3335 = vmatprep.subr.bf16.mxu0 %v1346
    %3336 = vmatpush1.bf16.msra.mxu0 %v1345
    %3337 = vmatprep.subr.bf16.mxu0 %v1362
    %3338 = vmatpush1.bf16.msra.mxu0 %v1361
    %3339 = vmatprep.subr.bf16.mxu0 %v1378
    %3340 = vmatpush1.bf16.msra.mxu0 %v1377
    %3341 = vmatprep.subr.bf16.mxu0 %v1394
    %3342 = vmatpush1.bf16.msra.mxu0 %v1393
    %3343 = vmatprep.subr.bf16.mxu0 %v1410
    %3344 = vmatpush1.bf16.msra.mxu0 %v1409
    %3345 = vmatprep.subr.bf16.mxu0 %v1426
    %3346 = vmatpush1.bf16.msra.mxu0 %v1425
    %3347 = vmatprep.subr.bf16.mxu0 %v1442
    %3348 = vmatpush1.bf16.msra.mxu0 %v1441
    %3349 = vmatprep.subr.bf16.mxu0 %v1458
    %3350 = vmatpush1.bf16.msra.mxu0 %v1457
    %3351 = vmatprep.subr.bf16.mxu0 %v1474
    %3352 = vmatpush1.bf16.msra.mxu0 %v1473
    %3353 = vmatprep.mubr.bf16.mxu0 %v2246
    %3354 = vmatmul.mubr.bf16.gmra.mrb[0].mxu0 %v2245
    %v3355 = vpop.f32.mrb[0].mxu0
    %v3356 = vadd.f32 %v2308, %v3355
    %v3357 = vpop.f32.mrb[0].mxu0
    %v3358 = vadd.f32 %v2312, %v3357
    %v3359 = vpop.f32.mrb[0].mxu0
    %v3360 = vpop.f32.mrb[0].mxu0
    %3361 = vdwg.mxu0
    %3362 = vmatprep.subr.bf16.mxu0 %v1490
    %3363 = vmatpush1.bf16.msra.mxu0 %v1489
    %3364 = vmatprep.subr.bf16.mxu0 %v1506
    %3365 = vmatpush1.bf16.msra.mxu0 %v1505
    %3366 = vmatprep.subr.bf16.mxu0 %v1522
    %3367 = vmatpush1.bf16.msra.mxu0 %v1521
    %3368 = vmatprep.subr.bf16.mxu0 %v1538
    %3369 = vmatpush1.bf16.msra.mxu0 %v1537
    %3370 = vmatprep.subr.bf16.mxu0 %v1554
    %3371 = vmatpush1.bf16.msra.mxu0 %v1553
    %3372 = vmatprep.subr.bf16.mxu0 %v1570
    %3373 = vmatpush1.bf16.msra.mxu0 %v1569
    %3374 = vmatprep.subr.bf16.mxu0 %v1586
    %3375 = vmatpush1.bf16.msra.mxu0 %v1585
    %3376 = vmatprep.subr.bf16.mxu0 %v1602
    %3377 = vmatpush1.bf16.msra.mxu0 %v1601
    %3378 = vmatprep.subr.bf16.mxu0 %v1618
    %3379 = vmatpush1.bf16.msra.mxu0 %v1617
    %3380 = vmatprep.subr.bf16.mxu0 %v1634
    %3381 = vmatpush1.bf16.msra.mxu0 %v1633
    %3382 = vmatprep.subr.bf16.mxu0 %v1650
    %3383 = vmatpush1.bf16.msra.mxu0 %v1649
    %3384 = vmatprep.subr.bf16.mxu0 %v1666
    %3385 = vmatpush1.bf16.msra.mxu0 %v1665
    %3386 = vmatprep.subr.bf16.mxu0 %v1682
    %3387 = vmatpush1.bf16.msra.mxu0 %v1681
    %3388 = vmatprep.subr.bf16.mxu0 %v1698
    %3389 = vmatpush1.bf16.msra.mxu0 %v1697
    %3390 = vmatprep.subr.bf16.mxu0 %v1714
    %3391 = vmatpush1.bf16.msra.mxu0 %v1713
    %3392 = vmatprep.subr.bf16.mxu0 %v1730
    %3393 = vmatpush1.bf16.msra.mxu0 %v1729
    %3394 = vmatprep.mubr.bf16.mxu0 %v2248
    %3395 = vmatmul.mubr.bf16.gmra.mrb[0].mxu0 %v2247
    %v3396 = vpop.f32.mrb[0].mxu0
    %v3397 = vadd.f32 %v3356, %v3396
    %v3398 = vpop.f32.mrb[0].mxu0
    %v3399 = vadd.f32 %v3358, %v3398
    %v3400 = vpop.f32.mrb[0].mxu0
    %v3401 = vpop.f32.mrb[0].mxu0
    %3402 = vdwg.mxu0
    %3403 = vmatprep.subr.bf16.mxu0 %v1746
    %3404 = vmatpush1.bf16.msra.mxu0 %v1745
    %3405 = vmatprep.subr.bf16.mxu0 %v1762
    %3406 = vmatpush1.bf16.msra.mxu0 %v1761
    %3407 = vmatprep.subr.bf16.mxu0 %v1778
    %3408 = vmatpush1.bf16.msra.mxu0 %v1777
    %3409 = vmatprep.subr.bf16.mxu0 %v1794
    %3410 = vmatpush1.bf16.msra.mxu0 %v1793
    %3411 = vmatprep.subr.bf16.mxu0 %v1810
    %3412 = vmatpush1.bf16.msra.mxu0 %v1809
    %3413 = vmatprep.subr.bf16.mxu0 %v1826
    %3414 = vmatpush1.bf16.msra.mxu0 %v1825
    %3415 = vmatprep.subr.bf16.mxu0 %v1842
    %3416 = vmatpush1.bf16.msra.mxu0 %v1841
    %3417 = vmatprep.subr.bf16.mxu0 %v1858
    %3418 = vmatpush1.bf16.msra.mxu0 %v1857
    %3419 = vmatprep.subr.bf16.mxu0 %v1874
    %3420 = vmatpush1.bf16.msra.mxu0 %v1873
    %3421 = vmatprep.subr.bf16.mxu0 %v1890
    %3422 = vmatpush1.bf16.msra.mxu0 %v1889
    %3423 = vmatprep.subr.bf16.mxu0 %v1906
    %3424 = vmatpush1.bf16.msra.mxu0 %v1905
    %3425 = vmatprep.subr.bf16.mxu0 %v1922
    %3426 = vmatpush1.bf16.msra.mxu0 %v1921
    %3427 = vmatprep.subr.bf16.mxu0 %v1938
    %3428 = vmatpush1.bf16.msra.mxu0 %v1937
    %3429 = vmatprep.subr.bf16.mxu0 %v1954
    %3430 = vmatpush1.bf16.msra.mxu0 %v1953
    %3431 = vmatprep.subr.bf16.mxu0 %v1970
    %3432 = vmatpush1.bf16.msra.mxu0 %v1969
    %3433 = vmatprep.subr.bf16.mxu0 %v1986
    %3434 = vmatpush1.bf16.msra.mxu0 %v1985
    %3435 = vmatprep.mubr.bf16.mxu0 %v2250
    %3436 = vmatmul.mubr.bf16.gmra.mrb[0].mxu0 %v2249
    %v3437 = vpop.f32.mrb[0].mxu0
    %v3438 = vadd.f32 %v3397, %v3437
    %v3439 = vpop.f32.mrb[0].mxu0
    %v3440 = vadd.f32 %v3399, %v3439
    %v3441 = vpop.f32.mrb[0].mxu0
    %v3442 = vpop.f32.mrb[0].mxu0
    %3443 = vdwg.mxu0
    %3444 = vmatprep.subr.bf16.mxu0 %v2002
    %3445 = vmatpush1.bf16.msra.mxu0 %v2001
    %3446 = vmatprep.subr.bf16.mxu0 %v2018
    %3447 = vmatpush1.bf16.msra.mxu0 %v2017
    %3448 = vmatprep.subr.bf16.mxu0 %v2034
    %3449 = vmatpush1.bf16.msra.mxu0 %v2033
    %3450 = vmatprep.subr.bf16.mxu0 %v2050
    %3451 = vmatpush1.bf16.msra.mxu0 %v2049
    %3452 = vmatprep.subr.bf16.mxu0 %v2066
    %3453 = vmatpush1.bf16.msra.mxu0 %v2065
    %3454 = vmatprep.subr.bf16.mxu0 %v2082
    %3455 = vmatpush1.bf16.msra.mxu0 %v2081
    %3456 = vmatprep.subr.bf16.mxu0 %v2098
    %3457 = vmatpush1.bf16.msra.mxu0 %v2097
    %3458 = vmatprep.subr.bf16.mxu0 %v2114
    %3459 = vmatpush1.bf16.msra.mxu0 %v2113
    %3460 = vmatprep.subr.bf16.mxu0 %v2130
    %3461 = vmatpush1.bf16.msra.mxu0 %v2129
    %3462 = vmatprep.subr.bf16.mxu0 %v2146
    %3463 = vmatpush1.bf16.msra.mxu0 %v2145
    %3464 = vmatprep.subr.bf16.mxu0 %v2162
    %3465 = vmatpush1.bf16.msra.mxu0 %v2161
    %3466 = vmatprep.subr.bf16.mxu0 %v2178
    %3467 = vmatpush1.bf16.msra.mxu0 %v2177
    %3468 = vmatprep.subr.bf16.mxu0 %v2194
    %3469 = vmatpush1.bf16.msra.mxu0 %v2193
    %3470 = vmatprep.subr.bf16.mxu0 %v2210
    %3471 = vmatpush1.bf16.msra.mxu0 %v2209
    %3472 = vmatprep.subr.bf16.mxu0 %v2226
    %3473 = vmatpush1.bf16.msra.mxu0 %v2225
    %3474 = vmatprep.subr.bf16.mxu0 %v2242
    %3475 = vmatpush1.bf16.msra.mxu0 %v2241
    %3476 = vmatprep.mubr.bf16.mxu0 %v2252
    %3477 = vmatmul.mubr.bf16.gmra.mrb[0].mxu0 %v2251
    %v3478 = vpop.f32.mrb[0].mxu0
    %v3479 = vadd.f32 %v3438, %v3478
    %v3480 = vpop.f32.mrb[0].mxu0
    %v3481 = vadd.f32 %v3440, %v3480
    %v3482 = vpop.f32.mrb[0].mxu0
    %v3483 = vpop.f32.mrb[0].mxu0
    %3484 = vdwg.mxu0
    %3485 = vmatprep.subr.bf16.mxu0 %v1236
    %3486 = vmatpush1.bf16.msra.mxu0 %v1235
    %3487 = vmatprep.subr.bf16.mxu0 %v1252
    %3488 = vmatpush1.bf16.msra.mxu0 %v1251
    %3489 = vmatprep.subr.bf16.mxu0 %v1268
    %3490 = vmatpush1.bf16.msra.mxu0 %v1267
    %3491 = vmatprep.subr.bf16.mxu0 %v1284
    %3492 = vmatpush1.bf16.msra.mxu0 %v1283
    %3493 = vmatprep.subr.bf16.mxu0 %v1300
    %3494 = vmatpush1.bf16.msra.mxu0 %v1299
    %3495 = vmatprep.subr.bf16.mxu0 %v1316
    %3496 = vmatpush1.bf16.msra.mxu0 %v1315
    %3497 = vmatprep.subr.bf16.mxu0 %v1332
    %3498 = vmatpush1.bf16.msra.mxu0 %v1331
    %3499 = vmatprep.subr.bf16.mxu0 %v1348
    %3500 = vmatpush1.bf16.msra.mxu0 %v1347
    %3501 = vmatprep.subr.bf16.mxu0 %v1364
    %3502 = vmatpush1.bf16.msra.mxu0 %v1363
    %3503 = vmatprep.subr.bf16.mxu0 %v1380
    %3504 = vmatpush1.bf16.msra.mxu0 %v1379
    %3505 = vmatprep.subr.bf16.mxu0 %v1396
    %3506 = vmatpush1.bf16.msra.mxu0 %v1395
    %3507 = vmatprep.subr.bf16.mxu0 %v1412
    %3508 = vmatpush1.bf16.msra.mxu0 %v1411
    %3509 = vmatprep.subr.bf16.mxu0 %v1428
    %3510 = vmatpush1.bf16.msra.mxu0 %v1427
    %3511 = vmatprep.subr.bf16.mxu0 %v1444
    %3512 = vmatpush1.bf16.msra.mxu0 %v1443
    %3513 = vmatprep.subr.bf16.mxu0 %v1460
    %3514 = vmatpush1.bf16.msra.mxu0 %v1459
    %3515 = vmatprep.subr.bf16.mxu0 %v1476
    %3516 = vmatpush1.bf16.msra.mxu0 %v1475
    %3517 = vmatprep.mubr.bf16.mxu0 %v2246
    %3518 = vmatmul.mubr.bf16.gmra.mrb[0].mxu0 %v2245
    %v3519 = vpop.f32.mrb[0].mxu0
    %v3520 = vadd.f32 %v2316, %v3519
    %v3521 = vpop.f32.mrb[0].mxu0
    %v3522 = vadd.f32 %v2320, %v3521
    %v3523 = vpop.f32.mrb[0].mxu0
    %v3524 = vpop.f32.mrb[0].mxu0
    %3525 = vdwg.mxu0
    %3526 = vmatprep.subr.bf16.mxu0 %v1492
    %3527 = vmatpush1.bf16.msra.mxu0 %v1491
    %3528 = vmatprep.subr.bf16.mxu0 %v1508
    %3529 = vmatpush1.bf16.msra.mxu0 %v1507
    %3530 = vmatprep.subr.bf16.mxu0 %v1524
    %3531 = vmatpush1.bf16.msra.mxu0 %v1523
    %3532 = vmatprep.subr.bf16.mxu0 %v1540
    %3533 = vmatpush1.bf16.msra.mxu0 %v1539
    %3534 = vmatprep.subr.bf16.mxu0 %v1556
    %3535 = vmatpush1.bf16.msra.mxu0 %v1555
    %3536 = vmatprep.subr.bf16.mxu0 %v1572
    %3537 = vmatpush1.bf16.msra.mxu0 %v1571
    %3538 = vmatprep.subr.bf16.mxu0 %v1588
    %3539 = vmatpush1.bf16.msra.mxu0 %v1587
    %3540 = vmatprep.subr.bf16.mxu0 %v1604
    %3541 = vmatpush1.bf16.msra.mxu0 %v1603
    %3542 = vmatprep.subr.bf16.mxu0 %v1620
    %3543 = vmatpush1.bf16.msra.mxu0 %v1619
    %3544 = vmatprep.subr.bf16.mxu0 %v1636
    %3545 = vmatpush1.bf16.msra.mxu0 %v1635
    %3546 = vmatprep.subr.bf16.mxu0 %v1652
    %3547 = vmatpush1.bf16.msra.mxu0 %v1651
    %3548 = vmatprep.subr.bf16.mxu0 %v1668
    %3549 = vmatpush1.bf16.msra.mxu0 %v1667
    %3550 = vmatprep.subr.bf16.mxu0 %v1684
    %3551 = vmatpush1.bf16.msra.mxu0 %v1683
    %3552 = vmatprep.subr.bf16.mxu0 %v1700
    %3553 = vmatpush1.bf16.msra.mxu0 %v1699
    %3554 = vmatprep.subr.bf16.mxu0 %v1716
    %3555 = vmatpush1.bf16.msra.mxu0 %v1715
    %3556 = vmatprep.subr.bf16.mxu0 %v1732
    %3557 = vmatpush1.bf16.msra.mxu0 %v1731
    %3558 = vmatprep.mubr.bf16.mxu0 %v2248
    %3559 = vmatmul.mubr.bf16.gmra.mrb[0].mxu0 %v2247
    %v3560 = vpop.f32.mrb[0].mxu0
    %v3561 = vadd.f32 %v3520, %v3560
    %v3562 = vpop.f32.mrb[0].mxu0
    %v3563 = vadd.f32 %v3522, %v3562
    %v3564 = vpop.f32.mrb[0].mxu0
    %v3565 = vpop.f32.mrb[0].mxu0
    %3566 = vdwg.mxu0
    %3567 = vmatprep.subr.bf16.mxu0 %v1748
    %3568 = vmatpush1.bf16.msra.mxu0 %v1747
    %3569 = vmatprep.subr.bf16.mxu0 %v1764
    %3570 = vmatpush1.bf16.msra.mxu0 %v1763
    %3571 = vmatprep.subr.bf16.mxu0 %v1780
    %3572 = vmatpush1.bf16.msra.mxu0 %v1779
    %3573 = vmatprep.subr.bf16.mxu0 %v1796
    %3574 = vmatpush1.bf16.msra.mxu0 %v1795
    %3575 = vmatprep.subr.bf16.mxu0 %v1812
    %3576 = vmatpush1.bf16.msra.mxu0 %v1811
    %3577 = vmatprep.subr.bf16.mxu0 %v1828
    %3578 = vmatpush1.bf16.msra.mxu0 %v1827
    %3579 = vmatprep.subr.bf16.mxu0 %v1844
    %3580 = vmatpush1.bf16.msra.mxu0 %v1843
    %3581 = vmatprep.subr.bf16.mxu0 %v1860
    %3582 = vmatpush1.bf16.msra.mxu0 %v1859
    %3583 = vmatprep.subr.bf16.mxu0 %v1876
    %3584 = vmatpush1.bf16.msra.mxu0 %v1875
    %3585 = vmatprep.subr.bf16.mxu0 %v1892
    %3586 = vmatpush1.bf16.msra.mxu0 %v1891
    %3587 = vmatprep.subr.bf16.mxu0 %v1908
    %3588 = vmatpush1.bf16.msra.mxu0 %v1907
    %3589 = vmatprep.subr.bf16.mxu0 %v1924
    %3590 = vmatpush1.bf16.msra.mxu0 %v1923
    %3591 = vmatprep.subr.bf16.mxu0 %v1940
    %3592 = vmatpush1.bf16.msra.mxu0 %v1939
    %3593 = vmatprep.subr.bf16.mxu0 %v1956
    %3594 = vmatpush1.bf16.msra.mxu0 %v1955
    %3595 = vmatprep.subr.bf16.mxu0 %v1972
    %3596 = vmatpush1.bf16.msra.mxu0 %v1971
    %3597 = vmatprep.subr.bf16.mxu0 %v1988
    %3598 = vmatpush1.bf16.msra.mxu0 %v1987
    %3599 = vmatprep.mubr.bf16.mxu0 %v2250
    %3600 = vmatmul.mubr.bf16.gmra.mrb[0].mxu0 %v2249
    %v3601 = vpop.f32.mrb[0].mxu0
    %v3602 = vadd.f32 %v3561, %v3601
    %v3603 = vpop.f32.mrb[0].mxu0
    %v3604 = vadd.f32 %v3563, %v3603
    %v3605 = vpop.f32.mrb[0].mxu0
    %v3606 = vpop.f32.mrb[0].mxu0
    %3607 = vdwg.mxu0
    %3608 = vmatprep.subr.bf16.mxu0 %v2004
    %3609 = vmatpush1.bf16.msra.mxu0 %v2003
    %3610 = vmatprep.subr.bf16.mxu0 %v2020
    %3611 = vmatpush1.bf16.msra.mxu0 %v2019
    %3612 = vmatprep.subr.bf16.mxu0 %v2036
    %3613 = vmatpush1.bf16.msra.mxu0 %v2035
    %3614 = vmatprep.subr.bf16.mxu0 %v2052
    %3615 = vmatpush1.bf16.msra.mxu0 %v2051
    %3616 = vmatprep.subr.bf16.mxu0 %v2068
    %3617 = vmatpush1.bf16.msra.mxu0 %v2067
    %3618 = vmatprep.subr.bf16.mxu0 %v2084
    %3619 = vmatpush1.bf16.msra.mxu0 %v2083
    %3620 = vmatprep.subr.bf16.mxu0 %v2100
    %3621 = vmatpush1.bf16.msra.mxu0 %v2099
    %3622 = vmatprep.subr.bf16.mxu0 %v2116
    %3623 = vmatpush1.bf16.msra.mxu0 %v2115
    %3624 = vmatprep.subr.bf16.mxu0 %v2132
    %3625 = vmatpush1.bf16.msra.mxu0 %v2131
    %3626 = vmatprep.subr.bf16.mxu0 %v2148
    %3627 = vmatpush1.bf16.msra.mxu0 %v2147
    %3628 = vmatprep.subr.bf16.mxu0 %v2164
    %3629 = vmatpush1.bf16.msra.mxu0 %v2163
    %3630 = vmatprep.subr.bf16.mxu0 %v2180
    %3631 = vmatpush1.bf16.msra.mxu0 %v2179
    %3632 = vmatprep.subr.bf16.mxu0 %v2196
    %3633 = vmatpush1.bf16.msra.mxu0 %v2195
    %3634 = vmatprep.subr.bf16.mxu0 %v2212
    %3635 = vmatpush1.bf16.msra.mxu0 %v2211
    %3636 = vmatprep.subr.bf16.mxu0 %v2228
    %3637 = vmatpush1.bf16.msra.mxu0 %v2227
    %3638 = vmatprep.subr.bf16.mxu0 %v2244
    %3639 = vmatpush1.bf16.msra.mxu0 %v2243
    %3640 = vmatprep.mubr.bf16.mxu0 %v2252
    %3641 = vmatmul.mubr.bf16.gmra.mrb[0].mxu0 %v2251
    %v3642 = vpop.f32.mrb[0].mxu0
    %v3643 = vadd.f32 %v3602, %v3642
    %v3644 = vpop.f32.mrb[0].mxu0
    %v3645 = vadd.f32 %v3604, %v3644
    %v3646 = vpop.f32.mrb[0].mxu0
    %v3647 = vpop.f32.mrb[0].mxu0
    %3648 = vdwg.mxu0
    %v3649 = vand.u32 2147483647, %v2495
    %v3650 = vand.u32 2147483647, %v2497
    %v3651 = vand.u32 2147483647, %v2659
    %v3652 = vand.u32 2147483647, %v2661
    %v3653 = vand.u32 2147483647, %v2823
    %v3654 = vand.u32 2147483647, %v2825
    %v3655 = vand.u32 2147483647, %v2987
    %v3656 = vand.u32 2147483647, %v2989
    %v3657 = vand.u32 2147483647, %v3151
    %v3658 = vand.u32 2147483647, %v3153
    %v3659 = vand.u32 2147483647, %v3315
    %v3660 = vand.u32 2147483647, %v3317
    %v3661 = vand.u32 2147483647, %v3479
    %v3662 = vand.u32 2147483647, %v3481
    %v3663 = vand.u32 2147483647, %v3643
    %v3664 = vand.u32 2147483647, %v3645
    %v3665 = vadd.f32 %v3649, 1.0
    %v3666 = vadd.f32 %v3650, 1.0
    %v3667 = vadd.f32 %v3651, 1.0
    %v3668 = vadd.f32 %v3652, 1.0
    %v3669 = vadd.f32 %v3653, 1.0
    %v3670 = vadd.f32 %v3654, 1.0
    %v3671 = vadd.f32 %v3655, 1.0
    %v3672 = vadd.f32 %v3656, 1.0
    %v3673 = vadd.f32 %v3657, 1.0
    %v3674 = vadd.f32 %v3658, 1.0
    %v3675 = vadd.f32 %v3659, 1.0
    %v3676 = vadd.f32 %v3660, 1.0
    %v3677 = vadd.f32 %v3661, 1.0
    %v3678 = vadd.f32 %v3662, 1.0
    %v3679 = vadd.f32 %v3663, 1.0
    %v3680 = vadd.f32 %v3664, 1.0
    %v3681 = vrcp.pop %v3665
    %v3682 = vrcp.pop %v3666
    %v3683 = vrcp.pop %v3667
    %v3684 = vrcp.pop %v3668
    %v3685 = vrcp.pop %v3669
    %v3686 = vrcp.pop %v3670
    %v3687 = vrcp.pop %v3671
    %v3688 = vrcp.pop %v3672
    %v3689 = vrcp.pop %v3673
    %v3690 = vrcp.pop %v3674
    %v3691 = vrcp.pop %v3675
    %v3692 = vrcp.pop %v3676
    %v3693 = vrcp.pop %v3677
    %v3694 = vrcp.pop %v3678
    %v3695 = vrcp.pop %v3679
    %v3696 = vrcp.pop %v3680
    %v3697 = vmul.f32 %v2495, %v3681
    %v3698 = vmul.f32 %v2497, %v3682
    %v3699 = vmul.f32 %v2659, %v3683
    %v3700 = vmul.f32 %v2661, %v3684
    %v3701 = vmul.f32 %v2823, %v3685
    %v3702 = vmul.f32 %v2825, %v3686
    %v3703 = vmul.f32 %v2987, %v3687
    %v3704 = vmul.f32 %v2989, %v3688
    %v3705 = vmul.f32 %v3151, %v3689
    %v3706 = vmul.f32 %v3153, %v3690
    %v3707 = vmul.f32 %v3315, %v3691
    %v3708 = vmul.f32 %v3317, %v3692
    %v3709 = vmul.f32 %v3479, %v3693
    %v3710 = vmul.f32 %v3481, %v3694
    %v3711 = vmul.f32 %v3643, %v3695
    %v3712 = vmul.f32 %v3645, %v3696
    %s3713 = smul.u32 4, 256
    %s3714 = smul.u32 %s3713, 4
    %s3715 = sshll.u32 %s3714, 4
    %3716 = dma.done %s127, %s3715
    %v3717 = vld [vmem:[#allocation3] sm:$0xff]
    %v3718 = vld [vmem:[#allocation3 + $0x8] sm:$0xff]
    %v3719 = vld [vmem:[#allocation3 + $0x10] sm:$0xff]
    %v3720 = vld [vmem:[#allocation3 + $0x18] sm:$0xff]
    %v3721 = vld [vmem:[#allocation3 + $0x20] sm:$0xff]
    %v3722 = vld [vmem:[#allocation3 + $0x28] sm:$0xff]
    %v3723 = vld [vmem:[#allocation3 + $0x30] sm:$0xff]
    %v3724 = vld [vmem:[#allocation3 + $0x38] sm:$0xff]
    %v3725 = vld [vmem:[#allocation3 + $0x40] sm:$0xff]
    %v3726 = vld [vmem:[#allocation3 + $0x48] sm:$0xff]
    %v3727 = vld [vmem:[#allocation3 + $0x50] sm:$0xff]
    %v3728 = vld [vmem:[#allocation3 + $0x58] sm:$0xff]
    %v3729 = vld [vmem:[#allocation3 + $0x60] sm:$0xff]
    %v3730 = vld [vmem:[#allocation3 + $0x68] sm:$0xff]
    %v3731 = vld [vmem:[#allocation3 + $0x70] sm:$0xff]
    %v3732 = vld [vmem:[#allocation3 + $0x78] sm:$0xff]
    %v3733 = vld [vmem:[#allocation3 + $0x80] sm:$0xff]
    %v3734 = vld [vmem:[#allocation3 + $0x88] sm:$0xff]
    %v3735 = vld [vmem:[#allocation3 + $0x90] sm:$0xff]
    %v3736 = vld [vmem:[#allocation3 + $0x98] sm:$0xff]
    %v3737 = vld [vmem:[#allocation3 + $0xa0] sm:$0xff]
    %v3738 = vld [vmem:[#allocation3 + $0xa8] sm:$0xff]
    %v3739 = vld [vmem:[#allocation3 + $0xb0] sm:$0xff]
    %v3740 = vld [vmem:[#allocation3 + $0xb8] sm:$0xff]
    %v3741 = vld [vmem:[#allocation3 + $0xc0] sm:$0xff]
    %v3742 = vld [vmem:[#allocation3 + $0xc8] sm:$0xff]
    %v3743 = vld [vmem:[#allocation3 + $0xd0] sm:$0xff]
    %v3744 = vld [vmem:[#allocation3 + $0xd8] sm:$0xff]
    %v3745 = vld [vmem:[#allocation3 + $0xe0] sm:$0xff]
    %v3746 = vld [vmem:[#allocation3 + $0xe8] sm:$0xff]
    %v3747 = vld [vmem:[#allocation3 + $0xf0] sm:$0xff]
    %v3748 = vld [vmem:[#allocation3 + $0xf8] sm:$0xff]
    %v3749 = vld [vmem:[#allocation3 + $0x100] sm:$0xff]
    %v3750 = vld [vmem:[#allocation3 + $0x108] sm:$0xff]
    %v3751 = vld [vmem:[#allocation3 + $0x110] sm:$0xff]
    %v3752 = vld [vmem:[#allocation3 + $0x118] sm:$0xff]
    %v3753 = vld [vmem:[#allocation3 + $0x120] sm:$0xff]
    %v3754 = vld [vmem:[#allocation3 + $0x128] sm:$0xff]
    %v3755 = vld [vmem:[#allocation3 + $0x130] sm:$0xff]
    %v3756 = vld [vmem:[#allocation3 + $0x138] sm:$0xff]
    %v3757 = vld [vmem:[#allocation3 + $0x140] sm:$0xff]
    %v3758 = vld [vmem:[#allocation3 + $0x148] sm:$0xff]
    %v3759 = vld [vmem:[#allocation3 + $0x150] sm:$0xff]
    %v3760 = vld [vmem:[#allocation3 + $0x158] sm:$0xff]
    %v3761 = vld [vmem:[#allocation3 + $0x160] sm:$0xff]
    %v3762 = vld [vmem:[#allocation3 + $0x168] sm:$0xff]
    %v3763 = vld [vmem:[#allocation3 + $0x170] sm:$0xff]
    %v3764 = vld [vmem:[#allocation3 + $0x178] sm:$0xff]
    %v3765 = vld [vmem:[#allocation3 + $0x180] sm:$0xff]
    %v3766 = vld [vmem:[#allocation3 + $0x188] sm:$0xff]
    %v3767 = vld [vmem:[#allocation3 + $0x190] sm:$0xff]
    %v3768 = vld [vmem:[#allocation3 + $0x198] sm:$0xff]
    %v3769 = vld [vmem:[#allocation3 + $0x1a0] sm:$0xff]
    %v3770 = vld [vmem:[#allocation3 + $0x1a8] sm:$0xff]
    %v3771 = vld [vmem:[#allocation3 + $0x1b0] sm:$0xff]
    %v3772 = vld [vmem:[#allocation3 + $0x1b8] sm:$0xff]
    %v3773 = vld [vmem:[#allocation3 + $0x1c0] sm:$0xff]
    %v3774 = vld [vmem:[#allocation3 + $0x1c8] sm:$0xff]
    %v3775 = vld [vmem:[#allocation3 + $0x1d0] sm:$0xff]
    %v3776 = vld [vmem:[#allocation3 + $0x1d8] sm:$0xff]
    %v3777 = vld [vmem:[#allocation3 + $0x1e0] sm:$0xff]
    %v3778 = vld [vmem:[#allocation3 + $0x1e8] sm:$0xff]
    %v3779 = vld [vmem:[#allocation3 + $0x1f0] sm:$0xff]
    %v3780 = vld [vmem:[#allocation3 + $0x1f8] sm:$0xff]
    %v3781 = vld [vmem:[#allocation3 + $0x200] sm:$0xff]
    %v3782 = vld [vmem:[#allocation3 + $0x208] sm:$0xff]
    %v3783 = vld [vmem:[#allocation3 + $0x210] sm:$0xff]
    %v3784 = vld [vmem:[#allocation3 + $0x218] sm:$0xff]
    %v3785 = vld [vmem:[#allocation3 + $0x220] sm:$0xff]
    %v3786 = vld [vmem:[#allocation3 + $0x228] sm:$0xff]
    %v3787 = vld [vmem:[#allocation3 + $0x230] sm:$0xff]
    %v3788 = vld [vmem:[#allocation3 + $0x238] sm:$0xff]
    %v3789 = vld [vmem:[#allocation3 + $0x240] sm:$0xff]
    %v3790 = vld [vmem:[#allocation3 + $0x248] sm:$0xff]
    %v3791 = vld [vmem:[#allocation3 + $0x250] sm:$0xff]
    %v3792 = vld [vmem:[#allocation3 + $0x258] sm:$0xff]
    %v3793 = vld [vmem:[#allocation3 + $0x260] sm:$0xff]
    %v3794 = vld [vmem:[#allocation3 + $0x268] sm:$0xff]
    %v3795 = vld [vmem:[#allocation3 + $0x270] sm:$0xff]
    %v3796 = vld [vmem:[#allocation3 + $0x278] sm:$0xff]
    %v3797 = vld [vmem:[#allocation3 + $0x280] sm:$0xff]
    %v3798 = vld [vmem:[#allocation3 + $0x288] sm:$0xff]
    %v3799 = vld [vmem:[#allocation3 + $0x290] sm:$0xff]
    %v3800 = vld [vmem:[#allocation3 + $0x298] sm:$0xff]
    %v3801 = vld [vmem:[#allocation3 + $0x2a0] sm:$0xff]
    %v3802 = vld [vmem:[#allocation3 + $0x2a8] sm:$0xff]
    %v3803 = vld [vmem:[#allocation3 + $0x2b0] sm:$0xff]
    %v3804 = vld [vmem:[#allocation3 + $0x2b8] sm:$0xff]
    %v3805 = vld [vmem:[#allocation3 + $0x2c0] sm:$0xff]
    %v3806 = vld [vmem:[#allocation3 + $0x2c8] sm:$0xff]
    %v3807 = vld [vmem:[#allocation3 + $0x2d0] sm:$0xff]
    %v3808 = vld [vmem:[#allocation3 + $0x2d8] sm:$0xff]
    %v3809 = vld [vmem:[#allocation3 + $0x2e0] sm:$0xff]
    %v3810 = vld [vmem:[#allocation3 + $0x2e8] sm:$0xff]
    %v3811 = vld [vmem:[#allocation3 + $0x2f0] sm:$0xff]
    %v3812 = vld [vmem:[#allocation3 + $0x2f8] sm:$0xff]
    %v3813 = vld [vmem:[#allocation3 + $0x300] sm:$0xff]
    %v3814 = vld [vmem:[#allocation3 + $0x308] sm:$0xff]
    %v3815 = vld [vmem:[#allocation3 + $0x310] sm:$0xff]
    %v3816 = vld [vmem:[#allocation3 + $0x318] sm:$0xff]
    %v3817 = vld [vmem:[#allocation3 + $0x320] sm:$0xff]
    %v3818 = vld [vmem:[#allocation3 + $0x328] sm:$0xff]
    %v3819 = vld [vmem:[#allocation3 + $0x330] sm:$0xff]
    %v3820 = vld [vmem:[#allocation3 + $0x338] sm:$0xff]
    %v3821 = vld [vmem:[#allocation3 + $0x340] sm:$0xff]
    %v3822 = vld [vmem:[#allocation3 + $0x348] sm:$0xff]
    %v3823 = vld [vmem:[#allocation3 + $0x350] sm:$0xff]
    %v3824 = vld [vmem:[#allocation3 + $0x358] sm:$0xff]
    %v3825 = vld [vmem:[#allocation3 + $0x360] sm:$0xff]
    %v3826 = vld [vmem:[#allocation3 + $0x368] sm:$0xff]
    %v3827 = vld [vmem:[#allocation3 + $0x370] sm:$0xff]
    %v3828 = vld [vmem:[#allocation3 + $0x378] sm:$0xff]
    %v3829 = vld [vmem:[#allocation3 + $0x380] sm:$0xff]
    %v3830 = vld [vmem:[#allocation3 + $0x388] sm:$0xff]
    %v3831 = vld [vmem:[#allocation3 + $0x390] sm:$0xff]
    %v3832 = vld [vmem:[#allocation3 + $0x398] sm:$0xff]
    %v3833 = vld [vmem:[#allocation3 + $0x3a0] sm:$0xff]
    %v3834 = vld [vmem:[#allocation3 + $0x3a8] sm:$0xff]
    %v3835 = vld [vmem:[#allocation3 + $0x3b0] sm:$0xff]
    %v3836 = vld [vmem:[#allocation3 + $0x3b8] sm:$0xff]
    %v3837 = vld [vmem:[#allocation3 + $0x3c0] sm:$0xff]
    %v3838 = vld [vmem:[#allocation3 + $0x3c8] sm:$0xff]
    %v3839 = vld [vmem:[#allocation3 + $0x3d0] sm:$0xff]
    %v3840 = vld [vmem:[#allocation3 + $0x3d8] sm:$0xff]
    %v3841 = vld [vmem:[#allocation3 + $0x3e0] sm:$0xff]
    %v3842 = vld [vmem:[#allocation3 + $0x3e8] sm:$0xff]
    %v3843 = vld [vmem:[#allocation3 + $0x3f0] sm:$0xff]
    %v3844 = vld [vmem:[#allocation3 + $0x3f8] sm:$0xff]
    %v3845 = vld [vmem:[#allocation3 + $0x400] sm:$0xff]
    %v3846 = vld [vmem:[#allocation3 + $0x408] sm:$0xff]
    %v3847 = vld [vmem:[#allocation3 + $0x410] sm:$0xff]
    %v3848 = vld [vmem:[#allocation3 + $0x418] sm:$0xff]
    %v3849 = vld [vmem:[#allocation3 + $0x420] sm:$0xff]
    %v3850 = vld [vmem:[#allocation3 + $0x428] sm:$0xff]
    %v3851 = vld [vmem:[#allocation3 + $0x430] sm:$0xff]
    %v3852 = vld [vmem:[#allocation3 + $0x438] sm:$0xff]
    %v3853 = vld [vmem:[#allocation3 + $0x440] sm:$0xff]
    %v3854 = vld [vmem:[#allocation3 + $0x448] sm:$0xff]
    %v3855 = vld [vmem:[#allocation3 + $0x450] sm:$0xff]
    %v3856 = vld [vmem:[#allocation3 + $0x458] sm:$0xff]
    %v3857 = vld [vmem:[#allocation3 + $0x460] sm:$0xff]
    %v3858 = vld [vmem:[#allocation3 + $0x468] sm:$0xff]
    %v3859 = vld [vmem:[#allocation3 + $0x470] sm:$0xff]
    %v3860 = vld [vmem:[#allocation3 + $0x478] sm:$0xff]
    %v3861 = vld [vmem:[#allocation3 + $0x480] sm:$0xff]
    %v3862 = vld [vmem:[#allocation3 + $0x488] sm:$0xff]
    %v3863 = vld [vmem:[#allocation3 + $0x490] sm:$0xff]
    %v3864 = vld [vmem:[#allocation3 + $0x498] sm:$0xff]
    %v3865 = vld [vmem:[#allocation3 + $0x4a0] sm:$0xff]
    %v3866 = vld [vmem:[#allocation3 + $0x4a8] sm:$0xff]
    %v3867 = vld [vmem:[#allocation3 + $0x4b0] sm:$0xff]
    %v3868 = vld [vmem:[#allocation3 + $0x4b8] sm:$0xff]
    %v3869 = vld [vmem:[#allocation3 + $0x4c0] sm:$0xff]
    %v3870 = vld [vmem:[#allocation3 + $0x4c8] sm:$0xff]
    %v3871 = vld [vmem:[#allocation3 + $0x4d0] sm:$0xff]
    %v3872 = vld [vmem:[#allocation3 + $0x4d8] sm:$0xff]
    %v3873 = vld [vmem:[#allocation3 + $0x4e0] sm:$0xff]
    %v3874 = vld [vmem:[#allocation3 + $0x4e8] sm:$0xff]
    %v3875 = vld [vmem:[#allocation3 + $0x4f0] sm:$0xff]
    %v3876 = vld [vmem:[#allocation3 + $0x4f8] sm:$0xff]
    %v3877 = vld [vmem:[#allocation3 + $0x500] sm:$0xff]
    %v3878 = vld [vmem:[#allocation3 + $0x508] sm:$0xff]
    %v3879 = vld [vmem:[#allocation3 + $0x510] sm:$0xff]
    %v3880 = vld [vmem:[#allocation3 + $0x518] sm:$0xff]
    %v3881 = vld [vmem:[#allocation3 + $0x520] sm:$0xff]
    %v3882 = vld [vmem:[#allocation3 + $0x528] sm:$0xff]
    %v3883 = vld [vmem:[#allocation3 + $0x530] sm:$0xff]
    %v3884 = vld [vmem:[#allocation3 + $0x538] sm:$0xff]
    %v3885 = vld [vmem:[#allocation3 + $0x540] sm:$0xff]
    %v3886 = vld [vmem:[#allocation3 + $0x548] sm:$0xff]
    %v3887 = vld [vmem:[#allocation3 + $0x550] sm:$0xff]
    %v3888 = vld [vmem:[#allocation3 + $0x558] sm:$0xff]
    %v3889 = vld [vmem:[#allocation3 + $0x560] sm:$0xff]
    %v3890 = vld [vmem:[#allocation3 + $0x568] sm:$0xff]
    %v3891 = vld [vmem:[#allocation3 + $0x570] sm:$0xff]
    %v3892 = vld [vmem:[#allocation3 + $0x578] sm:$0xff]
    %v3893 = vld [vmem:[#allocation3 + $0x580] sm:$0xff]
    %v3894 = vld [vmem:[#allocation3 + $0x588] sm:$0xff]
    %v3895 = vld [vmem:[#allocation3 + $0x590] sm:$0xff]
    %v3896 = vld [vmem:[#allocation3 + $0x598] sm:$0xff]
    %v3897 = vld [vmem:[#allocation3 + $0x5a0] sm:$0xff]
    %v3898 = vld [vmem:[#allocation3 + $0x5a8] sm:$0xff]
    %v3899 = vld [vmem:[#allocation3 + $0x5b0] sm:$0xff]
    %v3900 = vld [vmem:[#allocation3 + $0x5b8] sm:$0xff]
    %v3901 = vld [vmem:[#allocation3 + $0x5c0] sm:$0xff]
    %v3902 = vld [vmem:[#allocation3 + $0x5c8] sm:$0xff]
    %v3903 = vld [vmem:[#allocation3 + $0x5d0] sm:$0xff]
    %v3904 = vld [vmem:[#allocation3 + $0x5d8] sm:$0xff]
    %v3905 = vld [vmem:[#allocation3 + $0x5e0] sm:$0xff]
    %v3906 = vld [vmem:[#allocation3 + $0x5e8] sm:$0xff]
    %v3907 = vld [vmem:[#allocation3 + $0x5f0] sm:$0xff]
    %v3908 = vld [vmem:[#allocation3 + $0x5f8] sm:$0xff]
    %v3909 = vld [vmem:[#allocation3 + $0x600] sm:$0xff]
    %v3910 = vld [vmem:[#allocation3 + $0x608] sm:$0xff]
    %v3911 = vld [vmem:[#allocation3 + $0x610] sm:$0xff]
    %v3912 = vld [vmem:[#allocation3 + $0x618] sm:$0xff]
    %v3913 = vld [vmem:[#allocation3 + $0x620] sm:$0xff]
    %v3914 = vld [vmem:[#allocation3 + $0x628] sm:$0xff]
    %v3915 = vld [vmem:[#allocation3 + $0x630] sm:$0xff]
    %v3916 = vld [vmem:[#allocation3 + $0x638] sm:$0xff]
    %v3917 = vld [vmem:[#allocation3 + $0x640] sm:$0xff]
    %v3918 = vld [vmem:[#allocation3 + $0x648] sm:$0xff]
    %v3919 = vld [vmem:[#allocation3 + $0x650] sm:$0xff]
    %v3920 = vld [vmem:[#allocation3 + $0x658] sm:$0xff]
    %v3921 = vld [vmem:[#allocation3 + $0x660] sm:$0xff]
    %v3922 = vld [vmem:[#allocation3 + $0x668] sm:$0xff]
    %v3923 = vld [vmem:[#allocation3 + $0x670] sm:$0xff]
    %v3924 = vld [vmem:[#allocation3 + $0x678] sm:$0xff]
    %v3925 = vld [vmem:[#allocation3 + $0x680] sm:$0xff]
    %v3926 = vld [vmem:[#allocation3 + $0x688] sm:$0xff]
    %v3927 = vld [vmem:[#allocation3 + $0x690] sm:$0xff]
    %v3928 = vld [vmem:[#allocation3 + $0x698] sm:$0xff]
    %v3929 = vld [vmem:[#allocation3 + $0x6a0] sm:$0xff]
    %v3930 = vld [vmem:[#allocation3 + $0x6a8] sm:$0xff]
    %v3931 = vld [vmem:[#allocation3 + $0x6b0] sm:$0xff]
    %v3932 = vld [vmem:[#allocation3 + $0x6b8] sm:$0xff]
    %v3933 = vld [vmem:[#allocation3 + $0x6c0] sm:$0xff]
    %v3934 = vld [vmem:[#allocation3 + $0x6c8] sm:$0xff]
    %v3935 = vld [vmem:[#allocation3 + $0x6d0] sm:$0xff]
    %v3936 = vld [vmem:[#allocation3 + $0x6d8] sm:$0xff]
    %v3937 = vld [vmem:[#allocation3 + $0x6e0] sm:$0xff]
    %v3938 = vld [vmem:[#allocation3 + $0x6e8] sm:$0xff]
    %v3939 = vld [vmem:[#allocation3 + $0x6f0] sm:$0xff]
    %v3940 = vld [vmem:[#allocation3 + $0x6f8] sm:$0xff]
    %v3941 = vld [vmem:[#allocation3 + $0x700] sm:$0xff]
    %v3942 = vld [vmem:[#allocation3 + $0x708] sm:$0xff]
    %v3943 = vld [vmem:[#allocation3 + $0x710] sm:$0xff]
    %v3944 = vld [vmem:[#allocation3 + $0x718] sm:$0xff]
    %v3945 = vld [vmem:[#allocation3 + $0x720] sm:$0xff]
    %v3946 = vld [vmem:[#allocation3 + $0x728] sm:$0xff]
    %v3947 = vld [vmem:[#allocation3 + $0x730] sm:$0xff]
    %v3948 = vld [vmem:[#allocation3 + $0x738] sm:$0xff]
    %v3949 = vld [vmem:[#allocation3 + $0x740] sm:$0xff]
    %v3950 = vld [vmem:[#allocation3 + $0x748] sm:$0xff]
    %v3951 = vld [vmem:[#allocation3 + $0x750] sm:$0xff]
    %v3952 = vld [vmem:[#allocation3 + $0x758] sm:$0xff]
    %v3953 = vld [vmem:[#allocation3 + $0x760] sm:$0xff]
    %v3954 = vld [vmem:[#allocation3 + $0x768] sm:$0xff]
    %v3955 = vld [vmem:[#allocation3 + $0x770] sm:$0xff]
    %v3956 = vld [vmem:[#allocation3 + $0x778] sm:$0xff]
    %v3957 = vld [vmem:[#allocation3 + $0x780] sm:$0xff]
    %v3958 = vld [vmem:[#allocation3 + $0x788] sm:$0xff]
    %v3959 = vld [vmem:[#allocation3 + $0x790] sm:$0xff]
    %v3960 = vld [vmem:[#allocation3 + $0x798] sm:$0xff]
    %v3961 = vld [vmem:[#allocation3 + $0x7a0] sm:$0xff]
    %v3962 = vld [vmem:[#allocation3 + $0x7a8] sm:$0xff]
    %v3963 = vld [vmem:[#allocation3 + $0x7b0] sm:$0xff]
    %v3964 = vld [vmem:[#allocation3 + $0x7b8] sm:$0xff]
    %v3965 = vld [vmem:[#allocation3 + $0x7c0] sm:$0xff]
    %v3966 = vld [vmem:[#allocation3 + $0x7c8] sm:$0xff]
    %v3967 = vld [vmem:[#allocation3 + $0x7d0] sm:$0xff]
    %v3968 = vld [vmem:[#allocation3 + $0x7d8] sm:$0xff]
    %v3969 = vld [vmem:[#allocation3 + $0x7e0] sm:$0xff]
    %v3970 = vld [vmem:[#allocation3 + $0x7e8] sm:$0xff]
    %v3971 = vld [vmem:[#allocation3 + $0x7f0] sm:$0xff]
    %v3972 = vld [vmem:[#allocation3 + $0x7f8] sm:$0xff]
    %v3973 = vld [vmem:[#allocation3 + $0x800] sm:$0xff]
    %v3974 = vld [vmem:[#allocation3 + $0x808] sm:$0xff]
    %v3975 = vld [vmem:[#allocation3 + $0x810] sm:$0xff]
    %v3976 = vld [vmem:[#allocation3 + $0x818] sm:$0xff]
    %v3977 = vld [vmem:[#allocation3 + $0x820] sm:$0xff]
    %v3978 = vld [vmem:[#allocation3 + $0x828] sm:$0xff]
    %v3979 = vld [vmem:[#allocation3 + $0x830] sm:$0xff]
    %v3980 = vld [vmem:[#allocation3 + $0x838] sm:$0xff]
    %v3981 = vld [vmem:[#allocation3 + $0x840] sm:$0xff]
    %v3982 = vld [vmem:[#allocation3 + $0x848] sm:$0xff]
    %v3983 = vld [vmem:[#allocation3 + $0x850] sm:$0xff]
    %v3984 = vld [vmem:[#allocation3 + $0x858] sm:$0xff]
    %v3985 = vld [vmem:[#allocation3 + $0x860] sm:$0xff]
    %v3986 = vld [vmem:[#allocation3 + $0x868] sm:$0xff]
    %v3987 = vld [vmem:[#allocation3 + $0x870] sm:$0xff]
    %v3988 = vld [vmem:[#allocation3 + $0x878] sm:$0xff]
    %v3989 = vld [vmem:[#allocation3 + $0x880] sm:$0xff]
    %v3990 = vld [vmem:[#allocation3 + $0x888] sm:$0xff]
    %v3991 = vld [vmem:[#allocation3 + $0x890] sm:$0xff]
    %v3992 = vld [vmem:[#allocation3 + $0x898] sm:$0xff]
    %v3993 = vld [vmem:[#allocation3 + $0x8a0] sm:$0xff]
    %v3994 = vld [vmem:[#allocation3 + $0x8a8] sm:$0xff]
    %v3995 = vld [vmem:[#allocation3 + $0x8b0] sm:$0xff]
    %v3996 = vld [vmem:[#allocation3 + $0x8b8] sm:$0xff]
    %v3997 = vld [vmem:[#allocation3 + $0x8c0] sm:$0xff]
    %v3998 = vld [vmem:[#allocation3 + $0x8c8] sm:$0xff]
    %v3999 = vld [vmem:[#allocation3 + $0x8d0] sm:$0xff]
    %v4000 = vld [vmem:[#allocation3 + $0x8d8] sm:$0xff]
    %v4001 = vld [vmem:[#allocation3 + $0x8e0] sm:$0xff]
    %v4002 = vld [vmem:[#allocation3 + $0x8e8] sm:$0xff]
    %v4003 = vld [vmem:[#allocation3 + $0x8f0] sm:$0xff]
    %v4004 = vld [vmem:[#allocation3 + $0x8f8] sm:$0xff]
    %v4005 = vld [vmem:[#allocation3 + $0x900] sm:$0xff]
    %v4006 = vld [vmem:[#allocation3 + $0x908] sm:$0xff]
    %v4007 = vld [vmem:[#allocation3 + $0x910] sm:$0xff]
    %v4008 = vld [vmem:[#allocation3 + $0x918] sm:$0xff]
    %v4009 = vld [vmem:[#allocation3 + $0x920] sm:$0xff]
    %v4010 = vld [vmem:[#allocation3 + $0x928] sm:$0xff]
    %v4011 = vld [vmem:[#allocation3 + $0x930] sm:$0xff]
    %v4012 = vld [vmem:[#allocation3 + $0x938] sm:$0xff]
    %v4013 = vld [vmem:[#allocation3 + $0x940] sm:$0xff]
    %v4014 = vld [vmem:[#allocation3 + $0x948] sm:$0xff]
    %v4015 = vld [vmem:[#allocation3 + $0x950] sm:$0xff]
    %v4016 = vld [vmem:[#allocation3 + $0x958] sm:$0xff]
    %v4017 = vld [vmem:[#allocation3 + $0x960] sm:$0xff]
    %v4018 = vld [vmem:[#allocation3 + $0x968] sm:$0xff]
    %v4019 = vld [vmem:[#allocation3 + $0x970] sm:$0xff]
    %v4020 = vld [vmem:[#allocation3 + $0x978] sm:$0xff]
    %v4021 = vld [vmem:[#allocation3 + $0x980] sm:$0xff]
    %v4022 = vld [vmem:[#allocation3 + $0x988] sm:$0xff]
    %v4023 = vld [vmem:[#allocation3 + $0x990] sm:$0xff]
    %v4024 = vld [vmem:[#allocation3 + $0x998] sm:$0xff]
    %v4025 = vld [vmem:[#allocation3 + $0x9a0] sm:$0xff]
    %v4026 = vld [vmem:[#allocation3 + $0x9a8] sm:$0xff]
    %v4027 = vld [vmem:[#allocation3 + $0x9b0] sm:$0xff]
    %v4028 = vld [vmem:[#allocation3 + $0x9b8] sm:$0xff]
    %v4029 = vld [vmem:[#allocation3 + $0x9c0] sm:$0xff]
    %v4030 = vld [vmem:[#allocation3 + $0x9c8] sm:$0xff]
    %v4031 = vld [vmem:[#allocation3 + $0x9d0] sm:$0xff]
    %v4032 = vld [vmem:[#allocation3 + $0x9d8] sm:$0xff]
    %v4033 = vld [vmem:[#allocation3 + $0x9e0] sm:$0xff]
    %v4034 = vld [vmem:[#allocation3 + $0x9e8] sm:$0xff]
    %v4035 = vld [vmem:[#allocation3 + $0x9f0] sm:$0xff]
    %v4036 = vld [vmem:[#allocation3 + $0x9f8] sm:$0xff]
    %v4037 = vld [vmem:[#allocation3 + $0xa00] sm:$0xff]
    %v4038 = vld [vmem:[#allocation3 + $0xa08] sm:$0xff]
    %v4039 = vld [vmem:[#allocation3 + $0xa10] sm:$0xff]
    %v4040 = vld [vmem:[#allocation3 + $0xa18] sm:$0xff]
    %v4041 = vld [vmem:[#allocation3 + $0xa20] sm:$0xff]
    %v4042 = vld [vmem:[#allocation3 + $0xa28] sm:$0xff]
    %v4043 = vld [vmem:[#allocation3 + $0xa30] sm:$0xff]
    %v4044 = vld [vmem:[#allocation3 + $0xa38] sm:$0xff]
    %v4045 = vld [vmem:[#allocation3 + $0xa40] sm:$0xff]
    %v4046 = vld [vmem:[#allocation3 + $0xa48] sm:$0xff]
    %v4047 = vld [vmem:[#allocation3 + $0xa50] sm:$0xff]
    %v4048 = vld [vmem:[#allocation3 + $0xa58] sm:$0xff]
    %v4049 = vld [vmem:[#allocation3 + $0xa60] sm:$0xff]
    %v4050 = vld [vmem:[#allocation3 + $0xa68] sm:$0xff]
    %v4051 = vld [vmem:[#allocation3 + $0xa70] sm:$0xff]
    %v4052 = vld [vmem:[#allocation3 + $0xa78] sm:$0xff]
    %v4053 = vld [vmem:[#allocation3 + $0xa80] sm:$0xff]
    %v4054 = vld [vmem:[#allocation3 + $0xa88] sm:$0xff]
    %v4055 = vld [vmem:[#allocation3 + $0xa90] sm:$0xff]
    %v4056 = vld [vmem:[#allocation3 + $0xa98] sm:$0xff]
    %v4057 = vld [vmem:[#allocation3 + $0xaa0] sm:$0xff]
    %v4058 = vld [vmem:[#allocation3 + $0xaa8] sm:$0xff]
    %v4059 = vld [vmem:[#allocation3 + $0xab0] sm:$0xff]
    %v4060 = vld [vmem:[#allocation3 + $0xab8] sm:$0xff]
    %v4061 = vld [vmem:[#allocation3 + $0xac0] sm:$0xff]
    %v4062 = vld [vmem:[#allocation3 + $0xac8] sm:$0xff]
    %v4063 = vld [vmem:[#allocation3 + $0xad0] sm:$0xff]
    %v4064 = vld [vmem:[#allocation3 + $0xad8] sm:$0xff]
    %v4065 = vld [vmem:[#allocation3 + $0xae0] sm:$0xff]
    %v4066 = vld [vmem:[#allocation3 + $0xae8] sm:$0xff]
    %v4067 = vld [vmem:[#allocation3 + $0xaf0] sm:$0xff]
    %v4068 = vld [vmem:[#allocation3 + $0xaf8] sm:$0xff]
    %v4069 = vld [vmem:[#allocation3 + $0xb00] sm:$0xff]
    %v4070 = vld [vmem:[#allocation3 + $0xb08] sm:$0xff]
    %v4071 = vld [vmem:[#allocation3 + $0xb10] sm:$0xff]
    %v4072 = vld [vmem:[#allocation3 + $0xb18] sm:$0xff]
    %v4073 = vld [vmem:[#allocation3 + $0xb20] sm:$0xff]
    %v4074 = vld [vmem:[#allocation3 + $0xb28] sm:$0xff]
    %v4075 = vld [vmem:[#allocation3 + $0xb30] sm:$0xff]
    %v4076 = vld [vmem:[#allocation3 + $0xb38] sm:$0xff]
    %v4077 = vld [vmem:[#allocation3 + $0xb40] sm:$0xff]
    %v4078 = vld [vmem:[#allocation3 + $0xb48] sm:$0xff]
    %v4079 = vld [vmem:[#allocation3 + $0xb50] sm:$0xff]
    %v4080 = vld [vmem:[#allocation3 + $0xb58] sm:$0xff]
    %v4081 = vld [vmem:[#allocation3 + $0xb60] sm:$0xff]
    %v4082 = vld [vmem:[#allocation3 + $0xb68] sm:$0xff]
    %v4083 = vld [vmem:[#allocation3 + $0xb70] sm:$0xff]
    %v4084 = vld [vmem:[#allocation3 + $0xb78] sm:$0xff]
    %v4085 = vld [vmem:[#allocation3 + $0xb80] sm:$0xff]
    %v4086 = vld [vmem:[#allocation3 + $0xb88] sm:$0xff]
    %v4087 = vld [vmem:[#allocation3 + $0xb90] sm:$0xff]
    %v4088 = vld [vmem:[#allocation3 + $0xb98] sm:$0xff]
    %v4089 = vld [vmem:[#allocation3 + $0xba0] sm:$0xff]
    %v4090 = vld [vmem:[#allocation3 + $0xba8] sm:$0xff]
    %v4091 = vld [vmem:[#allocation3 + $0xbb0] sm:$0xff]
    %v4092 = vld [vmem:[#allocation3 + $0xbb8] sm:$0xff]
    %v4093 = vld [vmem:[#allocation3 + $0xbc0] sm:$0xff]
    %v4094 = vld [vmem:[#allocation3 + $0xbc8] sm:$0xff]
    %v4095 = vld [vmem:[#allocation3 + $0xbd0] sm:$0xff]
    %v4096 = vld [vmem:[#allocation3 + $0xbd8] sm:$0xff]
    %v4097 = vld [vmem:[#allocation3 + $0xbe0] sm:$0xff]
    %v4098 = vld [vmem:[#allocation3 + $0xbe8] sm:$0xff]
    %v4099 = vld [vmem:[#allocation3 + $0xbf0] sm:$0xff]
    %v4100 = vld [vmem:[#allocation3 + $0xbf8] sm:$0xff]
    %v4101 = vld [vmem:[#allocation3 + $0xc00] sm:$0xff]
    %v4102 = vld [vmem:[#allocation3 + $0xc08] sm:$0xff]
    %v4103 = vld [vmem:[#allocation3 + $0xc10] sm:$0xff]
    %v4104 = vld [vmem:[#allocation3 + $0xc18] sm:$0xff]
    %v4105 = vld [vmem:[#allocation3 + $0xc20] sm:$0xff]
    %v4106 = vld [vmem:[#allocation3 + $0xc28] sm:$0xff]
    %v4107 = vld [vmem:[#allocation3 + $0xc30] sm:$0xff]
    %v4108 = vld [vmem:[#allocation3 + $0xc38] sm:$0xff]
    %v4109 = vld [vmem:[#allocation3 + $0xc40] sm:$0xff]
    %v4110 = vld [vmem:[#allocation3 + $0xc48] sm:$0xff]
    %v4111 = vld [vmem:[#allocation3 + $0xc50] sm:$0xff]
    %v4112 = vld [vmem:[#allocation3 + $0xc58] sm:$0xff]
    %v4113 = vld [vmem:[#allocation3 + $0xc60] sm:$0xff]
    %v4114 = vld [vmem:[#allocation3 + $0xc68] sm:$0xff]
    %v4115 = vld [vmem:[#allocation3 + $0xc70] sm:$0xff]
    %v4116 = vld [vmem:[#allocation3 + $0xc78] sm:$0xff]
    %v4117 = vld [vmem:[#allocation3 + $0xc80] sm:$0xff]
    %v4118 = vld [vmem:[#allocation3 + $0xc88] sm:$0xff]
    %v4119 = vld [vmem:[#allocation3 + $0xc90] sm:$0xff]
    %v4120 = vld [vmem:[#allocation3 + $0xc98] sm:$0xff]
    %v4121 = vld [vmem:[#allocation3 + $0xca0] sm:$0xff]
    %v4122 = vld [vmem:[#allocation3 + $0xca8] sm:$0xff]
    %v4123 = vld [vmem:[#allocation3 + $0xcb0] sm:$0xff]
    %v4124 = vld [vmem:[#allocation3 + $0xcb8] sm:$0xff]
    %v4125 = vld [vmem:[#allocation3 + $0xcc0] sm:$0xff]
    %v4126 = vld [vmem:[#allocation3 + $0xcc8] sm:$0xff]
    %v4127 = vld [vmem:[#allocation3 + $0xcd0] sm:$0xff]
    %v4128 = vld [vmem:[#allocation3 + $0xcd8] sm:$0xff]
    %v4129 = vld [vmem:[#allocation3 + $0xce0] sm:$0xff]
    %v4130 = vld [vmem:[#allocation3 + $0xce8] sm:$0xff]
    %v4131 = vld [vmem:[#allocation3 + $0xcf0] sm:$0xff]
    %v4132 = vld [vmem:[#allocation3 + $0xcf8] sm:$0xff]
    %v4133 = vld [vmem:[#allocation3 + $0xd00] sm:$0xff]
    %v4134 = vld [vmem:[#allocation3 + $0xd08] sm:$0xff]
    %v4135 = vld [vmem:[#allocation3 + $0xd10] sm:$0xff]
    %v4136 = vld [vmem:[#allocation3 + $0xd18] sm:$0xff]
    %v4137 = vld [vmem:[#allocation3 + $0xd20] sm:$0xff]
    %v4138 = vld [vmem:[#allocation3 + $0xd28] sm:$0xff]
    %v4139 = vld [vmem:[#allocation3 + $0xd30] sm:$0xff]
    %v4140 = vld [vmem:[#allocation3 + $0xd38] sm:$0xff]
    %v4141 = vld [vmem:[#allocation3 + $0xd40] sm:$0xff]
    %v4142 = vld [vmem:[#allocation3 + $0xd48] sm:$0xff]
    %v4143 = vld [vmem:[#allocation3 + $0xd50] sm:$0xff]
    %v4144 = vld [vmem:[#allocation3 + $0xd58] sm:$0xff]
    %v4145 = vld [vmem:[#allocation3 + $0xd60] sm:$0xff]
    %v4146 = vld [vmem:[#allocation3 + $0xd68] sm:$0xff]
    %v4147 = vld [vmem:[#allocation3 + $0xd70] sm:$0xff]
    %v4148 = vld [vmem:[#allocation3 + $0xd78] sm:$0xff]
    %v4149 = vld [vmem:[#allocation3 + $0xd80] sm:$0xff]
    %v4150 = vld [vmem:[#allocation3 + $0xd88] sm:$0xff]
    %v4151 = vld [vmem:[#allocation3 + $0xd90] sm:$0xff]
    %v4152 = vld [vmem:[#allocation3 + $0xd98] sm:$0xff]
    %v4153 = vld [vmem:[#allocation3 + $0xda0] sm:$0xff]
    %v4154 = vld [vmem:[#allocation3 + $0xda8] sm:$0xff]
    %v4155 = vld [vmem:[#allocation3 + $0xdb0] sm:$0xff]
    %v4156 = vld [vmem:[#allocation3 + $0xdb8] sm:$0xff]
    %v4157 = vld [vmem:[#allocation3 + $0xdc0] sm:$0xff]
    %v4158 = vld [vmem:[#allocation3 + $0xdc8] sm:$0xff]
    %v4159 = vld [vmem:[#allocation3 + $0xdd0] sm:$0xff]
    %v4160 = vld [vmem:[#allocation3 + $0xdd8] sm:$0xff]
    %v4161 = vld [vmem:[#allocation3 + $0xde0] sm:$0xff]
    %v4162 = vld [vmem:[#allocation3 + $0xde8] sm:$0xff]
    %v4163 = vld [vmem:[#allocation3 + $0xdf0] sm:$0xff]
    %v4164 = vld [vmem:[#allocation3 + $0xdf8] sm:$0xff]
    %v4165 = vld [vmem:[#allocation3 + $0xe00] sm:$0xff]
    %v4166 = vld [vmem:[#allocation3 + $0xe08] sm:$0xff]
    %v4167 = vld [vmem:[#allocation3 + $0xe10] sm:$0xff]
    %v4168 = vld [vmem:[#allocation3 + $0xe18] sm:$0xff]
    %v4169 = vld [vmem:[#allocation3 + $0xe20] sm:$0xff]
    %v4170 = vld [vmem:[#allocation3 + $0xe28] sm:$0xff]
    %v4171 = vld [vmem:[#allocation3 + $0xe30] sm:$0xff]
    %v4172 = vld [vmem:[#allocation3 + $0xe38] sm:$0xff]
    %v4173 = vld [vmem:[#allocation3 + $0xe40] sm:$0xff]
    %v4174 = vld [vmem:[#allocation3 + $0xe48] sm:$0xff]
    %v4175 = vld [vmem:[#allocation3 + $0xe50] sm:$0xff]
    %v4176 = vld [vmem:[#allocation3 + $0xe58] sm:$0xff]
    %v4177 = vld [vmem:[#allocation3 + $0xe60] sm:$0xff]
    %v4178 = vld [vmem:[#allocation3 + $0xe68] sm:$0xff]
    %v4179 = vld [vmem:[#allocation3 + $0xe70] sm:$0xff]
    %v4180 = vld [vmem:[#allocation3 + $0xe78] sm:$0xff]
    %v4181 = vld [vmem:[#allocation3 + $0xe80] sm:$0xff]
    %v4182 = vld [vmem:[#allocation3 + $0xe88] sm:$0xff]
    %v4183 = vld [vmem:[#allocation3 + $0xe90] sm:$0xff]
    %v4184 = vld [vmem:[#allocation3 + $0xe98] sm:$0xff]
    %v4185 = vld [vmem:[#allocation3 + $0xea0] sm:$0xff]
    %v4186 = vld [vmem:[#allocation3 + $0xea8] sm:$0xff]
    %v4187 = vld [vmem:[#allocation3 + $0xeb0] sm:$0xff]
    %v4188 = vld [vmem:[#allocation3 + $0xeb8] sm:$0xff]
    %v4189 = vld [vmem:[#allocation3 + $0xec0] sm:$0xff]
    %v4190 = vld [vmem:[#allocation3 + $0xec8] sm:$0xff]
    %v4191 = vld [vmem:[#allocation3 + $0xed0] sm:$0xff]
    %v4192 = vld [vmem:[#allocation3 + $0xed8] sm:$0xff]
    %v4193 = vld [vmem:[#allocation3 + $0xee0] sm:$0xff]
    %v4194 = vld [vmem:[#allocation3 + $0xee8] sm:$0xff]
    %v4195 = vld [vmem:[#allocation3 + $0xef0] sm:$0xff]
    %v4196 = vld [vmem:[#allocation3 + $0xef8] sm:$0xff]
    %v4197 = vld [vmem:[#allocation3 + $0xf00] sm:$0xff]
    %v4198 = vld [vmem:[#allocation3 + $0xf08] sm:$0xff]
    %v4199 = vld [vmem:[#allocation3 + $0xf10] sm:$0xff]
    %v4200 = vld [vmem:[#allocation3 + $0xf18] sm:$0xff]
    %v4201 = vld [vmem:[#allocation3 + $0xf20] sm:$0xff]
    %v4202 = vld [vmem:[#allocation3 + $0xf28] sm:$0xff]
    %v4203 = vld [vmem:[#allocation3 + $0xf30] sm:$0xff]
    %v4204 = vld [vmem:[#allocation3 + $0xf38] sm:$0xff]
    %v4205 = vld [vmem:[#allocation3 + $0xf40] sm:$0xff]
    %v4206 = vld [vmem:[#allocation3 + $0xf48] sm:$0xff]
    %v4207 = vld [vmem:[#allocation3 + $0xf50] sm:$0xff]
    %v4208 = vld [vmem:[#allocation3 + $0xf58] sm:$0xff]
    %v4209 = vld [vmem:[#allocation3 + $0xf60] sm:$0xff]
    %v4210 = vld [vmem:[#allocation3 + $0xf68] sm:$0xff]
    %v4211 = vld [vmem:[#allocation3 + $0xf70] sm:$0xff]
    %v4212 = vld [vmem:[#allocation3 + $0xf78] sm:$0xff]
    %v4213 = vld [vmem:[#allocation3 + $0xf80] sm:$0xff]
    %v4214 = vld [vmem:[#allocation3 + $0xf88] sm:$0xff]
    %v4215 = vld [vmem:[#allocation3 + $0xf90] sm:$0xff]
    %v4216 = vld [vmem:[#allocation3 + $0xf98] sm:$0xff]
    %v4217 = vld [vmem:[#allocation3 + $0xfa0] sm:$0xff]
    %v4218 = vld [vmem:[#allocation3 + $0xfa8] sm:$0xff]
    %v4219 = vld [vmem:[#allocation3 + $0xfb0] sm:$0xff]
    %v4220 = vld [vmem:[#allocation3 + $0xfb8] sm:$0xff]
    %v4221 = vld [vmem:[#allocation3 + $0xfc0] sm:$0xff]
    %v4222 = vld [vmem:[#allocation3 + $0xfc8] sm:$0xff]
    %v4223 = vld [vmem:[#allocation3 + $0xfd0] sm:$0xff]
    %v4224 = vld [vmem:[#allocation3 + $0xfd8] sm:$0xff]
    %v4225 = vld [vmem:[#allocation3 + $0xfe0] sm:$0xff]
    %v4226 = vld [vmem:[#allocation3 + $0xfe8] sm:$0xff]
    %v4227 = vld [vmem:[#allocation3 + $0xff0] sm:$0xff]
    %v4228 = vld [vmem:[#allocation3 + $0xff8] sm:$0xff]
    %v4229 = vpack.c.bf16 %v3697, %v3697
    %v4230 = vpack.c.bf16 %v3698, %v3698
    %v4231 = vpack.c.bf16 %v3699, %v3699
    %v4232 = vpack.c.bf16 %v3700, %v3700
    %v4233 = vpack.c.bf16 %v3701, %v3701
    %v4234 = vpack.c.bf16 %v3702, %v3702
    %v4235 = vpack.c.bf16 %v3703, %v3703
    %v4236 = vpack.c.bf16 %v3704, %v3704
    %v4237 = vpack.c.bf16 %v3705, %v3705
    %v4238 = vpack.c.bf16 %v3706, %v3706
    %v4239 = vpack.c.bf16 %v3707, %v3707
    %v4240 = vpack.c.bf16 %v3708, %v3708
    %v4241 = vpack.c.bf16 %v3709, %v3709
    %v4242 = vpack.c.bf16 %v3710, %v3710
    %v4243 = vpack.c.bf16 %v3711, %v3711
    %v4244 = vpack.c.bf16 %v3712, %v3712
    %v4245 = vld [vmem:[#allocation13 + $0x18] sm:$0xf]
    %v4247 = vlaneseq
    %v4248 = vshrl.u32 %v4247, 7
    %v4249 = vsub.s32 0, %v4248
    %v4250 = vrot.slane %v4245, %v4249
    %v4251 = vlaneseq
    %v4252 = vshrl.u32 %v4251, 7
    %v4253 = vsub.s32 1, %v4252
    %v4254 = vrot.slane %v4245, %v4253
    %v4255 = vlaneseq
    %v4256 = vshrl.u32 %v4255, 7
    %v4257 = vsub.s32 2, %v4256
    %v4258 = vrot.slane %v4245, %v4257
    %v4259 = vlaneseq
    %v4260 = vshrl.u32 %v4259, 7
    %v4261 = vsub.s32 3, %v4260
    %v4262 = vrot.slane %v4245, %v4261
    %4267 = vmatprep.subr.bf16.mxu0 %v3718
    %4268 = vmatpush1.bf16.msra.mxu0 %v3717
    %4269 = vmatprep.subr.bf16.mxu0 %v3722
    %4270 = vmatpush1.bf16.msra.mxu0 %v3721
    %4271 = vmatprep.subr.bf16.mxu0 %v3726
    %4272 = vmatpush1.bf16.msra.mxu0 %v3725
    %4273 = vmatprep.subr.bf16.mxu0 %v3730
    %4274 = vmatpush1.bf16.msra.mxu0 %v3729
    %4275 = vmatprep.subr.bf16.mxu0 %v3734
    %4276 = vmatpush1.bf16.msra.mxu0 %v3733
    %4277 = vmatprep.subr.bf16.mxu0 %v3738
    %4278 = vmatpush1.bf16.msra.mxu0 %v3737
    %4279 = vmatprep.subr.bf16.mxu0 %v3742
    %4280 = vmatpush1.bf16.msra.mxu0 %v3741
    %4281 = vmatprep.subr.bf16.mxu0 %v3746
    %4282 = vmatpush1.bf16.msra.mxu0 %v3745
    %4283 = vmatprep.subr.bf16.mxu0 %v3750
    %4284 = vmatpush1.bf16.msra.mxu0 %v3749
    %4285 = vmatprep.subr.bf16.mxu0 %v3754
    %4286 = vmatpush1.bf16.msra.mxu0 %v3753
    %4287 = vmatprep.subr.bf16.mxu0 %v3758
    %4288 = vmatpush1.bf16.msra.mxu0 %v3757
    %4289 = vmatprep.subr.bf16.mxu0 %v3762
    %4290 = vmatpush1.bf16.msra.mxu0 %v3761
    %4291 = vmatprep.subr.bf16.mxu0 %v3766
    %4292 = vmatpush1.bf16.msra.mxu0 %v3765
    %4293 = vmatprep.subr.bf16.mxu0 %v3770
    %4294 = vmatpush1.bf16.msra.mxu0 %v3769
    %4295 = vmatprep.subr.bf16.mxu0 %v3774
    %4296 = vmatpush1.bf16.msra.mxu0 %v3773
    %4297 = vmatprep.subr.bf16.mxu0 %v3778
    %4298 = vmatpush1.bf16.msra.mxu0 %v3777
    %4299 = vmatprep.mubr.bf16.mxu0 %v4230
    %4300 = vmatmul.mubr.bf16.gmra.mrb[0].mxu0 %v4229
    %v4301 = vpop.f32.mrb[0].mxu0
    %v4302 = vadd.f32 %v4250, %v4301
    %v4303 = vpop.f32.mrb[0].mxu0
    %v4304 = vadd.f32 %v4254, %v4303
    %v4305 = vpop.f32.mrb[0].mxu0
    %v4306 = vpop.f32.mrb[0].mxu0
    %4307 = vdwg.mxu0
    %4308 = vmatprep.subr.bf16.mxu0 %v3782
    %4309 = vmatpush1.bf16.msra.mxu0 %v3781
    %4310 = vmatprep.subr.bf16.mxu0 %v3786
    %4311 = vmatpush1.bf16.msra.mxu0 %v3785
    %4312 = vmatprep.subr.bf16.mxu0 %v3790
    %4313 = vmatpush1.bf16.msra.mxu0 %v3789
    %4314 = vmatprep.subr.bf16.mxu0 %v3794
    %4315 = vmatpush1.bf16.msra.mxu0 %v3793
    %4316 = vmatprep.subr.bf16.mxu0 %v3798
    %4317 = vmatpush1.bf16.msra.mxu0 %v3797
    %4318 = vmatprep.subr.bf16.mxu0 %v3802
    %4319 = vmatpush1.bf16.msra.mxu0 %v3801
    %4320 = vmatprep.subr.bf16.mxu0 %v3806
    %4321 = vmatpush1.bf16.msra.mxu0 %v3805
    %4322 = vmatprep.subr.bf16.mxu0 %v3810
    %4323 = vmatpush1.bf16.msra.mxu0 %v3809
    %4324 = vmatprep.subr.bf16.mxu0 %v3814
    %4325 = vmatpush1.bf16.msra.mxu0 %v3813
    %4326 = vmatprep.subr.bf16.mxu0 %v3818
    %4327 = vmatpush1.bf16.msra.mxu0 %v3817
    %4328 = vmatprep.subr.bf16.mxu0 %v3822
    %4329 = vmatpush1.bf16.msra.mxu0 %v3821
    %4330 = vmatprep.subr.bf16.mxu0 %v3826
    %4331 = vmatpush1.bf16.msra.mxu0 %v3825
    %4332 = vmatprep.subr.bf16.mxu0 %v3830
    %4333 = vmatpush1.bf16.msra.mxu0 %v3829
    %4334 = vmatprep.subr.bf16.mxu0 %v3834
    %4335 = vmatpush1.bf16.msra.mxu0 %v3833
    %4336 = vmatprep.subr.bf16.mxu0 %v3838
    %4337 = vmatpush1.bf16.msra.mxu0 %v3837
    %4338 = vmatprep.subr.bf16.mxu0 %v3842
    %4339 = vmatpush1.bf16.msra.mxu0 %v3841
    %4340 = vmatprep.mubr.bf16.mxu0 %v4232
    %4341 = vmatmul.mubr.bf16.gmra.mrb[0].mxu0 %v4231
    %v4342 = vpop.f32.mrb[0].mxu0
    %v4343 = vadd.f32 %v4302, %v4342
    %v4344 = vpop.f32.mrb[0].mxu0
    %v4345 = vadd.f32 %v4304, %v4344
    %v4346 = vpop.f32.mrb[0].mxu0
    %v4347 = vpop.f32.mrb[0].mxu0
    %4348 = vdwg.mxu0
    %4349 = vmatprep.subr.bf16.mxu0 %v3846
    %4350 = vmatpush1.bf16.msra.mxu0 %v3845
    %4351 = vmatprep.subr.bf16.mxu0 %v3850
    %4352 = vmatpush1.bf16.msra.mxu0 %v3849
    %4353 = vmatprep.subr.bf16.mxu0 %v3854
    %4354 = vmatpush1.bf16.msra.mxu0 %v3853
    %4355 = vmatprep.subr.bf16.mxu0 %v3858
    %4356 = vmatpush1.bf16.msra.mxu0 %v3857
    %4357 = vmatprep.subr.bf16.mxu0 %v3862
    %4358 = vmatpush1.bf16.msra.mxu0 %v3861
    %4359 = vmatprep.subr.bf16.mxu0 %v3866
    %4360 = vmatpush1.bf16.msra.mxu0 %v3865
    %4361 = vmatprep.subr.bf16.mxu0 %v3870
    %4362 = vmatpush1.bf16.msra.mxu0 %v3869
    %4363 = vmatprep.subr.bf16.mxu0 %v3874
    %4364 = vmatpush1.bf16.msra.mxu0 %v3873
    %4365 = vmatprep.subr.bf16.mxu0 %v3878
    %4366 = vmatpush1.bf16.msra.mxu0 %v3877
    %4367 = vmatprep.subr.bf16.mxu0 %v3882
    %4368 = vmatpush1.bf16.msra.mxu0 %v3881
    %4369 = vmatprep.subr.bf16.mxu0 %v3886
    %4370 = vmatpush1.bf16.msra.mxu0 %v3885
    %4371 = vmatprep.subr.bf16.mxu0 %v3890
    %4372 = vmatpush1.bf16.msra.mxu0 %v3889
    %4373 = vmatprep.subr.bf16.mxu0 %v3894
    %4374 = vmatpush1.bf16.msra.mxu0 %v3893
    %4375 = vmatprep.subr.bf16.mxu0 %v3898
    %4376 = vmatpush1.bf16.msra.mxu0 %v3897
    %4377 = vmatprep.subr.bf16.mxu0 %v3902
    %4378 = vmatpush1.bf16.msra.mxu0 %v3901
    %4379 = vmatprep.subr.bf16.mxu0 %v3906
    %4380 = vmatpush1.bf16.msra.mxu0 %v3905
    %4381 = vmatprep.mubr.bf16.mxu0 %v4234
    %4382 = vmatmul.mubr.bf16.gmra.mrb[0].mxu0 %v4233
    %v4383 = vpop.f32.mrb[0].mxu0
    %v4384 = vadd.f32 %v4343, %v4383
    %v4385 = vpop.f32.mrb[0].mxu0
    %v4386 = vadd.f32 %v4345, %v4385
    %v4387 = vpop.f32.mrb[0].mxu0
    %v4388 = vpop.f32.mrb[0].mxu0
    %4389 = vdwg.mxu0
    %4390 = vmatprep.subr.bf16.mxu0 %v3910
    %4391 = vmatpush1.bf16.msra.mxu0 %v3909
    %4392 = vmatprep.subr.bf16.mxu0 %v3914
    %4393 = vmatpush1.bf16.msra.mxu0 %v3913
    %4394 = vmatprep.subr.bf16.mxu0 %v3918
    %4395 = vmatpush1.bf16.msra.mxu0 %v3917
    %4396 = vmatprep.subr.bf16.mxu0 %v3922
    %4397 = vmatpush1.bf16.msra.mxu0 %v3921
    %4398 = vmatprep.subr.bf16.mxu0 %v3926
    %4399 = vmatpush1.bf16.msra.mxu0 %v3925
    %4400 = vmatprep.subr.bf16.mxu0 %v3930
    %4401 = vmatpush1.bf16.msra.mxu0 %v3929
    %4402 = vmatprep.subr.bf16.mxu0 %v3934
    %4403 = vmatpush1.bf16.msra.mxu0 %v3933
    %4404 = vmatprep.subr.bf16.mxu0 %v3938
    %4405 = vmatpush1.bf16.msra.mxu0 %v3937
    %4406 = vmatprep.subr.bf16.mxu0 %v3942
    %4407 = vmatpush1.bf16.msra.mxu0 %v3941
    %4408 = vmatprep.subr.bf16.mxu0 %v3946
    %4409 = vmatpush1.bf16.msra.mxu0 %v3945
    %4410 = vmatprep.subr.bf16.mxu0 %v3950
    %4411 = vmatpush1.bf16.msra.mxu0 %v3949
    %4412 = vmatprep.subr.bf16.mxu0 %v3954
    %4413 = vmatpush1.bf16.msra.mxu0 %v3953
    %4414 = vmatprep.subr.bf16.mxu0 %v3958
    %4415 = vmatpush1.bf16.msra.mxu0 %v3957
    %4416 = vmatprep.subr.bf16.mxu0 %v3962
    %4417 = vmatpush1.bf16.msra.mxu0 %v3961
    %4418 = vmatprep.subr.bf16.mxu0 %v3966
    %4419 = vmatpush1.bf16.msra.mxu0 %v3965
    %4420 = vmatprep.subr.bf16.mxu0 %v3970
    %4421 = vmatpush1.bf16.msra.mxu0 %v3969
    %4422 = vmatprep.mubr.bf16.mxu0 %v4236
    %4423 = vmatmul.mubr.bf16.gmra.mrb[0].mxu0 %v4235
    %v4424 = vpop.f32.mrb[0].mxu0
    %v4425 = vadd.f32 %v4384, %v4424
    %v4426 = vpop.f32.mrb[0].mxu0
    %v4427 = vadd.f32 %v4386, %v4426
    %v4428 = vpop.f32.mrb[0].mxu0
    %v4429 = vpop.f32.mrb[0].mxu0
    %4430 = vdwg.mxu0
    %4431 = vmatprep.subr.bf16.mxu0 %v3974
    %4432 = vmatpush1.bf16.msra.mxu0 %v3973
    %4433 = vmatprep.subr.bf16.mxu0 %v3978
    %4434 = vmatpush1.bf16.msra.mxu0 %v3977
    %4435 = vmatprep.subr.bf16.mxu0 %v3982
    %4436 = vmatpush1.bf16.msra.mxu0 %v3981
    %4437 = vmatprep.subr.bf16.mxu0 %v3986
    %4438 = vmatpush1.bf16.msra.mxu0 %v3985
    %4439 = vmatprep.subr.bf16.mxu0 %v3990
    %4440 = vmatpush1.bf16.msra.mxu0 %v3989
    %4441 = vmatprep.subr.bf16.mxu0 %v3994
    %4442 = vmatpush1.bf16.msra.mxu0 %v3993
    %4443 = vmatprep.subr.bf16.mxu0 %v3998
    %4444 = vmatpush1.bf16.msra.mxu0 %v3997
    %4445 = vmatprep.subr.bf16.mxu0 %v4002
    %4446 = vmatpush1.bf16.msra.mxu0 %v4001
    %4447 = vmatprep.subr.bf16.mxu0 %v4006
    %4448 = vmatpush1.bf16.msra.mxu0 %v4005
    %4449 = vmatprep.subr.bf16.mxu0 %v4010
    %4450 = vmatpush1.bf16.msra.mxu0 %v4009
    %4451 = vmatprep.subr.bf16.mxu0 %v4014
    %4452 = vmatpush1.bf16.msra.mxu0 %v4013
    %4453 = vmatprep.subr.bf16.mxu0 %v4018
    %4454 = vmatpush1.bf16.msra.mxu0 %v4017
    %4455 = vmatprep.subr.bf16.mxu0 %v4022
    %4456 = vmatpush1.bf16.msra.mxu0 %v4021
    %4457 = vmatprep.subr.bf16.mxu0 %v4026
    %4458 = vmatpush1.bf16.msra.mxu0 %v4025
    %4459 = vmatprep.subr.bf16.mxu0 %v4030
    %4460 = vmatpush1.bf16.msra.mxu0 %v4029
    %4461 = vmatprep.subr.bf16.mxu0 %v4034
    %4462 = vmatpush1.bf16.msra.mxu0 %v4033
    %4463 = vmatprep.mubr.bf16.mxu0 %v4238
    %4464 = vmatmul.mubr.bf16.gmra.mrb[0].mxu0 %v4237
    %v4465 = vpop.f32.mrb[0].mxu0
    %v4466 = vadd.f32 %v4425, %v4465
    %v4467 = vpop.f32.mrb[0].mxu0
    %v4468 = vadd.f32 %v4427, %v4467
    %v4469 = vpop.f32.mrb[0].mxu0
    %v4470 = vpop.f32.mrb[0].mxu0
    %4471 = vdwg.mxu0
    %4472 = vmatprep.subr.bf16.mxu0 %v4038
    %4473 = vmatpush1.bf16.msra.mxu0 %v4037
    %4474 = vmatprep.subr.bf16.mxu0 %v4042
    %4475 = vmatpush1.bf16.msra.mxu0 %v4041
    %4476 = vmatprep.subr.bf16.mxu0 %v4046
    %4477 = vmatpush1.bf16.msra.mxu0 %v4045
    %4478 = vmatprep.subr.bf16.mxu0 %v4050
    %4479 = vmatpush1.bf16.msra.mxu0 %v4049
    %4480 = vmatprep.subr.bf16.mxu0 %v4054
    %4481 = vmatpush1.bf16.msra.mxu0 %v4053
    %4482 = vmatprep.subr.bf16.mxu0 %v4058
    %4483 = vmatpush1.bf16.msra.mxu0 %v4057
    %4484 = vmatprep.subr.bf16.mxu0 %v4062
    %4485 = vmatpush1.bf16.msra.mxu0 %v4061
    %4486 = vmatprep.subr.bf16.mxu0 %v4066
    %4487 = vmatpush1.bf16.msra.mxu0 %v4065
    %4488 = vmatprep.subr.bf16.mxu0 %v4070
    %4489 = vmatpush1.bf16.msra.mxu0 %v4069
    %4490 = vmatprep.subr.bf16.mxu0 %v4074
    %4491 = vmatpush1.bf16.msra.mxu0 %v4073
    %4492 = vmatprep.subr.bf16.mxu0 %v4078
    %4493 = vmatpush1.bf16.msra.mxu0 %v4077
    %4494 = vmatprep.subr.bf16.mxu0 %v4082
    %4495 = vmatpush1.bf16.msra.mxu0 %v4081
    %4496 = vmatprep.subr.bf16.mxu0 %v4086
    %4497 = vmatpush1.bf16.msra.mxu0 %v4085
    %4498 = vmatprep.subr.bf16.mxu0 %v4090
    %4499 = vmatpush1.bf16.msra.mxu0 %v4089
    %4500 = vmatprep.subr.bf16.mxu0 %v4094
    %4501 = vmatpush1.bf16.msra.mxu0 %v4093
    %4502 = vmatprep.subr.bf16.mxu0 %v4098
    %4503 = vmatpush1.bf16.msra.mxu0 %v4097
    %4504 = vmatprep.mubr.bf16.mxu0 %v4240
    %4505 = vmatmul.mubr.bf16.gmra.mrb[0].mxu0 %v4239
    %v4506 = vpop.f32.mrb[0].mxu0
    %v4507 = vadd.f32 %v4466, %v4506
    %v4508 = vpop.f32.mrb[0].mxu0
    %v4509 = vadd.f32 %v4468, %v4508
    %v4510 = vpop.f32.mrb[0].mxu0
    %v4511 = vpop.f32.mrb[0].mxu0
    %4512 = vdwg.mxu0
    %4513 = vmatprep.subr.bf16.mxu0 %v4102
    %4514 = vmatpush1.bf16.msra.mxu0 %v4101
    %4515 = vmatprep.subr.bf16.mxu0 %v4106
    %4516 = vmatpush1.bf16.msra.mxu0 %v4105
    %4517 = vmatprep.subr.bf16.mxu0 %v4110
    %4518 = vmatpush1.bf16.msra.mxu0 %v4109
    %4519 = vmatprep.subr.bf16.mxu0 %v4114
    %4520 = vmatpush1.bf16.msra.mxu0 %v4113
    %4521 = vmatprep.subr.bf16.mxu0 %v4118
    %4522 = vmatpush1.bf16.msra.mxu0 %v4117
    %4523 = vmatprep.subr.bf16.mxu0 %v4122
    %4524 = vmatpush1.bf16.msra.mxu0 %v4121
    %4525 = vmatprep.subr.bf16.mxu0 %v4126
    %4526 = vmatpush1.bf16.msra.mxu0 %v4125
    %4527 = vmatprep.subr.bf16.mxu0 %v4130
    %4528 = vmatpush1.bf16.msra.mxu0 %v4129
    %4529 = vmatprep.subr.bf16.mxu0 %v4134
    %4530 = vmatpush1.bf16.msra.mxu0 %v4133
    %4531 = vmatprep.subr.bf16.mxu0 %v4138
    %4532 = vmatpush1.bf16.msra.mxu0 %v4137
    %4533 = vmatprep.subr.bf16.mxu0 %v4142
    %4534 = vmatpush1.bf16.msra.mxu0 %v4141
    %4535 = vmatprep.subr.bf16.mxu0 %v4146
    %4536 = vmatpush1.bf16.msra.mxu0 %v4145
    %4537 = vmatprep.subr.bf16.mxu0 %v4150
    %4538 = vmatpush1.bf16.msra.mxu0 %v4149
    %4539 = vmatprep.subr.bf16.mxu0 %v4154
    %4540 = vmatpush1.bf16.msra.mxu0 %v4153
    %4541 = vmatprep.subr.bf16.mxu0 %v4158
    %4542 = vmatpush1.bf16.msra.mxu0 %v4157
    %4543 = vmatprep.subr.bf16.mxu0 %v4162
    %4544 = vmatpush1.bf16.msra.mxu0 %v4161
    %4545 = vmatprep.mubr.bf16.mxu0 %v4242
    %4546 = vmatmul.mubr.bf16.gmra.mrb[0].mxu0 %v4241
    %v4547 = vpop.f32.mrb[0].mxu0
    %v4548 = vadd.f32 %v4507, %v4547
    %v4549 = vpop.f32.mrb[0].mxu0
    %v4550 = vadd.f32 %v4509, %v4549
    %v4551 = vpop.f32.mrb[0].mxu0
    %v4552 = vpop.f32.mrb[0].mxu0
    %4553 = vdwg.mxu0
    %4554 = vmatprep.subr.bf16.mxu0 %v4166
    %4555 = vmatpush1.bf16.msra.mxu0 %v4165
    %4556 = vmatprep.subr.bf16.mxu0 %v4170
    %4557 = vmatpush1.bf16.msra.mxu0 %v4169
    %4558 = vmatprep.subr.bf16.mxu0 %v4174
    %4559 = vmatpush1.bf16.msra.mxu0 %v4173
    %4560 = vmatprep.subr.bf16.mxu0 %v4178
    %4561 = vmatpush1.bf16.msra.mxu0 %v4177
    %4562 = vmatprep.subr.bf16.mxu0 %v4182
    %4563 = vmatpush1.bf16.msra.mxu0 %v4181
    %4564 = vmatprep.subr.bf16.mxu0 %v4186
    %4565 = vmatpush1.bf16.msra.mxu0 %v4185
    %4566 = vmatprep.subr.bf16.mxu0 %v4190
    %4567 = vmatpush1.bf16.msra.mxu0 %v4189
    %4568 = vmatprep.subr.bf16.mxu0 %v4194
    %4569 = vmatpush1.bf16.msra.mxu0 %v4193
    %4570 = vmatprep.subr.bf16.mxu0 %v4198
    %4571 = vmatpush1.bf16.msra.mxu0 %v4197
    %4572 = vmatprep.subr.bf16.mxu0 %v4202
    %4573 = vmatpush1.bf16.msra.mxu0 %v4201
    %4574 = vmatprep.subr.bf16.mxu0 %v4206
    %4575 = vmatpush1.bf16.msra.mxu0 %v4205
    %4576 = vmatprep.subr.bf16.mxu0 %v4210
    %4577 = vmatpush1.bf16.msra.mxu0 %v4209
    %4578 = vmatprep.subr.bf16.mxu0 %v4214
    %4579 = vmatpush1.bf16.msra.mxu0 %v4213
    %4580 = vmatprep.subr.bf16.mxu0 %v4218
    %4581 = vmatpush1.bf16.msra.mxu0 %v4217
    %4582 = vmatprep.subr.bf16.mxu0 %v4222
    %4583 = vmatpush1.bf16.msra.mxu0 %v4221
    %4584 = vmatprep.subr.bf16.mxu0 %v4226
    %4585 = vmatpush1.bf16.msra.mxu0 %v4225
    %4586 = vmatprep.mubr.bf16.mxu0 %v4244
    %4587 = vmatmul.mubr.bf16.gmra.mrb[0].mxu0 %v4243
    %v4588 = vpop.f32.mrb[0].mxu0
    %v4589 = vadd.f32 %v4548, %v4588
    %v4590 = vpop.f32.mrb[0].mxu0
    %v4591 = vadd.f32 %v4550, %v4590
    %v4592 = vpop.f32.mrb[0].mxu0
    %v4593 = vpop.f32.mrb[0].mxu0
    %4594 = vdwg.mxu0
    %4595 = vmatprep.subr.bf16.mxu0 %v3720
    %4596 = vmatpush1.bf16.msra.mxu0 %v3719
    %4597 = vmatprep.subr.bf16.mxu0 %v3724
    %4598 = vmatpush1.bf16.msra.mxu0 %v3723
    %4599 = vmatprep.subr.bf16.mxu0 %v3728
    %4600 = vmatpush1.bf16.msra.mxu0 %v3727
    %4601 = vmatprep.subr.bf16.mxu0 %v3732
    %4602 = vmatpush1.bf16.msra.mxu0 %v3731
    %4603 = vmatprep.subr.bf16.mxu0 %v3736
    %4604 = vmatpush1.bf16.msra.mxu0 %v3735
    %4605 = vmatprep.subr.bf16.mxu0 %v3740
    %4606 = vmatpush1.bf16.msra.mxu0 %v3739
    %4607 = vmatprep.subr.bf16.mxu0 %v3744
    %4608 = vmatpush1.bf16.msra.mxu0 %v3743
    %4609 = vmatprep.subr.bf16.mxu0 %v3748
    %4610 = vmatpush1.bf16.msra.mxu0 %v3747
    %4611 = vmatprep.subr.bf16.mxu0 %v3752
    %4612 = vmatpush1.bf16.msra.mxu0 %v3751
    %4613 = vmatprep.subr.bf16.mxu0 %v3756
    %4614 = vmatpush1.bf16.msra.mxu0 %v3755
    %4615 = vmatprep.subr.bf16.mxu0 %v3760
    %4616 = vmatpush1.bf16.msra.mxu0 %v3759
    %4617 = vmatprep.subr.bf16.mxu0 %v3764
    %4618 = vmatpush1.bf16.msra.mxu0 %v3763
    %4619 = vmatprep.subr.bf16.mxu0 %v3768
    %4620 = vmatpush1.bf16.msra.mxu0 %v3767
    %4621 = vmatprep.subr.bf16.mxu0 %v3772
    %4622 = vmatpush1.bf16.msra.mxu0 %v3771
    %4623 = vmatprep.subr.bf16.mxu0 %v3776
    %4624 = vmatpush1.bf16.msra.mxu0 %v3775
    %4625 = vmatprep.subr.bf16.mxu0 %v3780
    %4626 = vmatpush1.bf16.msra.mxu0 %v3779
    %4627 = vmatprep.mubr.bf16.mxu0 %v4230
    %4628 = vmatmul.mubr.bf16.gmra.mrb[0].mxu0 %v4229
    %v4629 = vpop.f32.mrb[0].mxu0
    %v4630 = vadd.f32 %v4258, %v4629
    %v4631 = vpop.f32.mrb[0].mxu0
    %v4632 = vadd.f32 %v4262, %v4631
    %v4633 = vpop.f32.mrb[0].mxu0
    %v4634 = vpop.f32.mrb[0].mxu0
    %4635 = vdwg.mxu0
    %4636 = vmatprep.subr.bf16.mxu0 %v3784
    %4637 = vmatpush1.bf16.msra.mxu0 %v3783
    %4638 = vmatprep.subr.bf16.mxu0 %v3788
    %4639 = vmatpush1.bf16.msra.mxu0 %v3787
    %4640 = vmatprep.subr.bf16.mxu0 %v3792
    %4641 = vmatpush1.bf16.msra.mxu0 %v3791
    %4642 = vmatprep.subr.bf16.mxu0 %v3796
    %4643 = vmatpush1.bf16.msra.mxu0 %v3795
    %4644 = vmatprep.subr.bf16.mxu0 %v3800
    %4645 = vmatpush1.bf16.msra.mxu0 %v3799
    %4646 = vmatprep.subr.bf16.mxu0 %v3804
    %4647 = vmatpush1.bf16.msra.mxu0 %v3803
    %4648 = vmatprep.subr.bf16.mxu0 %v3808
    %4649 = vmatpush1.bf16.msra.mxu0 %v3807
    %4650 = vmatprep.subr.bf16.mxu0 %v3812
    %4651 = vmatpush1.bf16.msra.mxu0 %v3811
    %4652 = vmatprep.subr.bf16.mxu0 %v3816
    %4653 = vmatpush1.bf16.msra.mxu0 %v3815
    %4654 = vmatprep.subr.bf16.mxu0 %v3820
    %4655 = vmatpush1.bf16.msra.mxu0 %v3819
    %4656 = vmatprep.subr.bf16.mxu0 %v3824
    %4657 = vmatpush1.bf16.msra.mxu0 %v3823
    %4658 = vmatprep.subr.bf16.mxu0 %v3828
    %4659 = vmatpush1.bf16.msra.mxu0 %v3827
    %4660 = vmatprep.subr.bf16.mxu0 %v3832
    %4661 = vmatpush1.bf16.msra.mxu0 %v3831
    %4662 = vmatprep.subr.bf16.mxu0 %v3836
    %4663 = vmatpush1.bf16.msra.mxu0 %v3835
    %4664 = vmatprep.subr.bf16.mxu0 %v3840
    %4665 = vmatpush1.bf16.msra.mxu0 %v3839
    %4666 = vmatprep.subr.bf16.mxu0 %v3844
    %4667 = vmatpush1.bf16.msra.mxu0 %v3843
    %4668 = vmatprep.mubr.bf16.mxu0 %v4232
    %4669 = vmatmul.mubr.bf16.gmra.mrb[0].mxu0 %v4231
    %v4670 = vpop.f32.mrb[0].mxu0
    %v4671 = vadd.f32 %v4630, %v4670
    %v4672 = vpop.f32.mrb[0].mxu0
    %v4673 = vadd.f32 %v4632, %v4672
    %v4674 = vpop.f32.mrb[0].mxu0
    %v4675 = vpop.f32.mrb[0].mxu0
    %4676 = vdwg.mxu0
    %4677 = vmatprep.subr.bf16.mxu0 %v3848
    %4678 = vmatpush1.bf16.msra.mxu0 %v3847
    %4679 = vmatprep.subr.bf16.mxu0 %v3852
    %4680 = vmatpush1.bf16.msra.mxu0 %v3851
    %4681 = vmatprep.subr.bf16.mxu0 %v3856
    %4682 = vmatpush1.bf16.msra.mxu0 %v3855
    %4683 = vmatprep.subr.bf16.mxu0 %v3860
    %4684 = vmatpush1.bf16.msra.mxu0 %v3859
    %4685 = vmatprep.subr.bf16.mxu0 %v3864
    %4686 = vmatpush1.bf16.msra.mxu0 %v3863
    %4687 = vmatprep.subr.bf16.mxu0 %v3868
    %4688 = vmatpush1.bf16.msra.mxu0 %v3867
    %4689 = vmatprep.subr.bf16.mxu0 %v3872
    %4690 = vmatpush1.bf16.msra.mxu0 %v3871
    %4691 = vmatprep.subr.bf16.mxu0 %v3876
    %4692 = vmatpush1.bf16.msra.mxu0 %v3875
    %4693 = vmatprep.subr.bf16.mxu0 %v3880
    %4694 = vmatpush1.bf16.msra.mxu0 %v3879
    %4695 = vmatprep.subr.bf16.mxu0 %v3884
    %4696 = vmatpush1.bf16.msra.mxu0 %v3883
    %4697 = vmatprep.subr.bf16.mxu0 %v3888
    %4698 = vmatpush1.bf16.msra.mxu0 %v3887
    %4699 = vmatprep.subr.bf16.mxu0 %v3892
    %4700 = vmatpush1.bf16.msra.mxu0 %v3891
    %4701 = vmatprep.subr.bf16.mxu0 %v3896
    %4702 = vmatpush1.bf16.msra.mxu0 %v3895
    %4703 = vmatprep.subr.bf16.mxu0 %v3900
    %4704 = vmatpush1.bf16.msra.mxu0 %v3899
    %4705 = vmatprep.subr.bf16.mxu0 %v3904
    %4706 = vmatpush1.bf16.msra.mxu0 %v3903
    %4707 = vmatprep.subr.bf16.mxu0 %v3908
    %4708 = vmatpush1.bf16.msra.mxu0 %v3907
    %4709 = vmatprep.mubr.bf16.mxu0 %v4234
    %4710 = vmatmul.mubr.bf16.gmra.mrb[0].mxu0 %v4233
    %v4711 = vpop.f32.mrb[0].mxu0
    %v4712 = vadd.f32 %v4671, %v4711
    %v4713 = vpop.f32.mrb[0].mxu0
    %v4714 = vadd.f32 %v4673, %v4713
    %v4715 = vpop.f32.mrb[0].mxu0
    %v4716 = vpop.f32.mrb[0].mxu0
    %4717 = vdwg.mxu0
    %4718 = vmatprep.subr.bf16.mxu0 %v3912
    %4719 = vmatpush1.bf16.msra.mxu0 %v3911
    %4720 = vmatprep.subr.bf16.mxu0 %v3916
    %4721 = vmatpush1.bf16.msra.mxu0 %v3915
    %4722 = vmatprep.subr.bf16.mxu0 %v3920
    %4723 = vmatpush1.bf16.msra.mxu0 %v3919
    %4724 = vmatprep.subr.bf16.mxu0 %v3924
    %4725 = vmatpush1.bf16.msra.mxu0 %v3923
    %4726 = vmatprep.subr.bf16.mxu0 %v3928
    %4727 = vmatpush1.bf16.msra.mxu0 %v3927
    %4728 = vmatprep.subr.bf16.mxu0 %v3932
    %4729 = vmatpush1.bf16.msra.mxu0 %v3931
    %4730 = vmatprep.subr.bf16.mxu0 %v3936
    %4731 = vmatpush1.bf16.msra.mxu0 %v3935
    %4732 = vmatprep.subr.bf16.mxu0 %v3940
    %4733 = vmatpush1.bf16.msra.mxu0 %v3939
    %4734 = vmatprep.subr.bf16.mxu0 %v3944
    %4735 = vmatpush1.bf16.msra.mxu0 %v3943
    %4736 = vmatprep.subr.bf16.mxu0 %v3948
    %4737 = vmatpush1.bf16.msra.mxu0 %v3947
    %4738 = vmatprep.subr.bf16.mxu0 %v3952
    %4739 = vmatpush1.bf16.msra.mxu0 %v3951
    %4740 = vmatprep.subr.bf16.mxu0 %v3956
    %4741 = vmatpush1.bf16.msra.mxu0 %v3955
    %4742 = vmatprep.subr.bf16.mxu0 %v3960
    %4743 = vmatpush1.bf16.msra.mxu0 %v3959
    %4744 = vmatprep.subr.bf16.mxu0 %v3964
    %4745 = vmatpush1.bf16.msra.mxu0 %v3963
    %4746 = vmatprep.subr.bf16.mxu0 %v3968
    %4747 = vmatpush1.bf16.msra.mxu0 %v3967
    %4748 = vmatprep.subr.bf16.mxu0 %v3972
    %4749 = vmatpush1.bf16.msra.mxu0 %v3971
    %4750 = vmatprep.mubr.bf16.mxu0 %v4236
    %4751 = vmatmul.mubr.bf16.gmra.mrb[0].mxu0 %v4235
    %v4752 = vpop.f32.mrb[0].mxu0
    %v4753 = vadd.f32 %v4712, %v4752
    %v4754 = vpop.f32.mrb[0].mxu0
    %v4755 = vadd.f32 %v4714, %v4754
    %v4756 = vpop.f32.mrb[0].mxu0
    %v4757 = vpop.f32.mrb[0].mxu0
    %4758 = vdwg.mxu0
    %4759 = vmatprep.subr.bf16.mxu0 %v3976
    %4760 = vmatpush1.bf16.msra.mxu0 %v3975
    %4761 = vmatprep.subr.bf16.mxu0 %v3980
    %4762 = vmatpush1.bf16.msra.mxu0 %v3979
    %4763 = vmatprep.subr.bf16.mxu0 %v3984
    %4764 = vmatpush1.bf16.msra.mxu0 %v3983
    %4765 = vmatprep.subr.bf16.mxu0 %v3988
    %4766 = vmatpush1.bf16.msra.mxu0 %v3987
    %4767 = vmatprep.subr.bf16.mxu0 %v3992
    %4768 = vmatpush1.bf16.msra.mxu0 %v3991
    %4769 = vmatprep.subr.bf16.mxu0 %v3996
    %4770 = vmatpush1.bf16.msra.mxu0 %v3995
    %4771 = vmatprep.subr.bf16.mxu0 %v4000
    %4772 = vmatpush1.bf16.msra.mxu0 %v3999
    %4773 = vmatprep.subr.bf16.mxu0 %v4004
    %4774 = vmatpush1.bf16.msra.mxu0 %v4003
    %4775 = vmatprep.subr.bf16.mxu0 %v4008
    %4776 = vmatpush1.bf16.msra.mxu0 %v4007
    %4777 = vmatprep.subr.bf16.mxu0 %v4012
    %4778 = vmatpush1.bf16.msra.mxu0 %v4011
    %4779 = vmatprep.subr.bf16.mxu0 %v4016
    %4780 = vmatpush1.bf16.msra.mxu0 %v4015
    %4781 = vmatprep.subr.bf16.mxu0 %v4020
    %4782 = vmatpush1.bf16.msra.mxu0 %v4019
    %4783 = vmatprep.subr.bf16.mxu0 %v4024
    %4784 = vmatpush1.bf16.msra.mxu0 %v4023
    %4785 = vmatprep.subr.bf16.mxu0 %v4028
    %4786 = vmatpush1.bf16.msra.mxu0 %v4027
    %4787 = vmatprep.subr.bf16.mxu0 %v4032
    %4788 = vmatpush1.bf16.msra.mxu0 %v4031
    %4789 = vmatprep.subr.bf16.mxu0 %v4036
    %4790 = vmatpush1.bf16.msra.mxu0 %v4035
    %4791 = vmatprep.mubr.bf16.mxu0 %v4238
    %4792 = vmatmul.mubr.bf16.gmra.mrb[0].mxu0 %v4237
    %v4793 = vpop.f32.mrb[0].mxu0
    %v4794 = vadd.f32 %v4753, %v4793
    %v4795 = vpop.f32.mrb[0].mxu0
    %v4796 = vadd.f32 %v4755, %v4795
    %v4797 = vpop.f32.mrb[0].mxu0
    %v4798 = vpop.f32.mrb[0].mxu0
    %4799 = vdwg.mxu0
    %4800 = vmatprep.subr.bf16.mxu0 %v4040
    %4801 = vmatpush1.bf16.msra.mxu0 %v4039
    %4802 = vmatprep.subr.bf16.mxu0 %v4044
    %4803 = vmatpush1.bf16.msra.mxu0 %v4043
    %4804 = vmatprep.subr.bf16.mxu0 %v4048
    %4805 = vmatpush1.bf16.msra.mxu0 %v4047
    %4806 = vmatprep.subr.bf16.mxu0 %v4052
    %4807 = vmatpush1.bf16.msra.mxu0 %v4051
    %4808 = vmatprep.subr.bf16.mxu0 %v4056
    %4809 = vmatpush1.bf16.msra.mxu0 %v4055
    %4810 = vmatprep.subr.bf16.mxu0 %v4060
    %4811 = vmatpush1.bf16.msra.mxu0 %v4059
    %4812 = vmatprep.subr.bf16.mxu0 %v4064
    %4813 = vmatpush1.bf16.msra.mxu0 %v4063
    %4814 = vmatprep.subr.bf16.mxu0 %v4068
    %4815 = vmatpush1.bf16.msra.mxu0 %v4067
    %4816 = vmatprep.subr.bf16.mxu0 %v4072
    %4817 = vmatpush1.bf16.msra.mxu0 %v4071
    %4818 = vmatprep.subr.bf16.mxu0 %v4076
    %4819 = vmatpush1.bf16.msra.mxu0 %v4075
    %4820 = vmatprep.subr.bf16.mxu0 %v4080
    %4821 = vmatpush1.bf16.msra.mxu0 %v4079
    %4822 = vmatprep.subr.bf16.mxu0 %v4084
    %4823 = vmatpush1.bf16.msra.mxu0 %v4083
    %4824 = vmatprep.subr.bf16.mxu0 %v4088
    %4825 = vmatpush1.bf16.msra.mxu0 %v4087
    %4826 = vmatprep.subr.bf16.mxu0 %v4092
    %4827 = vmatpush1.bf16.msra.mxu0 %v4091
    %4828 = vmatprep.subr.bf16.mxu0 %v4096
    %4829 = vmatpush1.bf16.msra.mxu0 %v4095
    %4830 = vmatprep.subr.bf16.mxu0 %v4100
    %4831 = vmatpush1.bf16.msra.mxu0 %v4099
    %4832 = vmatprep.mubr.bf16.mxu0 %v4240
    %4833 = vmatmul.mubr.bf16.gmra.mrb[0].mxu0 %v4239
    %v4834 = vpop.f32.mrb[0].mxu0
    %v4835 = vadd.f32 %v4794, %v4834
    %v4836 = vpop.f32.mrb[0].mxu0
    %v4837 = vadd.f32 %v4796, %v4836
    %v4838 = vpop.f32.mrb[0].mxu0
    %v4839 = vpop.f32.mrb[0].mxu0
    %4840 = vdwg.mxu0
    %4841 = vmatprep.subr.bf16.mxu0 %v4104
    %4842 = vmatpush1.bf16.msra.mxu0 %v4103
    %4843 = vmatprep.subr.bf16.mxu0 %v4108
    %4844 = vmatpush1.bf16.msra.mxu0 %v4107
    %4845 = vmatprep.subr.bf16.mxu0 %v4112
    %4846 = vmatpush1.bf16.msra.mxu0 %v4111
    %4847 = vmatprep.subr.bf16.mxu0 %v4116
    %4848 = vmatpush1.bf16.msra.mxu0 %v4115
    %4849 = vmatprep.subr.bf16.mxu0 %v4120
    %4850 = vmatpush1.bf16.msra.mxu0 %v4119
    %4851 = vmatprep.subr.bf16.mxu0 %v4124
    %4852 = vmatpush1.bf16.msra.mxu0 %v4123
    %4853 = vmatprep.subr.bf16.mxu0 %v4128
    %4854 = vmatpush1.bf16.msra.mxu0 %v4127
    %4855 = vmatprep.subr.bf16.mxu0 %v4132
    %4856 = vmatpush1.bf16.msra.mxu0 %v4131
    %4857 = vmatprep.subr.bf16.mxu0 %v4136
    %4858 = vmatpush1.bf16.msra.mxu0 %v4135
    %4859 = vmatprep.subr.bf16.mxu0 %v4140
    %4860 = vmatpush1.bf16.msra.mxu0 %v4139
    %4861 = vmatprep.subr.bf16.mxu0 %v4144
    %4862 = vmatpush1.bf16.msra.mxu0 %v4143
    %4863 = vmatprep.subr.bf16.mxu0 %v4148
    %4864 = vmatpush1.bf16.msra.mxu0 %v4147
    %4865 = vmatprep.subr.bf16.mxu0 %v4152
    %4866 = vmatpush1.bf16.msra.mxu0 %v4151
    %4867 = vmatprep.subr.bf16.mxu0 %v4156
    %4868 = vmatpush1.bf16.msra.mxu0 %v4155
    %4869 = vmatprep.subr.bf16.mxu0 %v4160
    %4870 = vmatpush1.bf16.msra.mxu0 %v4159
    %4871 = vmatprep.subr.bf16.mxu0 %v4164
    %4872 = vmatpush1.bf16.msra.mxu0 %v4163
    %4873 = vmatprep.mubr.bf16.mxu0 %v4242
    %4874 = vmatmul.mubr.bf16.gmra.mrb[0].mxu0 %v4241
    %v4875 = vpop.f32.mrb[0].mxu0
    %v4876 = vadd.f32 %v4835, %v4875
    %v4877 = vpop.f32.mrb[0].mxu0
    %v4878 = vadd.f32 %v4837, %v4877
    %v4879 = vpop.f32.mrb[0].mxu0
    %v4880 = vpop.f32.mrb[0].mxu0
    %4881 = vdwg.mxu0
    %4882 = vmatprep.subr.bf16.mxu0 %v4168
    %4883 = vmatpush1.bf16.msra.mxu0 %v4167
    %4884 = vmatprep.subr.bf16.mxu0 %v4172
    %4885 = vmatpush1.bf16.msra.mxu0 %v4171
    %4886 = vmatprep.subr.bf16.mxu0 %v4176
    %4887 = vmatpush1.bf16.msra.mxu0 %v4175
    %4888 = vmatprep.subr.bf16.mxu0 %v4180
    %4889 = vmatpush1.bf16.msra.mxu0 %v4179
    %4890 = vmatprep.subr.bf16.mxu0 %v4184
    %4891 = vmatpush1.bf16.msra.mxu0 %v4183
    %4892 = vmatprep.subr.bf16.mxu0 %v4188
    %4893 = vmatpush1.bf16.msra.mxu0 %v4187
    %4894 = vmatprep.subr.bf16.mxu0 %v4192
    %4895 = vmatpush1.bf16.msra.mxu0 %v4191
    %4896 = vmatprep.subr.bf16.mxu0 %v4196
    %4897 = vmatpush1.bf16.msra.mxu0 %v4195
    %4898 = vmatprep.subr.bf16.mxu0 %v4200
    %4899 = vmatpush1.bf16.msra.mxu0 %v4199
    %4900 = vmatprep.subr.bf16.mxu0 %v4204
    %4901 = vmatpush1.bf16.msra.mxu0 %v4203
    %4902 = vmatprep.subr.bf16.mxu0 %v4208
    %4903 = vmatpush1.bf16.msra.mxu0 %v4207
    %4904 = vmatprep.subr.bf16.mxu0 %v4212
    %4905 = vmatpush1.bf16.msra.mxu0 %v4211
    %4906 = vmatprep.subr.bf16.mxu0 %v4216
    %4907 = vmatpush1.bf16.msra.mxu0 %v4215
    %4908 = vmatprep.subr.bf16.mxu0 %v4220
    %4909 = vmatpush1.bf16.msra.mxu0 %v4219
    %4910 = vmatprep.subr.bf16.mxu0 %v4224
    %4911 = vmatpush1.bf16.msra.mxu0 %v4223
    %4912 = vmatprep.subr.bf16.mxu0 %v4228
    %4913 = vmatpush1.bf16.msra.mxu0 %v4227
    %4914 = vmatprep.mubr.bf16.mxu0 %v4244
    %4915 = vmatmul.mubr.bf16.gmra.mrb[0].mxu0 %v4243
    %v4916 = vpop.f32.mrb[0].mxu0
    %v4917 = vadd.f32 %v4876, %v4916
    %v4918 = vpop.f32.mrb[0].mxu0
    %v4919 = vadd.f32 %v4878, %v4918
    %v4920 = vpop.f32.mrb[0].mxu0
    %v4921 = vpop.f32.mrb[0].mxu0
    %4922 = vdwg.mxu0
    %v4923 = vand.u32 2147483647, %v4589
    %v4924 = vand.u32 2147483647, %v4591
    %v4925 = vand.u32 2147483647, %v4917
    %v4926 = vand.u32 2147483647, %v4919
    %v4927 = vadd.f32 %v4923, 1.0
    %v4928 = vadd.f32 %v4924, 1.0
    %v4929 = vadd.f32 %v4925, 1.0
    %v4930 = vadd.f32 %v4926, 1.0
    %v4931 = vrcp.pop %v4927
    %v4932 = vrcp.pop %v4928
    %v4933 = vrcp.pop %v4929
    %v4934 = vrcp.pop %v4930
    %v4935 = vmul.f32 %v4589, %v4931
    %v4936 = vmul.f32 %v4591, %v4932
    %v4937 = vmul.f32 %v4917, %v4933
    %v4938 = vmul.f32 %v4919, %v4934
    %s4939 = smul.u32 4, 64
    %s4940 = smul.u32 %s4939, 4
    %s4941 = sshll.u32 %s4940, 4
    %4942 = dma.done %s162, %s4941
    %v4943 = vld [vmem:[#allocation4] sm:$0xff]
    %v4944 = vld [vmem:[#allocation4 + $0x8] sm:$0xff]
    %v4945 = vld [vmem:[#allocation4 + $0x10] sm:$0xff]
    %v4946 = vld [vmem:[#allocation4 + $0x18] sm:$0xff]
    %v4947 = vld [vmem:[#allocation4 + $0x20] sm:$0xff]
    %v4948 = vld [vmem:[#allocation4 + $0x28] sm:$0xff]
    %v4949 = vld [vmem:[#allocation4 + $0x30] sm:$0xff]
    %v4950 = vld [vmem:[#allocation4 + $0x38] sm:$0xff]
    %v4951 = vld [vmem:[#allocation4 + $0x40] sm:$0xff]
    %v4952 = vld [vmem:[#allocation4 + $0x48] sm:$0xff]
    %v4953 = vld [vmem:[#allocation4 + $0x50] sm:$0xff]
    %v4954 = vld [vmem:[#allocation4 + $0x58] sm:$0xff]
    %v4955 = vld [vmem:[#allocation4 + $0x60] sm:$0xff]
    %v4956 = vld [vmem:[#allocation4 + $0x68] sm:$0xff]
    %v4957 = vld [vmem:[#allocation4 + $0x70] sm:$0xff]
    %v4958 = vld [vmem:[#allocation4 + $0x78] sm:$0xff]
    %v4959 = vld [vmem:[#allocation4 + $0x80] sm:$0xff]
    %v4960 = vld [vmem:[#allocation4 + $0x88] sm:$0xff]
    %v4961 = vld [vmem:[#allocation4 + $0x90] sm:$0xff]
    %v4962 = vld [vmem:[#allocation4 + $0x98] sm:$0xff]
    %v4963 = vld [vmem:[#allocation4 + $0xa0] sm:$0xff]
    %v4964 = vld [vmem:[#allocation4 + $0xa8] sm:$0xff]
    %v4965 = vld [vmem:[#allocation4 + $0xb0] sm:$0xff]
    %v4966 = vld [vmem:[#allocation4 + $0xb8] sm:$0xff]
    %v4967 = vld [vmem:[#allocation4 + $0xc0] sm:$0xff]
    %v4968 = vld [vmem:[#allocation4 + $0xc8] sm:$0xff]
    %v4969 = vld [vmem:[#allocation4 + $0xd0] sm:$0xff]
    %v4970 = vld [vmem:[#allocation4 + $0xd8] sm:$0xff]
    %v4971 = vld [vmem:[#allocation4 + $0xe0] sm:$0xff]
    %v4972 = vld [vmem:[#allocation4 + $0xe8] sm:$0xff]
    %v4973 = vld [vmem:[#allocation4 + $0xf0] sm:$0xff]
    %v4974 = vld [vmem:[#allocation4 + $0xf8] sm:$0xff]
    %v4975 = vld [vmem:[#allocation4 + $0x100] sm:$0xff]
    %v4976 = vld [vmem:[#allocation4 + $0x108] sm:$0xff]
    %v4977 = vld [vmem:[#allocation4 + $0x110] sm:$0xff]
    %v4978 = vld [vmem:[#allocation4 + $0x118] sm:$0xff]
    %v4979 = vld [vmem:[#allocation4 + $0x120] sm:$0xff]
    %v4980 = vld [vmem:[#allocation4 + $0x128] sm:$0xff]
    %v4981 = vld [vmem:[#allocation4 + $0x130] sm:$0xff]
    %v4982 = vld [vmem:[#allocation4 + $0x138] sm:$0xff]
    %v4983 = vld [vmem:[#allocation4 + $0x140] sm:$0xff]
    %v4984 = vld [vmem:[#allocation4 + $0x148] sm:$0xff]
    %v4985 = vld [vmem:[#allocation4 + $0x150] sm:$0xff]
    %v4986 = vld [vmem:[#allocation4 + $0x158] sm:$0xff]
    %v4987 = vld [vmem:[#allocation4 + $0x160] sm:$0xff]
    %v4988 = vld [vmem:[#allocation4 + $0x168] sm:$0xff]
    %v4989 = vld [vmem:[#allocation4 + $0x170] sm:$0xff]
    %v4990 = vld [vmem:[#allocation4 + $0x178] sm:$0xff]
    %v4991 = vld [vmem:[#allocation4 + $0x180] sm:$0xff]
    %v4992 = vld [vmem:[#allocation4 + $0x188] sm:$0xff]
    %v4993 = vld [vmem:[#allocation4 + $0x190] sm:$0xff]
    %v4994 = vld [vmem:[#allocation4 + $0x198] sm:$0xff]
    %v4995 = vld [vmem:[#allocation4 + $0x1a0] sm:$0xff]
    %v4996 = vld [vmem:[#allocation4 + $0x1a8] sm:$0xff]
    %v4997 = vld [vmem:[#allocation4 + $0x1b0] sm:$0xff]
    %v4998 = vld [vmem:[#allocation4 + $0x1b8] sm:$0xff]
    %v4999 = vld [vmem:[#allocation4 + $0x1c0] sm:$0xff]
    %v5000 = vld [vmem:[#allocation4 + $0x1c8] sm:$0xff]
    %v5001 = vld [vmem:[#allocation4 + $0x1d0] sm:$0xff]
    %v5002 = vld [vmem:[#allocation4 + $0x1d8] sm:$0xff]
    %v5003 = vld [vmem:[#allocation4 + $0x1e0] sm:$0xff]
    %v5004 = vld [vmem:[#allocation4 + $0x1e8] sm:$0xff]
    %v5005 = vld [vmem:[#allocation4 + $0x1f0] sm:$0xff]
    %v5006 = vld [vmem:[#allocation4 + $0x1f8] sm:$0xff]
    %v5007 = vld [vmem:[#allocation4 + $0x200] sm:$0xff]
    %v5008 = vld [vmem:[#allocation4 + $0x208] sm:$0xff]
    %v5009 = vld [vmem:[#allocation4 + $0x210] sm:$0xff]
    %v5010 = vld [vmem:[#allocation4 + $0x218] sm:$0xff]
    %v5011 = vld [vmem:[#allocation4 + $0x220] sm:$0xff]
    %v5012 = vld [vmem:[#allocation4 + $0x228] sm:$0xff]
    %v5013 = vld [vmem:[#allocation4 + $0x230] sm:$0xff]
    %v5014 = vld [vmem:[#allocation4 + $0x238] sm:$0xff]
    %v5015 = vld [vmem:[#allocation4 + $0x240] sm:$0xff]
    %v5016 = vld [vmem:[#allocation4 + $0x248] sm:$0xff]
    %v5017 = vld [vmem:[#allocation4 + $0x250] sm:$0xff]
    %v5018 = vld [vmem:[#allocation4 + $0x258] sm:$0xff]
    %v5019 = vld [vmem:[#allocation4 + $0x260] sm:$0xff]
    %v5020 = vld [vmem:[#allocation4 + $0x268] sm:$0xff]
    %v5021 = vld [vmem:[#allocation4 + $0x270] sm:$0xff]
    %v5022 = vld [vmem:[#allocation4 + $0x278] sm:$0xff]
    %v5023 = vld [vmem:[#allocation4 + $0x280] sm:$0xff]
    %v5024 = vld [vmem:[#allocation4 + $0x288] sm:$0xff]
    %v5025 = vld [vmem:[#allocation4 + $0x290] sm:$0xff]
    %v5026 = vld [vmem:[#allocation4 + $0x298] sm:$0xff]
    %v5027 = vld [vmem:[#allocation4 + $0x2a0] sm:$0xff]
    %v5028 = vld [vmem:[#allocation4 + $0x2a8] sm:$0xff]
    %v5029 = vld [vmem:[#allocation4 + $0x2b0] sm:$0xff]
    %v5030 = vld [vmem:[#allocation4 + $0x2b8] sm:$0xff]
    %v5031 = vld [vmem:[#allocation4 + $0x2c0] sm:$0xff]
    %v5032 = vld [vmem:[#allocation4 + $0x2c8] sm:$0xff]
    %v5033 = vld [vmem:[#allocation4 + $0x2d0] sm:$0xff]
    %v5034 = vld [vmem:[#allocation4 + $0x2d8] sm:$0xff]
    %v5035 = vld [vmem:[#allocation4 + $0x2e0] sm:$0xff]
    %v5036 = vld [vmem:[#allocation4 + $0x2e8] sm:$0xff]
    %v5037 = vld [vmem:[#allocation4 + $0x2f0] sm:$0xff]
    %v5038 = vld [vmem:[#allocation4 + $0x2f8] sm:$0xff]
    %v5039 = vld [vmem:[#allocation4 + $0x300] sm:$0xff]
    %v5040 = vld [vmem:[#allocation4 + $0x308] sm:$0xff]
    %v5041 = vld [vmem:[#allocation4 + $0x310] sm:$0xff]
    %v5042 = vld [vmem:[#allocation4 + $0x318] sm:$0xff]
    %v5043 = vld [vmem:[#allocation4 + $0x320] sm:$0xff]
    %v5044 = vld [vmem:[#allocation4 + $0x328] sm:$0xff]
    %v5045 = vld [vmem:[#allocation4 + $0x330] sm:$0xff]
    %v5046 = vld [vmem:[#allocation4 + $0x338] sm:$0xff]
    %v5047 = vld [vmem:[#allocation4 + $0x340] sm:$0xff]
    %v5048 = vld [vmem:[#allocation4 + $0x348] sm:$0xff]
    %v5049 = vld [vmem:[#allocation4 + $0x350] sm:$0xff]
    %v5050 = vld [vmem:[#allocation4 + $0x358] sm:$0xff]
    %v5051 = vld [vmem:[#allocation4 + $0x360] sm:$0xff]
    %v5052 = vld [vmem:[#allocation4 + $0x368] sm:$0xff]
    %v5053 = vld [vmem:[#allocation4 + $0x370] sm:$0xff]
    %v5054 = vld [vmem:[#allocation4 + $0x378] sm:$0xff]
    %v5055 = vld [vmem:[#allocation4 + $0x380] sm:$0xff]
    %v5056 = vld [vmem:[#allocation4 + $0x388] sm:$0xff]
    %v5057 = vld [vmem:[#allocation4 + $0x390] sm:$0xff]
    %v5058 = vld [vmem:[#allocation4 + $0x398] sm:$0xff]
    %v5059 = vld [vmem:[#allocation4 + $0x3a0] sm:$0xff]
    %v5060 = vld [vmem:[#allocation4 + $0x3a8] sm:$0xff]
    %v5061 = vld [vmem:[#allocation4 + $0x3b0] sm:$0xff]
    %v5062 = vld [vmem:[#allocation4 + $0x3b8] sm:$0xff]
    %v5063 = vld [vmem:[#allocation4 + $0x3c0] sm:$0xff]
    %v5064 = vld [vmem:[#allocation4 + $0x3c8] sm:$0xff]
    %v5065 = vld [vmem:[#allocation4 + $0x3d0] sm:$0xff]
    %v5066 = vld [vmem:[#allocation4 + $0x3d8] sm:$0xff]
    %v5067 = vld [vmem:[#allocation4 + $0x3e0] sm:$0xff]
    %v5068 = vld [vmem:[#allocation4 + $0x3e8] sm:$0xff]
    %v5069 = vld [vmem:[#allocation4 + $0x3f0] sm:$0xff]
    %v5070 = vld [vmem:[#allocation4 + $0x3f8] sm:$0xff]
    %v5071 = vpack.c.bf16 %v4935, %v4935
    %v5072 = vpack.c.bf16 %v4936, %v4936
    %v5073 = vpack.c.bf16 %v4937, %v4937
    %v5074 = vpack.c.bf16 %v4938, %v4938
    %v5075 = vld [vmem:[#allocation13 + $0x1c] sm:$0xf]
    %v5077 = vlaneseq
    %v5078 = vshrl.u32 %v5077, 7
    %v5079 = vsub.s32 0, %v5078
    %v5080 = vrot.slane %v5075, %v5079
    %v5081 = vlaneseq
    %v5082 = vshrl.u32 %v5081, 7
    %v5083 = vsub.s32 1, %v5082
    %v5084 = vrot.slane %v5075, %v5083
    %v5085 = vlaneseq
    %v5086 = vshrl.u32 %v5085, 7
    %v5087 = vsub.s32 2, %v5086
    %v5088 = vrot.slane %v5075, %v5087
    %v5089 = vlaneseq
    %v5090 = vshrl.u32 %v5089, 7
    %v5091 = vsub.s32 3, %v5090
    %v5092 = vrot.slane %v5075, %v5091
    %5097 = vmatprep.subr.bf16.mxu0 %v4944
    %5098 = vmatpush1.bf16.msra.mxu0 %v4943
    %5099 = vmatprep.subr.bf16.mxu0 %v4948
    %5100 = vmatpush1.bf16.msra.mxu0 %v4947
    %5101 = vmatprep.subr.bf16.mxu0 %v4952
    %5102 = vmatpush1.bf16.msra.mxu0 %v4951
    %5103 = vmatprep.subr.bf16.mxu0 %v4956
    %5104 = vmatpush1.bf16.msra.mxu0 %v4955
    %5105 = vmatprep.subr.bf16.mxu0 %v4960
    %5106 = vmatpush1.bf16.msra.mxu0 %v4959
    %5107 = vmatprep.subr.bf16.mxu0 %v4964
    %5108 = vmatpush1.bf16.msra.mxu0 %v4963
    %5109 = vmatprep.subr.bf16.mxu0 %v4968
    %5110 = vmatpush1.bf16.msra.mxu0 %v4967
    %5111 = vmatprep.subr.bf16.mxu0 %v4972
    %5112 = vmatpush1.bf16.msra.mxu0 %v4971
    %5113 = vmatprep.subr.bf16.mxu0 %v4976
    %5114 = vmatpush1.bf16.msra.mxu0 %v4975
    %5115 = vmatprep.subr.bf16.mxu0 %v4980
    %5116 = vmatpush1.bf16.msra.mxu0 %v4979
    %5117 = vmatprep.subr.bf16.mxu0 %v4984
    %5118 = vmatpush1.bf16.msra.mxu0 %v4983
    %5119 = vmatprep.subr.bf16.mxu0 %v4988
    %5120 = vmatpush1.bf16.msra.mxu0 %v4987
    %5121 = vmatprep.subr.bf16.mxu0 %v4992
    %5122 = vmatpush1.bf16.msra.mxu0 %v4991
    %5123 = vmatprep.subr.bf16.mxu0 %v4996
    %5124 = vmatpush1.bf16.msra.mxu0 %v4995
    %5125 = vmatprep.subr.bf16.mxu0 %v5000
    %5126 = vmatpush1.bf16.msra.mxu0 %v4999
    %5127 = vmatprep.subr.bf16.mxu0 %v5004
    %5128 = vmatpush1.bf16.msra.mxu0 %v5003
    %5129 = vmatprep.mubr.bf16.mxu0 %v5072
    %5130 = vmatmul.mubr.bf16.gmra.mrb[0].mxu0 %v5071
    %v5131 = vpop.f32.mrb[0].mxu0
    %v5132 = vadd.f32 %v5080, %v5131
    %v5133 = vpop.f32.mrb[0].mxu0
    %v5134 = vadd.f32 %v5084, %v5133
    %v5135 = vpop.f32.mrb[0].mxu0
    %v5136 = vpop.f32.mrb[0].mxu0
    %5137 = vdwg.mxu0
    %5138 = vmatprep.subr.bf16.mxu0 %v5008
    %5139 = vmatpush1.bf16.msra.mxu0 %v5007
    %5140 = vmatprep.subr.bf16.mxu0 %v5012
    %5141 = vmatpush1.bf16.msra.mxu0 %v5011
    %5142 = vmatprep.subr.bf16.mxu0 %v5016
    %5143 = vmatpush1.bf16.msra.mxu0 %v5015
    %5144 = vmatprep.subr.bf16.mxu0 %v5020
    %5145 = vmatpush1.bf16.msra.mxu0 %v5019
    %5146 = vmatprep.subr.bf16.mxu0 %v5024
    %5147 = vmatpush1.bf16.msra.mxu0 %v5023
    %5148 = vmatprep.subr.bf16.mxu0 %v5028
    %5149 = vmatpush1.bf16.msra.mxu0 %v5027
    %5150 = vmatprep.subr.bf16.mxu0 %v5032
    %5151 = vmatpush1.bf16.msra.mxu0 %v5031
    %5152 = vmatprep.subr.bf16.mxu0 %v5036
    %5153 = vmatpush1.bf16.msra.mxu0 %v5035
    %5154 = vmatprep.subr.bf16.mxu0 %v5040
    %5155 = vmatpush1.bf16.msra.mxu0 %v5039
    %5156 = vmatprep.subr.bf16.mxu0 %v5044
    %5157 = vmatpush1.bf16.msra.mxu0 %v5043
    %5158 = vmatprep.subr.bf16.mxu0 %v5048
    %5159 = vmatpush1.bf16.msra.mxu0 %v5047
    %5160 = vmatprep.subr.bf16.mxu0 %v5052
    %5161 = vmatpush1.bf16.msra.mxu0 %v5051
    %5162 = vmatprep.subr.bf16.mxu0 %v5056
    %5163 = vmatpush1.bf16.msra.mxu0 %v5055
    %5164 = vmatprep.subr.bf16.mxu0 %v5060
    %5165 = vmatpush1.bf16.msra.mxu0 %v5059
    %5166 = vmatprep.subr.bf16.mxu0 %v5064
    %5167 = vmatpush1.bf16.msra.mxu0 %v5063
    %5168 = vmatprep.subr.bf16.mxu0 %v5068
    %5169 = vmatpush1.bf16.msra.mxu0 %v5067
    %5170 = vmatprep.mubr.bf16.mxu0 %v5074
    %5171 = vmatmul.mubr.bf16.gmra.mrb[0].mxu0 %v5073
    %v5172 = vpop.f32.mrb[0].mxu0
    %v5173 = vadd.f32 %v5132, %v5172
    %v5174 = vpop.f32.mrb[0].mxu0
    %v5175 = vadd.f32 %v5134, %v5174
    %v5176 = vpop.f32.mrb[0].mxu0
    %v5177 = vpop.f32.mrb[0].mxu0
    %5178 = vdwg.mxu0
    %5179 = vmatprep.subr.bf16.mxu0 %v4946
    %5180 = vmatpush1.bf16.msra.mxu0 %v4945
    %5181 = vmatprep.subr.bf16.mxu0 %v4950
    %5182 = vmatpush1.bf16.msra.mxu0 %v4949
    %5183 = vmatprep.subr.bf16.mxu0 %v4954
    %5184 = vmatpush1.bf16.msra.mxu0 %v4953
    %5185 = vmatprep.subr.bf16.mxu0 %v4958
    %5186 = vmatpush1.bf16.msra.mxu0 %v4957
    %5187 = vmatprep.subr.bf16.mxu0 %v4962
    %5188 = vmatpush1.bf16.msra.mxu0 %v4961
    %5189 = vmatprep.subr.bf16.mxu0 %v4966
    %5190 = vmatpush1.bf16.msra.mxu0 %v4965
    %5191 = vmatprep.subr.bf16.mxu0 %v4970
    %5192 = vmatpush1.bf16.msra.mxu0 %v4969
    %5193 = vmatprep.subr.bf16.mxu0 %v4974
    %5194 = vmatpush1.bf16.msra.mxu0 %v4973
    %5195 = vmatprep.subr.bf16.mxu0 %v4978
    %5196 = vmatpush1.bf16.msra.mxu0 %v4977
    %5197 = vmatprep.subr.bf16.mxu0 %v4982
    %5198 = vmatpush1.bf16.msra.mxu0 %v4981
    %5199 = vmatprep.subr.bf16.mxu0 %v4986
    %5200 = vmatpush1.bf16.msra.mxu0 %v4985
    %5201 = vmatprep.subr.bf16.mxu0 %v4990
    %5202 = vmatpush1.bf16.msra.mxu0 %v4989
    %5203 = vmatprep.subr.bf16.mxu0 %v4994
    %5204 = vmatpush1.bf16.msra.mxu0 %v4993
    %5205 = vmatprep.subr.bf16.mxu0 %v4998
    %5206 = vmatpush1.bf16.msra.mxu0 %v4997
    %5207 = vmatprep.subr.bf16.mxu0 %v5002
    %5208 = vmatpush1.bf16.msra.mxu0 %v5001
    %5209 = vmatprep.subr.bf16.mxu0 %v5006
    %5210 = vmatpush1.bf16.msra.mxu0 %v5005
    %5211 = vmatprep.mubr.bf16.mxu0 %v5072
    %5212 = vmatmul.mubr.bf16.gmra.mrb[0].mxu0 %v5071
    %v5213 = vpop.f32.mrb[0].mxu0
    %v5214 = vadd.f32 %v5088, %v5213
    %v5215 = vpop.f32.mrb[0].mxu0
    %v5216 = vadd.f32 %v5092, %v5215
    %v5217 = vpop.f32.mrb[0].mxu0
    %v5218 = vpop.f32.mrb[0].mxu0
    %5219 = vdwg.mxu0
    %5220 = vmatprep.subr.bf16.mxu0 %v5010
    %5221 = vmatpush1.bf16.msra.mxu0 %v5009
    %5222 = vmatprep.subr.bf16.mxu0 %v5014
    %5223 = vmatpush1.bf16.msra.mxu0 %v5013
    %5224 = vmatprep.subr.bf16.mxu0 %v5018
    %5225 = vmatpush1.bf16.msra.mxu0 %v5017
    %5226 = vmatprep.subr.bf16.mxu0 %v5022
    %5227 = vmatpush1.bf16.msra.mxu0 %v5021
    %5228 = vmatprep.subr.bf16.mxu0 %v5026
    %5229 = vmatpush1.bf16.msra.mxu0 %v5025
    %5230 = vmatprep.subr.bf16.mxu0 %v5030
    %5231 = vmatpush1.bf16.msra.mxu0 %v5029
    %5232 = vmatprep.subr.bf16.mxu0 %v5034
    %5233 = vmatpush1.bf16.msra.mxu0 %v5033
    %5234 = vmatprep.subr.bf16.mxu0 %v5038
    %5235 = vmatpush1.bf16.msra.mxu0 %v5037
    %5236 = vmatprep.subr.bf16.mxu0 %v5042
    %5237 = vmatpush1.bf16.msra.mxu0 %v5041
    %5238 = vmatprep.subr.bf16.mxu0 %v5046
    %5239 = vmatpush1.bf16.msra.mxu0 %v5045
    %5240 = vmatprep.subr.bf16.mxu0 %v5050
    %5241 = vmatpush1.bf16.msra.mxu0 %v5049
    %5242 = vmatprep.subr.bf16.mxu0 %v5054
    %5243 = vmatpush1.bf16.msra.mxu0 %v5053
    %5244 = vmatprep.subr.bf16.mxu0 %v5058
    %5245 = vmatpush1.bf16.msra.mxu0 %v5057
    %5246 = vmatprep.subr.bf16.mxu0 %v5062
    %5247 = vmatpush1.bf16.msra.mxu0 %v5061
    %5248 = vmatprep.subr.bf16.mxu0 %v5066
    %5249 = vmatpush1.bf16.msra.mxu0 %v5065
    %5250 = vmatprep.subr.bf16.mxu0 %v5070
    %5251 = vmatpush1.bf16.msra.mxu0 %v5069
    %5252 = vmatprep.mubr.bf16.mxu0 %v5074
    %5253 = vmatmul.mubr.bf16.gmra.mrb[0].mxu0 %v5073
    %v5254 = vpop.f32.mrb[0].mxu0
    %v5255 = vadd.f32 %v5214, %v5254
    %v5256 = vpop.f32.mrb[0].mxu0
    %v5257 = vadd.f32 %v5216, %v5256
    %v5258 = vpop.f32.mrb[0].mxu0
    %v5259 = vpop.f32.mrb[0].mxu0
    %5260 = vdwg.mxu0
    %v5261 = vand.u32 2147483647, %v5173
    %v5262 = vand.u32 2147483647, %v5175
    %v5263 = vand.u32 2147483647, %v5255
    %v5264 = vand.u32 2147483647, %v5257
    %v5265 = vadd.f32 %v5261, 1.0
    %v5266 = vadd.f32 %v5262, 1.0
    %v5267 = vadd.f32 %v5263, 1.0
    %v5268 = vadd.f32 %v5264, 1.0
    %v5269 = vrcp.pop %v5265
    %v5270 = vrcp.pop %v5266
    %v5271 = vrcp.pop %v5267
    %v5272 = vrcp.pop %v5268
    %v5273 = vmul.f32 %v5173, %v5269
    %v5274 = vmul.f32 %v5175, %v5270
    %v5275 = vmul.f32 %v5255, %v5271
    %v5276 = vmul.f32 %v5257, %v5272
    %v5277 = vld [vmem:[%s7] sm:$0xf]
    %v5278 = vld [vmem:[%s7 + $0x4] sm:$0xf]
    %v5279 = vld [vmem:[%s7 + $0x8] sm:$0xf]
    %v5280 = vld [vmem:[%s7 + $0xc] sm:$0xf]
    %v5281 = vld [vmem:[%s7 + $0x10] sm:$0xf]
    %v5282 = vld [vmem:[%s7 + $0x14] sm:$0xf]
    %v5283 = vld [vmem:[%s7 + $0x18] sm:$0xf]
    %v5284 = vld [vmem:[%s7 + $0x1c] sm:$0xf]
    %v5285 = vld [vmem:[%s7 + $0x20] sm:$0xf]
    %v5286 = vld [vmem:[%s7 + $0x24] sm:$0xf]
    %v5287 = vld [vmem:[%s7 + $0x28] sm:$0xf]
    %v5288 = vld [vmem:[%s7 + $0x2c] sm:$0xf]
    %v5289 = vld [vmem:[%s7 + $0x30] sm:$0xf]
    %v5290 = vld [vmem:[%s7 + $0x34] sm:$0xf]
    %v5291 = vld [vmem:[%s7 + $0x38] sm:$0xf]
    %v5292 = vld [vmem:[%s7 + $0x3c] sm:$0xf]
    %v5293 = vld [vmem:[%s7 + $0x40] sm:$0xf]
    %v5294 = vld [vmem:[%s7 + $0x44] sm:$0xf]
    %v5295 = vld [vmem:[%s7 + $0x48] sm:$0xf]
    %v5296 = vld [vmem:[%s7 + $0x4c] sm:$0xf]
    %v5297 = vld [vmem:[%s7 + $0x50] sm:$0xf]
    %v5298 = vld [vmem:[%s7 + $0x54] sm:$0xf]
    %v5299 = vld [vmem:[%s7 + $0x58] sm:$0xf]
    %v5300 = vld [vmem:[%s7 + $0x5c] sm:$0xf]
    %v5301 = vld [vmem:[%s7 + $0x60] sm:$0xf]
    %v5302 = vld [vmem:[%s7 + $0x64] sm:$0xf]
    %v5303 = vld [vmem:[%s7 + $0x68] sm:$0xf]
    %v5304 = vld [vmem:[%s7 + $0x6c] sm:$0xf]
    %v5305 = vld [vmem:[%s7 + $0x70] sm:$0xf]
    %v5306 = vld [vmem:[%s7 + $0x74] sm:$0xf]
    %v5307 = vld [vmem:[%s7 + $0x78] sm:$0xf]
    %v5308 = vld [vmem:[%s7 + $0x7c] sm:$0xf]
    %v5309 = vld [vmem:[%s7 + $0x80] sm:$0xf]
    %v5310 = vld [vmem:[%s7 + $0x84] sm:$0xf]
    %v5311 = vld [vmem:[%s7 + $0x88] sm:$0xf]
    %v5312 = vld [vmem:[%s7 + $0x8c] sm:$0xf]
    %v5313 = vld [vmem:[%s7 + $0x90] sm:$0xf]
    %v5314 = vld [vmem:[%s7 + $0x94] sm:$0xf]
    %v5315 = vld [vmem:[%s7 + $0x98] sm:$0xf]
    %v5316 = vld [vmem:[%s7 + $0x9c] sm:$0xf]
    %v5317 = vld [vmem:[%s7 + $0xa0] sm:$0xf]
    %v5318 = vld [vmem:[%s7 + $0xa4] sm:$0xf]
    %v5319 = vld [vmem:[%s7 + $0xa8] sm:$0xf]
    %v5320 = vld [vmem:[%s7 + $0xac] sm:$0xf]
    %v5321 = vld [vmem:[%s7 + $0xb0] sm:$0xf]
    %v5322 = vld [vmem:[%s7 + $0xb4] sm:$0xf]
    %v5323 = vld [vmem:[%s7 + $0xb8] sm:$0xf]
    %v5324 = vld [vmem:[%s7 + $0xbc] sm:$0xf]
    %v5325 = vld [vmem:[%s7 + $0xc0] sm:$0xf]
    %v5326 = vld [vmem:[%s7 + $0xc4] sm:$0xf]
    %v5327 = vld [vmem:[%s7 + $0xc8] sm:$0xf]
    %v5328 = vld [vmem:[%s7 + $0xcc] sm:$0xf]
    %v5329 = vld [vmem:[%s7 + $0xd0] sm:$0xf]
    %v5330 = vld [vmem:[%s7 + $0xd4] sm:$0xf]
    %v5331 = vld [vmem:[%s7 + $0xd8] sm:$0xf]
    %v5332 = vld [vmem:[%s7 + $0xdc] sm:$0xf]
    %v5333 = vld [vmem:[%s7 + $0xe0] sm:$0xf]
    %v5334 = vld [vmem:[%s7 + $0xe4] sm:$0xf]
    %v5335 = vld [vmem:[%s7 + $0xe8] sm:$0xf]
    %v5336 = vld [vmem:[%s7 + $0xec] sm:$0xf]
    %v5337 = vld [vmem:[%s7 + $0xf0] sm:$0xf]
    %v5338 = vld [vmem:[%s7 + $0xf4] sm:$0xf]
    %v5339 = vld [vmem:[%s7 + $0xf8] sm:$0xf]
    %v5340 = vld [vmem:[%s7 + $0xfc] sm:$0xf]
    %v5341 = vpack.c.bf16 %v5273, %v5273
    %v5342 = vpack.c.bf16 %v5274, %v5274
    %v5343 = vpack.c.bf16 %v5275, %v5275
    %v5344 = vpack.c.bf16 %v5276, %v5276
    %v5345 = vld [vmem:[#allocation15] sm:$0x1]
    %v5347 = vlaneseq
    %v5348 = vshrl.u32 %v5347, 7
    %v5349 = vsub.s32 0, %v5348
    %v5350 = vrot.slane %v5345, %v5349
    %v5416 = vunpack.c.l.b16 %v5277
    %v5417 = vunpack.c.l.b16 %v5278
    %v5418 = vunpack.c.l.b16 %v5279
    %v5419 = vunpack.c.l.b16 %v5280
    %v5420 = vunpack.c.l.b16 %v5281
    %v5421 = vunpack.c.l.b16 %v5282
    %v5422 = vunpack.c.l.b16 %v5283
    %v5423 = vunpack.c.l.b16 %v5284
    %v5424 = vunpack.c.l.b16 %v5285
    %v5425 = vunpack.c.l.b16 %v5286
    %v5426 = vunpack.c.l.b16 %v5287
    %v5427 = vunpack.c.l.b16 %v5288
    %v5428 = vunpack.c.l.b16 %v5289
    %v5429 = vunpack.c.l.b16 %v5290
    %v5430 = vunpack.c.l.b16 %v5291
    %v5431 = vunpack.c.l.b16 %v5292
    %v5432 = vunpack.c.l.b16 %v5293
    %v5433 = vunpack.c.l.b16 %v5294
    %v5434 = vunpack.c.l.b16 %v5295
    %v5435 = vunpack.c.l.b16 %v5296
    %v5436 = vunpack.c.l.b16 %v5297
    %v5437 = vunpack.c.l.b16 %v5298
    %v5438 = vunpack.c.l.b16 %v5299
    %v5439 = vunpack.c.l.b16 %v5300
    %v5440 = vunpack.c.l.b16 %v5301
    %v5441 = vunpack.c.l.b16 %v5302
    %v5442 = vunpack.c.l.b16 %v5303
    %v5443 = vunpack.c.l.b16 %v5304
    %v5444 = vunpack.c.l.b16 %v5305
    %v5445 = vunpack.c.l.b16 %v5306
    %v5446 = vunpack.c.l.b16 %v5307
    %v5447 = vunpack.c.l.b16 %v5308
    %v5448 = vunpack.c.l.b16 %v5309
    %v5449 = vunpack.c.l.b16 %v5310
    %v5450 = vunpack.c.l.b16 %v5311
    %v5451 = vunpack.c.l.b16 %v5312
    %v5452 = vunpack.c.l.b16 %v5313
    %v5453 = vunpack.c.l.b16 %v5314
    %v5454 = vunpack.c.l.b16 %v5315
    %v5455 = vunpack.c.l.b16 %v5316
    %v5456 = vunpack.c.l.b16 %v5317
    %v5457 = vunpack.c.l.b16 %v5318
    %v5458 = vunpack.c.l.b16 %v5319
    %v5459 = vunpack.c.l.b16 %v5320
    %v5460 = vunpack.c.l.b16 %v5321
    %v5461 = vunpack.c.l.b16 %v5322
    %v5462 = vunpack.c.l.b16 %v5323
    %v5463 = vunpack.c.l.b16 %v5324
    %v5464 = vunpack.c.l.b16 %v5325
    %v5465 = vunpack.c.l.b16 %v5326
    %v5466 = vunpack.c.l.b16 %v5327
    %v5467 = vunpack.c.l.b16 %v5328
    %v5468 = vunpack.c.l.b16 %v5329
    %v5469 = vunpack.c.l.b16 %v5330
    %v5470 = vunpack.c.l.b16 %v5331
    %v5471 = vunpack.c.l.b16 %v5332
    %v5472 = vunpack.c.l.b16 %v5333
    %v5473 = vunpack.c.l.b16 %v5334
    %v5474 = vunpack.c.l.b16 %v5335
    %v5475 = vunpack.c.l.b16 %v5336
    %v5476 = vunpack.c.l.b16 %v5337
    %v5477 = vunpack.c.l.b16 %v5338
    %v5478 = vunpack.c.l.b16 %v5339
    %v5479 = vunpack.c.l.b16 %v5340
    %v5480 = vpack.c.b16 %v5417, %v5416
    %v5481 = vpack.c.b16 %v5419, %v5418
    %v5482 = vpack.c.b16 %v5421, %v5420
    %v5483 = vpack.c.b16 %v5423, %v5422
    %v5484 = vpack.c.b16 %v5425, %v5424
    %v5485 = vpack.c.b16 %v5427, %v5426
    %v5486 = vpack.c.b16 %v5429, %v5428
    %v5487 = vpack.c.b16 %v5431, %v5430
    %v5488 = vpack.c.b16 %v5433, %v5432
    %v5489 = vpack.c.b16 %v5435, %v5434
    %v5490 = vpack.c.b16 %v5437, %v5436
    %v5491 = vpack.c.b16 %v5439, %v5438
    %v5492 = vpack.c.b16 %v5441, %v5440
    %v5493 = vpack.c.b16 %v5443, %v5442
    %v5494 = vpack.c.b16 %v5445, %v5444
    %v5495 = vpack.c.b16 %v5447, %v5446
    %v5496 = vpack.c.b16 %v5449, %v5448
    %v5497 = vpack.c.b16 %v5451, %v5450
    %v5498 = vpack.c.b16 %v5453, %v5452
    %v5499 = vpack.c.b16 %v5455, %v5454
    %v5500 = vpack.c.b16 %v5457, %v5456
    %v5501 = vpack.c.b16 %v5459, %v5458
    %v5502 = vpack.c.b16 %v5461, %v5460
    %v5503 = vpack.c.b16 %v5463, %v5462
    %v5504 = vpack.c.b16 %v5465, %v5464
    %v5505 = vpack.c.b16 %v5467, %v5466
    %v5506 = vpack.c.b16 %v5469, %v5468
    %v5507 = vpack.c.b16 %v5471, %v5470
    %v5508 = vpack.c.b16 %v5473, %v5472
    %v5509 = vpack.c.b16 %v5475, %v5474
    %v5510 = vpack.c.b16 %v5477, %v5476
    %v5511 = vpack.c.b16 %v5479, %v5478
    %5544 = vmatprep.subr.bf16.mxu0 0
    %5545 = vmatpush1.bf16.msra.mxu0 %v5480
    %5546 = vmatprep.subr.bf16.mxu0 0
    %5547 = vmatpush1.bf16.msra.mxu0 %v5481
    %5548 = vmatprep.subr.bf16.mxu0 0
    %5549 = vmatpush1.bf16.msra.mxu0 %v5482
    %5550 = vmatprep.subr.bf16.mxu0 0
    %5551 = vmatpush1.bf16.msra.mxu0 %v5483
    %5552 = vmatprep.subr.bf16.mxu0 0
    %5553 = vmatpush1.bf16.msra.mxu0 %v5484
    %5554 = vmatprep.subr.bf16.mxu0 0
    %5555 = vmatpush1.bf16.msra.mxu0 %v5485
    %5556 = vmatprep.subr.bf16.mxu0 0
    %5557 = vmatpush1.bf16.msra.mxu0 %v5486
    %5558 = vmatprep.subr.bf16.mxu0 0
    %5559 = vmatpush1.bf16.msra.mxu0 %v5487
    %5560 = vmatprep.subr.bf16.mxu0 0
    %5561 = vmatpush1.bf16.msra.mxu0 %v5488
    %5562 = vmatprep.subr.bf16.mxu0 0
    %5563 = vmatpush1.bf16.msra.mxu0 %v5489
    %5564 = vmatprep.subr.bf16.mxu0 0
    %5565 = vmatpush1.bf16.msra.mxu0 %v5490
    %5566 = vmatprep.subr.bf16.mxu0 0
    %5567 = vmatpush1.bf16.msra.mxu0 %v5491
    %5568 = vmatprep.subr.bf16.mxu0 0
    %5569 = vmatpush1.bf16.msra.mxu0 %v5492
    %5570 = vmatprep.subr.bf16.mxu0 0
    %5571 = vmatpush1.bf16.msra.mxu0 %v5493
    %5572 = vmatprep.subr.bf16.mxu0 0
    %5573 = vmatpush1.bf16.msra.mxu0 %v5494
    %5574 = vmatprep.subr.bf16.mxu0 0
    %5575 = vmatpush1.bf16.msra.mxu0 %v5495
    %5576 = vmatprep.mubr.bf16.mxu0 %v5342
    %5577 = vmatmul.mubr.bf16.gmra.mrb[0].mxu0 %v5341
    %v5578 = vpop.f32.mrb[0].mxu0
    %v5579 = vadd.f32 %v5350, %v5578
    %v5580 = vpop.f32.mrb[0].mxu0
    %v5581 = vpop.f32.mrb[0].mxu0
    %v5582 = vpop.f32.mrb[0].mxu0
    %5583 = vdwg.mxu0
    %5584 = vmatprep.subr.bf16.mxu0 0
    %5585 = vmatpush1.bf16.msra.mxu0 %v5496
    %5586 = vmatprep.subr.bf16.mxu0 0
    %5587 = vmatpush1.bf16.msra.mxu0 %v5497
    %5588 = vmatprep.subr.bf16.mxu0 0
    %5589 = vmatpush1.bf16.msra.mxu0 %v5498
    %5590 = vmatprep.subr.bf16.mxu0 0
    %5591 = vmatpush1.bf16.msra.mxu0 %v5499
    %5592 = vmatprep.subr.bf16.mxu0 0
    %5593 = vmatpush1.bf16.msra.mxu0 %v5500
    %5594 = vmatprep.subr.bf16.mxu0 0
    %5595 = vmatpush1.bf16.msra.mxu0 %v5501
    %5596 = vmatprep.subr.bf16.mxu0 0
    %5597 = vmatpush1.bf16.msra.mxu0 %v5502
    %5598 = vmatprep.subr.bf16.mxu0 0
    %5599 = vmatpush1.bf16.msra.mxu0 %v5503
    %5600 = vmatprep.subr.bf16.mxu0 0
    %5601 = vmatpush1.bf16.msra.mxu0 %v5504
    %5602 = vmatprep.subr.bf16.mxu0 0
    %5603 = vmatpush1.bf16.msra.mxu0 %v5505
    %5604 = vmatprep.subr.bf16.mxu0 0
    %5605 = vmatpush1.bf16.msra.mxu0 %v5506
    %5606 = vmatprep.subr.bf16.mxu0 0
    %5607 = vmatpush1.bf16.msra.mxu0 %v5507
    %5608 = vmatprep.subr.bf16.mxu0 0
    %5609 = vmatpush1.bf16.msra.mxu0 %v5508
    %5610 = vmatprep.subr.bf16.mxu0 0
    %5611 = vmatpush1.bf16.msra.mxu0 %v5509
    %5612 = vmatprep.subr.bf16.mxu0 0
    %5613 = vmatpush1.bf16.msra.mxu0 %v5510
    %5614 = vmatprep.subr.bf16.mxu0 0
    %5615 = vmatpush1.bf16.msra.mxu0 %v5511
    %5616 = vmatprep.mubr.bf16.mxu0 %v5344
    %5617 = vmatmul.mubr.bf16.gmra.mrb[0].mxu0 %v5343
    %v5618 = vpop.f32.mrb[0].mxu0
    %v5619 = vadd.f32 %v5579, %v5618
    %v5620 = vpop.f32.mrb[0].mxu0
    %v5621 = vpop.f32.mrb[0].mxu0
    %v5622 = vpop.f32.mrb[0].mxu0
    %5623 = vdwg.mxu0
    %v5624 = vand.u32 2147483647, %v5619
    %v5625 = vadd.f32 %v5624, 1.0
    %v5626 = vrcp.pop %v5625
    %v5627 = vmul.f32 %v5619, %v5626
    %vm5628 = vcmask 254976
    %5629 = vst.msk [vmem:[#allocation16] sm:$0x3] %vm5628, %v5619
    %5631 = vrot.lane.b32.xlu0 %v5619, 96
    %v5632 = vpop.permute.xlu0 %5631
    %5634 = vst.msk [vmem:[#allocation17] sm:$0x3] %vm5628, %v5632
    %v5635 = vmul.f32 %v5619, 0.5
    %v5636 = vmul.f32 %v5635, 1.442695
    %v5637 = vpow.pop %v5636
    %v5638 = vld [vmem:[#allocation10] sm:$0x3]
    %5640 = vrot.lane.b32.xlu0 %v5637, 96
    %v5641 = vpop.permute.xlu0 %5640
    %v5643 = vmul.f32 %v5638, %v5641
    %v5644 = vadd.f32 %v5619, %v5643
    %v5645 = vld [vmem:[#allocation15 + $0x1] sm:$0x1]
    %v5646 = vld [vmem:[%s7 + $0x100] sm:$0xf]
    %v5647 = vld [vmem:[%s7 + $0x104] sm:$0xf]
    %v5648 = vld [vmem:[%s7 + $0x108] sm:$0xf]
    %v5649 = vld [vmem:[%s7 + $0x10c] sm:$0xf]
    %v5650 = vpack.c.bf16 %v5627, %v5627
    %v5651 = vld [vmem:[%s7 + $0x110] sm:$0xf]
    %v5652 = vld [vmem:[%s7 + $0x114] sm:$0xf]
    %v5653 = vld [vmem:[%s7 + $0x118] sm:$0xf]
    %v5654 = vld [vmem:[%s7 + $0x11c] sm:$0xf]
    %v5655 = vpack.c.bf16 %v5644, %v5644
    %v5660 = vunpack.c.l.b16 %v5651
    %v5661 = vunpack.c.l.b16 %v5652
    %v5662 = vunpack.c.l.b16 %v5653
    %v5663 = vunpack.c.l.b16 %v5654
    %v5664 = vpack.c.b16 %v5661, %v5660
    %v5665 = vpack.c.b16 %v5663, %v5662
    %vm5668 = vcmask 261120
    %v5670 = vsel %vm5668, %v5655, 0
    %5672 = vmatprep.subr.bf16.mxu0 0
    %5673 = vmatpush1.bf16.msra.mxu0 %v5664
    %5674 = vmatprep.subr.bf16.mxu0 0
    %5675 = vmatpush1.bf16.msra.mxu0 %v5665
    %5676 = vmatprep.subr.bf16.mxu0 0
    %5677 = vmatpush1.bf16.msra.mxu0 0
    %5678 = vmatprep.subr.bf16.mxu0 0
    %5679 = vmatpush1.bf16.msra.mxu0 0
    %5680 = vmatprep.subr.bf16.mxu0 0
    %5681 = vmatpush1.bf16.msra.mxu0 0
    %5682 = vmatprep.subr.bf16.mxu0 0
    %5683 = vmatpush1.bf16.msra.mxu0 0
    %5684 = vmatprep.subr.bf16.mxu0 0
    %5685 = vmatpush1.bf16.msra.mxu0 0
    %5686 = vmatprep.subr.bf16.mxu0 0
    %5687 = vmatpush1.bf16.msra.mxu0 0
    %5688 = vmatprep.subr.bf16.mxu0 0
    %5689 = vmatpush1.bf16.msra.mxu0 0
    %5690 = vmatprep.subr.bf16.mxu0 0
    %5691 = vmatpush1.bf16.msra.mxu0 0
    %5692 = vmatprep.subr.bf16.mxu0 0
    %5693 = vmatpush1.bf16.msra.mxu0 0
    %5694 = vmatprep.subr.bf16.mxu0 0
    %5695 = vmatpush1.bf16.msra.mxu0 0
    %5696 = vmatprep.subr.bf16.mxu0 0
    %5697 = vmatpush1.bf16.msra.mxu0 0
    %5698 = vmatprep.subr.bf16.mxu0 0
    %5699 = vmatpush1.bf16.msra.mxu0 0
    %5700 = vmatprep.subr.bf16.mxu0 0
    %5701 = vmatpush1.bf16.msra.mxu0 0
    %5702 = vmatprep.subr.bf16.mxu0 0
    %5703 = vmatpush1.bf16.msra.mxu0 0
    %5704 = vmatprep.mubr.bf16.mxu0 0
    %5705 = vmatmul.mubr.bf16.gmra.mrb[0].mxu0 %v5670
    %v5706 = vpop.f32.mrb[0].mxu0
    %v5707 = vadd.f32 0.0, %v5706
    %v5708 = vpop.f32.mrb[0].mxu0
    %v5709 = vpop.f32.mrb[0].mxu0
    %v5710 = vpop.f32.mrb[0].mxu0
    %5711 = vdwg.mxu0
    %5713 = vrot.lane.b32.xlu0 %v5650, 64
    %v5714 = vpop.permute.xlu0 %5713
    %v5719 = vunpack.c.l.b16 %v5646
    %v5720 = vunpack.c.l.b16 %v5647
    %v5721 = vunpack.c.l.b16 %v5648
    %v5722 = vunpack.c.l.b16 %v5649
    %v5723 = vpack.c.b16 %v5720, %v5719
    %v5724 = vpack.c.b16 %v5722, %v5721
    %v5728 = vsel %vm5668, %v5714, 0
    %5730 = vmatprep.subr.bf16.mxu0 0
    %5731 = vmatpush1.bf16.msra.mxu0 %v5723
    %5732 = vmatprep.subr.bf16.mxu0 0
    %5733 = vmatpush1.bf16.msra.mxu0 %v5724
    %5734 = vmatprep.subr.bf16.mxu0 0
    %5735 = vmatpush1.bf16.msra.mxu0 0
    %5736 = vmatprep.subr.bf16.mxu0 0
    %5737 = vmatpush1.bf16.msra.mxu0 0
    %5738 = vmatprep.subr.bf16.mxu0 0
    %5739 = vmatpush1.bf16.msra.mxu0 0
    %5740 = vmatprep.subr.bf16.mxu0 0
    %5741 = vmatpush1.bf16.msra.mxu0 0
    %5742 = vmatprep.subr.bf16.mxu0 0
    %5743 = vmatpush1.bf16.msra.mxu0 0
    %5744 = vmatprep.subr.bf16.mxu0 0
    %5745 = vmatpush1.bf16.msra.mxu0 0
    %5746 = vmatprep.subr.bf16.mxu0 0
    %5747 = vmatpush1.bf16.msra.mxu0 0
    %5748 = vmatprep.subr.bf16.mxu0 0
    %5749 = vmatpush1.bf16.msra.mxu0 0
    %5750 = vmatprep.subr.bf16.mxu0 0
    %5751 = vmatpush1.bf16.msra.mxu0 0
    %5752 = vmatprep.subr.bf16.mxu0 0
    %5753 = vmatpush1.bf16.msra.mxu0 0
    %5754 = vmatprep.subr.bf16.mxu0 0
    %5755 = vmatpush1.bf16.msra.mxu0 0
    %5756 = vmatprep.subr.bf16.mxu0 0
    %5757 = vmatpush1.bf16.msra.mxu0 0
    %5758 = vmatprep.subr.bf16.mxu0 0
    %5759 = vmatpush1.bf16.msra.mxu0 0
    %5760 = vmatprep.subr.bf16.mxu0 0
    %5761 = vmatpush1.bf16.msra.mxu0 0
    %5762 = vmatprep.mubr.bf16.mxu0 0
    %5763 = vmatmul.mubr.bf16.gmra.mrb[0].mxu0 %v5728
    %v5764 = vpop.f32.mrb[0].mxu0
    %v5765 = vadd.f32 %v5707, %v5764
    %v5766 = vpop.f32.mrb[0].mxu0
    %v5767 = vpop.f32.mrb[0].mxu0
    %v5768 = vpop.f32.mrb[0].mxu0
    %5769 = vdwg.mxu0
    %v5771 = vlaneseq
    %v5772 = vshrl.u32 %v5771, 7
    %v5773 = vsub.s32 0, %v5772
    %v5774 = vrot.slane %v5645, %v5773
    %v5776 = vadd.f32 %v5765, %v5774
    %v5777 = vld [vmem:[%s7 + $0x120] sm:$0xf]
    %v5778 = vld [vmem:[%s7 + $0x124] sm:$0xf]
    %v5779 = vld [vmem:[%s7 + $0x128] sm:$0xf]
    %v5780 = vld [vmem:[%s7 + $0x12c] sm:$0xf]
    %v5781 = vld [vmem:[#allocation15 + $0x2] sm:$0x1]
    %v5783 = vlaneseq
    %v5784 = vshrl.u32 %v5783, 7
    %v5785 = vsub.s32 0, %v5784
    %v5786 = vrot.slane %v5781, %v5785
    %v5792 = vunpack.c.l.b16 %v5777
    %v5793 = vunpack.c.l.b16 %v5778
    %v5794 = vunpack.c.l.b16 %v5779
    %v5795 = vunpack.c.l.b16 %v5780
    %v5796 = vpack.c.b16 %v5793, %v5792
    %v5797 = vpack.c.b16 %v5795, %v5794
    %v5801 = vsel %vm5668, 0, 0
    %5803 = vmatprep.subr.bf16.mxu0 0
    %5804 = vmatpush1.bf16.msra.mxu0 %v5796
    %5805 = vmatprep.subr.bf16.mxu0 0
    %5806 = vmatpush1.bf16.msra.mxu0 %v5797
    %5807 = vmatprep.subr.bf16.mxu0 0
    %5808 = vmatpush1.bf16.msra.mxu0 0
    %5809 = vmatprep.subr.bf16.mxu0 0
    %5810 = vmatpush1.bf16.msra.mxu0 0
    %5811 = vmatprep.subr.bf16.mxu0 0
    %5812 = vmatpush1.bf16.msra.mxu0 0
    %5813 = vmatprep.subr.bf16.mxu0 0
    %5814 = vmatpush1.bf16.msra.mxu0 0
    %5815 = vmatprep.subr.bf16.mxu0 0
    %5816 = vmatpush1.bf16.msra.mxu0 0
    %5817 = vmatprep.subr.bf16.mxu0 0
    %5818 = vmatpush1.bf16.msra.mxu0 0
    %5819 = vmatprep.subr.bf16.mxu0 0
    %5820 = vmatpush1.bf16.msra.mxu0 0
    %5821 = vmatprep.subr.bf16.mxu0 0
    %5822 = vmatpush1.bf16.msra.mxu0 0
    %5823 = vmatprep.subr.bf16.mxu0 0
    %5824 = vmatpush1.bf16.msra.mxu0 0
    %5825 = vmatprep.subr.bf16.mxu0 0
    %5826 = vmatpush1.bf16.msra.mxu0 0
    %5827 = vmatprep.subr.bf16.mxu0 0
    %5828 = vmatpush1.bf16.msra.mxu0 0
    %5829 = vmatprep.subr.bf16.mxu0 0
    %5830 = vmatpush1.bf16.msra.mxu0 0
    %5831 = vmatprep.subr.bf16.mxu0 0
    %5832 = vmatpush1.bf16.msra.mxu0 0
    %5833 = vmatprep.subr.bf16.mxu0 0
    %5834 = vmatpush1.bf16.msra.mxu0 0
    %5835 = vmatprep.mubr.bf16.mxu0 0
    %5836 = vmatmul.mubr.bf16.gmra.mrb[0].mxu0 %v5801
    %v5837 = vpop.f32.mrb[0].mxu0
    %v5838 = vadd.f32 %v5786, %v5837
    %v5839 = vpop.f32.mrb[0].mxu0
    %v5840 = vpop.f32.mrb[0].mxu0
    %v5841 = vpop.f32.mrb[0].mxu0
    %5842 = vdwg.mxu0
    %v5843 = vadd.f32 %v5776, %v5838
    %v5844 = vxor.u32 %v5843, 2147483648
    %v5845 = vmul.f32 %v5844, 1.442695
    %v5846 = vpow.pop %v5845
    %v5847 = vadd.f32 %v5846, 1.0
    %v5848 = vrcp.pop %v5847
    %v5849 = vmul.f32 1.0, %v5848
    %5851 = vrot.lane.b32.xlu0 %v5838, 64
    %v5852 = vpop.permute.xlu0 %5851
    %v5854 = vmul.f32 %v5849, %v5852
    %5856 = vrot.lane.b32.xlu0 %v5854, 64
    %v5857 = vpop.permute.xlu0 %5856
    %v5859 = vadd.f32 %v5776, %v5857
    %v5860 = vtanh.pop %v5859
    %v5861 = vsub.f32 1.0, %v5849
    %5863 = vrot.lane.b32.xlu0 %v5860, 96
    %v5864 = vpop.permute.xlu0 %5863
    %v5866 = vmul.f32 %v5861, %v5864
    %v5867 = vmul.f32 %v5849, 0.0
    %v5868 = vadd.f32 %v5866, %v5867
    %5870 = vrot.lane.b32.xlu0 %v5868, 96
    %v5871 = vpop.permute.xlu0 %5870
    %5873 = vst.msk [vmem:[#allocation6] sm:$0x3] %vm5628, %v5871
    %v5874 = vpack.c.bf16 %v5868, %v5868
    %5876 = vrot.lane.b32.xlu0 %v5874, 96
    %v5877 = vpop.permute.xlu0 %5876
    %v5879 = vsel %vm5668, %v5877, 0
    %5881 = vmatprep.subr.bf16.mxu0 0
    %5882 = vmatpush1.bf16.msra.mxu0 %v5796
    %5883 = vmatprep.subr.bf16.mxu0 0
    %5884 = vmatpush1.bf16.msra.mxu0 %v5797
    %5885 = vmatprep.subr.bf16.mxu0 0
    %5886 = vmatpush1.bf16.msra.mxu0 0
    %5887 = vmatprep.subr.bf16.mxu0 0
    %5888 = vmatpush1.bf16.msra.mxu0 0
    %5889 = vmatprep.subr.bf16.mxu0 0
    %5890 = vmatpush1.bf16.msra.mxu0 0
    %5891 = vmatprep.subr.bf16.mxu0 0
    %5892 = vmatpush1.bf16.msra.mxu0 0
    %5893 = vmatprep.subr.bf16.mxu0 0
    %5894 = vmatpush1.bf16.msra.mxu0 0
    %5895 = vmatprep.subr.bf16.mxu0 0
    %5896 = vmatpush1.bf16.msra.mxu0 0
    %5897 = vmatprep.subr.bf16.mxu0 0
    %5898 = vmatpush1.bf16.msra.mxu0 0
    %5899 = vmatprep.subr.bf16.mxu0 0
    %5900 = vmatpush1.bf16.msra.mxu0 0
    %5901 = vmatprep.subr.bf16.mxu0 0
    %5902 = vmatpush1.bf16.msra.mxu0 0
    %5903 = vmatprep.subr.bf16.mxu0 0
    %5904 = vmatpush1.bf16.msra.mxu0 0
    %5905 = vmatprep.subr.bf16.mxu0 0
    %5906 = vmatpush1.bf16.msra.mxu0 0
    %5907 = vmatprep.subr.bf16.mxu0 0
    %5908 = vmatpush1.bf16.msra.mxu0 0
    %5909 = vmatprep.subr.bf16.mxu0 0
    %5910 = vmatpush1.bf16.msra.mxu0 0
    %5911 = vmatprep.subr.bf16.mxu0 0
    %5912 = vmatpush1.bf16.msra.mxu0 0
    %5913 = vmatprep.mubr.bf16.mxu0 0
    %5914 = vmatmul.mubr.bf16.gmra.mrb[0].mxu0 %v5879
    %v5915 = vpop.f32.mrb[0].mxu0
    %v5916 = vadd.f32 %v5786, %v5915
    %v5917 = vpop.f32.mrb[0].mxu0
    %v5918 = vpop.f32.mrb[0].mxu0
    %v5919 = vpop.f32.mrb[0].mxu0
    %5920 = vdwg.mxu0
    %v5921 = vadd.f32 %v5776, %v5916
    %v5922 = vxor.u32 %v5921, 2147483648
    %v5923 = vmul.f32 %v5922, 1.442695
    %v5924 = vpow.pop %v5923
    %v5925 = vadd.f32 %v5924, 1.0
    %v5926 = vrcp.pop %v5925
    %v5927 = vmul.f32 1.0, %v5926
    %5929 = vrot.lane.b32.xlu0 %v5916, 64
    %v5930 = vpop.permute.xlu0 %5929
    %v5932 = vmul.f32 %v5927, %v5930
    %5934 = vrot.lane.b32.xlu0 %v5932, 64
    %v5935 = vpop.permute.xlu0 %5934
    %v5937 = vadd.f32 %v5776, %v5935
    %v5938 = vtanh.pop %v5937
    %v5939 = vsub.f32 1.0, %v5927
    %5941 = vrot.lane.b32.xlu0 %v5938, 96
    %v5942 = vpop.permute.xlu0 %5941
    %v5944 = vmul.f32 %v5939, %v5942
    %v5945 = vmul.f32 %v5927, %v5868
    %v5946 = vadd.f32 %v5944, %v5945
    %5948 = vrot.lane.b32.xlu0 %v5946, 96
    %v5949 = vpop.permute.xlu0 %5948
    %5951 = vst.msk [vmem:[#allocation6 + $0x2] sm:$0x3] %vm5628, %v5949
    %v5952 = vpack.c.bf16 %v5946, %v5946
    %5954 = vrot.lane.b32.xlu0 %v5952, 96
    %v5955 = vpop.permute.xlu0 %5954
    %v5957 = vsel %vm5668, %v5955, 0
    %5959 = vmatprep.subr.bf16.mxu0 0
    %5960 = vmatpush1.bf16.msra.mxu0 %v5796
    %5961 = vmatprep.subr.bf16.mxu0 0
    %5962 = vmatpush1.bf16.msra.mxu0 %v5797
    %5963 = vmatprep.subr.bf16.mxu0 0
    %5964 = vmatpush1.bf16.msra.mxu0 0
    %5965 = vmatprep.subr.bf16.mxu0 0
    %5966 = vmatpush1.bf16.msra.mxu0 0
    %5967 = vmatprep.subr.bf16.mxu0 0
    %5968 = vmatpush1.bf16.msra.mxu0 0
    %5969 = vmatprep.subr.bf16.mxu0 0
    %5970 = vmatpush1.bf16.msra.mxu0 0
    %5971 = vmatprep.subr.bf16.mxu0 0
    %5972 = vmatpush1.bf16.msra.mxu0 0
    %5973 = vmatprep.subr.bf16.mxu0 0
    %5974 = vmatpush1.bf16.msra.mxu0 0
    %5975 = vmatprep.subr.bf16.mxu0 0
    %5976 = vmatpush1.bf16.msra.mxu0 0
    %5977 = vmatprep.subr.bf16.mxu0 0
    %5978 = vmatpush1.bf16.msra.mxu0 0
    %5979 = vmatprep.subr.bf16.mxu0 0
    %5980 = vmatpush1.bf16.msra.mxu0 0
    %5981 = vmatprep.subr.bf16.mxu0 0
    %5982 = vmatpush1.bf16.msra.mxu0 0
    %5983 = vmatprep.subr.bf16.mxu0 0
    %5984 = vmatpush1.bf16.msra.mxu0 0
    %5985 = vmatprep.subr.bf16.mxu0 0
    %5986 = vmatpush1.bf16.msra.mxu0 0
    %5987 = vmatprep.subr.bf16.mxu0 0
    %5988 = vmatpush1.bf16.msra.mxu0 0
    %5989 = vmatprep.subr.bf16.mxu0 0
    %5990 = vmatpush1.bf16.msra.mxu0 0
    %5991 = vmatprep.mubr.bf16.mxu0 0
    %5992 = vmatmul.mubr.bf16.gmra.mrb[0].mxu0 %v5957
    %v5993 = vpop.f32.mrb[0].mxu0
    %v5994 = vadd.f32 %v5786, %v5993
    %v5995 = vpop.f32.mrb[0].mxu0
    %v5996 = vpop.f32.mrb[0].mxu0
    %v5997 = vpop.f32.mrb[0].mxu0
    %5998 = vdwg.mxu0
    %v5999 = vadd.f32 %v5776, %v5994
    %v6000 = vxor.u32 %v5999, 2147483648
    %v6001 = vmul.f32 %v6000, 1.442695
    %v6002 = vpow.pop %v6001
    %v6003 = vadd.f32 %v6002, 1.0
    %v6004 = vrcp.pop %v6003
    %v6005 = vmul.f32 1.0, %v6004
    %6007 = vrot.lane.b32.xlu0 %v5994, 64
    %v6008 = vpop.permute.xlu0 %6007
    %v6010 = vmul.f32 %v6005, %v6008
    %6012 = vrot.lane.b32.xlu0 %v6010, 64
    %v6013 = vpop.permute.xlu0 %6012
    %v6015 = vadd.f32 %v5776, %v6013
    %v6016 = vtanh.pop %v6015
    %v6017 = vsub.f32 1.0, %v6005
    %6019 = vrot.lane.b32.xlu0 %v6016, 96
    %v6020 = vpop.permute.xlu0 %6019
    %v6022 = vmul.f32 %v6017, %v6020
    %v6023 = vmul.f32 %v6005, %v5946
    %v6024 = vadd.f32 %v6022, %v6023
    %6026 = vrot.lane.b32.xlu0 %v6024, 96
    %v6027 = vpop.permute.xlu0 %6026
    %6029 = vst.msk [vmem:[#allocation6 + $0x4] sm:$0x3] %vm5628, %v6027
    %v6030 = vpack.c.bf16 %v6024, %v6024
    %6032 = vrot.lane.b32.xlu0 %v6030, 96
    %v6033 = vpop.permute.xlu0 %6032
    %v6035 = vsel %vm5668, %v6033, 0
    %6037 = vmatprep.subr.bf16.mxu0 0
    %6038 = vmatpush1.bf16.msra.mxu0 %v5796
    %6039 = vmatprep.subr.bf16.mxu0 0
    %6040 = vmatpush1.bf16.msra.mxu0 %v5797
    %6041 = vmatprep.subr.bf16.mxu0 0
    %6042 = vmatpush1.bf16.msra.mxu0 0
    %6043 = vmatprep.subr.bf16.mxu0 0
    %6044 = vmatpush1.bf16.msra.mxu0 0
    %6045 = vmatprep.subr.bf16.mxu0 0
    %6046 = vmatpush1.bf16.msra.mxu0 0
    %6047 = vmatprep.subr.bf16.mxu0 0
    %6048 = vmatpush1.bf16.msra.mxu0 0
    %6049 = vmatprep.subr.bf16.mxu0 0
    %6050 = vmatpush1.bf16.msra.mxu0 0
    %6051 = vmatprep.subr.bf16.mxu0 0
    %6052 = vmatpush1.bf16.msra.mxu0 0
    %6053 = vmatprep.subr.bf16.mxu0 0
    %6054 = vmatpush1.bf16.msra.mxu0 0
    %6055 = vmatprep.subr.bf16.mxu0 0
    %6056 = vmatpush1.bf16.msra.mxu0 0
    %6057 = vmatprep.subr.bf16.mxu0 0
    %6058 = vmatpush1.bf16.msra.mxu0 0
    %6059 = vmatprep.subr.bf16.mxu0 0
    %6060 = vmatpush1.bf16.msra.mxu0 0
    %6061 = vmatprep.subr.bf16.mxu0 0
    %6062 = vmatpush1.bf16.msra.mxu0 0
    %6063 = vmatprep.subr.bf16.mxu0 0
    %6064 = vmatpush1.bf16.msra.mxu0 0
    %6065 = vmatprep.subr.bf16.mxu0 0
    %6066 = vmatpush1.bf16.msra.mxu0 0
    %6067 = vmatprep.subr.bf16.mxu0 0
    %6068 = vmatpush1.bf16.msra.mxu0 0
    %6069 = vmatprep.mubr.bf16.mxu0 0
    %6070 = vmatmul.mubr.bf16.gmra.mrb[0].mxu0 %v6035
    %v6071 = vpop.f32.mrb[0].mxu0
    %v6072 = vadd.f32 %v5786, %v6071
    %v6073 = vpop.f32.mrb[0].mxu0
    %v6074 = vpop.f32.mrb[0].mxu0
    %v6075 = vpop.f32.mrb[0].mxu0
    %6076 = vdwg.mxu0
    %v6077 = vadd.f32 %v5776, %v6072
    %v6078 = vxor.u32 %v6077, 2147483648
    %v6079 = vmul.f32 %v6078, 1.442695
    %v6080 = vpow.pop %v6079
    %v6081 = vadd.f32 %v6080, 1.0
    %v6082 = vrcp.pop %v6081
    %v6083 = vmul.f32 1.0, %v6082
    %6085 = vrot.lane.b32.xlu0 %v6072, 64
    %v6086 = vpop.permute.xlu0 %6085
    %v6088 = vmul.f32 %v6083, %v6086
    %6090 = vrot.lane.b32.xlu0 %v6088, 64
    %v6091 = vpop.permute.xlu0 %6090
    %v6093 = vadd.f32 %v5776, %v6091
    %v6094 = vtanh.pop %v6093
    %v6095 = vsub.f32 1.0, %v6083
    %6097 = vrot.lane.b32.xlu0 %v6094, 96
    %v6098 = vpop.permute.xlu0 %6097
    %v6100 = vmul.f32 %v6095, %v6098
    %v6101 = vmul.f32 %v6083, %v6024
    %v6102 = vadd.f32 %v6100, %v6101
    %6104 = vrot.lane.b32.xlu0 %v6102, 96
    %v6105 = vpop.permute.xlu0 %6104
    %6107 = vst.msk [vmem:[#allocation6 + $0x6] sm:$0x3] %vm5628, %v6105
    %v6108 = vpack.c.bf16 %v6102, %v6102
    %6110 = vrot.lane.b32.xlu0 %v6108, 96
    %v6111 = vpop.permute.xlu0 %6110
    %v6113 = vsel %vm5668, %v6111, 0
    %6115 = vmatprep.subr.bf16.mxu0 0
    %6116 = vmatpush1.bf16.msra.mxu0 %v5796
    %6117 = vmatprep.subr.bf16.mxu0 0
    %6118 = vmatpush1.bf16.msra.mxu0 %v5797
    %6119 = vmatprep.subr.bf16.mxu0 0
    %6120 = vmatpush1.bf16.msra.mxu0 0
    %6121 = vmatprep.subr.bf16.mxu0 0
    %6122 = vmatpush1.bf16.msra.mxu0 0
    %6123 = vmatprep.subr.bf16.mxu0 0
    %6124 = vmatpush1.bf16.msra.mxu0 0
    %6125 = vmatprep.subr.bf16.mxu0 0
    %6126 = vmatpush1.bf16.msra.mxu0 0
    %6127 = vmatprep.subr.bf16.mxu0 0
    %6128 = vmatpush1.bf16.msra.mxu0 0
    %6129 = vmatprep.subr.bf16.mxu0 0
    %6130 = vmatpush1.bf16.msra.mxu0 0
    %6131 = vmatprep.subr.bf16.mxu0 0
    %6132 = vmatpush1.bf16.msra.mxu0 0
    %6133 = vmatprep.subr.bf16.mxu0 0
    %6134 = vmatpush1.bf16.msra.mxu0 0
    %6135 = vmatprep.subr.bf16.mxu0 0
    %6136 = vmatpush1.bf16.msra.mxu0 0
    %6137 = vmatprep.subr.bf16.mxu0 0
    %6138 = vmatpush1.bf16.msra.mxu0 0
    %6139 = vmatprep.subr.bf16.mxu0 0
    %6140 = vmatpush1.bf16.msra.mxu0 0
    %6141 = vmatprep.subr.bf16.mxu0 0
    %6142 = vmatpush1.bf16.msra.mxu0 0
    %6143 = vmatprep.subr.bf16.mxu0 0
    %6144 = vmatpush1.bf16.msra.mxu0 0
    %6145 = vmatprep.subr.bf16.mxu0 0
    %6146 = vmatpush1.bf16.msra.mxu0 0
    %6147 = vmatprep.mubr.bf16.mxu0 0
    %6148 = vmatmul.mubr.bf16.gmra.mrb[0].mxu0 %v6113
    %v6149 = vpop.f32.mrb[0].mxu0
    %v6150 = vadd.f32 %v5786, %v6149
    %v6151 = vpop.f32.mrb[0].mxu0
    %v6152 = vpop.f32.mrb[0].mxu0
    %v6153 = vpop.f32.mrb[0].mxu0
    %6154 = vdwg.mxu0
    %v6155 = vadd.f32 %v5776, %v6150
    %v6156 = vxor.u32 %v6155, 2147483648
    %v6157 = vmul.f32 %v6156, 1.442695
    %v6158 = vpow.pop %v6157
    %v6159 = vadd.f32 %v6158, 1.0
    %v6160 = vrcp.pop %v6159
    %v6161 = vmul.f32 1.0, %v6160
    %6163 = vrot.lane.b32.xlu0 %v6150, 64
    %v6164 = vpop.permute.xlu0 %6163
    %v6166 = vmul.f32 %v6161, %v6164
    %6168 = vrot.lane.b32.xlu0 %v6166, 64
    %v6169 = vpop.permute.xlu0 %6168
    %v6171 = vadd.f32 %v5776, %v6169
    %v6172 = vtanh.pop %v6171
    %v6173 = vsub.f32 1.0, %v6161
    %6175 = vrot.lane.b32.xlu0 %v6172, 96
    %v6176 = vpop.permute.xlu0 %6175
    %v6178 = vmul.f32 %v6173, %v6176
    %v6179 = vmul.f32 %v6161, %v6102
    %v6180 = vadd.f32 %v6178, %v6179
    %6182 = vrot.lane.b32.xlu0 %v6180, 96
    %v6183 = vpop.permute.xlu0 %6182
    %6185 = vst.msk [vmem:[#allocation6 + $0x8] sm:$0x3] %vm5628, %v6183
    %v6186 = vpack.c.bf16 %v6180, %v6180
    %6188 = vrot.lane.b32.xlu0 %v6186, 96
    %v6189 = vpop.permute.xlu0 %6188
    %v6191 = vsel %vm5668, %v6189, 0
    %6193 = vmatprep.subr.bf16.mxu0 0
    %6194 = vmatpush1.bf16.msra.mxu0 %v5796
    %6195 = vmatprep.subr.bf16.mxu0 0
    %6196 = vmatpush1.bf16.msra.mxu0 %v5797
    %6197 = vmatprep.subr.bf16.mxu0 0
    %6198 = vmatpush1.bf16.msra.mxu0 0
    %6199 = vmatprep.subr.bf16.mxu0 0
    %6200 = vmatpush1.bf16.msra.mxu0 0
    %6201 = vmatprep.subr.bf16.mxu0 0
    %6202 = vmatpush1.bf16.msra.mxu0 0
    %6203 = vmatprep.subr.bf16.mxu0 0
    %6204 = vmatpush1.bf16.msra.mxu0 0
    %6205 = vmatprep.subr.bf16.mxu0 0
    %6206 = vmatpush1.bf16.msra.mxu0 0
    %6207 = vmatprep.subr.bf16.mxu0 0
    %6208 = vmatpush1.bf16.msra.mxu0 0
    %6209 = vmatprep.subr.bf16.mxu0 0
    %6210 = vmatpush1.bf16.msra.mxu0 0
    %6211 = vmatprep.subr.bf16.mxu0 0
    %6212 = vmatpush1.bf16.msra.mxu0 0
    %6213 = vmatprep.subr.bf16.mxu0 0
    %6214 = vmatpush1.bf16.msra.mxu0 0
    %6215 = vmatprep.subr.bf16.mxu0 0
    %6216 = vmatpush1.bf16.msra.mxu0 0
    %6217 = vmatprep.subr.bf16.mxu0 0
    %6218 = vmatpush1.bf16.msra.mxu0 0
    %6219 = vmatprep.subr.bf16.mxu0 0
    %6220 = vmatpush1.bf16.msra.mxu0 0
    %6221 = vmatprep.subr.bf16.mxu0 0
    %6222 = vmatpush1.bf16.msra.mxu0 0
    %6223 = vmatprep.subr.bf16.mxu0 0
    %6224 = vmatpush1.bf16.msra.mxu0 0
    %6225 = vmatprep.mubr.bf16.mxu0 0
    %6226 = vmatmul.mubr.bf16.gmra.mrb[0].mxu0 %v6191
    %v6227 = vpop.f32.mrb[0].mxu0
    %v6228 = vadd.f32 %v5786, %v6227
    %v6229 = vpop.f32.mrb[0].mxu0
    %v6230 = vpop.f32.mrb[0].mxu0
    %v6231 = vpop.f32.mrb[0].mxu0
    %6232 = vdwg.mxu0
    %v6233 = vadd.f32 %v5776, %v6228
    %v6234 = vxor.u32 %v6233, 2147483648
    %v6235 = vmul.f32 %v6234, 1.442695
    %v6236 = vpow.pop %v6235
    %v6237 = vadd.f32 %v6236, 1.0
    %v6238 = vrcp.pop %v6237
    %v6239 = vmul.f32 1.0, %v6238
    %6241 = vrot.lane.b32.xlu0 %v6228, 64
    %v6242 = vpop.permute.xlu0 %6241
    %v6244 = vmul.f32 %v6239, %v6242
    %6246 = vrot.lane.b32.xlu0 %v6244, 64
    %v6247 = vpop.permute.xlu0 %6246
    %v6249 = vadd.f32 %v5776, %v6247
    %v6250 = vtanh.pop %v6249
    %v6251 = vsub.f32 1.0, %v6239
    %6253 = vrot.lane.b32.xlu0 %v6250, 96
    %v6254 = vpop.permute.xlu0 %6253
    %v6256 = vmul.f32 %v6251, %v6254
    %v6257 = vmul.f32 %v6239, %v6180
    %v6258 = vadd.f32 %v6256, %v6257
    %6260 = vrot.lane.b32.xlu0 %v6258, 96
    %v6261 = vpop.permute.xlu0 %6260
    %6263 = vst.msk [vmem:[#allocation6 + $0xa] sm:$0x3] %vm5628, %v6261
    %v6264 = vpack.c.bf16 %v6258, %v6258
    %6266 = vrot.lane.b32.xlu0 %v6264, 96
    %v6267 = vpop.permute.xlu0 %6266
    %v6269 = vsel %vm5668, %v6267, 0
    %6271 = vmatprep.subr.bf16.mxu0 0
    %6272 = vmatpush1.bf16.msra.mxu0 %v5796
    %6273 = vmatprep.subr.bf16.mxu0 0
    %6274 = vmatpush1.bf16.msra.mxu0 %v5797
    %6275 = vmatprep.subr.bf16.mxu0 0
    %6276 = vmatpush1.bf16.msra.mxu0 0
    %6277 = vmatprep.subr.bf16.mxu0 0
    %6278 = vmatpush1.bf16.msra.mxu0 0
    %6279 = vmatprep.subr.bf16.mxu0 0
    %6280 = vmatpush1.bf16.msra.mxu0 0
    %6281 = vmatprep.subr.bf16.mxu0 0
    %6282 = vmatpush1.bf16.msra.mxu0 0
    %6283 = vmatprep.subr.bf16.mxu0 0
    %6284 = vmatpush1.bf16.msra.mxu0 0
    %6285 = vmatprep.subr.bf16.mxu0 0
    %6286 = vmatpush1.bf16.msra.mxu0 0
    %6287 = vmatprep.subr.bf16.mxu0 0
    %6288 = vmatpush1.bf16.msra.mxu0 0
    %6289 = vmatprep.subr.bf16.mxu0 0
    %6290 = vmatpush1.bf16.msra.mxu0 0
    %6291 = vmatprep.subr.bf16.mxu0 0
    %6292 = vmatpush1.bf16.msra.mxu0 0
    %6293 = vmatprep.subr.bf16.mxu0 0
    %6294 = vmatpush1.bf16.msra.mxu0 0
    %6295 = vmatprep.subr.bf16.mxu0 0
    %6296 = vmatpush1.bf16.msra.mxu0 0
    %6297 = vmatprep.subr.bf16.mxu0 0
    %6298 = vmatpush1.bf16.msra.mxu0 0
    %6299 = vmatprep.subr.bf16.mxu0 0
    %6300 = vmatpush1.bf16.msra.mxu0 0
    %6301 = vmatprep.subr.bf16.mxu0 0
    %6302 = vmatpush1.bf16.msra.mxu0 0
    %6303 = vmatprep.mubr.bf16.mxu0 0
    %6304 = vmatmul.mubr.bf16.gmra.mrb[0].mxu0 %v6269
    %v6305 = vpop.f32.mrb[0].mxu0
    %v6306 = vadd.f32 %v5786, %v6305
    %v6307 = vpop.f32.mrb[0].mxu0
    %v6308 = vpop.f32.mrb[0].mxu0
    %v6309 = vpop.f32.mrb[0].mxu0
    %6310 = vdwg.mxu0
    %v6311 = vadd.f32 %v5776, %v6306
    %v6312 = vxor.u32 %v6311, 2147483648
    %v6313 = vmul.f32 %v6312, 1.442695
    %v6314 = vpow.pop %v6313
    %v6315 = vadd.f32 %v6314, 1.0
    %v6316 = vrcp.pop %v6315
    %v6317 = vmul.f32 1.0, %v6316
    %6319 = vrot.lane.b32.xlu0 %v6306, 64
    %v6320 = vpop.permute.xlu0 %6319
    %v6322 = vmul.f32 %v6317, %v6320
    %6324 = vrot.lane.b32.xlu0 %v6322, 64
    %v6325 = vpop.permute.xlu0 %6324
    %v6327 = vadd.f32 %v5776, %v6325
    %v6328 = vtanh.pop %v6327
    %v6329 = vsub.f32 1.0, %v6317
    %6331 = vrot.lane.b32.xlu0 %v6328, 96
    %v6332 = vpop.permute.xlu0 %6331
    %v6334 = vmul.f32 %v6329, %v6332
    %v6335 = vmul.f32 %v6317, %v6258
    %v6336 = vadd.f32 %v6334, %v6335
    %6338 = vrot.lane.b32.xlu0 %v6336, 96
    %v6339 = vpop.permute.xlu0 %6338
    %6341 = vst.msk [vmem:[#allocation6 + $0xc] sm:$0x3] %vm5628, %v6339
    %v6342 = vpack.c.bf16 %v6336, %v6336
    %6344 = vrot.lane.b32.xlu0 %v6342, 96
    %v6345 = vpop.permute.xlu0 %6344
    %v6347 = vsel %vm5668, %v6345, 0
    %6349 = vmatprep.subr.bf16.mxu0 0
    %6350 = vmatpush1.bf16.msra.mxu0 %v5796
    %6351 = vmatprep.subr.bf16.mxu0 0
    %6352 = vmatpush1.bf16.msra.mxu0 %v5797
    %6353 = vmatprep.subr.bf16.mxu0 0
    %6354 = vmatpush1.bf16.msra.mxu0 0
    %6355 = vmatprep.subr.bf16.mxu0 0
    %6356 = vmatpush1.bf16.msra.mxu0 0
    %6357 = vmatprep.subr.bf16.mxu0 0
    %6358 = vmatpush1.bf16.msra.mxu0 0
    %6359 = vmatprep.subr.bf16.mxu0 0
    %6360 = vmatpush1.bf16.msra.mxu0 0
    %6361 = vmatprep.subr.bf16.mxu0 0
    %6362 = vmatpush1.bf16.msra.mxu0 0
    %6363 = vmatprep.subr.bf16.mxu0 0
    %6364 = vmatpush1.bf16.msra.mxu0 0
    %6365 = vmatprep.subr.bf16.mxu0 0
    %6366 = vmatpush1.bf16.msra.mxu0 0
    %6367 = vmatprep.subr.bf16.mxu0 0
    %6368 = vmatpush1.bf16.msra.mxu0 0
    %6369 = vmatprep.subr.bf16.mxu0 0
    %6370 = vmatpush1.bf16.msra.mxu0 0
    %6371 = vmatprep.subr.bf16.mxu0 0
    %6372 = vmatpush1.bf16.msra.mxu0 0
    %6373 = vmatprep.subr.bf16.mxu0 0
    %6374 = vmatpush1.bf16.msra.mxu0 0
    %6375 = vmatprep.subr.bf16.mxu0 0
    %6376 = vmatpush1.bf16.msra.mxu0 0
    %6377 = vmatprep.subr.bf16.mxu0 0
    %6378 = vmatpush1.bf16.msra.mxu0 0
    %6379 = vmatprep.subr.bf16.mxu0 0
    %6380 = vmatpush1.bf16.msra.mxu0 0
    %6381 = vmatprep.mubr.bf16.mxu0 0
    %6382 = vmatmul.mubr.bf16.gmra.mrb[0].mxu0 %v6347
    %v6383 = vpop.f32.mrb[0].mxu0
    %v6384 = vadd.f32 %v5786, %v6383
    %v6385 = vpop.f32.mrb[0].mxu0
    %v6386 = vpop.f32.mrb[0].mxu0
    %v6387 = vpop.f32.mrb[0].mxu0
    %6388 = vdwg.mxu0
    %v6389 = vadd.f32 %v5776, %v6384
    %v6390 = vxor.u32 %v6389, 2147483648
    %v6391 = vmul.f32 %v6390, 1.442695
    %v6392 = vpow.pop %v6391
    %v6393 = vadd.f32 %v6392, 1.0
    %v6394 = vrcp.pop %v6393
    %v6395 = vmul.f32 1.0, %v6394
    %6397 = vrot.lane.b32.xlu0 %v6384, 64
    %v6398 = vpop.permute.xlu0 %6397
    %v6400 = vmul.f32 %v6395, %v6398
    %6402 = vrot.lane.b32.xlu0 %v6400, 64
    %v6403 = vpop.permute.xlu0 %6402
    %v6405 = vadd.f32 %v5776, %v6403
    %v6406 = vtanh.pop %v6405
    %v6407 = vsub.f32 1.0, %v6395
    %6409 = vrot.lane.b32.xlu0 %v6406, 96
    %v6410 = vpop.permute.xlu0 %6409
    %v6412 = vmul.f32 %v6407, %v6410
    %v6413 = vmul.f32 %v6395, %v6336
    %v6414 = vadd.f32 %v6412, %v6413
    %6416 = vrot.lane.b32.xlu0 %v6414, 96
    %v6417 = vpop.permute.xlu0 %6416
    %6419 = vst.msk [vmem:[#allocation6 + $0xe] sm:$0x3] %vm5628, %v6417
    %v6420 = vld [vmem:[%s7 + $0x130] sm:$0xf]
    %v6421 = vld [vmem:[%s7 + $0x134] sm:$0xf]
    %v6422 = vld [vmem:[%s7 + $0x138] sm:$0xf]
    %v6423 = vld [vmem:[%s7 + $0x13c] sm:$0xf]
    %v6424 = vld [vmem:[#allocation15 + $0x3] sm:$0x1]
    %v6425 = vld [vmem:[#allocation6] sm:$0xff]
    %v6426 = vld [vmem:[#allocation6 + $0x8] sm:$0xff]
    %v6427 = vpack.c.bf16 %v6426, %v6425
    %v6432 = vunpack.c.l.b16 %v6420
    %v6433 = vunpack.c.l.b16 %v6421
    %v6434 = vunpack.c.l.b16 %v6422
    %v6435 = vunpack.c.l.b16 %v6423
    %v6436 = vpack.c.b16 %v6433, %v6432
    %v6437 = vpack.c.b16 %v6435, %v6434
    %v6441 = vsel %vm5668, %v6427, 0
    %6443 = vmatprep.subr.bf16.mxu0 0
    %6444 = vmatpush1.bf16.msra.mxu0 %v6436
    %6445 = vmatprep.subr.bf16.mxu0 0
    %6446 = vmatpush1.bf16.msra.mxu0 %v6437
    %6447 = vmatprep.subr.bf16.mxu0 0
    %6448 = vmatpush1.bf16.msra.mxu0 0
    %6449 = vmatprep.subr.bf16.mxu0 0
    %6450 = vmatpush1.bf16.msra.mxu0 0
    %6451 = vmatprep.subr.bf16.mxu0 0
    %6452 = vmatpush1.bf16.msra.mxu0 0
    %6453 = vmatprep.subr.bf16.mxu0 0
    %6454 = vmatpush1.bf16.msra.mxu0 0
    %6455 = vmatprep.subr.bf16.mxu0 0
    %6456 = vmatpush1.bf16.msra.mxu0 0
    %6457 = vmatprep.subr.bf16.mxu0 0
    %6458 = vmatpush1.bf16.msra.mxu0 0
    %6459 = vmatprep.subr.bf16.mxu0 0
    %6460 = vmatpush1.bf16.msra.mxu0 0
    %6461 = vmatprep.subr.bf16.mxu0 0
    %6462 = vmatpush1.bf16.msra.mxu0 0
    %6463 = vmatprep.subr.bf16.mxu0 0
    %6464 = vmatpush1.bf16.msra.mxu0 0
    %6465 = vmatprep.subr.bf16.mxu0 0
    %6466 = vmatpush1.bf16.msra.mxu0 0
    %6467 = vmatprep.subr.bf16.mxu0 0
    %6468 = vmatpush1.bf16.msra.mxu0 0
    %6469 = vmatprep.subr.bf16.mxu0 0
    %6470 = vmatpush1.bf16.msra.mxu0 0
    %6471 = vmatprep.subr.bf16.mxu0 0
    %6472 = vmatpush1.bf16.msra.mxu0 0
    %6473 = vmatprep.subr.bf16.mxu0 0
    %6474 = vmatpush1.bf16.msra.mxu0 0
    %6475 = vmatprep.mubr.bf16.mxu0 0
    %6476 = vmatmul.mubr.bf16.gmra.mrb[0].mxu0 %v6441
    %v6477 = vpop.f32.mrb[0].mxu0
    %v6478 = vadd.f32 0.0, %v6477
    %v6479 = vpop.f32.mrb[0].mxu0
    %v6480 = vpop.f32.mrb[0].mxu0
    %v6481 = vadd.f32 0.0, %v6480
    %v6482 = vpop.f32.mrb[0].mxu0
    %6483 = vdwg.mxu0
    %v6485 = vlaneseq
    %v6486 = vshrl.u32 %v6485, 7
    %v6487 = vsub.s32 0, %v6486
    %v6488 = vrot.slane %v6424, %v6487
    %v6490 = vadd.f32 %v6478, %v6488
    %v6491 = vadd.f32 %v6481, %v6488
    %v6492 = vand.u32 2147483647, %v6490
    %v6493 = vand.u32 2147483647, %v6491
    %v6494 = vadd.f32 %v6492, 1.0
    %v6495 = vadd.f32 %v6493, 1.0
    %v6496 = vrcp.pop %v6494
    %v6497 = vrcp.pop %v6495
    %v6498 = vmul.f32 %v6490, %v6496
    %v6499 = vmul.f32 %v6491, %v6497
    %v6500 = vmul.f32 %v6498, 5.0
    %v6501 = vmul.f32 %v6499, 5.0
    %vm6502 = vcmask 15360
    %6503 = vst.msk [vmem:[%s9] sm:$0xff] %vm6502, %v6500
    %6504 = vst.msk [vmem:[%s9 + $0x8] sm:$0xff] %vm6502, %v6501
    // Predicated region
    $region46: #{tpu_custom_call.1} parent=1 // pred_check
      _
    $region47: #{tpu_custom_call.1} parent=1 // pred_check_branch
      %6506 = sbr.rel (0) target = $region49
    $region48: #{tpu_custom_call.1} parent=1 // pred_region
      _
    $region49: #{tpu_custom_call.1} parent=1 // pred_fallthru
      _
    // Predicated region
    $region50: #{tpu_custom_call.1} parent=1 // pred_check
      _
    $region51: #{tpu_custom_call.1} parent=1 // pred_check_branch
      %6508 = sbr.rel (0) target = $region53
    $region52: #{tpu_custom_call.1} parent=1 // pred_region
      %s6510 = ssub.s32 32, 32
      %6511 = vsyncadd [#allocation9], %s6510
      %s6513 = sshll.u32 [#allocation16], 4
      %s6514 = int_to_ptr.vmem [resolvable:$true] %s6513
      %6516 = dma.vmem_to_hbm [thread:$0]  %s6514, 32, %s10, [#allocation9]
    $region53: #{tpu_custom_call.1} parent=1 // pred_fallthru
      _
    // Predicated region
    $region54: #{tpu_custom_call.1} parent=1 // pred_check
      _
    $region55: #{tpu_custom_call.1} parent=1 // pred_check_branch
      %6518 = sbr.rel (0) target = $region57
    $region56: #{tpu_custom_call.1} parent=1 // pred_region
      %s6520 = ssub.s32 32, 32
      %6521 = vsyncadd [#allocation18], %s6520
      %s6523 = sshll.u32 [#allocation17], 4
      %s6524 = int_to_ptr.vmem [resolvable:$true] %s6523
      %6526 = dma.vmem_to_hbm [thread:$0]  %s6524, 32, %s11, [#allocation18]
    $region57: #{tpu_custom_call.1} parent=1 // pred_fallthru
      _
    // Predicated region
    $region58: #{tpu_custom_call.1} parent=1 // pred_check
      _
    $region59: #{tpu_custom_call.1} parent=1 // pred_check_branch
      %6528 = sbr.rel (0) target = $region61
    $region60: #{tpu_custom_call.1} parent=1 // pred_region
      _
    $region61: #{tpu_custom_call.1} parent=1 // pred_fallthru
      _
    // Predicated region
    $region62: #{tpu_custom_call.1} parent=1 // pred_check
      _
    $region63: #{tpu_custom_call.1} parent=1 // pred_check_branch
      %6530 = sbr.rel (0) target = $region65
    $region64: #{tpu_custom_call.1} parent=1 // pred_region
      %6531 = dma.done [#allocation9], 32
    $region65: #{tpu_custom_call.1} parent=1 // pred_fallthru
      _
    // Predicated region
    $region66: #{tpu_custom_call.1} parent=1 // pred_check
      _
    $region67: #{tpu_custom_call.1} parent=1 // pred_check_branch
      %6533 = sbr.rel (0) target = $region69
    $region68: #{tpu_custom_call.1} parent=1 // pred_region
      %6534 = dma.done [#allocation18], 32
    $region69: #{tpu_custom_call.1} parent=1 // pred_fallthru
      _
    %6535 = vsyncpa [#allocation8], 1
    %6536 = vsyncpa [#allocation11], 1
    %6537 = vsyncpa [#allocation14], 1
    %6538 = vsyncpa [#allocation9], 1
    %6539 = vsyncpa [#allocation18], 1
  %6540 = vsyncmov [#allocation5]
  %s6541 = vpop.sfrf %6540
  %p6542 = scmp.eq.s32.totalorder %s6541, 0
  %p6543 = pneg %p6542
  %6545 = shalt.err (%p6543)
  %s6546 = scalar_lea.sflag [#allocation5], 1
  %6547 = vsyncmov %s6546
  %s6548 = vpop.sfrf %6547
  %p6549 = scmp.eq.s32.totalorder %s6548, 0
  %p6550 = pneg %p6549
  %6552 = shalt.err (%p6550)
  %s6553 = scalar_lea.sflag [#allocation5], 2
  %6554 = vsyncmov %s6553
  %s6555 = vpop.sfrf %6554
  %p6556 = scmp.eq.s32.totalorder %s6555, 0
  %p6557 = pneg %p6556
  %6559 = shalt.err (%p6557)

</llo_original>
